<compile_context>
chip_gen: v6e
topology: v6e:2x2x1
jax: 0.10.0
libtpu: 0.0.40
codegen_flags: <defaults>
</compile_context>

<pallas_src>
import jax
import jax.numpy as jnp
from jax.experimental import pallas as pl
from jax.experimental.pallas import tpu as pltpu

EPS = 1e-5


# --------------------------- fused Pallas kernel -----------------------------

def _build_memblock_kernel(H, W, C, R, M, margin):
    """Builds the fused MemoryBlock kernel for static (H, W, C, R, M)."""
    Wp = W + 2                     # padded width
    Pp = (H + 2) * (W + 2)         # flattened padded spatial size (lane axis)

    def kernel(x_ref, ys_ref, mask_ref,
               w1_ref, w2_ref, wg_ref,
               s1_ref, b1_ref, s2_ref, b2_ref, sg_ref, bg_ref,
               o_ref, pad_ref):
        mask = mask_ref[...]                        # (1, Pp): 1 interior, 0 ring

        # Zero the halo scratch once per grid step (margins must read as 0;
        # the interior window is fully overwritten before every use).
        pad_ref[...] = jnp.zeros_like(pad_ref)

        def bn_relu_conv3x3(act, w_ref, scale, shift):
            # BN (eval, folded) + ReLU; zero the 1-pixel ring so the shifted
            # reads below see exact zero padding (== Conv2d padding=1).
            b = jnp.maximum(act * scale + shift, 0.0) * mask      # (C, Pp)
            pad_ref[:, margin:margin + Pp] = b
            acc = jnp.zeros((C, Pp), jnp.float32)
            # 3x3 conv == 9 shifted (C,C)@(C,Pp) matmuls, accumulated in f32.
            for ky in range(3):
                for kx in range(3):
                    off = (ky - 1) * Wp + (kx - 1)
                    tap = pad_ref[:, margin + off: margin + off + Pp]
                    acc = acc + jnp.dot(w_ref[ky * 3 + kx], tap,
                                        preferred_element_type=jnp.float32)
            return acc

        x = x_ref[0]                                 # (C, Pp)
        gate = jnp.zeros((C, Pp), jnp.float32)

        # Shared-weight recursion; everything stays in VMEM.  The gate
        # contribution of each short-term memory x_i is accumulated on the
        # fly, so xs never needs to be stored / concatenated.
        for i in range(R):
            out = bn_relu_conv3x3(x, w1_ref, s1_ref[...], b1_ref[...])
            out = bn_relu_conv3x3(out, w2_ref, s2_ref[...], b2_ref[...])
            x = out + x                               # residual add
            a = jnp.maximum(x * sg_ref[i] + bg_ref[i], 0.0)
            gate = gate + jnp.dot(wg_ref[i], a,
                                  preferred_element_type=jnp.float32)

        # Long-term memory (ys) contributions to the gate unit.
        for g in range(M):
            y = ys_ref[0, g]
            a = jnp.maximum(y * sg_ref[R + g] + bg_ref[R + g], 0.0)
            gate = gate + jnp.dot(wg_ref[R + g], a,
                                  preferred_element_type=jnp.float32)

        o_ref[0] = gate.astype(o_ref.dtype)

    return kernel


# --------------------------- public wrapper ----------------------------------

def memory_block_forward(x_nchw, ys_nchw, params):
    """Mirror of MemoryBlock.forward(x, ys): appends the gate output (NCHW)
    to `ys_nchw` and returns it."""
    R = params['num_resblock']
    N, C, H, W = x_nchw.shape
    M = len(ys_nchw)
    G = R + M
    Pp = (H + 2) * (W + 2)
    margin = pl.cdiv(W + 3, 128) * 128      # halo >= W+3, lane-aligned store

    def pad_flat(a):   # (N, C, H, W) -> (N, C, (H+2)*(W+2)), zero ring
        return jnp.pad(a.astype(jnp.float32),
                       ((0, 0), (0, 0), (1, 1), (1, 1))).reshape(N, C, Pp)

    x_p = pad_flat(x_nchw)                                     # (N, C, Pp)
    ys_p = jnp.stack([pad_flat(y) for y in ys_nchw], axis=1)   # (N, M, C, Pp)

    interior = jnp.zeros((H + 2, W + 2), jnp.float32)
    interior = interior.at[1:H + 1, 1:W + 1].set(1.0).reshape(1, Pp)

    kernel = _build_memblock_kernel(H, W, C, R, M, margin)

    def full_spec(shape):
        return pl.BlockSpec(shape, lambda n, _s=shape: (0,) * len(_s))

    in_specs = [
        pl.BlockSpec((1, C, Pp), lambda n: (n, 0, 0)),         # x
        pl.BlockSpec((1, M, C, Pp), lambda n: (n, 0, 0, 0)),   # ys
        full_spec((1, Pp)),                                    # interior mask
        full_spec((9, C, C)),                                  # w1 taps
        full_spec((9, C, C)),                                  # w2 taps
        full_spec((G, C, C)),                                  # gate weights
        full_spec((C, 1)), full_spec((C, 1)),                  # bn1 scale/shift
        full_spec((C, 1)), full_spec((C, 1)),                  # bn2 scale/shift
        full_spec((G, C, 1)), full_spec((G, C, 1)),            # gate bn
    ]

    out_p = pl.pallas_call(
        kernel,
        out_shape=jax.ShapeDtypeStruct((N, C, Pp), jnp.float32),
        grid=(N,),
        in_specs=in_specs,
        out_specs=pl.BlockSpec((1, C, Pp), lambda n: (n, 0, 0)),
        scratch_shapes=[pltpu.VMEM((C, Pp + 2 * margin), jnp.float32)],
        compiler_params=pltpu.CompilerParams(
            dimension_semantics=("parallel",)),
    )(x_p, ys_p, interior,
      params['w1_t'], params['w2_t'], params['wg_t'],
      params['bn1_scale'], params['bn1_shift'],
      params['bn2_scale'], params['bn2_shift'],
      params['bng_scale'], params['bng_shift'])

    gate = out_p.reshape(N, C, H + 2, W + 2)[:, :, 1:H + 1, 1:W + 1]
    ys_nchw.append(gate)                    # ys.append(gate_out)
    return gate


# --------------------------- parameters --------------------------------------

def init_params(key, channels, num_resblock, num_memblock):
    c = channels
    G = num_resblock + num_memblock
    cin_gate = G * c

    def bn_params(k, ch):
        k1, k2, k3, k4 = jax.random.split(k, 4)
        gamma = jax.random.uniform(k1, (ch,), jnp.float32, 0.5, 1.5)
        beta = jax.random.normal(k2, (ch,), jnp.float32) * 0.1
        mean = jax.random.normal(k3, (ch,), jnp.float32) * 0.1
        var = jax.random.uniform(k4, (ch,), jnp.float32, 0.5, 1.5)
        scale = gamma / jnp.sqrt(var + EPS)
        shift = beta - mean * scale
        return scale, shift

    keys = jax.random.split(key, 6)
    bn1_s, bn1_b = bn_params(keys[0], c)
    bn2_s, bn2_b = bn_params(keys[1], c)
    bng_s, bng_b = bn_params(keys[2], cin_gate)
    w1_oihw = jax.random.normal(keys[3], (c, c, 3, 3), jnp.float32) * 0.1
    w2_oihw = jax.random.normal(keys[4], (c, c, 3, 3), jnp.float32) * 0.1
    wg_oihw = jax.random.normal(keys[5], (c, cin_gate, 1, 1), jnp.float32) * 0.1

    def conv_to_taps(w):   # (O, I, 3, 3) -> (9, O, I), tap index t = ky*3+kx
        return jnp.transpose(w, (2, 3, 0, 1)).reshape(9, w.shape[0], w.shape[1])

    params = {
        'num_resblock': num_resblock,
        'w1_t': conv_to_taps(w1_oihw),
        'w2_t': conv_to_taps(w2_oihw),
        # gate weight per memory group g: (G, Cout, Cin)
        'wg_t': jnp.transpose(wg_oihw[:, :, 0, 0].reshape(c, G, c), (1, 0, 2)),
        'bn1_scale': bn1_s.reshape(c, 1), 'bn1_shift': bn1_b.reshape(c, 1),
        'bn2_scale': bn2_s.reshape(c, 1), 'bn2_shift': bn2_b.reshape(c, 1),
        'bng_scale': bng_s.reshape(G, c, 1), 'bng_shift': bng_b.reshape(G, c, 1),
    }
    raw = {
        'num_resblock': num_resblock,
        'bn1_scale': bn1_s, 'bn1_shift': bn1_b, 'w1_oihw': w1_oihw,
        'bn2_scale': bn2_s, 'bn2_shift': bn2_b, 'w2_oihw': w2_oihw,
        'bng_scale': bng_s, 'bng_shift': bng_b, 'wg_oihw': wg_oihw,
    }
    return params, raw


# --------------------------- pure-JAX reference -------------------------------

def _ref_conv(x_nhwc, w_oihw, pad):
    w_hwio = jnp.transpose(w_oihw, (2, 3, 1, 0))
    return jax.lax.conv_general_dilated(
        x_nhwc, w_hwio, (1, 1), [(pad, pad), (pad, pad)],
        dimension_numbers=('NHWC', 'HWIO', 'NHWC'),
        precision=jax.lax.Precision.HIGHEST)


def ref_memory_block(x_nchw, ys_nchw, raw):
    x = jnp.transpose(x_nchw, (0, 2, 3, 1)).astype(jnp.float32)
    ys = [jnp.transpose(y, (0, 2, 3, 1)).astype(jnp.float32) for y in ys_nchw]

    def brc(z, scale, shift, w, pad):
        a = jnp.maximum(z * scale + shift, 0.0)
        return _ref_conv(a, w, pad)

    xs = []
    for _ in range(raw['num_resblock']):
        out = brc(x, raw['bn1_scale'], raw['bn1_shift'], raw['w1_oihw'], 1)
        out = brc(out, raw['bn2_scale'], raw['bn2_shift'], raw['w2_oihw'], 1) + x
        x = out
        xs.append(x)
    gate_in = jnp.concatenate(xs + ys, axis=-1)
    g = brc(gate_in, raw['bng_scale'], raw['bng_shift'], raw['wg_oihw'], 0)
    return jnp.transpose(g, (0, 3, 1, 2))


# --------------------------- main ---------------------------------------------

if __name__ == "__main__":
    N, C, H, W = 2, 4, 16, 16      # x: (N, C, H, W) NCHW, like PyTorch
    R, M = 2, 2                    # num_resblock, num_memblock (= len(ys))

    key = jax.random.PRNGKey(0)
    k_x, k_y, k_p = jax.random.split(key, 3)
    x = jax.random.normal(k_x, (N, C, H, W), jnp.float32)
    ys = [jax.random.normal(k, (N, C, H, W), jnp.float32)
          for k in jax.random.split(k_y, M)]

    params, raw = init_params(k_p, C, R, M)

    ys_run = list(ys)
    out = memory_block_forward(x, ys_run, params)
    out = jax.block_until_ready(out)

    assert out.shape == (N, C, H, W)
    assert len(ys_run) == M + 1      # ys.append(gate_out)

    ref = jax.block_until_ready(ref_memory_block(x, list(ys), raw))
    max_err = float(jnp.max(jnp.abs(out - ref)))
    assert jnp.allclose(out, ref, atol=1e-3, rtol=1e-3), max_err

    print("KERNEL_OK")
</pallas_src>

<mosaic_0001>
module attributes {stable_mosaic.version = 11 : i64} {
  func.func @kernel(%arg0: i32, %arg1: memref<1x4x324xf32, #tpu.memory_space<vmem>>, %arg2: memref<1x2x4x324xf32, #tpu.memory_space<vmem>>, %arg3: memref<1x324xf32, #tpu.memory_space<vmem>>, %arg4: memref<9x4x4xf32, #tpu.memory_space<vmem>>, %arg5: memref<9x4x4xf32, #tpu.memory_space<vmem>>, %arg6: memref<4x4x4xf32, #tpu.memory_space<vmem>>, %arg7: memref<4x1xf32, #tpu.memory_space<vmem>>, %arg8: memref<4x1xf32, #tpu.memory_space<vmem>>, %arg9: memref<4x1xf32, #tpu.memory_space<vmem>>, %arg10: memref<4x1xf32, #tpu.memory_space<vmem>>, %arg11: memref<4x4x1xf32, #tpu.memory_space<vmem>>, %arg12: memref<4x4x1xf32, #tpu.memory_space<vmem>>, %arg13: memref<1x4x324xf32, #tpu.memory_space<vmem>>, %arg14: memref<4x580xf32, #tpu.memory_space<vmem>>) attributes {dimension_semantics = [#tpu.dimension_semantics<parallel>], iteration_bounds = array<i64: 2>, scalar_prefetch = 0 : i64, scratch_operands = 1 : i64, tpu.core_type = #tpu.core_type<tc>, window_params = [{transform_indices = @transform_0, window_bounds = array<i64: 1, 4, 324>}, {transform_indices = @transform_1, window_bounds = array<i64: 1, 2, 4, 324>}, {pipeline_mode = #tpu.pipeline_mode<synchronous>, transform_indices = @transform_2, window_bounds = array<i64: 1, 324>}, {pipeline_mode = #tpu.pipeline_mode<synchronous>, transform_indices = @transform_3, window_bounds = array<i64: 9, 4, 4>}, {pipeline_mode = #tpu.pipeline_mode<synchronous>, transform_indices = @transform_4, window_bounds = array<i64: 9, 4, 4>}, {pipeline_mode = #tpu.pipeline_mode<synchronous>, transform_indices = @transform_5, window_bounds = array<i64: 4, 4, 4>}, {pipeline_mode = #tpu.pipeline_mode<synchronous>, transform_indices = @transform_6, window_bounds = array<i64: 4, 1>}, {pipeline_mode = #tpu.pipeline_mode<synchronous>, transform_indices = @transform_7, window_bounds = array<i64: 4, 1>}, {pipeline_mode = #tpu.pipeline_mode<synchronous>, transform_indices = @transform_8, window_bounds = array<i64: 4, 1>}, {pipeline_mode = #tpu.pipeline_mode<synchronous>, transform_indices = @transform_9, window_bounds = array<i64: 4, 1>}, {pipeline_mode = #tpu.pipeline_mode<synchronous>, transform_indices = @transform_10, window_bounds = array<i64: 4, 4, 1>}, {pipeline_mode = #tpu.pipeline_mode<synchronous>, transform_indices = @transform_11, window_bounds = array<i64: 4, 4, 1>}, {transform_indices = @transform_12, window_bounds = array<i64: 1, 4, 324>}]} {
    %c0 = arith.constant 0 : index
    %c0_0 = arith.constant 0 : index
    %0 = vector.load %arg3[%c0, %c0_0] : memref<1x324xf32, #tpu.memory_space<vmem>>, vector<1x324xf32>
    %cst = arith.constant 0.000000e+00 : f32
    %1 = vector.broadcast %cst : f32 to vector<4x580xf32>
    %c0_1 = arith.constant 0 : index
    %c0_2 = arith.constant 0 : index
    %2 = vector.load %arg14[%c0_1, %c0_2] : memref<4x580xf32, #tpu.memory_space<vmem>>, vector<4x580xf32>
    tpu.vector_store %arg14[%c0_1, %c0_2], %1 {strides = array<i32>} : memref<4x580xf32, #tpu.memory_space<vmem>>, vector<4x580xf32>,
    %c0_3 = arith.constant 0 : index
    %c0_4 = arith.constant 0 : index
    %c0_5 = arith.constant 0 : index
    %3 = vector.load %arg1[%c0_3, %c0_4, %c0_5] : memref<1x4x324xf32, #tpu.memory_space<vmem>>, vector<1x4x324xf32>
    %4 = vector.shape_cast %3 : vector<1x4x324xf32> to vector<4x324xf32>
    %cst_6 = arith.constant 0.000000e+00 : f32
    %5 = vector.broadcast %cst_6 : f32 to vector<4x324xf32>
    %c0_7 = arith.constant 0 : index
    %c0_8 = arith.constant 0 : index
    %6 = vector.load %arg7[%c0_7, %c0_8] : memref<4x1xf32, #tpu.memory_space<vmem>>, vector<4x1xf32>
    %c0_9 = arith.constant 0 : index
    %c0_10 = arith.constant 0 : index
    %7 = vector.load %arg8[%c0_9, %c0_10] : memref<4x1xf32, #tpu.memory_space<vmem>>, vector<4x1xf32>
    %8 = vector.broadcast %6 : vector<4x1xf32> to vector<4x324xf32>
    %9 = arith.mulf %4, %8 : vector<4x324xf32>
    %10 = vector.broadcast %7 : vector<4x1xf32> to vector<4x324xf32>
    %11 = arith.addf %9, %10 : vector<4x324xf32>
    %cst_11 = arith.constant 0.000000e+00 : f32
    %12 = vector.broadcast %cst_11 : f32 to vector<4x324xf32>
    %13 = arith.maximumf %11, %12 : vector<4x324xf32>
    %14 = vector.broadcast %0 : vector<1x324xf32> to vector<4x324xf32>
    %15 = arith.mulf %13, %14 : vector<4x324xf32>
    %c0_12 = arith.constant 0 : index
    %c128 = arith.constant 128 : index
    %16 = vector.load %arg14[%c0_12, %c128] : memref<4x580xf32, #tpu.memory_space<vmem>>, vector<4x324xf32>
    tpu.vector_store %arg14[%c0_12, %c128], %15 {strides = array<i32>} : memref<4x580xf32, #tpu.memory_space<vmem>>, vector<4x324xf32>,
    %cst_13 = arith.constant 0.000000e+00 : f32
    %17 = vector.broadcast %cst_13 : f32 to vector<4x324xf32>
    %c0_14 = arith.constant 0 : index
    %c109 = arith.constant 109 : index
    %18 = vector.load %arg14[%c0_14, %c109] : memref<4x580xf32, #tpu.memory_space<vmem>>, vector<4x324xf32>
    %c0_15 = arith.constant 0 : index
    %c0_16 = arith.constant 0 : index
    %c0_17 = arith.constant 0 : index
    %19 = vector.load %arg4[%c0_15, %c0_16, %c0_17] : memref<9x4x4xf32, #tpu.memory_space<vmem>>, vector<1x4x4xf32>
    %20 = vector.shape_cast %19 : vector<1x4x4xf32> to vector<4x4xf32>
    %cst_18 = arith.constant dense<0.000000e+00> : vector<4x324xf32>
    %21 = tpu.matmul %20, %18, %cst_18 {dimension_numbers = #tpu.dot_dimension_numbers<[1], [0], [0], [1], [0, 0, 1, 1], [], []>} : vector<4x4xf32>, vector<4x324xf32>, vector<4x324xf32> -> vector<4x324xf32>
    %22 = arith.addf %17, %21 : vector<4x324xf32>
    %c0_19 = arith.constant 0 : index
    %c110 = arith.constant 110 : index
    %23 = vector.load %arg14[%c0_19, %c110] : memref<4x580xf32, #tpu.memory_space<vmem>>, vector<4x324xf32>
    %c1 = arith.constant 1 : index
    %c0_20 = arith.constant 0 : index
    %c0_21 = arith.constant 0 : index
    %24 = vector.load %arg4[%c1, %c0_20, %c0_21] : memref<9x4x4xf32, #tpu.memory_space<vmem>>, vector<1x4x4xf32>
    %25 = vector.shape_cast %24 : vector<1x4x4xf32> to vector<4x4xf32>
    %cst_22 = arith.constant dense<0.000000e+00> : vector<4x324xf32>
    %26 = tpu.matmul %25, %23, %cst_22 {dimension_numbers = #tpu.dot_dimension_numbers<[1], [0], [0], [1], [0, 0, 1, 1], [], []>} : vector<4x4xf32>, vector<4x324xf32>, vector<4x324xf32> -> vector<4x324xf32>
    %27 = arith.addf %22, %26 : vector<4x324xf32>
    %c0_23 = arith.constant 0 : index
    %c111 = arith.constant 111 : index
    %28 = vector.load %arg14[%c0_23, %c111] : memref<4x580xf32, #tpu.memory_space<vmem>>, vector<4x324xf32>
    %c2 = arith.constant 2 : index
    %c0_24 = arith.constant 0 : index
    %c0_25 = arith.constant 0 : index
    %29 = vector.load %arg4[%c2, %c0_24, %c0_25] : memref<9x4x4xf32, #tpu.memory_space<vmem>>, vector<1x4x4xf32>
    %30 = vector.shape_cast %29 : vector<1x4x4xf32> to vector<4x4xf32>
    %cst_26 = arith.constant dense<0.000000e+00> : vector<4x324xf32>
    %31 = tpu.matmul %30, %28, %cst_26 {dimension_numbers = #tpu.dot_dimension_numbers<[1], [0], [0], [1], [0, 0, 1, 1], [], []>} : vector<4x4xf32>, vector<4x324xf32>, vector<4x324xf32> -> vector<4x324xf32>
    %32 = arith.addf %27, %31 : vector<4x324xf32>
    %c0_27 = arith.constant 0 : index
    %c127 = arith.constant 127 : index
    %33 = vector.load %arg14[%c0_27, %c127] : memref<4x580xf32, #tpu.memory_space<vmem>>, vector<4x324xf32>
    %c3 = arith.constant 3 : index
    %c0_28 = arith.constant 0 : index
    %c0_29 = arith.constant 0 : index
    %34 = vector.load %arg4[%c3, %c0_28, %c0_29] : memref<9x4x4xf32, #tpu.memory_space<vmem>>, vector<1x4x4xf32>
    %35 = vector.shape_cast %34 : vector<1x4x4xf32> to vector<4x4xf32>
    %cst_30 = arith.constant dense<0.000000e+00> : vector<4x324xf32>
    %36 = tpu.matmul %35, %33, %cst_30 {dimension_numbers = #tpu.dot_dimension_numbers<[1], [0], [0], [1], [0, 0, 1, 1], [], []>} : vector<4x4xf32>, vector<4x324xf32>, vector<4x324xf32> -> vector<4x324xf32>
    %37 = arith.addf %32, %36 : vector<4x324xf32>
    %c0_31 = arith.constant 0 : index
    %c128_32 = arith.constant 128 : index
    %38 = vector.load %arg14[%c0_31, %c128_32] : memref<4x580xf32, #tpu.memory_space<vmem>>, vector<4x324xf32>
    %c4 = arith.constant 4 : index
    %c0_33 = arith.constant 0 : index
    %c0_34 = arith.constant 0 : index
    %39 = vector.load %arg4[%c4, %c0_33, %c0_34] : memref<9x4x4xf32, #tpu.memory_space<vmem>>, vector<1x4x4xf32>
    %40 = vector.shape_cast %39 : vector<1x4x4xf32> to vector<4x4xf32>
    %cst_35 = arith.constant dense<0.000000e+00> : vector<4x324xf32>
    %41 = tpu.matmul %40, %38, %cst_35 {dimension_numbers = #tpu.dot_dimension_numbers<[1], [0], [0], [1], [0, 0, 1, 1], [], []>} : vector<4x4xf32>, vector<4x324xf32>, vector<4x324xf32> -> vector<4x324xf32>
    %42 = arith.addf %37, %41 : vector<4x324xf32>
    %c0_36 = arith.constant 0 : index
    %c129 = arith.constant 129 : index
    %43 = vector.load %arg14[%c0_36, %c129] : memref<4x580xf32, #tpu.memory_space<vmem>>, vector<4x324xf32>
    %c5 = arith.constant 5 : index
    %c0_37 = arith.constant 0 : index
    %c0_38 = arith.constant 0 : index
    %44 = vector.load %arg4[%c5, %c0_37, %c0_38] : memref<9x4x4xf32, #tpu.memory_space<vmem>>, vector<1x4x4xf32>
    %45 = vector.shape_cast %44 : vector<1x4x4xf32> to vector<4x4xf32>
    %cst_39 = arith.constant dense<0.000000e+00> : vector<4x324xf32>
    %46 = tpu.matmul %45, %43, %cst_39 {dimension_numbers = #tpu.dot_dimension_numbers<[1], [0], [0], [1], [0, 0, 1, 1], [], []>} : vector<4x4xf32>, vector<4x324xf32>, vector<4x324xf32> -> vector<4x324xf32>
    %47 = arith.addf %42, %46 : vector<4x324xf32>
    %c0_40 = arith.constant 0 : index
    %c145 = arith.constant 145 : index
    %48 = vector.load %arg14[%c0_40, %c145] : memref<4x580xf32, #tpu.memory_space<vmem>>, vector<4x324xf32>
    %c6 = arith.constant 6 : index
    %c0_41 = arith.constant 0 : index
    %c0_42 = arith.constant 0 : index
    %49 = vector.load %arg4[%c6, %c0_41, %c0_42] : memref<9x4x4xf32, #tpu.memory_space<vmem>>, vector<1x4x4xf32>
    %50 = vector.shape_cast %49 : vector<1x4x4xf32> to vector<4x4xf32>
    %cst_43 = arith.constant dense<0.000000e+00> : vector<4x324xf32>
    %51 = tpu.matmul %50, %48, %cst_43 {dimension_numbers = #tpu.dot_dimension_numbers<[1], [0], [0], [1], [0, 0, 1, 1], [], []>} : vector<4x4xf32>, vector<4x324xf32>, vector<4x324xf32> -> vector<4x324xf32>
    %52 = arith.addf %47, %51 : vector<4x324xf32>
    %c0_44 = arith.constant 0 : index
    %c146 = arith.constant 146 : index
    %53 = vector.load %arg14[%c0_44, %c146] : memref<4x580xf32, #tpu.memory_space<vmem>>, vector<4x324xf32>
    %c7 = arith.constant 7 : index
    %c0_45 = arith.constant 0 : index
    %c0_46 = arith.constant 0 : index
    %54 = vector.load %arg4[%c7, %c0_45, %c0_46] : memref<9x4x4xf32, #tpu.memory_space<vmem>>, vector<1x4x4xf32>
    %55 = vector.shape_cast %54 : vector<1x4x4xf32> to vector<4x4xf32>
    %cst_47 = arith.constant dense<0.000000e+00> : vector<4x324xf32>
    %56 = tpu.matmul %55, %53, %cst_47 {dimension_numbers = #tpu.dot_dimension_numbers<[1], [0], [0], [1], [0, 0, 1, 1], [], []>} : vector<4x4xf32>, vector<4x324xf32>, vector<4x324xf32> -> vector<4x324xf32>
    %57 = arith.addf %52, %56 : vector<4x324xf32>
    %c0_48 = arith.constant 0 : index
    %c147 = arith.constant 147 : index
    %58 = vector.load %arg14[%c0_48, %c147] : memref<4x580xf32, #tpu.memory_space<vmem>>, vector<4x324xf32>
    %c8 = arith.constant 8 : index
    %c0_49 = arith.constant 0 : index
    %c0_50 = arith.constant 0 : index
    %59 = vector.load %arg4[%c8, %c0_49, %c0_50] : memref<9x4x4xf32, #tpu.memory_space<vmem>>, vector<1x4x4xf32>
    %60 = vector.shape_cast %59 : vector<1x4x4xf32> to vector<4x4xf32>
    %cst_51 = arith.constant dense<0.000000e+00> : vector<4x324xf32>
    %61 = tpu.matmul %60, %58, %cst_51 {dimension_numbers = #tpu.dot_dimension_numbers<[1], [0], [0], [1], [0, 0, 1, 1], [], []>} : vector<4x4xf32>, vector<4x324xf32>, vector<4x324xf32> -> vector<4x324xf32>
    %62 = arith.addf %57, %61 : vector<4x324xf32>
    %c0_52 = arith.constant 0 : index
    %c0_53 = arith.constant 0 : index
    %63 = vector.load %arg9[%c0_52, %c0_53] : memref<4x1xf32, #tpu.memory_space<vmem>>, vector<4x1xf32>
    %c0_54 = arith.constant 0 : index
    %c0_55 = arith.constant 0 : index
    %64 = vector.load %arg10[%c0_54, %c0_55] : memref<4x1xf32, #tpu.memory_space<vmem>>, vector<4x1xf32>
    %65 = vector.broadcast %63 : vector<4x1xf32> to vector<4x324xf32>
    %66 = arith.mulf %62, %65 : vector<4x324xf32>
    %67 = vector.broadcast %64 : vector<4x1xf32> to vector<4x324xf32>
    %68 = arith.addf %66, %67 : vector<4x324xf32>
    %cst_56 = arith.constant 0.000000e+00 : f32
    %69 = vector.broadcast %cst_56 : f32 to vector<4x324xf32>
    %70 = arith.maximumf %68, %69 : vector<4x324xf32>
    %71 = vector.broadcast %0 : vector<1x324xf32> to vector<4x324xf32>
    %72 = arith.mulf %70, %71 : vector<4x324xf32>
    %c0_57 = arith.constant 0 : index
    %c128_58 = arith.constant 128 : index
    %73 = vector.load %arg14[%c0_57, %c128_58] : memref<4x580xf32, #tpu.memory_space<vmem>>, vector<4x324xf32>
    tpu.vector_store %arg14[%c0_57, %c128_58], %72 {strides = array<i32>} : memref<4x580xf32, #tpu.memory_space<vmem>>, vector<4x324xf32>,
    %cst_59 = arith.constant 0.000000e+00 : f32
    %74 = vector.broadcast %cst_59 : f32 to vector<4x324xf32>
    %c0_60 = arith.constant 0 : index
    %c109_61 = arith.constant 109 : index
    %75 = vector.load %arg14[%c0_60, %c109_61] : memref<4x580xf32, #tpu.memory_space<vmem>>, vector<4x324xf32>
    %c0_62 = arith.constant 0 : index
    %c0_63 = arith.constant 0 : index
    %c0_64 = arith.constant 0 : index
    %76 = vector.load %arg5[%c0_62, %c0_63, %c0_64] : memref<9x4x4xf32, #tpu.memory_space<vmem>>, vector<1x4x4xf32>
    %77 = vector.shape_cast %76 : vector<1x4x4xf32> to vector<4x4xf32>
    %cst_65 = arith.constant dense<0.000000e+00> : vector<4x324xf32>
    %78 = tpu.matmul %77, %75, %cst_65 {dimension_numbers = #tpu.dot_dimension_numbers<[1], [0], [0], [1], [0, 0, 1, 1], [], []>} : vector<4x4xf32>, vector<4x324xf32>, vector<4x324xf32> -> vector<4x324xf32>
    %79 = arith.addf %74, %78 : vector<4x324xf32>
    %c0_66 = arith.constant 0 : index
    %c110_67 = arith.constant 110 : index
    %80 = vector.load %arg14[%c0_66, %c110_67] : memref<4x580xf32, #tpu.memory_space<vmem>>, vector<4x324xf32>
    %c1_68 = arith.constant 1 : index
    %c0_69 = arith.constant 0 : index
    %c0_70 = arith.constant 0 : index
    %81 = vector.load %arg5[%c1_68, %c0_69, %c0_70] : memref<9x4x4xf32, #tpu.memory_space<vmem>>, vector<1x4x4xf32>
    %82 = vector.shape_cast %81 : vector<1x4x4xf32> to vector<4x4xf32>
    %cst_71 = arith.constant dense<0.000000e+00> : vector<4x324xf32>
    %83 = tpu.matmul %82, %80, %cst_71 {dimension_numbers = #tpu.dot_dimension_numbers<[1], [0], [0], [1], [0, 0, 1, 1], [], []>} : vector<4x4xf32>, vector<4x324xf32>, vector<4x324xf32> -> vector<4x324xf32>
    %84 = arith.addf %79, %83 : vector<4x324xf32>
    %c0_72 = arith.constant 0 : index
    %c111_73 = arith.constant 111 : index
    %85 = vector.load %arg14[%c0_72, %c111_73] : memref<4x580xf32, #tpu.memory_space<vmem>>, vector<4x324xf32>
    %c2_74 = arith.constant 2 : index
    %c0_75 = arith.constant 0 : index
    %c0_76 = arith.constant 0 : index
    %86 = vector.load %arg5[%c2_74, %c0_75, %c0_76] : memref<9x4x4xf32, #tpu.memory_space<vmem>>, vector<1x4x4xf32>
    %87 = vector.shape_cast %86 : vector<1x4x4xf32> to vector<4x4xf32>
    %cst_77 = arith.constant dense<0.000000e+00> : vector<4x324xf32>
    %88 = tpu.matmul %87, %85, %cst_77 {dimension_numbers = #tpu.dot_dimension_numbers<[1], [0], [0], [1], [0, 0, 1, 1], [], []>} : vector<4x4xf32>, vector<4x324xf32>, vector<4x324xf32> -> vector<4x324xf32>
    %89 = arith.addf %84, %88 : vector<4x324xf32>
    %c0_78 = arith.constant 0 : index
    %c127_79 = arith.constant 127 : index
    %90 = vector.load %arg14[%c0_78, %c127_79] : memref<4x580xf32, #tpu.memory_space<vmem>>, vector<4x324xf32>
    %c3_80 = arith.constant 3 : index
    %c0_81 = arith.constant 0 : index
    %c0_82 = arith.constant 0 : index
    %91 = vector.load %arg5[%c3_80, %c0_81, %c0_82] : memref<9x4x4xf32, #tpu.memory_space<vmem>>, vector<1x4x4xf32>
    %92 = vector.shape_cast %91 : vector<1x4x4xf32> to vector<4x4xf32>
    %cst_83 = arith.constant dense<0.000000e+00> : vector<4x324xf32>
    %93 = tpu.matmul %92, %90, %cst_83 {dimension_numbers = #tpu.dot_dimension_numbers<[1], [0], [0], [1], [0, 0, 1, 1], [], []>} : vector<4x4xf32>, vector<4x324xf32>, vector<4x324xf32> -> vector<4x324xf32>
    %94 = arith.addf %89, %93 : vector<4x324xf32>
    %c0_84 = arith.constant 0 : index
    %c128_85 = arith.constant 128 : index
    %95 = vector.load %arg14[%c0_84, %c128_85] : memref<4x580xf32, #tpu.memory_space<vmem>>, vector<4x324xf32>
    %c4_86 = arith.constant 4 : index
    %c0_87 = arith.constant 0 : index
    %c0_88 = arith.constant 0 : index
    %96 = vector.load %arg5[%c4_86, %c0_87, %c0_88] : memref<9x4x4xf32, #tpu.memory_space<vmem>>, vector<1x4x4xf32>
    %97 = vector.shape_cast %96 : vector<1x4x4xf32> to vector<4x4xf32>
    %cst_89 = arith.constant dense<0.000000e+00> : vector<4x324xf32>
    %98 = tpu.matmul %97, %95, %cst_89 {dimension_numbers = #tpu.dot_dimension_numbers<[1], [0], [0], [1], [0, 0, 1, 1], [], []>} : vector<4x4xf32>, vector<4x324xf32>, vector<4x324xf32> -> vector<4x324xf32>
    %99 = arith.addf %94, %98 : vector<4x324xf32>
    %c0_90 = arith.constant 0 : index
    %c129_91 = arith.constant 129 : index
    %100 = vector.load %arg14[%c0_90, %c129_91] : memref<4x580xf32, #tpu.memory_space<vmem>>, vector<4x324xf32>
    %c5_92 = arith.constant 5 : index
    %c0_93 = arith.constant 0 : index
    %c0_94 = arith.constant 0 : index
    %101 = vector.load %arg5[%c5_92, %c0_93, %c0_94] : memref<9x4x4xf32, #tpu.memory_space<vmem>>, vector<1x4x4xf32>
    %102 = vector.shape_cast %101 : vector<1x4x4xf32> to vector<4x4xf32>
    %cst_95 = arith.constant dense<0.000000e+00> : vector<4x324xf32>
    %103 = tpu.matmul %102, %100, %cst_95 {dimension_numbers = #tpu.dot_dimension_numbers<[1], [0], [0], [1], [0, 0, 1, 1], [], []>} : vector<4x4xf32>, vector<4x324xf32>, vector<4x324xf32> -> vector<4x324xf32>
    %104 = arith.addf %99, %103 : vector<4x324xf32>
    %c0_96 = arith.constant 0 : index
    %c145_97 = arith.constant 145 : index
    %105 = vector.load %arg14[%c0_96, %c145_97] : memref<4x580xf32, #tpu.memory_space<vmem>>, vector<4x324xf32>
    %c6_98 = arith.constant 6 : index
    %c0_99 = arith.constant 0 : index
    %c0_100 = arith.constant 0 : index
    %106 = vector.load %arg5[%c6_98, %c0_99, %c0_100] : memref<9x4x4xf32, #tpu.memory_space<vmem>>, vector<1x4x4xf32>
    %107 = vector.shape_cast %106 : vector<1x4x4xf32> to vector<4x4xf32>
    %cst_101 = arith.constant dense<0.000000e+00> : vector<4x324xf32>
    %108 = tpu.matmul %107, %105, %cst_101 {dimension_numbers = #tpu.dot_dimension_numbers<[1], [0], [0], [1], [0, 0, 1, 1], [], []>} : vector<4x4xf32>, vector<4x324xf32>, vector<4x324xf32> -> vector<4x324xf32>
    %109 = arith.addf %104, %108 : vector<4x324xf32>
    %c0_102 = arith.constant 0 : index
    %c146_103 = arith.constant 146 : index
    %110 = vector.load %arg14[%c0_102, %c146_103] : memref<4x580xf32, #tpu.memory_space<vmem>>, vector<4x324xf32>
    %c7_104 = arith.constant 7 : index
    %c0_105 = arith.constant 0 : index
    %c0_106 = arith.constant 0 : index
    %111 = vector.load %arg5[%c7_104, %c0_105, %c0_106] : memref<9x4x4xf32, #tpu.memory_space<vmem>>, vector<1x4x4xf32>
    %112 = vector.shape_cast %111 : vector<1x4x4xf32> to vector<4x4xf32>
    %cst_107 = arith.constant dense<0.000000e+00> : vector<4x324xf32>
    %113 = tpu.matmul %112, %110, %cst_107 {dimension_numbers = #tpu.dot_dimension_numbers<[1], [0], [0], [1], [0, 0, 1, 1], [], []>} : vector<4x4xf32>, vector<4x324xf32>, vector<4x324xf32> -> vector<4x324xf32>
    %114 = arith.addf %109, %113 : vector<4x324xf32>
    %c0_108 = arith.constant 0 : index
    %c147_109 = arith.constant 147 : index
    %115 = vector.load %arg14[%c0_108, %c147_109] : memref<4x580xf32, #tpu.memory_space<vmem>>, vector<4x324xf32>
    %c8_110 = arith.constant 8 : index
    %c0_111 = arith.constant 0 : index
    %c0_112 = arith.constant 0 : index
    %116 = vector.load %arg5[%c8_110, %c0_111, %c0_112] : memref<9x4x4xf32, #tpu.memory_space<vmem>>, vector<1x4x4xf32>
    %117 = vector.shape_cast %116 : vector<1x4x4xf32> to vector<4x4xf32>
    %cst_113 = arith.constant dense<0.000000e+00> : vector<4x324xf32>
    %118 = tpu.matmul %117, %115, %cst_113 {dimension_numbers = #tpu.dot_dimension_numbers<[1], [0], [0], [1], [0, 0, 1, 1], [], []>} : vector<4x4xf32>, vector<4x324xf32>, vector<4x324xf32> -> vector<4x324xf32>
    %119 = arith.addf %114, %118 : vector<4x324xf32>
    %120 = arith.addf %119, %4 : vector<4x324xf32>
    %c0_114 = arith.constant 0 : index
    %c0_115 = arith.constant 0 : index
    %c0_116 = arith.constant 0 : index
    %121 = vector.load %arg11[%c0_114, %c0_115, %c0_116] : memref<4x4x1xf32, #tpu.memory_space<vmem>>, vector<1x4x1xf32>
    %122 = vector.shape_cast %121 : vector<1x4x1xf32> to vector<4x1xf32>
    %123 = vector.broadcast %122 : vector<4x1xf32> to vector<4x324xf32>
    %124 = arith.mulf %120, %123 : vector<4x324xf32>
    %c0_117 = arith.constant 0 : index
    %c0_118 = arith.constant 0 : index
    %c0_119 = arith.constant 0 : index
    %125 = vector.load %arg12[%c0_117, %c0_118, %c0_119] : memref<4x4x1xf32, #tpu.memory_space<vmem>>, vector<1x4x1xf32>
    %126 = vector.shape_cast %125 : vector<1x4x1xf32> to vector<4x1xf32>
    %127 = vector.broadcast %126 : vector<4x1xf32> to vector<4x324xf32>
    %128 = arith.addf %124, %127 : vector<4x324xf32>
    %cst_120 = arith.constant 0.000000e+00 : f32
    %129 = vector.broadcast %cst_120 : f32 to vector<4x324xf32>
    %130 = arith.maximumf %128, %129 : vector<4x324xf32>
    %c0_121 = arith.constant 0 : index
    %c0_122 = arith.constant 0 : index
    %c0_123 = arith.constant 0 : index
    %131 = vector.load %arg6[%c0_121, %c0_122, %c0_123] : memref<4x4x4xf32, #tpu.memory_space<vmem>>, vector<1x4x4xf32>
    %132 = vector.shape_cast %131 : vector<1x4x4xf32> to vector<4x4xf32>
    %cst_124 = arith.constant dense<0.000000e+00> : vector<4x324xf32>
    %133 = tpu.matmul %132, %130, %cst_124 {dimension_numbers = #tpu.dot_dimension_numbers<[1], [0], [0], [1], [0, 0, 1, 1], [], []>} : vector<4x4xf32>, vector<4x324xf32>, vector<4x324xf32> -> vector<4x324xf32>
    %134 = arith.addf %5, %133 : vector<4x324xf32>
    %c0_125 = arith.constant 0 : index
    %c0_126 = arith.constant 0 : index
    %135 = vector.load %arg7[%c0_125, %c0_126] : memref<4x1xf32, #tpu.memory_space<vmem>>, vector<4x1xf32>
    %c0_127 = arith.constant 0 : index
    %c0_128 = arith.constant 0 : index
    %136 = vector.load %arg8[%c0_127, %c0_128] : memref<4x1xf32, #tpu.memory_space<vmem>>, vector<4x1xf32>
    %137 = vector.broadcast %135 : vector<4x1xf32> to vector<4x324xf32>
    %138 = arith.mulf %120, %137 : vector<4x324xf32>
    %139 = vector.broadcast %136 : vector<4x1xf32> to vector<4x324xf32>
    %140 = arith.addf %138, %139 : vector<4x324xf32>
    %cst_129 = arith.constant 0.000000e+00 : f32
    %141 = vector.broadcast %cst_129 : f32 to vector<4x324xf32>
    %142 = arith.maximumf %140, %141 : vector<4x324xf32>
    %143 = vector.broadcast %0 : vector<1x324xf32> to vector<4x324xf32>
    %144 = arith.mulf %142, %143 : vector<4x324xf32>
    %c0_130 = arith.constant 0 : index
    %c128_131 = arith.constant 128 : index
    %145 = vector.load %arg14[%c0_130, %c128_131] : memref<4x580xf32, #tpu.memory_space<vmem>>, vector<4x324xf32>
    tpu.vector_store %arg14[%c0_130, %c128_131], %144 {strides = array<i32>} : memref<4x580xf32, #tpu.memory_space<vmem>>, vector<4x324xf32>,
    %cst_132 = arith.constant 0.000000e+00 : f32
    %146 = vector.broadcast %cst_132 : f32 to vector<4x324xf32>
    %c0_133 = arith.constant 0 : index
    %c109_134 = arith.constant 109 : index
    %147 = vector.load %arg14[%c0_133, %c109_134] : memref<4x580xf32, #tpu.memory_space<vmem>>, vector<4x324xf32>
    %c0_135 = arith.constant 0 : index
    %c0_136 = arith.constant 0 : index
    %c0_137 = arith.constant 0 : index
    %148 = vector.load %arg4[%c0_135, %c0_136, %c0_137] : memref<9x4x4xf32, #tpu.memory_space<vmem>>, vector<1x4x4xf32>
    %149 = vector.shape_cast %148 : vector<1x4x4xf32> to vector<4x4xf32>
    %cst_138 = arith.constant dense<0.000000e+00> : vector<4x324xf32>
    %150 = tpu.matmul %149, %147, %cst_138 {dimension_numbers = #tpu.dot_dimension_numbers<[1], [0], [0], [1], [0, 0, 1, 1], [], []>} : vector<4x4xf32>, vector<4x324xf32>, vector<4x324xf32> -> vector<4x324xf32>
    %151 = arith.addf %146, %150 : vector<4x324xf32>
    %c0_139 = arith.constant 0 : index
    %c110_140 = arith.constant 110 : index
    %152 = vector.load %arg14[%c0_139, %c110_140] : memref<4x580xf32, #tpu.memory_space<vmem>>, vector<4x324xf32>
    %c1_141 = arith.constant 1 : index
    %c0_142 = arith.constant 0 : index
    %c0_143 = arith.constant 0 : index
    %153 = vector.load %arg4[%c1_141, %c0_142, %c0_143] : memref<9x4x4xf32, #tpu.memory_space<vmem>>, vector<1x4x4xf32>
    %154 = vector.shape_cast %153 : vector<1x4x4xf32> to vector<4x4xf32>
    %cst_144 = arith.constant dense<0.000000e+00> : vector<4x324xf32>
    %155 = tpu.matmul %154, %152, %cst_144 {dimension_numbers = #tpu.dot_dimension_numbers<[1], [0], [0], [1], [0, 0, 1, 1], [], []>} : vector<4x4xf32>, vector<4x324xf32>, vector<4x324xf32> -> vector<4x324xf32>
    %156 = arith.addf %151, %155 : vector<4x324xf32>
    %c0_145 = arith.constant 0 : index
    %c111_146 = arith.constant 111 : index
    %157 = vector.load %arg14[%c0_145, %c111_146] : memref<4x580xf32, #tpu.memory_space<vmem>>, vector<4x324xf32>
    %c2_147 = arith.constant 2 : index
    %c0_148 = arith.constant 0 : index
    %c0_149 = arith.constant 0 : index
    %158 = vector.load %arg4[%c2_147, %c0_148, %c0_149] : memref<9x4x4xf32, #tpu.memory_space<vmem>>, vector<1x4x4xf32>
    %159 = vector.shape_cast %158 : vector<1x4x4xf32> to vector<4x4xf32>
    %cst_150 = arith.constant dense<0.000000e+00> : vector<4x324xf32>
    %160 = tpu.matmul %159, %157, %cst_150 {dimension_numbers = #tpu.dot_dimension_numbers<[1], [0], [0], [1], [0, 0, 1, 1], [], []>} : vector<4x4xf32>, vector<4x324xf32>, vector<4x324xf32> -> vector<4x324xf32>
    %161 = arith.addf %156, %160 : vector<4x324xf32>
    %c0_151 = arith.constant 0 : index
    %c127_152 = arith.constant 127 : index
    %162 = vector.load %arg14[%c0_151, %c127_152] : memref<4x580xf32, #tpu.memory_space<vmem>>, vector<4x324xf32>
    %c3_153 = arith.constant 3 : index
    %c0_154 = arith.constant 0 : index
    %c0_155 = arith.constant 0 : index
    %163 = vector.load %arg4[%c3_153, %c0_154, %c0_155] : memref<9x4x4xf32, #tpu.memory_space<vmem>>, vector<1x4x4xf32>
    %164 = vector.shape_cast %163 : vector<1x4x4xf32> to vector<4x4xf32>
    %cst_156 = arith.constant dense<0.000000e+00> : vector<4x324xf32>
    %165 = tpu.matmul %164, %162, %cst_156 {dimension_numbers = #tpu.dot_dimension_numbers<[1], [0], [0], [1], [0, 0, 1, 1], [], []>} : vector<4x4xf32>, vector<4x324xf32>, vector<4x324xf32> -> vector<4x324xf32>
    %166 = arith.addf %161, %165 : vector<4x324xf32>
    %c0_157 = arith.constant 0 : index
    %c128_158 = arith.constant 128 : index
    %167 = vector.load %arg14[%c0_157, %c128_158] : memref<4x580xf32, #tpu.memory_space<vmem>>, vector<4x324xf32>
    %c4_159 = arith.constant 4 : index
    %c0_160 = arith.constant 0 : index
    %c0_161 = arith.constant 0 : index
    %168 = vector.load %arg4[%c4_159, %c0_160, %c0_161] : memref<9x4x4xf32, #tpu.memory_space<vmem>>, vector<1x4x4xf32>
    %169 = vector.shape_cast %168 : vector<1x4x4xf32> to vector<4x4xf32>
    %cst_162 = arith.constant dense<0.000000e+00> : vector<4x324xf32>
    %170 = tpu.matmul %169, %167, %cst_162 {dimension_numbers = #tpu.dot_dimension_numbers<[1], [0], [0], [1], [0, 0, 1, 1], [], []>} : vector<4x4xf32>, vector<4x324xf32>, vector<4x324xf32> -> vector<4x324xf32>
    %171 = arith.addf %166, %170 : vector<4x324xf32>
    %c0_163 = arith.constant 0 : index
    %c129_164 = arith.constant 129 : index
    %172 = vector.load %arg14[%c0_163, %c129_164] : memref<4x580xf32, #tpu.memory_space<vmem>>, vector<4x324xf32>
    %c5_165 = arith.constant 5 : index
    %c0_166 = arith.constant 0 : index
    %c0_167 = arith.constant 0 : index
    %173 = vector.load %arg4[%c5_165, %c0_166, %c0_167] : memref<9x4x4xf32, #tpu.memory_space<vmem>>, vector<1x4x4xf32>
    %174 = vector.shape_cast %173 : vector<1x4x4xf32> to vector<4x4xf32>
    %cst_168 = arith.constant dense<0.000000e+00> : vector<4x324xf32>
    %175 = tpu.matmul %174, %172, %cst_168 {dimension_numbers = #tpu.dot_dimension_numbers<[1], [0], [0], [1], [0, 0, 1, 1], [], []>} : vector<4x4xf32>, vector<4x324xf32>, vector<4x324xf32> -> vector<4x324xf32>
    %176 = arith.addf %171, %175 : vector<4x324xf32>
    %c0_169 = arith.constant 0 : index
    %c145_170 = arith.constant 145 : index
    %177 = vector.load %arg14[%c0_169, %c145_170] : memref<4x580xf32, #tpu.memory_space<vmem>>, vector<4x324xf32>
    %c6_171 = arith.constant 6 : index
    %c0_172 = arith.constant 0 : index
    %c0_173 = arith.constant 0 : index
    %178 = vector.load %arg4[%c6_171, %c0_172, %c0_173] : memref<9x4x4xf32, #tpu.memory_space<vmem>>, vector<1x4x4xf32>
    %179 = vector.shape_cast %178 : vector<1x4x4xf32> to vector<4x4xf32>
    %cst_174 = arith.constant dense<0.000000e+00> : vector<4x324xf32>
    %180 = tpu.matmul %179, %177, %cst_174 {dimension_numbers = #tpu.dot_dimension_numbers<[1], [0], [0], [1], [0, 0, 1, 1], [], []>} : vector<4x4xf32>, vector<4x324xf32>, vector<4x324xf32> -> vector<4x324xf32>
    %181 = arith.addf %176, %180 : vector<4x324xf32>
    %c0_175 = arith.constant 0 : index
    %c146_176 = arith.constant 146 : index
    %182 = vector.load %arg14[%c0_175, %c146_176] : memref<4x580xf32, #tpu.memory_space<vmem>>, vector<4x324xf32>
    %c7_177 = arith.constant 7 : index
    %c0_178 = arith.constant 0 : index
    %c0_179 = arith.constant 0 : index
    %183 = vector.load %arg4[%c7_177, %c0_178, %c0_179] : memref<9x4x4xf32, #tpu.memory_space<vmem>>, vector<1x4x4xf32>
    %184 = vector.shape_cast %183 : vector<1x4x4xf32> to vector<4x4xf32>
    %cst_180 = arith.constant dense<0.000000e+00> : vector<4x324xf32>
    %185 = tpu.matmul %184, %182, %cst_180 {dimension_numbers = #tpu.dot_dimension_numbers<[1], [0], [0], [1], [0, 0, 1, 1], [], []>} : vector<4x4xf32>, vector<4x324xf32>, vector<4x324xf32> -> vector<4x324xf32>
    %186 = arith.addf %181, %185 : vector<4x324xf32>
    %c0_181 = arith.constant 0 : index
    %c147_182 = arith.constant 147 : index
    %187 = vector.load %arg14[%c0_181, %c147_182] : memref<4x580xf32, #tpu.memory_space<vmem>>, vector<4x324xf32>
    %c8_183 = arith.constant 8 : index
    %c0_184 = arith.constant 0 : index
    %c0_185 = arith.constant 0 : index
    %188 = vector.load %arg4[%c8_183, %c0_184, %c0_185] : memref<9x4x4xf32, #tpu.memory_space<vmem>>, vector<1x4x4xf32>
    %189 = vector.shape_cast %188 : vector<1x4x4xf32> to vector<4x4xf32>
    %cst_186 = arith.constant dense<0.000000e+00> : vector<4x324xf32>
    %190 = tpu.matmul %189, %187, %cst_186 {dimension_numbers = #tpu.dot_dimension_numbers<[1], [0], [0], [1], [0, 0, 1, 1], [], []>} : vector<4x4xf32>, vector<4x324xf32>, vector<4x324xf32> -> vector<4x324xf32>
    %191 = arith.addf %186, %190 : vector<4x324xf32>
    %c0_187 = arith.constant 0 : index
    %c0_188 = arith.constant 0 : index
    %192 = vector.load %arg9[%c0_187, %c0_188] : memref<4x1xf32, #tpu.memory_space<vmem>>, vector<4x1xf32>
    %c0_189 = arith.constant 0 : index
    %c0_190 = arith.constant 0 : index
    %193 = vector.load %arg10[%c0_189, %c0_190] : memref<4x1xf32, #tpu.memory_space<vmem>>, vector<4x1xf32>
    %194 = vector.broadcast %192 : vector<4x1xf32> to vector<4x324xf32>
    %195 = arith.mulf %191, %194 : vector<4x324xf32>
    %196 = vector.broadcast %193 : vector<4x1xf32> to vector<4x324xf32>
    %197 = arith.addf %195, %196 : vector<4x324xf32>
    %cst_191 = arith.constant 0.000000e+00 : f32
    %198 = vector.broadcast %cst_191 : f32 to vector<4x324xf32>
    %199 = arith.maximumf %197, %198 : vector<4x324xf32>
    %200 = vector.broadcast %0 : vector<1x324xf32> to vector<4x324xf32>
    %201 = arith.mulf %199, %200 : vector<4x324xf32>
    %c0_192 = arith.constant 0 : index
    %c128_193 = arith.constant 128 : index
    %202 = vector.load %arg14[%c0_192, %c128_193] : memref<4x580xf32, #tpu.memory_space<vmem>>, vector<4x324xf32>
    tpu.vector_store %arg14[%c0_192, %c128_193], %201 {strides = array<i32>} : memref<4x580xf32, #tpu.memory_space<vmem>>, vector<4x324xf32>,
    %cst_194 = arith.constant 0.000000e+00 : f32
    %203 = vector.broadcast %cst_194 : f32 to vector<4x324xf32>
    %c0_195 = arith.constant 0 : index
    %c109_196 = arith.constant 109 : index
    %204 = vector.load %arg14[%c0_195, %c109_196] : memref<4x580xf32, #tpu.memory_space<vmem>>, vector<4x324xf32>
    %c0_197 = arith.constant 0 : index
    %c0_198 = arith.constant 0 : index
    %c0_199 = arith.constant 0 : index
    %205 = vector.load %arg5[%c0_197, %c0_198, %c0_199] : memref<9x4x4xf32, #tpu.memory_space<vmem>>, vector<1x4x4xf32>
    %206 = vector.shape_cast %205 : vector<1x4x4xf32> to vector<4x4xf32>
    %cst_200 = arith.constant dense<0.000000e+00> : vector<4x324xf32>
    %207 = tpu.matmul %206, %204, %cst_200 {dimension_numbers = #tpu.dot_dimension_numbers<[1], [0], [0], [1], [0, 0, 1, 1], [], []>} : vector<4x4xf32>, vector<4x324xf32>, vector<4x324xf32> -> vector<4x324xf32>
    %208 = arith.addf %203, %207 : vector<4x324xf32>
    %c0_201 = arith.constant 0 : index
    %c110_202 = arith.constant 110 : index
    %209 = vector.load %arg14[%c0_201, %c110_202] : memref<4x580xf32, #tpu.memory_space<vmem>>, vector<4x324xf32>
    %c1_203 = arith.constant 1 : index
    %c0_204 = arith.constant 0 : index
    %c0_205 = arith.constant 0 : index
    %210 = vector.load %arg5[%c1_203, %c0_204, %c0_205] : memref<9x4x4xf32, #tpu.memory_space<vmem>>, vector<1x4x4xf32>
    %211 = vector.shape_cast %210 : vector<1x4x4xf32> to vector<4x4xf32>
    %cst_206 = arith.constant dense<0.000000e+00> : vector<4x324xf32>
    %212 = tpu.matmul %211, %209, %cst_206 {dimension_numbers = #tpu.dot_dimension_numbers<[1], [0], [0], [1], [0, 0, 1, 1], [], []>} : vector<4x4xf32>, vector<4x324xf32>, vector<4x324xf32> -> vector<4x324xf32>
    %213 = arith.addf %208, %212 : vector<4x324xf32>
    %c0_207 = arith.constant 0 : index
    %c111_208 = arith.constant 111 : index
    %214 = vector.load %arg14[%c0_207, %c111_208] : memref<4x580xf32, #tpu.memory_space<vmem>>, vector<4x324xf32>
    %c2_209 = arith.constant 2 : index
    %c0_210 = arith.constant 0 : index
    %c0_211 = arith.constant 0 : index
    %215 = vector.load %arg5[%c2_209, %c0_210, %c0_211] : memref<9x4x4xf32, #tpu.memory_space<vmem>>, vector<1x4x4xf32>
    %216 = vector.shape_cast %215 : vector<1x4x4xf32> to vector<4x4xf32>
    %cst_212 = arith.constant dense<0.000000e+00> : vector<4x324xf32>
    %217 = tpu.matmul %216, %214, %cst_212 {dimension_numbers = #tpu.dot_dimension_numbers<[1], [0], [0], [1], [0, 0, 1, 1], [], []>} : vector<4x4xf32>, vector<4x324xf32>, vector<4x324xf32> -> vector<4x324xf32>
    %218 = arith.addf %213, %217 : vector<4x324xf32>
    %c0_213 = arith.constant 0 : index
    %c127_214 = arith.constant 127 : index
    %219 = vector.load %arg14[%c0_213, %c127_214] : memref<4x580xf32, #tpu.memory_space<vmem>>, vector<4x324xf32>
    %c3_215 = arith.constant 3 : index
    %c0_216 = arith.constant 0 : index
    %c0_217 = arith.constant 0 : index
    %220 = vector.load %arg5[%c3_215, %c0_216, %c0_217] : memref<9x4x4xf32, #tpu.memory_space<vmem>>, vector<1x4x4xf32>
    %221 = vector.shape_cast %220 : vector<1x4x4xf32> to vector<4x4xf32>
    %cst_218 = arith.constant dense<0.000000e+00> : vector<4x324xf32>
    %222 = tpu.matmul %221, %219, %cst_218 {dimension_numbers = #tpu.dot_dimension_numbers<[1], [0], [0], [1], [0, 0, 1, 1], [], []>} : vector<4x4xf32>, vector<4x324xf32>, vector<4x324xf32> -> vector<4x324xf32>
    %223 = arith.addf %218, %222 : vector<4x324xf32>
    %c0_219 = arith.constant 0 : index
    %c128_220 = arith.constant 128 : index
    %224 = vector.load %arg14[%c0_219, %c128_220] : memref<4x580xf32, #tpu.memory_space<vmem>>, vector<4x324xf32>
    %c4_221 = arith.constant 4 : index
    %c0_222 = arith.constant 0 : index
    %c0_223 = arith.constant 0 : index
    %225 = vector.load %arg5[%c4_221, %c0_222, %c0_223] : memref<9x4x4xf32, #tpu.memory_space<vmem>>, vector<1x4x4xf32>
    %226 = vector.shape_cast %225 : vector<1x4x4xf32> to vector<4x4xf32>
    %cst_224 = arith.constant dense<0.000000e+00> : vector<4x324xf32>
    %227 = tpu.matmul %226, %224, %cst_224 {dimension_numbers = #tpu.dot_dimension_numbers<[1], [0], [0], [1], [0, 0, 1, 1], [], []>} : vector<4x4xf32>, vector<4x324xf32>, vector<4x324xf32> -> vector<4x324xf32>
    %228 = arith.addf %223, %227 : vector<4x324xf32>
    %c0_225 = arith.constant 0 : index
    %c129_226 = arith.constant 129 : index
    %229 = vector.load %arg14[%c0_225, %c129_226] : memref<4x580xf32, #tpu.memory_space<vmem>>, vector<4x324xf32>
    %c5_227 = arith.constant 5 : index
    %c0_228 = arith.constant 0 : index
    %c0_229 = arith.constant 0 : index
    %230 = vector.load %arg5[%c5_227, %c0_228, %c0_229] : memref<9x4x4xf32, #tpu.memory_space<vmem>>, vector<1x4x4xf32>
    %231 = vector.shape_cast %230 : vector<1x4x4xf32> to vector<4x4xf32>
    %cst_230 = arith.constant dense<0.000000e+00> : vector<4x324xf32>
    %232 = tpu.matmul %231, %229, %cst_230 {dimension_numbers = #tpu.dot_dimension_numbers<[1], [0], [0], [1], [0, 0, 1, 1], [], []>} : vector<4x4xf32>, vector<4x324xf32>, vector<4x324xf32> -> vector<4x324xf32>
    %233 = arith.addf %228, %232 : vector<4x324xf32>
    %c0_231 = arith.constant 0 : index
    %c145_232 = arith.constant 145 : index
    %234 = vector.load %arg14[%c0_231, %c145_232] : memref<4x580xf32, #tpu.memory_space<vmem>>, vector<4x324xf32>
    %c6_233 = arith.constant 6 : index
    %c0_234 = arith.constant 0 : index
    %c0_235 = arith.constant 0 : index
    %235 = vector.load %arg5[%c6_233, %c0_234, %c0_235] : memref<9x4x4xf32, #tpu.memory_space<vmem>>, vector<1x4x4xf32>
    %236 = vector.shape_cast %235 : vector<1x4x4xf32> to vector<4x4xf32>
    %cst_236 = arith.constant dense<0.000000e+00> : vector<4x324xf32>
    %237 = tpu.matmul %236, %234, %cst_236 {dimension_numbers = #tpu.dot_dimension_numbers<[1], [0], [0], [1], [0, 0, 1, 1], [], []>} : vector<4x4xf32>, vector<4x324xf32>, vector<4x324xf32> -> vector<4x324xf32>
    %238 = arith.addf %233, %237 : vector<4x324xf32>
    %c0_237 = arith.constant 0 : index
    %c146_238 = arith.constant 146 : index
    %239 = vector.load %arg14[%c0_237, %c146_238] : memref<4x580xf32, #tpu.memory_space<vmem>>, vector<4x324xf32>
    %c7_239 = arith.constant 7 : index
    %c0_240 = arith.constant 0 : index
    %c0_241 = arith.constant 0 : index
    %240 = vector.load %arg5[%c7_239, %c0_240, %c0_241] : memref<9x4x4xf32, #tpu.memory_space<vmem>>, vector<1x4x4xf32>
    %241 = vector.shape_cast %240 : vector<1x4x4xf32> to vector<4x4xf32>
    %cst_242 = arith.constant dense<0.000000e+00> : vector<4x324xf32>
    %242 = tpu.matmul %241, %239, %cst_242 {dimension_numbers = #tpu.dot_dimension_numbers<[1], [0], [0], [1], [0, 0, 1, 1], [], []>} : vector<4x4xf32>, vector<4x324xf32>, vector<4x324xf32> -> vector<4x324xf32>
    %243 = arith.addf %238, %242 : vector<4x324xf32>
    %c0_243 = arith.constant 0 : index
    %c147_244 = arith.constant 147 : index
    %244 = vector.load %arg14[%c0_243, %c147_244] : memref<4x580xf32, #tpu.memory_space<vmem>>, vector<4x324xf32>
    %c8_245 = arith.constant 8 : index
    %c0_246 = arith.constant 0 : index
    %c0_247 = arith.constant 0 : index
    %245 = vector.load %arg5[%c8_245, %c0_246, %c0_247] : memref<9x4x4xf32, #tpu.memory_space<vmem>>, vector<1x4x4xf32>
    %246 = vector.shape_cast %245 : vector<1x4x4xf32> to vector<4x4xf32>
    %cst_248 = arith.constant dense<0.000000e+00> : vector<4x324xf32>
    %247 = tpu.matmul %246, %244, %cst_248 {dimension_numbers = #tpu.dot_dimension_numbers<[1], [0], [0], [1], [0, 0, 1, 1], [], []>} : vector<4x4xf32>, vector<4x324xf32>, vector<4x324xf32> -> vector<4x324xf32>
    %248 = arith.addf %243, %247 : vector<4x324xf32>
    %249 = arith.addf %248, %120 : vector<4x324xf32>
    %c1_249 = arith.constant 1 : index
    %c0_250 = arith.constant 0 : index
    %c0_251 = arith.constant 0 : index
    %250 = vector.load %arg11[%c1_249, %c0_250, %c0_251] : memref<4x4x1xf32, #tpu.memory_space<vmem>>, vector<1x4x1xf32>
    %251 = vector.shape_cast %250 : vector<1x4x1xf32> to vector<4x1xf32>
    %252 = vector.broadcast %251 : vector<4x1xf32> to vector<4x324xf32>
    %253 = arith.mulf %249, %252 : vector<4x324xf32>
    %c1_252 = arith.constant 1 : index
    %c0_253 = arith.constant 0 : index
    %c0_254 = arith.constant 0 : index
    %254 = vector.load %arg12[%c1_252, %c0_253, %c0_254] : memref<4x4x1xf32, #tpu.memory_space<vmem>>, vector<1x4x1xf32>
    %255 = vector.shape_cast %254 : vector<1x4x1xf32> to vector<4x1xf32>
    %256 = vector.broadcast %255 : vector<4x1xf32> to vector<4x324xf32>
    %257 = arith.addf %253, %256 : vector<4x324xf32>
    %cst_255 = arith.constant 0.000000e+00 : f32
    %258 = vector.broadcast %cst_255 : f32 to vector<4x324xf32>
    %259 = arith.maximumf %257, %258 : vector<4x324xf32>
    %c1_256 = arith.constant 1 : index
    %c0_257 = arith.constant 0 : index
    %c0_258 = arith.constant 0 : index
    %260 = vector.load %arg6[%c1_256, %c0_257, %c0_258] : memref<4x4x4xf32, #tpu.memory_space<vmem>>, vector<1x4x4xf32>
    %261 = vector.shape_cast %260 : vector<1x4x4xf32> to vector<4x4xf32>
    %cst_259 = arith.constant dense<0.000000e+00> : vector<4x324xf32>
    %262 = tpu.matmul %261, %259, %cst_259 {dimension_numbers = #tpu.dot_dimension_numbers<[1], [0], [0], [1], [0, 0, 1, 1], [], []>} : vector<4x4xf32>, vector<4x324xf32>, vector<4x324xf32> -> vector<4x324xf32>
    %263 = arith.addf %134, %262 : vector<4x324xf32>
    %c0_260 = arith.constant 0 : index
    %c0_261 = arith.constant 0 : index
    %c0_262 = arith.constant 0 : index
    %c0_263 = arith.constant 0 : index
    %264 = vector.load %arg2[%c0_260, %c0_261, %c0_262, %c0_263] : memref<1x2x4x324xf32, #tpu.memory_space<vmem>>, vector<1x1x4x324xf32>
    %265 = vector.shape_cast %264 : vector<1x1x4x324xf32> to vector<4x324xf32>
    %c2_264 = arith.constant 2 : index
    %c0_265 = arith.constant 0 : index
    %c0_266 = arith.constant 0 : index
    %266 = vector.load %arg11[%c2_264, %c0_265, %c0_266] : memref<4x4x1xf32, #tpu.memory_space<vmem>>, vector<1x4x1xf32>
    %267 = vector.shape_cast %266 : vector<1x4x1xf32> to vector<4x1xf32>
    %268 = vector.broadcast %267 : vector<4x1xf32> to vector<4x324xf32>
    %269 = arith.mulf %265, %268 : vector<4x324xf32>
    %c2_267 = arith.constant 2 : index
    %c0_268 = arith.constant 0 : index
    %c0_269 = arith.constant 0 : index
    %270 = vector.load %arg12[%c2_267, %c0_268, %c0_269] : memref<4x4x1xf32, #tpu.memory_space<vmem>>, vector<1x4x1xf32>
    %271 = vector.shape_cast %270 : vector<1x4x1xf32> to vector<4x1xf32>
    %272 = vector.broadcast %271 : vector<4x1xf32> to vector<4x324xf32>
    %273 = arith.addf %269, %272 : vector<4x324xf32>
    %cst_270 = arith.constant 0.000000e+00 : f32
    %274 = vector.broadcast %cst_270 : f32 to vector<4x324xf32>
    %275 = arith.maximumf %273, %274 : vector<4x324xf32>
    %c2_271 = arith.constant 2 : index
    %c0_272 = arith.constant 0 : index
    %c0_273 = arith.constant 0 : index
    %276 = vector.load %arg6[%c2_271, %c0_272, %c0_273] : memref<4x4x4xf32, #tpu.memory_space<vmem>>, vector<1x4x4xf32>
    %277 = vector.shape_cast %276 : vector<1x4x4xf32> to vector<4x4xf32>
    %cst_274 = arith.constant dense<0.000000e+00> : vector<4x324xf32>
    %278 = tpu.matmul %277, %275, %cst_274 {dimension_numbers = #tpu.dot_dimension_numbers<[1], [0], [0], [1], [0, 0, 1, 1], [], []>} : vector<4x4xf32>, vector<4x324xf32>, vector<4x324xf32> -> vector<4x324xf32>
    %279 = arith.addf %263, %278 : vector<4x324xf32>
    %c0_275 = arith.constant 0 : index
    %c1_276 = arith.constant 1 : index
    %c0_277 = arith.constant 0 : index
    %c0_278 = arith.constant 0 : index
    %280 = vector.load %arg2[%c0_275, %c1_276, %c0_277, %c0_278] : memref<1x2x4x324xf32, #tpu.memory_space<vmem>>, vector<1x1x4x324xf32>
    %281 = vector.shape_cast %280 : vector<1x1x4x324xf32> to vector<4x324xf32>
    %c3_279 = arith.constant 3 : index
    %c0_280 = arith.constant 0 : index
    %c0_281 = arith.constant 0 : index
    %282 = vector.load %arg11[%c3_279, %c0_280, %c0_281] : memref<4x4x1xf32, #tpu.memory_space<vmem>>, vector<1x4x1xf32>
    %283 = vector.shape_cast %282 : vector<1x4x1xf32> to vector<4x1xf32>
    %284 = vector.broadcast %283 : vector<4x1xf32> to vector<4x324xf32>
    %285 = arith.mulf %281, %284 : vector<4x324xf32>
    %c3_282 = arith.constant 3 : index
    %c0_283 = arith.constant 0 : index
    %c0_284 = arith.constant 0 : index
    %286 = vector.load %arg12[%c3_282, %c0_283, %c0_284] : memref<4x4x1xf32, #tpu.memory_space<vmem>>, vector<1x4x1xf32>
    %287 = vector.shape_cast %286 : vector<1x4x1xf32> to vector<4x1xf32>
    %288 = vector.broadcast %287 : vector<4x1xf32> to vector<4x324xf32>
    %289 = arith.addf %285, %288 : vector<4x324xf32>
    %cst_285 = arith.constant 0.000000e+00 : f32
    %290 = vector.broadcast %cst_285 : f32 to vector<4x324xf32>
    %291 = arith.maximumf %289, %290 : vector<4x324xf32>
    %c3_286 = arith.constant 3 : index
    %c0_287 = arith.constant 0 : index
    %c0_288 = arith.constant 0 : index
    %292 = vector.load %arg6[%c3_286, %c0_287, %c0_288] : memref<4x4x4xf32, #tpu.memory_space<vmem>>, vector<1x4x4xf32>
    %293 = vector.shape_cast %292 : vector<1x4x4xf32> to vector<4x4xf32>
    %cst_289 = arith.constant dense<0.000000e+00> : vector<4x324xf32>
    %294 = tpu.matmul %293, %291, %cst_289 {dimension_numbers = #tpu.dot_dimension_numbers<[1], [0], [0], [1], [0, 0, 1, 1], [], []>} : vector<4x4xf32>, vector<4x324xf32>, vector<4x324xf32> -> vector<4x324xf32>
    %295 = arith.addf %279, %294 : vector<4x324xf32>
    %c0_290 = arith.constant 0 : index
    %c0_291 = arith.constant 0 : index
    %c0_292 = arith.constant 0 : index
    %296 = vector.load %arg13[%c0_290, %c0_291, %c0_292] : memref<1x4x324xf32, #tpu.memory_space<vmem>>, vector<1x4x324xf32>
    %297 = vector.shape_cast %296 : vector<1x4x324xf32> to vector<4x324xf32>
    %298 = vector.shape_cast %295 : vector<4x324xf32> to vector<1x4x324xf32>
    tpu.vector_store %arg13[%c0_290, %c0_291, %c0_292], %298 {strides = array<i32>} : memref<1x4x324xf32, #tpu.memory_space<vmem>>, vector<1x4x324xf32>,
    return
  }
  func.func @transform_0(%arg0: i32) -> (i32, i32, i32) {
    %c0_i32 = arith.constant 0 : i32
    %c0_i32_0 = arith.constant 0 : i32
    %c0_i32_1 = arith.constant 0 : i32
    return %arg0, %c0_i32, %c0_i32_0 : i32, i32, i32
  }
  func.func @transform_1(%arg0: i32) -> (i32, i32, i32, i32) {
    %c0_i32 = arith.constant 0 : i32
    %c0_i32_0 = arith.constant 0 : i32
    %c0_i32_1 = arith.constant 0 : i32
    %c0_i32_2 = arith.constant 0 : i32
    return %arg0, %c0_i32, %c0_i32_0, %c0_i32_1 : i32, i32, i32, i32
  }
  func.func @transform_2(%arg0: i32) -> (i32, i32) {
    %c0_i32 = arith.constant 0 : i32
    %c0_i32_0 = arith.constant 0 : i32
    %c0_i32_1 = arith.constant 0 : i32
    return %c0_i32, %c0_i32_0 : i32, i32
  }
  func.func @transform_3(%arg0: i32) -> (i32, i32, i32) {
    %c0_i32 = arith.constant 0 : i32
    %c0_i32_0 = arith.constant 0 : i32
    %c0_i32_1 = arith.constant 0 : i32
    %c0_i32_2 = arith.constant 0 : i32
    return %c0_i32, %c0_i32_0, %c0_i32_1 : i32, i32, i32
  }
  func.func @transform_4(%arg0: i32) -> (i32, i32, i32) {
    %c0_i32 = arith.constant 0 : i32
    %c0_i32_0 = arith.constant 0 : i32
    %c0_i32_1 = arith.constant 0 : i32
    %c0_i32_2 = arith.constant 0 : i32
    return %c0_i32, %c0_i32_0, %c0_i32_1 : i32, i32, i32
  }
  func.func @transform_5(%arg0: i32) -> (i32, i32, i32) {
    %c0_i32 = arith.constant 0 : i32
    %c0_i32_0 = arith.constant 0 : i32
    %c0_i32_1 = arith.constant 0 : i32
    %c0_i32_2 = arith.constant 0 : i32
    return %c0_i32, %c0_i32_0, %c0_i32_1 : i32, i32, i32
  }
  func.func @transform_6(%arg0: i32) -> (i32, i32) {
    %c0_i32 = arith.constant 0 : i32
    %c0_i32_0 = arith.constant 0 : i32
    %c0_i32_1 = arith.constant 0 : i32
    return %c0_i32, %c0_i32_0 : i32, i32
  }
  func.func @transform_7(%arg0: i32) -> (i32, i32) {
    %c0_i32 = arith.constant 0 : i32
    %c0_i32_0 = arith.constant 0 : i32
    %c0_i32_1 = arith.constant 0 : i32
    return %c0_i32, %c0_i32_0 : i32, i32
  }
  func.func @transform_8(%arg0: i32) -> (i32, i32) {
    %c0_i32 = arith.constant 0 : i32
    %c0_i32_0 = arith.constant 0 : i32
    %c0_i32_1 = arith.constant 0 : i32
    return %c0_i32, %c0_i32_0 : i32, i32
  }
  func.func @transform_9(%arg0: i32) -> (i32, i32) {
    %c0_i32 = arith.constant 0 : i32
    %c0_i32_0 = arith.constant 0 : i32
    %c0_i32_1 = arith.constant 0 : i32
    return %c0_i32, %c0_i32_0 : i32, i32
  }
  func.func @transform_10(%arg0: i32) -> (i32, i32, i32) {
    %c0_i32 = arith.constant 0 : i32
    %c0_i32_0 = arith.constant 0 : i32
    %c0_i32_1 = arith.constant 0 : i32
    %c0_i32_2 = arith.constant 0 : i32
    return %c0_i32, %c0_i32_0, %c0_i32_1 : i32, i32, i32
  }
  func.func @transform_11(%arg0: i32) -> (i32, i32, i32) {
    %c0_i32 = arith.constant 0 : i32
    %c0_i32_0 = arith.constant 0 : i32
    %c0_i32_1 = arith.constant 0 : i32
    %c0_i32_2 = arith.constant 0 : i32
    return %c0_i32, %c0_i32_0, %c0_i32_1 : i32, i32, i32
  }
  func.func @transform_12(%arg0: i32) -> (i32, i32, i32) {
    %c0_i32 = arith.constant 0 : i32
    %c0_i32_0 = arith.constant 0 : i32
    %c0_i32_1 = arith.constant 0 : i32
    return %arg0, %c0_i32, %c0_i32_0 : i32, i32, i32
  }
}

</mosaic_0001>

<llo_original>
// kernel: tpu_custom_call.1
$region0: #{tpu_custom_call.1}
  #allocation0 [shape = 'u32[]', space=smem, size = 0x4, offset = 0x4, fixed_abs, tag = 'smem constant byte address 0x4 - core index']
  #allocation1 [shape = 'u32[144,128]{1,0:T(1,128)}', space=vmem, size = 0x12000, scoped, tag = 'internal scratch']
  #allocation2 [shape = 'f32[4,580]{1,0:T(4,128)}', space=vmem, size = 0x2800, scoped, tag = 'scratch operand']
  %s0 = inlined_call_operand.vmem [shape: f32[2,4,324], index: 0, kind: input, shape index: {}]
  %s1 = inlined_call_operand.vmem [shape: f32[2,2,4,324], index: 1, kind: input, shape index: {}]
  %s2 = inlined_call_operand.vmem [shape: f32[1,324], index: 2, kind: input, shape index: {}]
  %s3 = inlined_call_operand.vmem [shape: f32[9,4,4], index: 3, kind: input, shape index: {}]
  %s4 = inlined_call_operand.vmem [shape: f32[9,4,4], index: 4, kind: input, shape index: {}]
  %s5 = inlined_call_operand.vmem [shape: f32[4,4,4], index: 5, kind: input, shape index: {}]
  %s6 = inlined_call_operand.vmem [shape: f32[4,1], index: 6, kind: input, shape index: {}]
  %s7 = inlined_call_operand.vmem [shape: f32[4,1], index: 7, kind: input, shape index: {}]
  %s8 = inlined_call_operand.vmem [shape: f32[4,1], index: 8, kind: input, shape index: {}]
  %s9 = inlined_call_operand.vmem [shape: f32[4,1], index: 9, kind: input, shape index: {}]
  %s10 = inlined_call_operand.vmem [shape: f32[4,4,1], index: 10, kind: input, shape index: {}]
  %s11 = inlined_call_operand.vmem [shape: f32[4,4,1], index: 11, kind: input, shape index: {}]
  %s12 = inlined_call_operand.hbm [shape: f32[2,4,324], index: 12, kind: output, shape index: {}]
  %s13 = sld [smem:[#allocation0]]
  $region81: #{tpu_custom_call.1} parent=0
    _
  %s15 = ssub.s32 1, %s13
  %s16 = scalar_select 0, %s15, %s13
  $region1: #{tpu_custom_call.1} parent=0
    #allocation3 [shape = 'u8[12288]{0}', space=vmem, size = 0x3000, scoped, tag = 'output window, operand 0']
    #allocation4 [shape = 's32[2]{0}', space=sflag, size = 0x8, scoped, tag = 'scoped memory for tpu_custom_call.1']
    %17 = vsyncpa [#allocation4], 0
    %s18 = scalar_lea.sflag [#allocation4], 1
    %19 = vsyncpa %s18, 0
    loop: start=0, step=1, limit=4
    $region2: #{tpu_custom_call.1} parent=1 // loop_pre_header
      _
    $region3: #{tpu_custom_call.1} parent=1 // loop_header
      %s21 = sphi 0, %s25
      %p22 = scmp.ge.s32.totalorder %s21, 4
      %s31 = sphi 0, %s33
      %s34 = sphi 0, %s31
      %s35 = sphi 0, %s34
      %s51 = sphi 0, %s35
      %s57 = sphi 0, %s59
      %s60 = sphi 0, %s57
      %s61 = sphi 0, %s60
      %s77 = sphi 0, %s61
      %s81 = sphi 0, %s81
      %s83 = sphi 0, %s81
      %s84 = sphi 0, %s83
      %s98 = sphi 0, %s84
      %s102 = sphi 0, %s102
      %s104 = sphi 0, %s102
      %s105 = sphi 0, %s104
      %s119 = sphi 0, %s105
      %s123 = sphi 0, %s123
      %s125 = sphi 0, %s123
      %s126 = sphi 0, %s125
      %s140 = sphi 0, %s126
      %s144 = sphi 0, %s144
      %s146 = sphi 0, %s144
      %s147 = sphi 0, %s146
      %s161 = sphi 0, %s147
      %s165 = sphi 0, %s165
      %s167 = sphi 0, %s165
      %s168 = sphi 0, %s167
      %s182 = sphi 0, %s168
      %s186 = sphi 0, %s186
      %s188 = sphi 0, %s186
      %s189 = sphi 0, %s188
      %s203 = sphi 0, %s189
      %s207 = sphi 0, %s207
      %s209 = sphi 0, %s207
      %s210 = sphi 0, %s209
      %s224 = sphi 0, %s210
      %s228 = sphi 0, %s228
      %s230 = sphi 0, %s228
      %s231 = sphi 0, %s230
      %s245 = sphi 0, %s231
      %s249 = sphi 0, %s249
      %s251 = sphi 0, %s249
      %s252 = sphi 0, %s251
      %s266 = sphi 0, %s252
      %s270 = sphi 0, %s270
      %s272 = sphi 0, %s270
      %s273 = sphi 0, %s272
      %s287 = sphi 0, %s273
      %s293 = sphi 0, %s295
      %s296 = sphi 0, %s293
      %s297 = sphi 0, %s296
      %s313 = sphi 0, %s297
    $region4: #{tpu_custom_call.1} parent=1 // loop_header_branch
      %24 = sbr.rel (%p22) target = $region8
    $region5: #{tpu_custom_call.1} parent=1 // loop_body
      %s26 = ssub.s32 %s21, 1
      %s27 = ssub.s32 %s21, 2
      %s28 = sadd.s32 %s21, 1
      %s29 = ssub.s32 %s21, %s28
      %p30 = scmp.eq.s32.totalorder %s29, 0
      %s32 = sadd.s32 %s31, 1
      %s33 = scalar_select %p30, %s31, %s32
      %p36 = pneg %p30
      %p37 = scmp.eq.s32.totalorder %s21, 1
      %p38 = por %p36, %p37
      %p39 = scmp.ne.s32.totalorder %s31, %s34
      %p40 = scmp.eq.s32.totalorder %s21, 0
      %p41 = por %p39, %p40
      %p42 = scmp.ne.s32.totalorder %s31, %s34
      %p43 = scmp.eq.s32.totalorder %s26, 1
      %p44 = por %p42, %p43
      %p45 = scmp.ne.s32.totalorder %s34, %s35
      %p46 = scmp.eq.s32.totalorder %s26, 0
      %p47 = por %p45, %p46
      %p48 = scmp.ne.s32.totalorder %s34, %s35
      %p49 = scmp.eq.s32.totalorder %s27, 1
      %p50 = por %p48, %p49
      %p52 = scmp.ne.s32.totalorder %s35, %s51
      %p53 = scmp.eq.s32.totalorder %s27, 0
      %p54 = por %p52, %p53
      %s55 = ssub.s32 %s21, %s28
      %p56 = scmp.eq.s32.totalorder %s55, 0
      %s58 = sadd.s32 %s57, 1
      %s59 = scalar_select %p56, %s57, %s58
      %p62 = pneg %p56
      %p63 = scmp.eq.s32.totalorder %s21, 1
      %p64 = por %p62, %p63
      %p65 = scmp.ne.s32.totalorder %s57, %s60
      %p66 = scmp.eq.s32.totalorder %s21, 0
      %p67 = por %p65, %p66
      %p68 = scmp.ne.s32.totalorder %s57, %s60
      %p69 = scmp.eq.s32.totalorder %s26, 1
      %p70 = por %p68, %p69
      %p71 = scmp.ne.s32.totalorder %s60, %s61
      %p72 = scmp.eq.s32.totalorder %s26, 0
      %p73 = por %p71, %p72
      %p74 = scmp.ne.s32.totalorder %s60, %s61
      %p75 = scmp.eq.s32.totalorder %s27, 1
      %p76 = por %p74, %p75
      %p78 = scmp.ne.s32.totalorder %s61, %s77
      %p79 = scmp.eq.s32.totalorder %s27, 0
      %p80 = por %p78, %p79
      %s82 = sadd.s32 %s81, 1
      %p85 = scmp.eq.s32.totalorder %s21, 1
      %p86 = scmp.ne.s32.totalorder %s81, %s83
      %p87 = scmp.eq.s32.totalorder %s21, 0
      %p88 = por %p86, %p87
      %p89 = scmp.ne.s32.totalorder %s81, %s83
      %p90 = scmp.eq.s32.totalorder %s26, 1
      %p91 = por %p89, %p90
      %p92 = scmp.ne.s32.totalorder %s83, %s84
      %p93 = scmp.eq.s32.totalorder %s26, 0
      %p94 = por %p92, %p93
      %p95 = scmp.ne.s32.totalorder %s83, %s84
      %p96 = scmp.eq.s32.totalorder %s27, 1
      %p97 = por %p95, %p96
      %p99 = scmp.ne.s32.totalorder %s84, %s98
      %p100 = scmp.eq.s32.totalorder %s27, 0
      %p101 = por %p99, %p100
      %s103 = sadd.s32 %s102, 1
      %p106 = scmp.eq.s32.totalorder %s21, 1
      %p107 = scmp.ne.s32.totalorder %s102, %s104
      %p108 = scmp.eq.s32.totalorder %s21, 0
      %p109 = por %p107, %p108
      %p110 = scmp.ne.s32.totalorder %s102, %s104
      %p111 = scmp.eq.s32.totalorder %s26, 1
      %p112 = por %p110, %p111
      %p113 = scmp.ne.s32.totalorder %s104, %s105
      %p114 = scmp.eq.s32.totalorder %s26, 0
      %p115 = por %p113, %p114
      %p116 = scmp.ne.s32.totalorder %s104, %s105
      %p117 = scmp.eq.s32.totalorder %s27, 1
      %p118 = por %p116, %p117
      %p120 = scmp.ne.s32.totalorder %s105, %s119
      %p121 = scmp.eq.s32.totalorder %s27, 0
      %p122 = por %p120, %p121
      %s124 = sadd.s32 %s123, 1
      %p127 = scmp.eq.s32.totalorder %s21, 1
      %p128 = scmp.ne.s32.totalorder %s123, %s125
      %p129 = scmp.eq.s32.totalorder %s21, 0
      %p130 = por %p128, %p129
      %p131 = scmp.ne.s32.totalorder %s123, %s125
      %p132 = scmp.eq.s32.totalorder %s26, 1
      %p133 = por %p131, %p132
      %p134 = scmp.ne.s32.totalorder %s125, %s126
      %p135 = scmp.eq.s32.totalorder %s26, 0
      %p136 = por %p134, %p135
      %p137 = scmp.ne.s32.totalorder %s125, %s126
      %p138 = scmp.eq.s32.totalorder %s27, 1
      %p139 = por %p137, %p138
      %p141 = scmp.ne.s32.totalorder %s126, %s140
      %p142 = scmp.eq.s32.totalorder %s27, 0
      %p143 = por %p141, %p142
      %s145 = sadd.s32 %s144, 1
      %p148 = scmp.eq.s32.totalorder %s21, 1
      %p149 = scmp.ne.s32.totalorder %s144, %s146
      %p150 = scmp.eq.s32.totalorder %s21, 0
      %p151 = por %p149, %p150
      %p152 = scmp.ne.s32.totalorder %s144, %s146
      %p153 = scmp.eq.s32.totalorder %s26, 1
      %p154 = por %p152, %p153
      %p155 = scmp.ne.s32.totalorder %s146, %s147
      %p156 = scmp.eq.s32.totalorder %s26, 0
      %p157 = por %p155, %p156
      %p158 = scmp.ne.s32.totalorder %s146, %s147
      %p159 = scmp.eq.s32.totalorder %s27, 1
      %p160 = por %p158, %p159
      %p162 = scmp.ne.s32.totalorder %s147, %s161
      %p163 = scmp.eq.s32.totalorder %s27, 0
      %p164 = por %p162, %p163
      %s166 = sadd.s32 %s165, 1
      %p169 = scmp.eq.s32.totalorder %s21, 1
      %p170 = scmp.ne.s32.totalorder %s165, %s167
      %p171 = scmp.eq.s32.totalorder %s21, 0
      %p172 = por %p170, %p171
      %p173 = scmp.ne.s32.totalorder %s165, %s167
      %p174 = scmp.eq.s32.totalorder %s26, 1
      %p175 = por %p173, %p174
      %p176 = scmp.ne.s32.totalorder %s167, %s168
      %p177 = scmp.eq.s32.totalorder %s26, 0
      %p178 = por %p176, %p177
      %p179 = scmp.ne.s32.totalorder %s167, %s168
      %p180 = scmp.eq.s32.totalorder %s27, 1
      %p181 = por %p179, %p180
      %p183 = scmp.ne.s32.totalorder %s168, %s182
      %p184 = scmp.eq.s32.totalorder %s27, 0
      %p185 = por %p183, %p184
      %s187 = sadd.s32 %s186, 1
      %p190 = scmp.eq.s32.totalorder %s21, 1
      %p191 = scmp.ne.s32.totalorder %s186, %s188
      %p192 = scmp.eq.s32.totalorder %s21, 0
      %p193 = por %p191, %p192
      %p194 = scmp.ne.s32.totalorder %s186, %s188
      %p195 = scmp.eq.s32.totalorder %s26, 1
      %p196 = por %p194, %p195
      %p197 = scmp.ne.s32.totalorder %s188, %s189
      %p198 = scmp.eq.s32.totalorder %s26, 0
      %p199 = por %p197, %p198
      %p200 = scmp.ne.s32.totalorder %s188, %s189
      %p201 = scmp.eq.s32.totalorder %s27, 1
      %p202 = por %p200, %p201
      %p204 = scmp.ne.s32.totalorder %s189, %s203
      %p205 = scmp.eq.s32.totalorder %s27, 0
      %p206 = por %p204, %p205
      %s208 = sadd.s32 %s207, 1
      %p211 = scmp.eq.s32.totalorder %s21, 1
      %p212 = scmp.ne.s32.totalorder %s207, %s209
      %p213 = scmp.eq.s32.totalorder %s21, 0
      %p214 = por %p212, %p213
      %p215 = scmp.ne.s32.totalorder %s207, %s209
      %p216 = scmp.eq.s32.totalorder %s26, 1
      %p217 = por %p215, %p216
      %p218 = scmp.ne.s32.totalorder %s209, %s210
      %p219 = scmp.eq.s32.totalorder %s26, 0
      %p220 = por %p218, %p219
      %p221 = scmp.ne.s32.totalorder %s209, %s210
      %p222 = scmp.eq.s32.totalorder %s27, 1
      %p223 = por %p221, %p222
      %p225 = scmp.ne.s32.totalorder %s210, %s224
      %p226 = scmp.eq.s32.totalorder %s27, 0
      %p227 = por %p225, %p226
      %s229 = sadd.s32 %s228, 1
      %p232 = scmp.eq.s32.totalorder %s21, 1
      %p233 = scmp.ne.s32.totalorder %s228, %s230
      %p234 = scmp.eq.s32.totalorder %s21, 0
      %p235 = por %p233, %p234
      %p236 = scmp.ne.s32.totalorder %s228, %s230
      %p237 = scmp.eq.s32.totalorder %s26, 1
      %p238 = por %p236, %p237
      %p239 = scmp.ne.s32.totalorder %s230, %s231
      %p240 = scmp.eq.s32.totalorder %s26, 0
      %p241 = por %p239, %p240
      %p242 = scmp.ne.s32.totalorder %s230, %s231
      %p243 = scmp.eq.s32.totalorder %s27, 1
      %p244 = por %p242, %p243
      %p246 = scmp.ne.s32.totalorder %s231, %s245
      %p247 = scmp.eq.s32.totalorder %s27, 0
      %p248 = por %p246, %p247
      %s250 = sadd.s32 %s249, 1
      %p253 = scmp.eq.s32.totalorder %s21, 1
      %p254 = scmp.ne.s32.totalorder %s249, %s251
      %p255 = scmp.eq.s32.totalorder %s21, 0
      %p256 = por %p254, %p255
      %p257 = scmp.ne.s32.totalorder %s249, %s251
      %p258 = scmp.eq.s32.totalorder %s26, 1
      %p259 = por %p257, %p258
      %p260 = scmp.ne.s32.totalorder %s251, %s252
      %p261 = scmp.eq.s32.totalorder %s26, 0
      %p262 = por %p260, %p261
      %p263 = scmp.ne.s32.totalorder %s251, %s252
      %p264 = scmp.eq.s32.totalorder %s27, 1
      %p265 = por %p263, %p264
      %p267 = scmp.ne.s32.totalorder %s252, %s266
      %p268 = scmp.eq.s32.totalorder %s27, 0
      %p269 = por %p267, %p268
      %s271 = sadd.s32 %s270, 1
      %p274 = scmp.eq.s32.totalorder %s21, 1
      %p275 = scmp.ne.s32.totalorder %s270, %s272
      %p276 = scmp.eq.s32.totalorder %s21, 0
      %p277 = por %p275, %p276
      %p278 = scmp.ne.s32.totalorder %s270, %s272
      %p279 = scmp.eq.s32.totalorder %s26, 1
      %p280 = por %p278, %p279
      %p281 = scmp.ne.s32.totalorder %s272, %s273
      %p282 = scmp.eq.s32.totalorder %s26, 0
      %p283 = por %p281, %p282
      %p284 = scmp.ne.s32.totalorder %s272, %s273
      %p285 = scmp.eq.s32.totalorder %s27, 1
      %p286 = por %p284, %p285
      %p288 = scmp.ne.s32.totalorder %s273, %s287
      %p289 = scmp.eq.s32.totalorder %s27, 0
      %p290 = por %p288, %p289
      %s291 = ssub.s32 %s21, %s28
      %p292 = scmp.eq.s32.totalorder %s291, 0
      %s294 = sadd.s32 %s293, 1
      %s295 = scalar_select %p292, %s293, %s294
      %p298 = pneg %p292
      %p299 = scmp.eq.s32.totalorder %s21, 1
      %p300 = por %p298, %p299
      %p301 = scmp.ne.s32.totalorder %s293, %s296
      %p302 = scmp.eq.s32.totalorder %s21, 0
      %p303 = por %p301, %p302
      %p304 = scmp.ne.s32.totalorder %s293, %s296
      %p305 = scmp.eq.s32.totalorder %s26, 1
      %p306 = por %p304, %p305
      %p307 = scmp.ne.s32.totalorder %s296, %s297
      %p308 = scmp.eq.s32.totalorder %s26, 0
      %p309 = por %p307, %p308
      %p310 = scmp.ne.s32.totalorder %s296, %s297
      %p311 = scmp.eq.s32.totalorder %s27, 1
      %p312 = por %p310, %p311
      %p314 = scmp.ne.s32.totalorder %s297, %s313
      %p315 = scmp.eq.s32.totalorder %s27, 0
      %p316 = por %p314, %p315
      %p317 = scmp.le.s32.totalorder 1, %s21
      %p318 = scmp.lt.s32.totalorder %s21, 3
      %p319 = pnand %p317, %p318
      %p320 = pneg %p319
      // Predicated region
      $region9: #{tpu_custom_call.1} parent=5 // pred_check
        _
      $region10: #{tpu_custom_call.1} parent=5 // pred_check_branch
        %322 = sbr.rel (%p319) target = $region12
      $region11: #{tpu_custom_call.1} parent=5 // pred_region
        %s323 = ssub.s32 %s21, 1
        // Predicated region
        $region13: #{tpu_custom_call.1} parent=11 // pred_check
          %p324 = pneg %p94
        $region14: #{tpu_custom_call.1} parent=11 // pred_check_branch
          %326 = sbr.rel (%p324) target = $region16
        $region15: #{tpu_custom_call.1} parent=11 // pred_region
          _
        $region16: #{tpu_custom_call.1} parent=11 // pred_fallthru
          _
        // Predicated region
        $region17: #{tpu_custom_call.1} parent=11 // pred_check
          %p327 = pneg %p115
        $region18: #{tpu_custom_call.1} parent=11 // pred_check_branch
          %329 = sbr.rel (%p327) target = $region20
        $region19: #{tpu_custom_call.1} parent=11 // pred_region
          _
        $region20: #{tpu_custom_call.1} parent=11 // pred_fallthru
          _
        // Predicated region
        $region21: #{tpu_custom_call.1} parent=11 // pred_check
          %p330 = pneg %p136
        $region22: #{tpu_custom_call.1} parent=11 // pred_check_branch
          %332 = sbr.rel (%p330) target = $region24
        $region23: #{tpu_custom_call.1} parent=11 // pred_region
          _
        $region24: #{tpu_custom_call.1} parent=11 // pred_fallthru
          _
        // Predicated region
        $region25: #{tpu_custom_call.1} parent=11 // pred_check
          %p333 = pneg %p157
        $region26: #{tpu_custom_call.1} parent=11 // pred_check_branch
          %335 = sbr.rel (%p333) target = $region28
        $region27: #{tpu_custom_call.1} parent=11 // pred_region
          _
        $region28: #{tpu_custom_call.1} parent=11 // pred_fallthru
          _
        // Predicated region
        $region29: #{tpu_custom_call.1} parent=11 // pred_check
          %p336 = pneg %p178
        $region30: #{tpu_custom_call.1} parent=11 // pred_check_branch
          %338 = sbr.rel (%p336) target = $region32
        $region31: #{tpu_custom_call.1} parent=11 // pred_region
          _
        $region32: #{tpu_custom_call.1} parent=11 // pred_fallthru
          _
        // Predicated region
        $region33: #{tpu_custom_call.1} parent=11 // pred_check
          %p339 = pneg %p199
        $region34: #{tpu_custom_call.1} parent=11 // pred_check_branch
          %341 = sbr.rel (%p339) target = $region36
        $region35: #{tpu_custom_call.1} parent=11 // pred_region
          _
        $region36: #{tpu_custom_call.1} parent=11 // pred_fallthru
          _
        // Predicated region
        $region37: #{tpu_custom_call.1} parent=11 // pred_check
          %p342 = pneg %p220
        $region38: #{tpu_custom_call.1} parent=11 // pred_check_branch
          %344 = sbr.rel (%p342) target = $region40
        $region39: #{tpu_custom_call.1} parent=11 // pred_region
          _
        $region40: #{tpu_custom_call.1} parent=11 // pred_fallthru
          _
        // Predicated region
        $region41: #{tpu_custom_call.1} parent=11 // pred_check
          %p345 = pneg %p241
        $region42: #{tpu_custom_call.1} parent=11 // pred_check_branch
          %347 = sbr.rel (%p345) target = $region44
        $region43: #{tpu_custom_call.1} parent=11 // pred_region
          _
        $region44: #{tpu_custom_call.1} parent=11 // pred_fallthru
          _
        // Predicated region
        $region45: #{tpu_custom_call.1} parent=11 // pred_check
          %p348 = pneg %p262
        $region46: #{tpu_custom_call.1} parent=11 // pred_check_branch
          %350 = sbr.rel (%p348) target = $region48
        $region47: #{tpu_custom_call.1} parent=11 // pred_region
          _
        $region48: #{tpu_custom_call.1} parent=11 // pred_fallthru
          _
        // Predicated region
        $region49: #{tpu_custom_call.1} parent=11 // pred_check
          %p351 = pneg %p283
        $region50: #{tpu_custom_call.1} parent=11 // pred_check_branch
          %353 = sbr.rel (%p351) target = $region52
        $region51: #{tpu_custom_call.1} parent=11 // pred_region
          _
        $region52: #{tpu_custom_call.1} parent=11 // pred_fallthru
          _
      $region12: #{tpu_custom_call.1} parent=5 // pred_fallthru
        _
      %p354 = scmp.lt.s32.totalorder %s21, 2
      // Predicated region
      $region53: #{tpu_custom_call.1} parent=5 // pred_check
        %p355 = pneg %p354
      $region54: #{tpu_custom_call.1} parent=5 // pred_check_branch
        %357 = sbr.rel (%p355) target = $region56
      $region55: #{tpu_custom_call.1} parent=5 // pred_region
        // Predicated region
        $region57: #{tpu_custom_call.1} parent=55 // pred_check
          %p358 = pneg %p41
        $region58: #{tpu_custom_call.1} parent=55 // pred_check_branch
          %360 = sbr.rel (%p358) target = $region60
        $region59: #{tpu_custom_call.1} parent=55 // pred_region
          %p361 = scmp.lt.s32.totalorder %s21, 1
          %s362 = scalar_select %p361, %s21, 1
          %s363 = smul.addr %s362, 3
          %s364 = smul.addr %s363, 4
          %s365 = scalar_lea.vmem %s0, %s364
        $region60: #{tpu_custom_call.1} parent=55 // pred_fallthru
          _
        // Predicated region
        $region61: #{tpu_custom_call.1} parent=55 // pred_check
          %p366 = pneg %p67
        $region62: #{tpu_custom_call.1} parent=55 // pred_check_branch
          %368 = sbr.rel (%p366) target = $region64
        $region63: #{tpu_custom_call.1} parent=55 // pred_region
          %p369 = scmp.lt.s32.totalorder %s21, 1
          %s370 = scalar_select %p369, %s21, 1
          %s371 = smul.addr %s370, 6
          %s372 = smul.addr %s371, 4
          %s373 = scalar_lea.vmem %s1, %s372
        $region64: #{tpu_custom_call.1} parent=55 // pred_fallthru
          _
      $region56: #{tpu_custom_call.1} parent=5 // pred_fallthru
        _
      %p374 = scmp.le.s32.totalorder 1, %s21
      %p375 = scmp.lt.s32.totalorder %s21, 3
      %p376 = pnand %p374, %p375
      %p377 = pneg %p376
      // Predicated region
      $region65: #{tpu_custom_call.1} parent=5 // pred_check
        _
      $region66: #{tpu_custom_call.1} parent=5 // pred_check_branch
        %379 = sbr.rel (%p376) target = $region68
      $region67: #{tpu_custom_call.1} parent=5 // pred_region
        %s380 = ssub.s32 %s21, 1
        %p381 = scmp.lt.s32.totalorder %s26, 1
        %s382 = scalar_select %p381, %s26, 1
        %s383 = smul.addr %s382, 3
        %s384 = smul.addr %s383, 4
        %s385 = scalar_lea.vmem %s0, %s384
        %p386 = pneg %p47
        %p387 = pneg %p44
        %p388 = scmp.lt.s32.totalorder %s26, 1
        %s389 = scalar_select %p388, %s26, 1
        %s390 = smul.addr %s389, 6
        %s391 = smul.addr %s390, 4
        %s392 = scalar_lea.vmem %s1, %s391
        %p393 = pneg %p73
        %p394 = pneg %p70
        %p395 = pneg %p94
        %p396 = pneg %p91
        %p397 = pneg %p115
        %p398 = pneg %p112
        %p399 = pneg %p136
        %p400 = pneg %p133
        %p401 = pneg %p157
        %p402 = pneg %p154
        %p403 = pneg %p178
        %p404 = pneg %p175
        %p405 = pneg %p199
        %p406 = pneg %p196
        %p407 = pneg %p220
        %p408 = pneg %p217
        %p409 = pneg %p241
        %p410 = pneg %p238
        %p411 = pneg %p262
        %p412 = pneg %p259
        %p413 = pneg %p283
        %p414 = pneg %p280
        %p415 = pneg %p309
        %p416 = pneg %p306
        %s417 = sand.u32 %s296, 1
        %s418 = scalar_lea.sflag [#allocation4], %s417
        %s419 = sand.u32 %s296, 1
        %s420 = smul.addr %s419, 12
        %s421 = scalar_lea.vmem [#allocation3], %s420
        %p422 = scmp.lt.s32.totalorder %s26, 1
        %s423 = scalar_select %p422, %s26, 1
        %s424 = smul.addr %s423, 3
        %s425 = smul.addr %s424, 4
        %s426 = scalar_lea.vmem %s0, %s425
        %p427 = scmp.lt.s32.totalorder %s26, 1
        %s428 = scalar_select %p427, %s26, 1
        %s429 = smul.addr %s428, 6
        %s430 = smul.addr %s429, 4
        %s431 = scalar_lea.vmem %s1, %s430
        %v432 = vld [vmem:[%s2] sm:$0x7]
        %433 = vst [vmem:[#allocation2] sm:$0xff] 0.0
        %434 = vst [vmem:[#allocation2 + $0x8] sm:$0xff] 0.0
        %vm435 = vcmask 551936
        %436 = vst.msk [vmem:[#allocation2 + $0x10] sm:$0xf] %vm435, 0.0
        %v437 = vld [vmem:[%s426] sm:$0xff]
        %v438 = vld [vmem:[%s426 + $0x8] sm:$0xf]
        %v439 = vld [vmem:[%s6] sm:$0xf]
        %v440 = vld [vmem:[%s7] sm:$0xf]
        %442 = vset.pattern.permute.xlu0 0
        %443 = vperm.xlu0 %442, %v439
        %v444 = vpop.permute.xlu0 %443
        %v446 = vunpack.c.l.s4 839922192
        %v447 = vunpack.c.0.s8 %v446
        %v448 = vlaneseq
        %v449 = vshrl.u32 %v448, 7
        %v450 = vsub.s32 %v447, %v449
        %v451 = vrot.slane %v444, %v450
        %v453 = vmul.f32 %v437, %v451
        %v454 = vmul.f32 %v438, %v451
        %456 = vset.pattern.permute.xlu0 0
        %457 = vperm.xlu0 %456, %v440
        %v458 = vpop.permute.xlu0 %457
        %v460 = vunpack.c.l.s4 839922192
        %v461 = vunpack.c.0.s8 %v460
        %v462 = vlaneseq
        %v463 = vshrl.u32 %v462, 7
        %v464 = vsub.s32 %v461, %v463
        %v465 = vrot.slane %v458, %v464
        %v467 = vadd.f32 %v453, %v465
        %v468 = vadd.f32 %v454, %v465
        %v469 = vmax.f32 %v467, 0.0
        %v470 = vmax.f32 %v468, 0.0
        %v472 = vlaneseq
        %v473 = vshrl.u32 %v472, 7
        %v474 = vsub.s32 0, %v473
        %v475 = vrot.slane %v432, %v474
        %v476 = vlaneseq
        %v477 = vshrl.u32 %v476, 7
        %v478 = vsub.s32 1, %v477
        %v479 = vrot.slane %v432, %v478
        %v480 = vlaneseq
        %v481 = vshrl.u32 %v480, 7
        %v482 = vsub.s32 2, %v481
        %v483 = vrot.slane %v432, %v482
        %v487 = vcombine.low %v475, %v479
        %v489 = vmul.f32 %v469, %v487
        %v490 = vmul.f32 %v470, %v483
        %491 = vst [vmem:[#allocation2 + $0x4] sm:$0xff] %v489
        %492 = vst.msk [vmem:[#allocation2 + $0xc] sm:$0xf] %vm435, %v490
        %v493 = vld [vmem:[#allocation2] sm:$0xff]
        %v494 = vld [vmem:[#allocation2 + $0x8] sm:$0xff]
        %v495 = vld [vmem:[%s3] sm:$0xf]
        %s496 = scalar_lea.vmem %s3, 4
        %v497 = vld [vmem:[%s496] sm:$0xf]
        %v500 = vcombine.high %v493, %v493
        %v501 = vcombine.high %v494, %v494
        %502 = vrot.lane.b32.xlu0 %v493, 18
        %v503 = vpop.permute.xlu0 %502
        %504 = vrot.lane.b32.xlu0 %v500, 18
        %v505 = vpop.permute.xlu0 %504
        %506 = vrot.lane.b32.xlu0 %v494, 18
        %v507 = vpop.permute.xlu0 %506
        %508 = vrot.lane.b32.xlu0 %v501, 18
        %v509 = vpop.permute.xlu0 %508
        %vm510 = vcmask 146432
        %v511 = vsel %vm510, %v503, %v505
        %v512 = vsel %vm510, %v505, %v507
        %v513 = vsel %vm510, %v507, %v509
        %vm514 = vcmask 31744
        %v516 = vsel %vm514, %v497, 0
        %vm518 = vcmask 1043456
        %v519 = vsel %vm518, %v511, 0
        %v521 = vsel %vm518, %v512, 0
        %v523 = vsel %vm518, %v513, 0
        %525 = vmatprep.subr.mxu0 0.0
        %526 = vmatpush1.msra.mxu0 0.0
        %527 = vmatprep.subr.mxu0 0.0
        %528 = vmatpush1.msra.mxu0 0.0
        %529 = vmatprep.subr.mxu0 0.0
        %530 = vmatpush1.msra.mxu0 0.0
        %531 = vmatprep.subr.mxu0 0.0
        %532 = vmatpush1.msra.mxu0 0.0
        %533 = vmatprep.subr.mxu0 0.0
        %534 = vmatpush1.msra.mxu0 0.0
        %535 = vmatprep.subr.mxu0 0.0
        %536 = vmatpush1.msra.mxu0 0.0
        %537 = vmatprep.subr.mxu0 0.0
        %538 = vmatpush1.msra.mxu0 0.0
        %539 = vmatprep.subr.mxu0 0.0
        %540 = vmatpush1.msra.mxu0 0.0
        %541 = vmatprep.subr.mxu0 0.0
        %542 = vmatpush1.msra.mxu0 0.0
        %543 = vmatprep.subr.mxu0 0.0
        %544 = vmatpush1.msra.mxu0 0.0
        %545 = vmatprep.subr.mxu0 0.0
        %546 = vmatpush1.msra.mxu0 0.0
        %547 = vmatprep.subr.mxu0 0.0
        %548 = vmatpush1.msra.mxu0 0.0
        %549 = vmatprep.subr.mxu0 0.0
        %550 = vmatpush1.msra.mxu0 0.0
        %551 = vmatprep.subr.mxu0 0.0
        %552 = vmatpush1.msra.mxu0 0.0
        %553 = vmatprep.subr.mxu0 0.0
        %554 = vmatpush1.msra.mxu0 0.0
        %555 = vmatprep.subr.mxu0 %v521
        %556 = vmatpush1.msra.mxu0 %v519
        %557 = vmatprep.subr.mxu0 0.0
        %558 = vmatpush2.msra.mxu0 0.0
        %559 = vmatprep.subr.mxu0 0.0
        %560 = vmatpush2.msra.mxu0 0.0
        %561 = vmatprep.subr.mxu0 0.0
        %562 = vmatpush2.msra.mxu0 0.0
        %563 = vmatprep.subr.mxu0 0.0
        %564 = vmatpush2.msra.mxu0 0.0
        %565 = vmatprep.subr.mxu0 0.0
        %566 = vmatpush2.msra.mxu0 0.0
        %567 = vmatprep.subr.mxu0 0.0
        %568 = vmatpush2.msra.mxu0 0.0
        %569 = vmatprep.subr.mxu0 0.0
        %570 = vmatpush2.msra.mxu0 0.0
        %571 = vmatprep.subr.mxu0 0.0
        %572 = vmatpush2.msra.mxu0 0.0
        %573 = vmatprep.subr.mxu0 0.0
        %574 = vmatpush2.msra.mxu0 0.0
        %575 = vmatprep.subr.mxu0 0.0
        %576 = vmatpush2.msra.mxu0 0.0
        %577 = vmatprep.subr.mxu0 0.0
        %578 = vmatpush2.msra.mxu0 0.0
        %579 = vmatprep.subr.mxu0 0.0
        %580 = vmatpush2.msra.mxu0 0.0
        %581 = vmatprep.subr.mxu0 0.0
        %582 = vmatpush2.msra.mxu0 0.0
        %583 = vmatprep.subr.mxu0 0.0
        %584 = vmatpush2.msra.mxu0 0.0
        %585 = vmatprep.subr.mxu0 0.0
        %586 = vmatpush2.msra.mxu0 0.0
        %587 = vmatprep.subr.mxu0 0.0
        %588 = vmatpush2.msra.mxu0 0.0
        %589 = vmatprep.mubr.f32.mxu0 0.0
        %590 = vmatmul.mubr.f32.gmra.mxu0 %v516
        %v591 = vpop.f32.mrf.mxu0
        %v592 = vadd.f32 0.0, %v591
        %v593 = vpop.f32.mrf.mxu0
        %v594 = vadd.f32 0.0, %v593
        %595 = vdwg.mxu0
        %596 = vmatprep.subr.mxu0 0.0
        %597 = vmatpush1.msra.mxu0 0.0
        %598 = vmatprep.subr.mxu0 0.0
        %599 = vmatpush1.msra.mxu0 0.0
        %600 = vmatprep.subr.mxu0 0.0
        %601 = vmatpush1.msra.mxu0 0.0
        %602 = vmatprep.subr.mxu0 0.0
        %603 = vmatpush1.msra.mxu0 0.0
        %604 = vmatprep.subr.mxu0 0.0
        %605 = vmatpush1.msra.mxu0 0.0
        %606 = vmatprep.subr.mxu0 0.0
        %607 = vmatpush1.msra.mxu0 0.0
        %608 = vmatprep.subr.mxu0 0.0
        %609 = vmatpush1.msra.mxu0 0.0
        %610 = vmatprep.subr.mxu0 0.0
        %611 = vmatpush1.msra.mxu0 0.0
        %612 = vmatprep.subr.mxu0 0.0
        %613 = vmatpush1.msra.mxu0 0.0
        %614 = vmatprep.subr.mxu0 0.0
        %615 = vmatpush1.msra.mxu0 0.0
        %616 = vmatprep.subr.mxu0 0.0
        %617 = vmatpush1.msra.mxu0 0.0
        %618 = vmatprep.subr.mxu0 0.0
        %619 = vmatpush1.msra.mxu0 0.0
        %620 = vmatprep.subr.mxu0 0.0
        %621 = vmatpush1.msra.mxu0 0.0
        %622 = vmatprep.subr.mxu0 0.0
        %623 = vmatpush1.msra.mxu0 0.0
        %624 = vmatprep.subr.mxu0 0.0
        %625 = vmatpush1.msra.mxu0 0.0
        %626 = vmatprep.subr.mxu0 0.0
        %627 = vmatpush1.msra.mxu0 %v523
        %628 = vmatprep.subr.mxu0 0.0
        %629 = vmatpush2.msra.mxu0 0.0
        %630 = vmatprep.subr.mxu0 0.0
        %631 = vmatpush2.msra.mxu0 0.0
        %632 = vmatprep.subr.mxu0 0.0
        %633 = vmatpush2.msra.mxu0 0.0
        %634 = vmatprep.subr.mxu0 0.0
        %635 = vmatpush2.msra.mxu0 0.0
        %636 = vmatprep.subr.mxu0 0.0
        %637 = vmatpush2.msra.mxu0 0.0
        %638 = vmatprep.subr.mxu0 0.0
        %639 = vmatpush2.msra.mxu0 0.0
        %640 = vmatprep.subr.mxu0 0.0
        %641 = vmatpush2.msra.mxu0 0.0
        %642 = vmatprep.subr.mxu0 0.0
        %643 = vmatpush2.msra.mxu0 0.0
        %644 = vmatprep.subr.mxu0 0.0
        %645 = vmatpush2.msra.mxu0 0.0
        %646 = vmatprep.subr.mxu0 0.0
        %647 = vmatpush2.msra.mxu0 0.0
        %648 = vmatprep.subr.mxu0 0.0
        %649 = vmatpush2.msra.mxu0 0.0
        %650 = vmatprep.subr.mxu0 0.0
        %651 = vmatpush2.msra.mxu0 0.0
        %652 = vmatprep.subr.mxu0 0.0
        %653 = vmatpush2.msra.mxu0 0.0
        %654 = vmatprep.subr.mxu0 0.0
        %655 = vmatpush2.msra.mxu0 0.0
        %656 = vmatprep.subr.mxu0 0.0
        %657 = vmatpush2.msra.mxu0 0.0
        %658 = vmatprep.subr.mxu0 0.0
        %659 = vmatpush2.msra.mxu0 0.0
        %660 = vmatprep.mubr.f32.mxu0 0.0
        %661 = vmatmul.mubr.f32.gmra.mxu0 %v516
        %v662 = vpop.f32.mrf.mxu0
        %v663 = vadd.f32 0.0, %v662
        %v664 = vpop.f32.mrf.mxu0
        %665 = vdwg.mxu0
        %666 = vrot.lane.b32.xlu0 %v493, 19
        %v667 = vpop.permute.xlu0 %666
        %668 = vrot.lane.b32.xlu0 %v500, 19
        %v669 = vpop.permute.xlu0 %668
        %670 = vrot.lane.b32.xlu0 %v494, 19
        %v671 = vpop.permute.xlu0 %670
        %672 = vrot.lane.b32.xlu0 %v501, 19
        %v673 = vpop.permute.xlu0 %672
        %vm674 = vcmask 154624
        %v675 = vsel %vm674, %v667, %v669
        %v676 = vsel %vm674, %v669, %v671
        %v677 = vsel %vm674, %v671, %v673
        %v679 = vsel %vm514, %v495, 0
        %v681 = vsel %vm518, %v675, 0
        %v683 = vsel %vm518, %v676, 0
        %v685 = vsel %vm518, %v677, 0
        %687 = vmatprep.subr.mxu0 0.0
        %688 = vmatpush1.msra.mxu0 0.0
        %689 = vmatprep.subr.mxu0 0.0
        %690 = vmatpush1.msra.mxu0 0.0
        %691 = vmatprep.subr.mxu0 0.0
        %692 = vmatpush1.msra.mxu0 0.0
        %693 = vmatprep.subr.mxu0 0.0
        %694 = vmatpush1.msra.mxu0 0.0
        %695 = vmatprep.subr.mxu0 0.0
        %696 = vmatpush1.msra.mxu0 0.0
        %697 = vmatprep.subr.mxu0 0.0
        %698 = vmatpush1.msra.mxu0 0.0
        %699 = vmatprep.subr.mxu0 0.0
        %700 = vmatpush1.msra.mxu0 0.0
        %701 = vmatprep.subr.mxu0 0.0
        %702 = vmatpush1.msra.mxu0 0.0
        %703 = vmatprep.subr.mxu0 0.0
        %704 = vmatpush1.msra.mxu0 0.0
        %705 = vmatprep.subr.mxu0 0.0
        %706 = vmatpush1.msra.mxu0 0.0
        %707 = vmatprep.subr.mxu0 0.0
        %708 = vmatpush1.msra.mxu0 0.0
        %709 = vmatprep.subr.mxu0 0.0
        %710 = vmatpush1.msra.mxu0 0.0
        %711 = vmatprep.subr.mxu0 0.0
        %712 = vmatpush1.msra.mxu0 0.0
        %713 = vmatprep.subr.mxu0 0.0
        %714 = vmatpush1.msra.mxu0 0.0
        %715 = vmatprep.subr.mxu0 0.0
        %716 = vmatpush1.msra.mxu0 0.0
        %717 = vmatprep.subr.mxu0 %v683
        %718 = vmatpush1.msra.mxu0 %v681
        %719 = vmatprep.subr.mxu0 0.0
        %720 = vmatpush2.msra.mxu0 0.0
        %721 = vmatprep.subr.mxu0 0.0
        %722 = vmatpush2.msra.mxu0 0.0
        %723 = vmatprep.subr.mxu0 0.0
        %724 = vmatpush2.msra.mxu0 0.0
        %725 = vmatprep.subr.mxu0 0.0
        %726 = vmatpush2.msra.mxu0 0.0
        %727 = vmatprep.subr.mxu0 0.0
        %728 = vmatpush2.msra.mxu0 0.0
        %729 = vmatprep.subr.mxu0 0.0
        %730 = vmatpush2.msra.mxu0 0.0
        %731 = vmatprep.subr.mxu0 0.0
        %732 = vmatpush2.msra.mxu0 0.0
        %733 = vmatprep.subr.mxu0 0.0
        %734 = vmatpush2.msra.mxu0 0.0
        %735 = vmatprep.subr.mxu0 0.0
        %736 = vmatpush2.msra.mxu0 0.0
        %737 = vmatprep.subr.mxu0 0.0
        %738 = vmatpush2.msra.mxu0 0.0
        %739 = vmatprep.subr.mxu0 0.0
        %740 = vmatpush2.msra.mxu0 0.0
        %741 = vmatprep.subr.mxu0 0.0
        %742 = vmatpush2.msra.mxu0 0.0
        %743 = vmatprep.subr.mxu0 0.0
        %744 = vmatpush2.msra.mxu0 0.0
        %745 = vmatprep.subr.mxu0 0.0
        %746 = vmatpush2.msra.mxu0 0.0
        %747 = vmatprep.subr.mxu0 0.0
        %748 = vmatpush2.msra.mxu0 0.0
        %749 = vmatprep.subr.mxu0 0.0
        %750 = vmatpush2.msra.mxu0 0.0
        %751 = vmatprep.mubr.f32.mxu0 0.0
        %752 = vmatmul.mubr.f32.gmra.mxu0 %v679
        %v753 = vpop.f32.mrf.mxu0
        %v754 = vadd.f32 %v592, %v753
        %v755 = vpop.f32.mrf.mxu0
        %v756 = vadd.f32 %v594, %v755
        %757 = vdwg.mxu0
        %758 = vmatprep.subr.mxu0 0.0
        %759 = vmatpush1.msra.mxu0 0.0
        %760 = vmatprep.subr.mxu0 0.0
        %761 = vmatpush1.msra.mxu0 0.0
        %762 = vmatprep.subr.mxu0 0.0
        %763 = vmatpush1.msra.mxu0 0.0
        %764 = vmatprep.subr.mxu0 0.0
        %765 = vmatpush1.msra.mxu0 0.0
        %766 = vmatprep.subr.mxu0 0.0
        %767 = vmatpush1.msra.mxu0 0.0
        %768 = vmatprep.subr.mxu0 0.0
        %769 = vmatpush1.msra.mxu0 0.0
        %770 = vmatprep.subr.mxu0 0.0
        %771 = vmatpush1.msra.mxu0 0.0
        %772 = vmatprep.subr.mxu0 0.0
        %773 = vmatpush1.msra.mxu0 0.0
        %774 = vmatprep.subr.mxu0 0.0
        %775 = vmatpush1.msra.mxu0 0.0
        %776 = vmatprep.subr.mxu0 0.0
        %777 = vmatpush1.msra.mxu0 0.0
        %778 = vmatprep.subr.mxu0 0.0
        %779 = vmatpush1.msra.mxu0 0.0
        %780 = vmatprep.subr.mxu0 0.0
        %781 = vmatpush1.msra.mxu0 0.0
        %782 = vmatprep.subr.mxu0 0.0
        %783 = vmatpush1.msra.mxu0 0.0
        %784 = vmatprep.subr.mxu0 0.0
        %785 = vmatpush1.msra.mxu0 0.0
        %786 = vmatprep.subr.mxu0 0.0
        %787 = vmatpush1.msra.mxu0 0.0
        %788 = vmatprep.subr.mxu0 0.0
        %789 = vmatpush1.msra.mxu0 %v685
        %790 = vmatprep.subr.mxu0 0.0
        %791 = vmatpush2.msra.mxu0 0.0
        %792 = vmatprep.subr.mxu0 0.0
        %793 = vmatpush2.msra.mxu0 0.0
        %794 = vmatprep.subr.mxu0 0.0
        %795 = vmatpush2.msra.mxu0 0.0
        %796 = vmatprep.subr.mxu0 0.0
        %797 = vmatpush2.msra.mxu0 0.0
        %798 = vmatprep.subr.mxu0 0.0
        %799 = vmatpush2.msra.mxu0 0.0
        %800 = vmatprep.subr.mxu0 0.0
        %801 = vmatpush2.msra.mxu0 0.0
        %802 = vmatprep.subr.mxu0 0.0
        %803 = vmatpush2.msra.mxu0 0.0
        %804 = vmatprep.subr.mxu0 0.0
        %805 = vmatpush2.msra.mxu0 0.0
        %806 = vmatprep.subr.mxu0 0.0
        %807 = vmatpush2.msra.mxu0 0.0
        %808 = vmatprep.subr.mxu0 0.0
        %809 = vmatpush2.msra.mxu0 0.0
        %810 = vmatprep.subr.mxu0 0.0
        %811 = vmatpush2.msra.mxu0 0.0
        %812 = vmatprep.subr.mxu0 0.0
        %813 = vmatpush2.msra.mxu0 0.0
        %814 = vmatprep.subr.mxu0 0.0
        %815 = vmatpush2.msra.mxu0 0.0
        %816 = vmatprep.subr.mxu0 0.0
        %817 = vmatpush2.msra.mxu0 0.0
        %818 = vmatprep.subr.mxu0 0.0
        %819 = vmatpush2.msra.mxu0 0.0
        %820 = vmatprep.subr.mxu0 0.0
        %821 = vmatpush2.msra.mxu0 0.0
        %822 = vmatprep.mubr.f32.mxu0 0.0
        %823 = vmatmul.mubr.f32.gmra.mxu0 %v679
        %v824 = vpop.f32.mrf.mxu0
        %v825 = vadd.f32 %v663, %v824
        %v826 = vpop.f32.mrf.mxu0
        %827 = vdwg.mxu0
        %v828 = vld [vmem:[#allocation2] sm:$0xff]
        %v829 = vld [vmem:[#allocation2 + $0x8] sm:$0xff]
        %s830 = scalar_lea.vmem %s3, 8
        %v831 = vld [vmem:[%s830] sm:$0xf]
        %v834 = vcombine.high %v828, %v828
        %v835 = vcombine.high %v829, %v829
        %836 = vrot.lane.b32.xlu0 %v828, 17
        %v837 = vpop.permute.xlu0 %836
        %838 = vrot.lane.b32.xlu0 %v834, 17
        %v839 = vpop.permute.xlu0 %838
        %840 = vrot.lane.b32.xlu0 %v829, 17
        %v841 = vpop.permute.xlu0 %840
        %842 = vrot.lane.b32.xlu0 %v835, 17
        %v843 = vpop.permute.xlu0 %842
        %vm844 = vcmask 138240
        %v845 = vsel %vm844, %v837, %v839
        %v846 = vsel %vm844, %v839, %v841
        %v847 = vsel %vm844, %v841, %v843
        %v849 = vsel %vm514, %v831, 0
        %v851 = vsel %vm518, %v845, 0
        %v853 = vsel %vm518, %v846, 0
        %v855 = vsel %vm518, %v847, 0
        %857 = vmatprep.subr.mxu0 0.0
        %858 = vmatpush1.msra.mxu0 0.0
        %859 = vmatprep.subr.mxu0 0.0
        %860 = vmatpush1.msra.mxu0 0.0
        %861 = vmatprep.subr.mxu0 0.0
        %862 = vmatpush1.msra.mxu0 0.0
        %863 = vmatprep.subr.mxu0 0.0
        %864 = vmatpush1.msra.mxu0 0.0
        %865 = vmatprep.subr.mxu0 0.0
        %866 = vmatpush1.msra.mxu0 0.0
        %867 = vmatprep.subr.mxu0 0.0
        %868 = vmatpush1.msra.mxu0 0.0
        %869 = vmatprep.subr.mxu0 0.0
        %870 = vmatpush1.msra.mxu0 0.0
        %871 = vmatprep.subr.mxu0 0.0
        %872 = vmatpush1.msra.mxu0 0.0
        %873 = vmatprep.subr.mxu0 0.0
        %874 = vmatpush1.msra.mxu0 0.0
        %875 = vmatprep.subr.mxu0 0.0
        %876 = vmatpush1.msra.mxu0 0.0
        %877 = vmatprep.subr.mxu0 0.0
        %878 = vmatpush1.msra.mxu0 0.0
        %879 = vmatprep.subr.mxu0 0.0
        %880 = vmatpush1.msra.mxu0 0.0
        %881 = vmatprep.subr.mxu0 0.0
        %882 = vmatpush1.msra.mxu0 0.0
        %883 = vmatprep.subr.mxu0 0.0
        %884 = vmatpush1.msra.mxu0 0.0
        %885 = vmatprep.subr.mxu0 0.0
        %886 = vmatpush1.msra.mxu0 0.0
        %887 = vmatprep.subr.mxu0 %v853
        %888 = vmatpush1.msra.mxu0 %v851
        %889 = vmatprep.subr.mxu0 0.0
        %890 = vmatpush2.msra.mxu0 0.0
        %891 = vmatprep.subr.mxu0 0.0
        %892 = vmatpush2.msra.mxu0 0.0
        %893 = vmatprep.subr.mxu0 0.0
        %894 = vmatpush2.msra.mxu0 0.0
        %895 = vmatprep.subr.mxu0 0.0
        %896 = vmatpush2.msra.mxu0 0.0
        %897 = vmatprep.subr.mxu0 0.0
        %898 = vmatpush2.msra.mxu0 0.0
        %899 = vmatprep.subr.mxu0 0.0
        %900 = vmatpush2.msra.mxu0 0.0
        %901 = vmatprep.subr.mxu0 0.0
        %902 = vmatpush2.msra.mxu0 0.0
        %903 = vmatprep.subr.mxu0 0.0
        %904 = vmatpush2.msra.mxu0 0.0
        %905 = vmatprep.subr.mxu0 0.0
        %906 = vmatpush2.msra.mxu0 0.0
        %907 = vmatprep.subr.mxu0 0.0
        %908 = vmatpush2.msra.mxu0 0.0
        %909 = vmatprep.subr.mxu0 0.0
        %910 = vmatpush2.msra.mxu0 0.0
        %911 = vmatprep.subr.mxu0 0.0
        %912 = vmatpush2.msra.mxu0 0.0
        %913 = vmatprep.subr.mxu0 0.0
        %914 = vmatpush2.msra.mxu0 0.0
        %915 = vmatprep.subr.mxu0 0.0
        %916 = vmatpush2.msra.mxu0 0.0
        %917 = vmatprep.subr.mxu0 0.0
        %918 = vmatpush2.msra.mxu0 0.0
        %919 = vmatprep.subr.mxu0 0.0
        %920 = vmatpush2.msra.mxu0 0.0
        %921 = vmatprep.mubr.f32.mxu0 0.0
        %922 = vmatmul.mubr.f32.gmra.mxu0 %v849
        %v923 = vpop.f32.mrf.mxu0
        %v924 = vadd.f32 0.0, %v923
        %v925 = vpop.f32.mrf.mxu0
        %v926 = vadd.f32 0.0, %v925
        %927 = vdwg.mxu0
        %928 = vmatprep.subr.mxu0 0.0
        %929 = vmatpush1.msra.mxu0 0.0
        %930 = vmatprep.subr.mxu0 0.0
        %931 = vmatpush1.msra.mxu0 0.0
        %932 = vmatprep.subr.mxu0 0.0
        %933 = vmatpush1.msra.mxu0 0.0
        %934 = vmatprep.subr.mxu0 0.0
        %935 = vmatpush1.msra.mxu0 0.0
        %936 = vmatprep.subr.mxu0 0.0
        %937 = vmatpush1.msra.mxu0 0.0
        %938 = vmatprep.subr.mxu0 0.0
        %939 = vmatpush1.msra.mxu0 0.0
        %940 = vmatprep.subr.mxu0 0.0
        %941 = vmatpush1.msra.mxu0 0.0
        %942 = vmatprep.subr.mxu0 0.0
        %943 = vmatpush1.msra.mxu0 0.0
        %944 = vmatprep.subr.mxu0 0.0
        %945 = vmatpush1.msra.mxu0 0.0
        %946 = vmatprep.subr.mxu0 0.0
        %947 = vmatpush1.msra.mxu0 0.0
        %948 = vmatprep.subr.mxu0 0.0
        %949 = vmatpush1.msra.mxu0 0.0
        %950 = vmatprep.subr.mxu0 0.0
        %951 = vmatpush1.msra.mxu0 0.0
        %952 = vmatprep.subr.mxu0 0.0
        %953 = vmatpush1.msra.mxu0 0.0
        %954 = vmatprep.subr.mxu0 0.0
        %955 = vmatpush1.msra.mxu0 0.0
        %956 = vmatprep.subr.mxu0 0.0
        %957 = vmatpush1.msra.mxu0 0.0
        %958 = vmatprep.subr.mxu0 0.0
        %959 = vmatpush1.msra.mxu0 %v855
        %960 = vmatprep.subr.mxu0 0.0
        %961 = vmatpush2.msra.mxu0 0.0
        %962 = vmatprep.subr.mxu0 0.0
        %963 = vmatpush2.msra.mxu0 0.0
        %964 = vmatprep.subr.mxu0 0.0
        %965 = vmatpush2.msra.mxu0 0.0
        %966 = vmatprep.subr.mxu0 0.0
        %967 = vmatpush2.msra.mxu0 0.0
        %968 = vmatprep.subr.mxu0 0.0
        %969 = vmatpush2.msra.mxu0 0.0
        %970 = vmatprep.subr.mxu0 0.0
        %971 = vmatpush2.msra.mxu0 0.0
        %972 = vmatprep.subr.mxu0 0.0
        %973 = vmatpush2.msra.mxu0 0.0
        %974 = vmatprep.subr.mxu0 0.0
        %975 = vmatpush2.msra.mxu0 0.0
        %976 = vmatprep.subr.mxu0 0.0
        %977 = vmatpush2.msra.mxu0 0.0
        %978 = vmatprep.subr.mxu0 0.0
        %979 = vmatpush2.msra.mxu0 0.0
        %980 = vmatprep.subr.mxu0 0.0
        %981 = vmatpush2.msra.mxu0 0.0
        %982 = vmatprep.subr.mxu0 0.0
        %983 = vmatpush2.msra.mxu0 0.0
        %984 = vmatprep.subr.mxu0 0.0
        %985 = vmatpush2.msra.mxu0 0.0
        %986 = vmatprep.subr.mxu0 0.0
        %987 = vmatpush2.msra.mxu0 0.0
        %988 = vmatprep.subr.mxu0 0.0
        %989 = vmatpush2.msra.mxu0 0.0
        %990 = vmatprep.subr.mxu0 0.0
        %991 = vmatpush2.msra.mxu0 0.0
        %992 = vmatprep.mubr.f32.mxu0 0.0
        %993 = vmatmul.mubr.f32.gmra.mxu0 %v849
        %v994 = vpop.f32.mrf.mxu0
        %v995 = vadd.f32 0.0, %v994
        %v996 = vpop.f32.mrf.mxu0
        %997 = vdwg.mxu0
        %v998 = vadd.f32 %v754, %v924
        %v999 = vadd.f32 %v756, %v926
        %v1000 = vadd.f32 %v825, %v995
        %v1001 = vld [vmem:[#allocation2] sm:$0xff]
        %v1002 = vld [vmem:[#allocation2 + $0x8] sm:$0xff]
        %s1003 = scalar_lea.vmem %s3, 12
        %v1004 = vld [vmem:[%s1003] sm:$0xf]
        %v1007 = vcombine.high %v1001, %v1001
        %v1008 = vcombine.high %v1002, %v1002
        %1009 = vrot.lane.b32.xlu0 %v1001, 1
        %v1010 = vpop.permute.xlu0 %1009
        %1011 = vrot.lane.b32.xlu0 %v1007, 1
        %v1012 = vpop.permute.xlu0 %1011
        %1013 = vrot.lane.b32.xlu0 %v1002, 1
        %v1014 = vpop.permute.xlu0 %1013
        %1015 = vrot.lane.b32.xlu0 %v1008, 1
        %v1016 = vpop.permute.xlu0 %1015
        %vm1017 = vcmask 7168
        %v1018 = vsel %vm1017, %v1010, %v1012
        %v1019 = vsel %vm1017, %v1012, %v1014
        %v1020 = vsel %vm1017, %v1014, %v1016
        %v1022 = vsel %vm514, %v1004, 0
        %v1024 = vsel %vm518, %v1018, 0
        %v1026 = vsel %vm518, %v1019, 0
        %v1028 = vsel %vm518, %v1020, 0
        %1030 = vmatprep.subr.mxu0 0.0
        %1031 = vmatpush1.msra.mxu0 0.0
        %1032 = vmatprep.subr.mxu0 0.0
        %1033 = vmatpush1.msra.mxu0 0.0
        %1034 = vmatprep.subr.mxu0 0.0
        %1035 = vmatpush1.msra.mxu0 0.0
        %1036 = vmatprep.subr.mxu0 0.0
        %1037 = vmatpush1.msra.mxu0 0.0
        %1038 = vmatprep.subr.mxu0 0.0
        %1039 = vmatpush1.msra.mxu0 0.0
        %1040 = vmatprep.subr.mxu0 0.0
        %1041 = vmatpush1.msra.mxu0 0.0
        %1042 = vmatprep.subr.mxu0 0.0
        %1043 = vmatpush1.msra.mxu0 0.0
        %1044 = vmatprep.subr.mxu0 0.0
        %1045 = vmatpush1.msra.mxu0 0.0
        %1046 = vmatprep.subr.mxu0 0.0
        %1047 = vmatpush1.msra.mxu0 0.0
        %1048 = vmatprep.subr.mxu0 0.0
        %1049 = vmatpush1.msra.mxu0 0.0
        %1050 = vmatprep.subr.mxu0 0.0
        %1051 = vmatpush1.msra.mxu0 0.0
        %1052 = vmatprep.subr.mxu0 0.0
        %1053 = vmatpush1.msra.mxu0 0.0
        %1054 = vmatprep.subr.mxu0 0.0
        %1055 = vmatpush1.msra.mxu0 0.0
        %1056 = vmatprep.subr.mxu0 0.0
        %1057 = vmatpush1.msra.mxu0 0.0
        %1058 = vmatprep.subr.mxu0 0.0
        %1059 = vmatpush1.msra.mxu0 0.0
        %1060 = vmatprep.subr.mxu0 %v1026
        %1061 = vmatpush1.msra.mxu0 %v1024
        %1062 = vmatprep.subr.mxu0 0.0
        %1063 = vmatpush2.msra.mxu0 0.0
        %1064 = vmatprep.subr.mxu0 0.0
        %1065 = vmatpush2.msra.mxu0 0.0
        %1066 = vmatprep.subr.mxu0 0.0
        %1067 = vmatpush2.msra.mxu0 0.0
        %1068 = vmatprep.subr.mxu0 0.0
        %1069 = vmatpush2.msra.mxu0 0.0
        %1070 = vmatprep.subr.mxu0 0.0
        %1071 = vmatpush2.msra.mxu0 0.0
        %1072 = vmatprep.subr.mxu0 0.0
        %1073 = vmatpush2.msra.mxu0 0.0
        %1074 = vmatprep.subr.mxu0 0.0
        %1075 = vmatpush2.msra.mxu0 0.0
        %1076 = vmatprep.subr.mxu0 0.0
        %1077 = vmatpush2.msra.mxu0 0.0
        %1078 = vmatprep.subr.mxu0 0.0
        %1079 = vmatpush2.msra.mxu0 0.0
        %1080 = vmatprep.subr.mxu0 0.0
        %1081 = vmatpush2.msra.mxu0 0.0
        %1082 = vmatprep.subr.mxu0 0.0
        %1083 = vmatpush2.msra.mxu0 0.0
        %1084 = vmatprep.subr.mxu0 0.0
        %1085 = vmatpush2.msra.mxu0 0.0
        %1086 = vmatprep.subr.mxu0 0.0
        %1087 = vmatpush2.msra.mxu0 0.0
        %1088 = vmatprep.subr.mxu0 0.0
        %1089 = vmatpush2.msra.mxu0 0.0
        %1090 = vmatprep.subr.mxu0 0.0
        %1091 = vmatpush2.msra.mxu0 0.0
        %1092 = vmatprep.subr.mxu0 0.0
        %1093 = vmatpush2.msra.mxu0 0.0
        %1094 = vmatprep.mubr.f32.mxu0 0.0
        %1095 = vmatmul.mubr.f32.gmra.mxu0 %v1022
        %v1096 = vpop.f32.mrf.mxu0
        %v1097 = vadd.f32 0.0, %v1096
        %v1098 = vpop.f32.mrf.mxu0
        %v1099 = vadd.f32 0.0, %v1098
        %1100 = vdwg.mxu0
        %1101 = vmatprep.subr.mxu0 0.0
        %1102 = vmatpush1.msra.mxu0 0.0
        %1103 = vmatprep.subr.mxu0 0.0
        %1104 = vmatpush1.msra.mxu0 0.0
        %1105 = vmatprep.subr.mxu0 0.0
        %1106 = vmatpush1.msra.mxu0 0.0
        %1107 = vmatprep.subr.mxu0 0.0
        %1108 = vmatpush1.msra.mxu0 0.0
        %1109 = vmatprep.subr.mxu0 0.0
        %1110 = vmatpush1.msra.mxu0 0.0
        %1111 = vmatprep.subr.mxu0 0.0
        %1112 = vmatpush1.msra.mxu0 0.0
        %1113 = vmatprep.subr.mxu0 0.0
        %1114 = vmatpush1.msra.mxu0 0.0
        %1115 = vmatprep.subr.mxu0 0.0
        %1116 = vmatpush1.msra.mxu0 0.0
        %1117 = vmatprep.subr.mxu0 0.0
        %1118 = vmatpush1.msra.mxu0 0.0
        %1119 = vmatprep.subr.mxu0 0.0
        %1120 = vmatpush1.msra.mxu0 0.0
        %1121 = vmatprep.subr.mxu0 0.0
        %1122 = vmatpush1.msra.mxu0 0.0
        %1123 = vmatprep.subr.mxu0 0.0
        %1124 = vmatpush1.msra.mxu0 0.0
        %1125 = vmatprep.subr.mxu0 0.0
        %1126 = vmatpush1.msra.mxu0 0.0
        %1127 = vmatprep.subr.mxu0 0.0
        %1128 = vmatpush1.msra.mxu0 0.0
        %1129 = vmatprep.subr.mxu0 0.0
        %1130 = vmatpush1.msra.mxu0 0.0
        %1131 = vmatprep.subr.mxu0 0.0
        %1132 = vmatpush1.msra.mxu0 %v1028
        %1133 = vmatprep.subr.mxu0 0.0
        %1134 = vmatpush2.msra.mxu0 0.0
        %1135 = vmatprep.subr.mxu0 0.0
        %1136 = vmatpush2.msra.mxu0 0.0
        %1137 = vmatprep.subr.mxu0 0.0
        %1138 = vmatpush2.msra.mxu0 0.0
        %1139 = vmatprep.subr.mxu0 0.0
        %1140 = vmatpush2.msra.mxu0 0.0
        %1141 = vmatprep.subr.mxu0 0.0
        %1142 = vmatpush2.msra.mxu0 0.0
        %1143 = vmatprep.subr.mxu0 0.0
        %1144 = vmatpush2.msra.mxu0 0.0
        %1145 = vmatprep.subr.mxu0 0.0
        %1146 = vmatpush2.msra.mxu0 0.0
        %1147 = vmatprep.subr.mxu0 0.0
        %1148 = vmatpush2.msra.mxu0 0.0
        %1149 = vmatprep.subr.mxu0 0.0
        %1150 = vmatpush2.msra.mxu0 0.0
        %1151 = vmatprep.subr.mxu0 0.0
        %1152 = vmatpush2.msra.mxu0 0.0
        %1153 = vmatprep.subr.mxu0 0.0
        %1154 = vmatpush2.msra.mxu0 0.0
        %1155 = vmatprep.subr.mxu0 0.0
        %1156 = vmatpush2.msra.mxu0 0.0
        %1157 = vmatprep.subr.mxu0 0.0
        %1158 = vmatpush2.msra.mxu0 0.0
        %1159 = vmatprep.subr.mxu0 0.0
        %1160 = vmatpush2.msra.mxu0 0.0
        %1161 = vmatprep.subr.mxu0 0.0
        %1162 = vmatpush2.msra.mxu0 0.0
        %1163 = vmatprep.subr.mxu0 0.0
        %1164 = vmatpush2.msra.mxu0 0.0
        %1165 = vmatprep.mubr.f32.mxu0 0.0
        %1166 = vmatmul.mubr.f32.gmra.mxu0 %v1022
        %v1167 = vpop.f32.mrf.mxu0
        %v1168 = vadd.f32 0.0, %v1167
        %v1169 = vpop.f32.mrf.mxu0
        %1170 = vdwg.mxu0
        %v1171 = vadd.f32 %v998, %v1097
        %v1172 = vadd.f32 %v999, %v1099
        %v1173 = vadd.f32 %v1000, %v1168
        %v1174 = vld [vmem:[#allocation2 + $0x4] sm:$0xff]
        %v1175 = vld [vmem:[#allocation2 + $0xc] sm:$0xf]
        %s1176 = scalar_lea.vmem %s3, 16
        %v1177 = vld [vmem:[%s1176] sm:$0xf]
        %v1180 = vcombine.high %v1174, %v1174
        %v1182 = vsel %vm514, %v1177, 0
        %v1184 = vsel %vm518, %v1174, 0
        %v1186 = vsel %vm518, %v1180, 0
        %v1188 = vsel %vm518, %v1175, 0
        %1190 = vmatprep.subr.mxu0 0.0
        %1191 = vmatpush1.msra.mxu0 0.0
        %1192 = vmatprep.subr.mxu0 0.0
        %1193 = vmatpush1.msra.mxu0 0.0
        %1194 = vmatprep.subr.mxu0 0.0
        %1195 = vmatpush1.msra.mxu0 0.0
        %1196 = vmatprep.subr.mxu0 0.0
        %1197 = vmatpush1.msra.mxu0 0.0
        %1198 = vmatprep.subr.mxu0 0.0
        %1199 = vmatpush1.msra.mxu0 0.0
        %1200 = vmatprep.subr.mxu0 0.0
        %1201 = vmatpush1.msra.mxu0 0.0
        %1202 = vmatprep.subr.mxu0 0.0
        %1203 = vmatpush1.msra.mxu0 0.0
        %1204 = vmatprep.subr.mxu0 0.0
        %1205 = vmatpush1.msra.mxu0 0.0
        %1206 = vmatprep.subr.mxu0 0.0
        %1207 = vmatpush1.msra.mxu0 0.0
        %1208 = vmatprep.subr.mxu0 0.0
        %1209 = vmatpush1.msra.mxu0 0.0
        %1210 = vmatprep.subr.mxu0 0.0
        %1211 = vmatpush1.msra.mxu0 0.0
        %1212 = vmatprep.subr.mxu0 0.0
        %1213 = vmatpush1.msra.mxu0 0.0
        %1214 = vmatprep.subr.mxu0 0.0
        %1215 = vmatpush1.msra.mxu0 0.0
        %1216 = vmatprep.subr.mxu0 0.0
        %1217 = vmatpush1.msra.mxu0 0.0
        %1218 = vmatprep.subr.mxu0 0.0
        %1219 = vmatpush1.msra.mxu0 0.0
        %1220 = vmatprep.subr.mxu0 %v1186
        %1221 = vmatpush1.msra.mxu0 %v1184
        %1222 = vmatprep.subr.mxu0 0.0
        %1223 = vmatpush2.msra.mxu0 0.0
        %1224 = vmatprep.subr.mxu0 0.0
        %1225 = vmatpush2.msra.mxu0 0.0
        %1226 = vmatprep.subr.mxu0 0.0
        %1227 = vmatpush2.msra.mxu0 0.0
        %1228 = vmatprep.subr.mxu0 0.0
        %1229 = vmatpush2.msra.mxu0 0.0
        %1230 = vmatprep.subr.mxu0 0.0
        %1231 = vmatpush2.msra.mxu0 0.0
        %1232 = vmatprep.subr.mxu0 0.0
        %1233 = vmatpush2.msra.mxu0 0.0
        %1234 = vmatprep.subr.mxu0 0.0
        %1235 = vmatpush2.msra.mxu0 0.0
        %1236 = vmatprep.subr.mxu0 0.0
        %1237 = vmatpush2.msra.mxu0 0.0
        %1238 = vmatprep.subr.mxu0 0.0
        %1239 = vmatpush2.msra.mxu0 0.0
        %1240 = vmatprep.subr.mxu0 0.0
        %1241 = vmatpush2.msra.mxu0 0.0
        %1242 = vmatprep.subr.mxu0 0.0
        %1243 = vmatpush2.msra.mxu0 0.0
        %1244 = vmatprep.subr.mxu0 0.0
        %1245 = vmatpush2.msra.mxu0 0.0
        %1246 = vmatprep.subr.mxu0 0.0
        %1247 = vmatpush2.msra.mxu0 0.0
        %1248 = vmatprep.subr.mxu0 0.0
        %1249 = vmatpush2.msra.mxu0 0.0
        %1250 = vmatprep.subr.mxu0 0.0
        %1251 = vmatpush2.msra.mxu0 0.0
        %1252 = vmatprep.subr.mxu0 0.0
        %1253 = vmatpush2.msra.mxu0 0.0
        %1254 = vmatprep.mubr.f32.mxu0 0.0
        %1255 = vmatmul.mubr.f32.gmra.mxu0 %v1182
        %v1256 = vpop.f32.mrf.mxu0
        %v1257 = vadd.f32 0.0, %v1256
        %v1258 = vpop.f32.mrf.mxu0
        %v1259 = vadd.f32 0.0, %v1258
        %1260 = vdwg.mxu0
        %1261 = vmatprep.subr.mxu0 0.0
        %1262 = vmatpush1.msra.mxu0 0.0
        %1263 = vmatprep.subr.mxu0 0.0
        %1264 = vmatpush1.msra.mxu0 0.0
        %1265 = vmatprep.subr.mxu0 0.0
        %1266 = vmatpush1.msra.mxu0 0.0
        %1267 = vmatprep.subr.mxu0 0.0
        %1268 = vmatpush1.msra.mxu0 0.0
        %1269 = vmatprep.subr.mxu0 0.0
        %1270 = vmatpush1.msra.mxu0 0.0
        %1271 = vmatprep.subr.mxu0 0.0
        %1272 = vmatpush1.msra.mxu0 0.0
        %1273 = vmatprep.subr.mxu0 0.0
        %1274 = vmatpush1.msra.mxu0 0.0
        %1275 = vmatprep.subr.mxu0 0.0
        %1276 = vmatpush1.msra.mxu0 0.0
        %1277 = vmatprep.subr.mxu0 0.0
        %1278 = vmatpush1.msra.mxu0 0.0
        %1279 = vmatprep.subr.mxu0 0.0
        %1280 = vmatpush1.msra.mxu0 0.0
        %1281 = vmatprep.subr.mxu0 0.0
        %1282 = vmatpush1.msra.mxu0 0.0
        %1283 = vmatprep.subr.mxu0 0.0
        %1284 = vmatpush1.msra.mxu0 0.0
        %1285 = vmatprep.subr.mxu0 0.0
        %1286 = vmatpush1.msra.mxu0 0.0
        %1287 = vmatprep.subr.mxu0 0.0
        %1288 = vmatpush1.msra.mxu0 0.0
        %1289 = vmatprep.subr.mxu0 0.0
        %1290 = vmatpush1.msra.mxu0 0.0
        %1291 = vmatprep.subr.mxu0 0.0
        %1292 = vmatpush1.msra.mxu0 %v1188
        %1293 = vmatprep.subr.mxu0 0.0
        %1294 = vmatpush2.msra.mxu0 0.0
        %1295 = vmatprep.subr.mxu0 0.0
        %1296 = vmatpush2.msra.mxu0 0.0
        %1297 = vmatprep.subr.mxu0 0.0
        %1298 = vmatpush2.msra.mxu0 0.0
        %1299 = vmatprep.subr.mxu0 0.0
        %1300 = vmatpush2.msra.mxu0 0.0
        %1301 = vmatprep.subr.mxu0 0.0
        %1302 = vmatpush2.msra.mxu0 0.0
        %1303 = vmatprep.subr.mxu0 0.0
        %1304 = vmatpush2.msra.mxu0 0.0
        %1305 = vmatprep.subr.mxu0 0.0
        %1306 = vmatpush2.msra.mxu0 0.0
        %1307 = vmatprep.subr.mxu0 0.0
        %1308 = vmatpush2.msra.mxu0 0.0
        %1309 = vmatprep.subr.mxu0 0.0
        %1310 = vmatpush2.msra.mxu0 0.0
        %1311 = vmatprep.subr.mxu0 0.0
        %1312 = vmatpush2.msra.mxu0 0.0
        %1313 = vmatprep.subr.mxu0 0.0
        %1314 = vmatpush2.msra.mxu0 0.0
        %1315 = vmatprep.subr.mxu0 0.0
        %1316 = vmatpush2.msra.mxu0 0.0
        %1317 = vmatprep.subr.mxu0 0.0
        %1318 = vmatpush2.msra.mxu0 0.0
        %1319 = vmatprep.subr.mxu0 0.0
        %1320 = vmatpush2.msra.mxu0 0.0
        %1321 = vmatprep.subr.mxu0 0.0
        %1322 = vmatpush2.msra.mxu0 0.0
        %1323 = vmatprep.subr.mxu0 0.0
        %1324 = vmatpush2.msra.mxu0 0.0
        %1325 = vmatprep.mubr.f32.mxu0 0.0
        %1326 = vmatmul.mubr.f32.gmra.mxu0 %v1182
        %v1327 = vpop.f32.mrf.mxu0
        %v1328 = vadd.f32 0.0, %v1327
        %v1329 = vpop.f32.mrf.mxu0
        %1330 = vdwg.mxu0
        %v1331 = vadd.f32 %v1171, %v1257
        %v1332 = vadd.f32 %v1172, %v1259
        %v1333 = vadd.f32 %v1173, %v1328
        %v1334 = vld [vmem:[#allocation2 + $0x4] sm:$0xff]
        %v1335 = vld [vmem:[#allocation2 + $0xc] sm:$0xf]
        %s1336 = scalar_lea.vmem %s3, 20
        %v1337 = vld [vmem:[%s1336] sm:$0xf]
        %v1340 = vcombine.high %v1334, %v1334
        %1341 = vrot.lane.b32.xlu0 %v1334, 127
        %v1342 = vpop.permute.xlu0 %1341
        %1343 = vrot.lane.b32.xlu0 %v1340, 127
        %v1344 = vpop.permute.xlu0 %1343
        %1345 = vrot.lane.b32.xlu0 %v1335, 127
        %v1346 = vpop.permute.xlu0 %1345
        %vm1347 = vcmask 1039360
        %v1348 = vsel %vm1347, %v1342, %v1344
        %v1349 = vsel %vm1347, %v1344, %v1346
        %v1351 = vsel %vm514, %v1337, 0
        %v1353 = vsel %vm518, %v1348, 0
        %v1355 = vsel %vm518, %v1349, 0
        %v1357 = vsel %vm518, %v1346, 0
        %1359 = vmatprep.subr.mxu0 0.0
        %1360 = vmatpush1.msra.mxu0 0.0
        %1361 = vmatprep.subr.mxu0 0.0
        %1362 = vmatpush1.msra.mxu0 0.0
        %1363 = vmatprep.subr.mxu0 0.0
        %1364 = vmatpush1.msra.mxu0 0.0
        %1365 = vmatprep.subr.mxu0 0.0
        %1366 = vmatpush1.msra.mxu0 0.0
        %1367 = vmatprep.subr.mxu0 0.0
        %1368 = vmatpush1.msra.mxu0 0.0
        %1369 = vmatprep.subr.mxu0 0.0
        %1370 = vmatpush1.msra.mxu0 0.0
        %1371 = vmatprep.subr.mxu0 0.0
        %1372 = vmatpush1.msra.mxu0 0.0
        %1373 = vmatprep.subr.mxu0 0.0
        %1374 = vmatpush1.msra.mxu0 0.0
        %1375 = vmatprep.subr.mxu0 0.0
        %1376 = vmatpush1.msra.mxu0 0.0
        %1377 = vmatprep.subr.mxu0 0.0
        %1378 = vmatpush1.msra.mxu0 0.0
        %1379 = vmatprep.subr.mxu0 0.0
        %1380 = vmatpush1.msra.mxu0 0.0
        %1381 = vmatprep.subr.mxu0 0.0
        %1382 = vmatpush1.msra.mxu0 0.0
        %1383 = vmatprep.subr.mxu0 0.0
        %1384 = vmatpush1.msra.mxu0 0.0
        %1385 = vmatprep.subr.mxu0 0.0
        %1386 = vmatpush1.msra.mxu0 0.0
        %1387 = vmatprep.subr.mxu0 0.0
        %1388 = vmatpush1.msra.mxu0 0.0
        %1389 = vmatprep.subr.mxu0 %v1355
        %1390 = vmatpush1.msra.mxu0 %v1353
        %1391 = vmatprep.subr.mxu0 0.0
        %1392 = vmatpush2.msra.mxu0 0.0
        %1393 = vmatprep.subr.mxu0 0.0
        %1394 = vmatpush2.msra.mxu0 0.0
        %1395 = vmatprep.subr.mxu0 0.0
        %1396 = vmatpush2.msra.mxu0 0.0
        %1397 = vmatprep.subr.mxu0 0.0
        %1398 = vmatpush2.msra.mxu0 0.0
        %1399 = vmatprep.subr.mxu0 0.0
        %1400 = vmatpush2.msra.mxu0 0.0
        %1401 = vmatprep.subr.mxu0 0.0
        %1402 = vmatpush2.msra.mxu0 0.0
        %1403 = vmatprep.subr.mxu0 0.0
        %1404 = vmatpush2.msra.mxu0 0.0
        %1405 = vmatprep.subr.mxu0 0.0
        %1406 = vmatpush2.msra.mxu0 0.0
        %1407 = vmatprep.subr.mxu0 0.0
        %1408 = vmatpush2.msra.mxu0 0.0
        %1409 = vmatprep.subr.mxu0 0.0
        %1410 = vmatpush2.msra.mxu0 0.0
        %1411 = vmatprep.subr.mxu0 0.0
        %1412 = vmatpush2.msra.mxu0 0.0
        %1413 = vmatprep.subr.mxu0 0.0
        %1414 = vmatpush2.msra.mxu0 0.0
        %1415 = vmatprep.subr.mxu0 0.0
        %1416 = vmatpush2.msra.mxu0 0.0
        %1417 = vmatprep.subr.mxu0 0.0
        %1418 = vmatpush2.msra.mxu0 0.0
        %1419 = vmatprep.subr.mxu0 0.0
        %1420 = vmatpush2.msra.mxu0 0.0
        %1421 = vmatprep.subr.mxu0 0.0
        %1422 = vmatpush2.msra.mxu0 0.0
        %1423 = vmatprep.mubr.f32.mxu0 0.0
        %1424 = vmatmul.mubr.f32.gmra.mxu0 %v1351
        %v1425 = vpop.f32.mrf.mxu0
        %v1426 = vadd.f32 0.0, %v1425
        %v1427 = vpop.f32.mrf.mxu0
        %v1428 = vadd.f32 0.0, %v1427
        %1429 = vdwg.mxu0
        %1430 = vmatprep.subr.mxu0 0.0
        %1431 = vmatpush1.msra.mxu0 0.0
        %1432 = vmatprep.subr.mxu0 0.0
        %1433 = vmatpush1.msra.mxu0 0.0
        %1434 = vmatprep.subr.mxu0 0.0
        %1435 = vmatpush1.msra.mxu0 0.0
        %1436 = vmatprep.subr.mxu0 0.0
        %1437 = vmatpush1.msra.mxu0 0.0
        %1438 = vmatprep.subr.mxu0 0.0
        %1439 = vmatpush1.msra.mxu0 0.0
        %1440 = vmatprep.subr.mxu0 0.0
        %1441 = vmatpush1.msra.mxu0 0.0
        %1442 = vmatprep.subr.mxu0 0.0
        %1443 = vmatpush1.msra.mxu0 0.0
        %1444 = vmatprep.subr.mxu0 0.0
        %1445 = vmatpush1.msra.mxu0 0.0
        %1446 = vmatprep.subr.mxu0 0.0
        %1447 = vmatpush1.msra.mxu0 0.0
        %1448 = vmatprep.subr.mxu0 0.0
        %1449 = vmatpush1.msra.mxu0 0.0
        %1450 = vmatprep.subr.mxu0 0.0
        %1451 = vmatpush1.msra.mxu0 0.0
        %1452 = vmatprep.subr.mxu0 0.0
        %1453 = vmatpush1.msra.mxu0 0.0
        %1454 = vmatprep.subr.mxu0 0.0
        %1455 = vmatpush1.msra.mxu0 0.0
        %1456 = vmatprep.subr.mxu0 0.0
        %1457 = vmatpush1.msra.mxu0 0.0
        %1458 = vmatprep.subr.mxu0 0.0
        %1459 = vmatpush1.msra.mxu0 0.0
        %1460 = vmatprep.subr.mxu0 0.0
        %1461 = vmatpush1.msra.mxu0 %v1357
        %1462 = vmatprep.subr.mxu0 0.0
        %1463 = vmatpush2.msra.mxu0 0.0
        %1464 = vmatprep.subr.mxu0 0.0
        %1465 = vmatpush2.msra.mxu0 0.0
        %1466 = vmatprep.subr.mxu0 0.0
        %1467 = vmatpush2.msra.mxu0 0.0
        %1468 = vmatprep.subr.mxu0 0.0
        %1469 = vmatpush2.msra.mxu0 0.0
        %1470 = vmatprep.subr.mxu0 0.0
        %1471 = vmatpush2.msra.mxu0 0.0
        %1472 = vmatprep.subr.mxu0 0.0
        %1473 = vmatpush2.msra.mxu0 0.0
        %1474 = vmatprep.subr.mxu0 0.0
        %1475 = vmatpush2.msra.mxu0 0.0
        %1476 = vmatprep.subr.mxu0 0.0
        %1477 = vmatpush2.msra.mxu0 0.0
        %1478 = vmatprep.subr.mxu0 0.0
        %1479 = vmatpush2.msra.mxu0 0.0
        %1480 = vmatprep.subr.mxu0 0.0
        %1481 = vmatpush2.msra.mxu0 0.0
        %1482 = vmatprep.subr.mxu0 0.0
        %1483 = vmatpush2.msra.mxu0 0.0
        %1484 = vmatprep.subr.mxu0 0.0
        %1485 = vmatpush2.msra.mxu0 0.0
        %1486 = vmatprep.subr.mxu0 0.0
        %1487 = vmatpush2.msra.mxu0 0.0
        %1488 = vmatprep.subr.mxu0 0.0
        %1489 = vmatpush2.msra.mxu0 0.0
        %1490 = vmatprep.subr.mxu0 0.0
        %1491 = vmatpush2.msra.mxu0 0.0
        %1492 = vmatprep.subr.mxu0 0.0
        %1493 = vmatpush2.msra.mxu0 0.0
        %1494 = vmatprep.mubr.f32.mxu0 0.0
        %1495 = vmatmul.mubr.f32.gmra.mxu0 %v1351
        %v1496 = vpop.f32.mrf.mxu0
        %v1497 = vadd.f32 0.0, %v1496
        %v1498 = vpop.f32.mrf.mxu0
        %1499 = vdwg.mxu0
        %v1500 = vadd.f32 %v1331, %v1426
        %v1501 = vadd.f32 %v1332, %v1428
        %v1502 = vadd.f32 %v1333, %v1497
        %v1503 = vld [vmem:[#allocation2 + $0x4] sm:$0xff]
        %v1504 = vld [vmem:[#allocation2 + $0xc] sm:$0xf]
        %s1505 = scalar_lea.vmem %s3, 24
        %v1506 = vld [vmem:[%s1505] sm:$0xf]
        %v1509 = vcombine.high %v1503, %v1503
        %1510 = vrot.lane.b32.xlu0 %v1503, 111
        %v1511 = vpop.permute.xlu0 %1510
        %1512 = vrot.lane.b32.xlu0 %v1509, 111
        %v1513 = vpop.permute.xlu0 %1512
        %1514 = vrot.lane.b32.xlu0 %v1504, 111
        %v1515 = vpop.permute.xlu0 %1514
        %vm1516 = vcmask 908288
        %v1517 = vsel %vm1516, %v1511, %v1513
        %v1518 = vsel %vm1516, %v1513, %v1515
        %v1520 = vsel %vm514, %v1506, 0
        %v1522 = vsel %vm518, %v1517, 0
        %v1524 = vsel %vm518, %v1518, 0
        %v1526 = vsel %vm518, %v1515, 0
        %1528 = vmatprep.subr.mxu0 0.0
        %1529 = vmatpush1.msra.mxu0 0.0
        %1530 = vmatprep.subr.mxu0 0.0
        %1531 = vmatpush1.msra.mxu0 0.0
        %1532 = vmatprep.subr.mxu0 0.0
        %1533 = vmatpush1.msra.mxu0 0.0
        %1534 = vmatprep.subr.mxu0 0.0
        %1535 = vmatpush1.msra.mxu0 0.0
        %1536 = vmatprep.subr.mxu0 0.0
        %1537 = vmatpush1.msra.mxu0 0.0
        %1538 = vmatprep.subr.mxu0 0.0
        %1539 = vmatpush1.msra.mxu0 0.0
        %1540 = vmatprep.subr.mxu0 0.0
        %1541 = vmatpush1.msra.mxu0 0.0
        %1542 = vmatprep.subr.mxu0 0.0
        %1543 = vmatpush1.msra.mxu0 0.0
        %1544 = vmatprep.subr.mxu0 0.0
        %1545 = vmatpush1.msra.mxu0 0.0
        %1546 = vmatprep.subr.mxu0 0.0
        %1547 = vmatpush1.msra.mxu0 0.0
        %1548 = vmatprep.subr.mxu0 0.0
        %1549 = vmatpush1.msra.mxu0 0.0
        %1550 = vmatprep.subr.mxu0 0.0
        %1551 = vmatpush1.msra.mxu0 0.0
        %1552 = vmatprep.subr.mxu0 0.0
        %1553 = vmatpush1.msra.mxu0 0.0
        %1554 = vmatprep.subr.mxu0 0.0
        %1555 = vmatpush1.msra.mxu0 0.0
        %1556 = vmatprep.subr.mxu0 0.0
        %1557 = vmatpush1.msra.mxu0 0.0
        %1558 = vmatprep.subr.mxu0 %v1524
        %1559 = vmatpush1.msra.mxu0 %v1522
        %1560 = vmatprep.subr.mxu0 0.0
        %1561 = vmatpush2.msra.mxu0 0.0
        %1562 = vmatprep.subr.mxu0 0.0
        %1563 = vmatpush2.msra.mxu0 0.0
        %1564 = vmatprep.subr.mxu0 0.0
        %1565 = vmatpush2.msra.mxu0 0.0
        %1566 = vmatprep.subr.mxu0 0.0
        %1567 = vmatpush2.msra.mxu0 0.0
        %1568 = vmatprep.subr.mxu0 0.0
        %1569 = vmatpush2.msra.mxu0 0.0
        %1570 = vmatprep.subr.mxu0 0.0
        %1571 = vmatpush2.msra.mxu0 0.0
        %1572 = vmatprep.subr.mxu0 0.0
        %1573 = vmatpush2.msra.mxu0 0.0
        %1574 = vmatprep.subr.mxu0 0.0
        %1575 = vmatpush2.msra.mxu0 0.0
        %1576 = vmatprep.subr.mxu0 0.0
        %1577 = vmatpush2.msra.mxu0 0.0
        %1578 = vmatprep.subr.mxu0 0.0
        %1579 = vmatpush2.msra.mxu0 0.0
        %1580 = vmatprep.subr.mxu0 0.0
        %1581 = vmatpush2.msra.mxu0 0.0
        %1582 = vmatprep.subr.mxu0 0.0
        %1583 = vmatpush2.msra.mxu0 0.0
        %1584 = vmatprep.subr.mxu0 0.0
        %1585 = vmatpush2.msra.mxu0 0.0
        %1586 = vmatprep.subr.mxu0 0.0
        %1587 = vmatpush2.msra.mxu0 0.0
        %1588 = vmatprep.subr.mxu0 0.0
        %1589 = vmatpush2.msra.mxu0 0.0
        %1590 = vmatprep.subr.mxu0 0.0
        %1591 = vmatpush2.msra.mxu0 0.0
        %1592 = vmatprep.mubr.f32.mxu0 0.0
        %1593 = vmatmul.mubr.f32.gmra.mxu0 %v1520
        %v1594 = vpop.f32.mrf.mxu0
        %v1595 = vadd.f32 0.0, %v1594
        %v1596 = vpop.f32.mrf.mxu0
        %v1597 = vadd.f32 0.0, %v1596
        %1598 = vdwg.mxu0
        %1599 = vmatprep.subr.mxu0 0.0
        %1600 = vmatpush1.msra.mxu0 0.0
        %1601 = vmatprep.subr.mxu0 0.0
        %1602 = vmatpush1.msra.mxu0 0.0
        %1603 = vmatprep.subr.mxu0 0.0
        %1604 = vmatpush1.msra.mxu0 0.0
        %1605 = vmatprep.subr.mxu0 0.0
        %1606 = vmatpush1.msra.mxu0 0.0
        %1607 = vmatprep.subr.mxu0 0.0
        %1608 = vmatpush1.msra.mxu0 0.0
        %1609 = vmatprep.subr.mxu0 0.0
        %1610 = vmatpush1.msra.mxu0 0.0
        %1611 = vmatprep.subr.mxu0 0.0
        %1612 = vmatpush1.msra.mxu0 0.0
        %1613 = vmatprep.subr.mxu0 0.0
        %1614 = vmatpush1.msra.mxu0 0.0
        %1615 = vmatprep.subr.mxu0 0.0
        %1616 = vmatpush1.msra.mxu0 0.0
        %1617 = vmatprep.subr.mxu0 0.0
        %1618 = vmatpush1.msra.mxu0 0.0
        %1619 = vmatprep.subr.mxu0 0.0
        %1620 = vmatpush1.msra.mxu0 0.0
        %1621 = vmatprep.subr.mxu0 0.0
        %1622 = vmatpush1.msra.mxu0 0.0
        %1623 = vmatprep.subr.mxu0 0.0
        %1624 = vmatpush1.msra.mxu0 0.0
        %1625 = vmatprep.subr.mxu0 0.0
        %1626 = vmatpush1.msra.mxu0 0.0
        %1627 = vmatprep.subr.mxu0 0.0
        %1628 = vmatpush1.msra.mxu0 0.0
        %1629 = vmatprep.subr.mxu0 0.0
        %1630 = vmatpush1.msra.mxu0 %v1526
        %1631 = vmatprep.subr.mxu0 0.0
        %1632 = vmatpush2.msra.mxu0 0.0
        %1633 = vmatprep.subr.mxu0 0.0
        %1634 = vmatpush2.msra.mxu0 0.0
        %1635 = vmatprep.subr.mxu0 0.0
        %1636 = vmatpush2.msra.mxu0 0.0
        %1637 = vmatprep.subr.mxu0 0.0
        %1638 = vmatpush2.msra.mxu0 0.0
        %1639 = vmatprep.subr.mxu0 0.0
        %1640 = vmatpush2.msra.mxu0 0.0
        %1641 = vmatprep.subr.mxu0 0.0
        %1642 = vmatpush2.msra.mxu0 0.0
        %1643 = vmatprep.subr.mxu0 0.0
        %1644 = vmatpush2.msra.mxu0 0.0
        %1645 = vmatprep.subr.mxu0 0.0
        %1646 = vmatpush2.msra.mxu0 0.0
        %1647 = vmatprep.subr.mxu0 0.0
        %1648 = vmatpush2.msra.mxu0 0.0
        %1649 = vmatprep.subr.mxu0 0.0
        %1650 = vmatpush2.msra.mxu0 0.0
        %1651 = vmatprep.subr.mxu0 0.0
        %1652 = vmatpush2.msra.mxu0 0.0
        %1653 = vmatprep.subr.mxu0 0.0
        %1654 = vmatpush2.msra.mxu0 0.0
        %1655 = vmatprep.subr.mxu0 0.0
        %1656 = vmatpush2.msra.mxu0 0.0
        %1657 = vmatprep.subr.mxu0 0.0
        %1658 = vmatpush2.msra.mxu0 0.0
        %1659 = vmatprep.subr.mxu0 0.0
        %1660 = vmatpush2.msra.mxu0 0.0
        %1661 = vmatprep.subr.mxu0 0.0
        %1662 = vmatpush2.msra.mxu0 0.0
        %1663 = vmatprep.mubr.f32.mxu0 0.0
        %1664 = vmatmul.mubr.f32.gmra.mxu0 %v1520
        %v1665 = vpop.f32.mrf.mxu0
        %v1666 = vadd.f32 0.0, %v1665
        %v1667 = vpop.f32.mrf.mxu0
        %1668 = vdwg.mxu0
        %v1669 = vadd.f32 %v1500, %v1595
        %v1670 = vadd.f32 %v1501, %v1597
        %v1671 = vadd.f32 %v1502, %v1666
        %v1672 = vld [vmem:[#allocation2 + $0x4] sm:$0xff]
        %v1673 = vld [vmem:[#allocation2 + $0xc] sm:$0xf]
        %s1674 = scalar_lea.vmem %s3, 28
        %v1675 = vld [vmem:[%s1674] sm:$0xf]
        %v1678 = vcombine.high %v1672, %v1672
        %1679 = vrot.lane.b32.xlu0 %v1672, 110
        %v1680 = vpop.permute.xlu0 %1679
        %1681 = vrot.lane.b32.xlu0 %v1678, 110
        %v1682 = vpop.permute.xlu0 %1681
        %1683 = vrot.lane.b32.xlu0 %v1673, 110
        %v1684 = vpop.permute.xlu0 %1683
        %vm1685 = vcmask 900096
        %v1686 = vsel %vm1685, %v1680, %v1682
        %v1687 = vsel %vm1685, %v1682, %v1684
        %v1689 = vsel %vm514, %v1675, 0
        %v1691 = vsel %vm518, %v1686, 0
        %v1693 = vsel %vm518, %v1687, 0
        %v1695 = vsel %vm518, %v1684, 0
        %1697 = vmatprep.subr.mxu0 0.0
        %1698 = vmatpush1.msra.mxu0 0.0
        %1699 = vmatprep.subr.mxu0 0.0
        %1700 = vmatpush1.msra.mxu0 0.0
        %1701 = vmatprep.subr.mxu0 0.0
        %1702 = vmatpush1.msra.mxu0 0.0
        %1703 = vmatprep.subr.mxu0 0.0
        %1704 = vmatpush1.msra.mxu0 0.0
        %1705 = vmatprep.subr.mxu0 0.0
        %1706 = vmatpush1.msra.mxu0 0.0
        %1707 = vmatprep.subr.mxu0 0.0
        %1708 = vmatpush1.msra.mxu0 0.0
        %1709 = vmatprep.subr.mxu0 0.0
        %1710 = vmatpush1.msra.mxu0 0.0
        %1711 = vmatprep.subr.mxu0 0.0
        %1712 = vmatpush1.msra.mxu0 0.0
        %1713 = vmatprep.subr.mxu0 0.0
        %1714 = vmatpush1.msra.mxu0 0.0
        %1715 = vmatprep.subr.mxu0 0.0
        %1716 = vmatpush1.msra.mxu0 0.0
        %1717 = vmatprep.subr.mxu0 0.0
        %1718 = vmatpush1.msra.mxu0 0.0
        %1719 = vmatprep.subr.mxu0 0.0
        %1720 = vmatpush1.msra.mxu0 0.0
        %1721 = vmatprep.subr.mxu0 0.0
        %1722 = vmatpush1.msra.mxu0 0.0
        %1723 = vmatprep.subr.mxu0 0.0
        %1724 = vmatpush1.msra.mxu0 0.0
        %1725 = vmatprep.subr.mxu0 0.0
        %1726 = vmatpush1.msra.mxu0 0.0
        %1727 = vmatprep.subr.mxu0 %v1693
        %1728 = vmatpush1.msra.mxu0 %v1691
        %1729 = vmatprep.subr.mxu0 0.0
        %1730 = vmatpush2.msra.mxu0 0.0
        %1731 = vmatprep.subr.mxu0 0.0
        %1732 = vmatpush2.msra.mxu0 0.0
        %1733 = vmatprep.subr.mxu0 0.0
        %1734 = vmatpush2.msra.mxu0 0.0
        %1735 = vmatprep.subr.mxu0 0.0
        %1736 = vmatpush2.msra.mxu0 0.0
        %1737 = vmatprep.subr.mxu0 0.0
        %1738 = vmatpush2.msra.mxu0 0.0
        %1739 = vmatprep.subr.mxu0 0.0
        %1740 = vmatpush2.msra.mxu0 0.0
        %1741 = vmatprep.subr.mxu0 0.0
        %1742 = vmatpush2.msra.mxu0 0.0
        %1743 = vmatprep.subr.mxu0 0.0
        %1744 = vmatpush2.msra.mxu0 0.0
        %1745 = vmatprep.subr.mxu0 0.0
        %1746 = vmatpush2.msra.mxu0 0.0
        %1747 = vmatprep.subr.mxu0 0.0
        %1748 = vmatpush2.msra.mxu0 0.0
        %1749 = vmatprep.subr.mxu0 0.0
        %1750 = vmatpush2.msra.mxu0 0.0
        %1751 = vmatprep.subr.mxu0 0.0
        %1752 = vmatpush2.msra.mxu0 0.0
        %1753 = vmatprep.subr.mxu0 0.0
        %1754 = vmatpush2.msra.mxu0 0.0
        %1755 = vmatprep.subr.mxu0 0.0
        %1756 = vmatpush2.msra.mxu0 0.0
        %1757 = vmatprep.subr.mxu0 0.0
        %1758 = vmatpush2.msra.mxu0 0.0
        %1759 = vmatprep.subr.mxu0 0.0
        %1760 = vmatpush2.msra.mxu0 0.0
        %1761 = vmatprep.mubr.f32.mxu0 0.0
        %1762 = vmatmul.mubr.f32.gmra.mxu0 %v1689
        %v1763 = vpop.f32.mrf.mxu0
        %v1764 = vadd.f32 0.0, %v1763
        %v1765 = vpop.f32.mrf.mxu0
        %v1766 = vadd.f32 0.0, %v1765
        %1767 = vdwg.mxu0
        %1768 = vmatprep.subr.mxu0 0.0
        %1769 = vmatpush1.msra.mxu0 0.0
        %1770 = vmatprep.subr.mxu0 0.0
        %1771 = vmatpush1.msra.mxu0 0.0
        %1772 = vmatprep.subr.mxu0 0.0
        %1773 = vmatpush1.msra.mxu0 0.0
        %1774 = vmatprep.subr.mxu0 0.0
        %1775 = vmatpush1.msra.mxu0 0.0
        %1776 = vmatprep.subr.mxu0 0.0
        %1777 = vmatpush1.msra.mxu0 0.0
        %1778 = vmatprep.subr.mxu0 0.0
        %1779 = vmatpush1.msra.mxu0 0.0
        %1780 = vmatprep.subr.mxu0 0.0
        %1781 = vmatpush1.msra.mxu0 0.0
        %1782 = vmatprep.subr.mxu0 0.0
        %1783 = vmatpush1.msra.mxu0 0.0
        %1784 = vmatprep.subr.mxu0 0.0
        %1785 = vmatpush1.msra.mxu0 0.0
        %1786 = vmatprep.subr.mxu0 0.0
        %1787 = vmatpush1.msra.mxu0 0.0
        %1788 = vmatprep.subr.mxu0 0.0
        %1789 = vmatpush1.msra.mxu0 0.0
        %1790 = vmatprep.subr.mxu0 0.0
        %1791 = vmatpush1.msra.mxu0 0.0
        %1792 = vmatprep.subr.mxu0 0.0
        %1793 = vmatpush1.msra.mxu0 0.0
        %1794 = vmatprep.subr.mxu0 0.0
        %1795 = vmatpush1.msra.mxu0 0.0
        %1796 = vmatprep.subr.mxu0 0.0
        %1797 = vmatpush1.msra.mxu0 0.0
        %1798 = vmatprep.subr.mxu0 0.0
        %1799 = vmatpush1.msra.mxu0 %v1695
        %1800 = vmatprep.subr.mxu0 0.0
        %1801 = vmatpush2.msra.mxu0 0.0
        %1802 = vmatprep.subr.mxu0 0.0
        %1803 = vmatpush2.msra.mxu0 0.0
        %1804 = vmatprep.subr.mxu0 0.0
        %1805 = vmatpush2.msra.mxu0 0.0
        %1806 = vmatprep.subr.mxu0 0.0
        %1807 = vmatpush2.msra.mxu0 0.0
        %1808 = vmatprep.subr.mxu0 0.0
        %1809 = vmatpush2.msra.mxu0 0.0
        %1810 = vmatprep.subr.mxu0 0.0
        %1811 = vmatpush2.msra.mxu0 0.0
        %1812 = vmatprep.subr.mxu0 0.0
        %1813 = vmatpush2.msra.mxu0 0.0
        %1814 = vmatprep.subr.mxu0 0.0
        %1815 = vmatpush2.msra.mxu0 0.0
        %1816 = vmatprep.subr.mxu0 0.0
        %1817 = vmatpush2.msra.mxu0 0.0
        %1818 = vmatprep.subr.mxu0 0.0
        %1819 = vmatpush2.msra.mxu0 0.0
        %1820 = vmatprep.subr.mxu0 0.0
        %1821 = vmatpush2.msra.mxu0 0.0
        %1822 = vmatprep.subr.mxu0 0.0
        %1823 = vmatpush2.msra.mxu0 0.0
        %1824 = vmatprep.subr.mxu0 0.0
        %1825 = vmatpush2.msra.mxu0 0.0
        %1826 = vmatprep.subr.mxu0 0.0
        %1827 = vmatpush2.msra.mxu0 0.0
        %1828 = vmatprep.subr.mxu0 0.0
        %1829 = vmatpush2.msra.mxu0 0.0
        %1830 = vmatprep.subr.mxu0 0.0
        %1831 = vmatpush2.msra.mxu0 0.0
        %1832 = vmatprep.mubr.f32.mxu0 0.0
        %1833 = vmatmul.mubr.f32.gmra.mxu0 %v1689
        %v1834 = vpop.f32.mrf.mxu0
        %v1835 = vadd.f32 0.0, %v1834
        %v1836 = vpop.f32.mrf.mxu0
        %1837 = vdwg.mxu0
        %v1838 = vadd.f32 %v1669, %v1764
        %v1839 = vadd.f32 %v1670, %v1766
        %v1840 = vadd.f32 %v1671, %v1835
        %v1841 = vld [vmem:[#allocation2 + $0x4] sm:$0xff]
        %v1842 = vld [vmem:[#allocation2 + $0xc] sm:$0xf]
        %s1843 = scalar_lea.vmem %s3, 32
        %v1844 = vld [vmem:[%s1843] sm:$0xf]
        %v1847 = vcombine.high %v1841, %v1841
        %1848 = vrot.lane.b32.xlu0 %v1841, 109
        %v1849 = vpop.permute.xlu0 %1848
        %1850 = vrot.lane.b32.xlu0 %v1847, 109
        %v1851 = vpop.permute.xlu0 %1850
        %1852 = vrot.lane.b32.xlu0 %v1842, 109
        %v1853 = vpop.permute.xlu0 %1852
        %vm1854 = vcmask 891904
        %v1855 = vsel %vm1854, %v1849, %v1851
        %v1856 = vsel %vm1854, %v1851, %v1853
        %v1858 = vsel %vm514, %v1844, 0
        %v1860 = vsel %vm518, %v1855, 0
        %v1862 = vsel %vm518, %v1856, 0
        %v1864 = vsel %vm518, %v1853, 0
        %1866 = vmatprep.subr.mxu0 0.0
        %1867 = vmatpush1.msra.mxu0 0.0
        %1868 = vmatprep.subr.mxu0 0.0
        %1869 = vmatpush1.msra.mxu0 0.0
        %1870 = vmatprep.subr.mxu0 0.0
        %1871 = vmatpush1.msra.mxu0 0.0
        %1872 = vmatprep.subr.mxu0 0.0
        %1873 = vmatpush1.msra.mxu0 0.0
        %1874 = vmatprep.subr.mxu0 0.0
        %1875 = vmatpush1.msra.mxu0 0.0
        %1876 = vmatprep.subr.mxu0 0.0
        %1877 = vmatpush1.msra.mxu0 0.0
        %1878 = vmatprep.subr.mxu0 0.0
        %1879 = vmatpush1.msra.mxu0 0.0
        %1880 = vmatprep.subr.mxu0 0.0
        %1881 = vmatpush1.msra.mxu0 0.0
        %1882 = vmatprep.subr.mxu0 0.0
        %1883 = vmatpush1.msra.mxu0 0.0
        %1884 = vmatprep.subr.mxu0 0.0
        %1885 = vmatpush1.msra.mxu0 0.0
        %1886 = vmatprep.subr.mxu0 0.0
        %1887 = vmatpush1.msra.mxu0 0.0
        %1888 = vmatprep.subr.mxu0 0.0
        %1889 = vmatpush1.msra.mxu0 0.0
        %1890 = vmatprep.subr.mxu0 0.0
        %1891 = vmatpush1.msra.mxu0 0.0
        %1892 = vmatprep.subr.mxu0 0.0
        %1893 = vmatpush1.msra.mxu0 0.0
        %1894 = vmatprep.subr.mxu0 0.0
        %1895 = vmatpush1.msra.mxu0 0.0
        %1896 = vmatprep.subr.mxu0 %v1862
        %1897 = vmatpush1.msra.mxu0 %v1860
        %1898 = vmatprep.subr.mxu0 0.0
        %1899 = vmatpush2.msra.mxu0 0.0
        %1900 = vmatprep.subr.mxu0 0.0
        %1901 = vmatpush2.msra.mxu0 0.0
        %1902 = vmatprep.subr.mxu0 0.0
        %1903 = vmatpush2.msra.mxu0 0.0
        %1904 = vmatprep.subr.mxu0 0.0
        %1905 = vmatpush2.msra.mxu0 0.0
        %1906 = vmatprep.subr.mxu0 0.0
        %1907 = vmatpush2.msra.mxu0 0.0
        %1908 = vmatprep.subr.mxu0 0.0
        %1909 = vmatpush2.msra.mxu0 0.0
        %1910 = vmatprep.subr.mxu0 0.0
        %1911 = vmatpush2.msra.mxu0 0.0
        %1912 = vmatprep.subr.mxu0 0.0
        %1913 = vmatpush2.msra.mxu0 0.0
        %1914 = vmatprep.subr.mxu0 0.0
        %1915 = vmatpush2.msra.mxu0 0.0
        %1916 = vmatprep.subr.mxu0 0.0
        %1917 = vmatpush2.msra.mxu0 0.0
        %1918 = vmatprep.subr.mxu0 0.0
        %1919 = vmatpush2.msra.mxu0 0.0
        %1920 = vmatprep.subr.mxu0 0.0
        %1921 = vmatpush2.msra.mxu0 0.0
        %1922 = vmatprep.subr.mxu0 0.0
        %1923 = vmatpush2.msra.mxu0 0.0
        %1924 = vmatprep.subr.mxu0 0.0
        %1925 = vmatpush2.msra.mxu0 0.0
        %1926 = vmatprep.subr.mxu0 0.0
        %1927 = vmatpush2.msra.mxu0 0.0
        %1928 = vmatprep.subr.mxu0 0.0
        %1929 = vmatpush2.msra.mxu0 0.0
        %1930 = vmatprep.mubr.f32.mxu0 0.0
        %1931 = vmatmul.mubr.f32.gmra.mxu0 %v1858
        %v1932 = vpop.f32.mrf.mxu0
        %v1933 = vadd.f32 0.0, %v1932
        %v1934 = vpop.f32.mrf.mxu0
        %v1935 = vadd.f32 0.0, %v1934
        %1936 = vdwg.mxu0
        %1937 = vmatprep.subr.mxu0 0.0
        %1938 = vmatpush1.msra.mxu0 0.0
        %1939 = vmatprep.subr.mxu0 0.0
        %1940 = vmatpush1.msra.mxu0 0.0
        %1941 = vmatprep.subr.mxu0 0.0
        %1942 = vmatpush1.msra.mxu0 0.0
        %1943 = vmatprep.subr.mxu0 0.0
        %1944 = vmatpush1.msra.mxu0 0.0
        %1945 = vmatprep.subr.mxu0 0.0
        %1946 = vmatpush1.msra.mxu0 0.0
        %1947 = vmatprep.subr.mxu0 0.0
        %1948 = vmatpush1.msra.mxu0 0.0
        %1949 = vmatprep.subr.mxu0 0.0
        %1950 = vmatpush1.msra.mxu0 0.0
        %1951 = vmatprep.subr.mxu0 0.0
        %1952 = vmatpush1.msra.mxu0 0.0
        %1953 = vmatprep.subr.mxu0 0.0
        %1954 = vmatpush1.msra.mxu0 0.0
        %1955 = vmatprep.subr.mxu0 0.0
        %1956 = vmatpush1.msra.mxu0 0.0
        %1957 = vmatprep.subr.mxu0 0.0
        %1958 = vmatpush1.msra.mxu0 0.0
        %1959 = vmatprep.subr.mxu0 0.0
        %1960 = vmatpush1.msra.mxu0 0.0
        %1961 = vmatprep.subr.mxu0 0.0
        %1962 = vmatpush1.msra.mxu0 0.0
        %1963 = vmatprep.subr.mxu0 0.0
        %1964 = vmatpush1.msra.mxu0 0.0
        %1965 = vmatprep.subr.mxu0 0.0
        %1966 = vmatpush1.msra.mxu0 0.0
        %1967 = vmatprep.subr.mxu0 0.0
        %1968 = vmatpush1.msra.mxu0 %v1864
        %1969 = vmatprep.subr.mxu0 0.0
        %1970 = vmatpush2.msra.mxu0 0.0
        %1971 = vmatprep.subr.mxu0 0.0
        %1972 = vmatpush2.msra.mxu0 0.0
        %1973 = vmatprep.subr.mxu0 0.0
        %1974 = vmatpush2.msra.mxu0 0.0
        %1975 = vmatprep.subr.mxu0 0.0
        %1976 = vmatpush2.msra.mxu0 0.0
        %1977 = vmatprep.subr.mxu0 0.0
        %1978 = vmatpush2.msra.mxu0 0.0
        %1979 = vmatprep.subr.mxu0 0.0
        %1980 = vmatpush2.msra.mxu0 0.0
        %1981 = vmatprep.subr.mxu0 0.0
        %1982 = vmatpush2.msra.mxu0 0.0
        %1983 = vmatprep.subr.mxu0 0.0
        %1984 = vmatpush2.msra.mxu0 0.0
        %1985 = vmatprep.subr.mxu0 0.0
        %1986 = vmatpush2.msra.mxu0 0.0
        %1987 = vmatprep.subr.mxu0 0.0
        %1988 = vmatpush2.msra.mxu0 0.0
        %1989 = vmatprep.subr.mxu0 0.0
        %1990 = vmatpush2.msra.mxu0 0.0
        %1991 = vmatprep.subr.mxu0 0.0
        %1992 = vmatpush2.msra.mxu0 0.0
        %1993 = vmatprep.subr.mxu0 0.0
        %1994 = vmatpush2.msra.mxu0 0.0
        %1995 = vmatprep.subr.mxu0 0.0
        %1996 = vmatpush2.msra.mxu0 0.0
        %1997 = vmatprep.subr.mxu0 0.0
        %1998 = vmatpush2.msra.mxu0 0.0
        %1999 = vmatprep.subr.mxu0 0.0
        %2000 = vmatpush2.msra.mxu0 0.0
        %2001 = vmatprep.mubr.f32.mxu0 0.0
        %2002 = vmatmul.mubr.f32.gmra.mxu0 %v1858
        %v2003 = vpop.f32.mrf.mxu0
        %v2004 = vadd.f32 0.0, %v2003
        %v2005 = vpop.f32.mrf.mxu0
        %2006 = vdwg.mxu0
        %v2007 = vadd.f32 %v1838, %v1933
        %v2008 = vadd.f32 %v1839, %v1935
        %v2009 = vadd.f32 %v1840, %v2004
        %v2010 = vld [vmem:[%s8] sm:$0xf]
        %v2011 = vld [vmem:[%s9] sm:$0xf]
        %2013 = vset.pattern.permute.xlu0 0
        %2014 = vperm.xlu0 %2013, %v2010
        %v2015 = vpop.permute.xlu0 %2014
        %v2017 = vmul.f32 %v2007, %v2015
        %v2018 = vmul.f32 %v2008, %v2015
        %v2019 = vmul.f32 %v2009, %v2015
        %2021 = vset.pattern.permute.xlu0 0
        %2022 = vperm.xlu0 %2021, %v2011
        %v2023 = vpop.permute.xlu0 %2022
        %v2025 = vadd.f32 %v2017, %v2023
        %v2026 = vadd.f32 %v2018, %v2023
        %v2027 = vadd.f32 %v2019, %v2023
        %v2028 = vmax.f32 %v2025, 0.0
        %v2029 = vmax.f32 %v2026, 0.0
        %v2030 = vmax.f32 %v2027, 0.0
        %v2031 = vmul.f32 %v2028, %v475
        %v2032 = vmul.f32 %v2029, %v479
        %v2033 = vmul.f32 %v2030, %v483
        %v2036 = vcombine.low %v2031, %v2032
        %2038 = vst [vmem:[#allocation2 + $0x4] sm:$0xff] %v2036
        %2039 = vst.msk [vmem:[#allocation2 + $0xc] sm:$0xf] %vm435, %v2033
        %v2040 = vld [vmem:[#allocation2] sm:$0xff]
        %v2041 = vld [vmem:[#allocation2 + $0x8] sm:$0xff]
        %v2042 = vld [vmem:[%s4] sm:$0xf]
        %s2043 = scalar_lea.vmem %s4, 4
        %v2044 = vld [vmem:[%s2043] sm:$0xf]
        %v2047 = vcombine.high %v2040, %v2040
        %v2048 = vcombine.high %v2041, %v2041
        %2049 = vrot.lane.b32.xlu0 %v2040, 18
        %v2050 = vpop.permute.xlu0 %2049
        %2051 = vrot.lane.b32.xlu0 %v2047, 18
        %v2052 = vpop.permute.xlu0 %2051
        %2053 = vrot.lane.b32.xlu0 %v2041, 18
        %v2054 = vpop.permute.xlu0 %2053
        %2055 = vrot.lane.b32.xlu0 %v2048, 18
        %v2056 = vpop.permute.xlu0 %2055
        %v2057 = vsel %vm510, %v2050, %v2052
        %v2058 = vsel %vm510, %v2052, %v2054
        %v2059 = vsel %vm510, %v2054, %v2056
        %v2061 = vsel %vm514, %v2044, 0
        %v2063 = vsel %vm518, %v2057, 0
        %v2065 = vsel %vm518, %v2058, 0
        %v2067 = vsel %vm518, %v2059, 0
        %2069 = vmatprep.subr.mxu0 0.0
        %2070 = vmatpush1.msra.mxu0 0.0
        %2071 = vmatprep.subr.mxu0 0.0
        %2072 = vmatpush1.msra.mxu0 0.0
        %2073 = vmatprep.subr.mxu0 0.0
        %2074 = vmatpush1.msra.mxu0 0.0
        %2075 = vmatprep.subr.mxu0 0.0
        %2076 = vmatpush1.msra.mxu0 0.0
        %2077 = vmatprep.subr.mxu0 0.0
        %2078 = vmatpush1.msra.mxu0 0.0
        %2079 = vmatprep.subr.mxu0 0.0
        %2080 = vmatpush1.msra.mxu0 0.0
        %2081 = vmatprep.subr.mxu0 0.0
        %2082 = vmatpush1.msra.mxu0 0.0
        %2083 = vmatprep.subr.mxu0 0.0
        %2084 = vmatpush1.msra.mxu0 0.0
        %2085 = vmatprep.subr.mxu0 0.0
        %2086 = vmatpush1.msra.mxu0 0.0
        %2087 = vmatprep.subr.mxu0 0.0
        %2088 = vmatpush1.msra.mxu0 0.0
        %2089 = vmatprep.subr.mxu0 0.0
        %2090 = vmatpush1.msra.mxu0 0.0
        %2091 = vmatprep.subr.mxu0 0.0
        %2092 = vmatpush1.msra.mxu0 0.0
        %2093 = vmatprep.subr.mxu0 0.0
        %2094 = vmatpush1.msra.mxu0 0.0
        %2095 = vmatprep.subr.mxu0 0.0
        %2096 = vmatpush1.msra.mxu0 0.0
        %2097 = vmatprep.subr.mxu0 0.0
        %2098 = vmatpush1.msra.mxu0 0.0
        %2099 = vmatprep.subr.mxu0 %v2065
        %2100 = vmatpush1.msra.mxu0 %v2063
        %2101 = vmatprep.subr.mxu0 0.0
        %2102 = vmatpush2.msra.mxu0 0.0
        %2103 = vmatprep.subr.mxu0 0.0
        %2104 = vmatpush2.msra.mxu0 0.0
        %2105 = vmatprep.subr.mxu0 0.0
        %2106 = vmatpush2.msra.mxu0 0.0
        %2107 = vmatprep.subr.mxu0 0.0
        %2108 = vmatpush2.msra.mxu0 0.0
        %2109 = vmatprep.subr.mxu0 0.0
        %2110 = vmatpush2.msra.mxu0 0.0
        %2111 = vmatprep.subr.mxu0 0.0
        %2112 = vmatpush2.msra.mxu0 0.0
        %2113 = vmatprep.subr.mxu0 0.0
        %2114 = vmatpush2.msra.mxu0 0.0
        %2115 = vmatprep.subr.mxu0 0.0
        %2116 = vmatpush2.msra.mxu0 0.0
        %2117 = vmatprep.subr.mxu0 0.0
        %2118 = vmatpush2.msra.mxu0 0.0
        %2119 = vmatprep.subr.mxu0 0.0
        %2120 = vmatpush2.msra.mxu0 0.0
        %2121 = vmatprep.subr.mxu0 0.0
        %2122 = vmatpush2.msra.mxu0 0.0
        %2123 = vmatprep.subr.mxu0 0.0
        %2124 = vmatpush2.msra.mxu0 0.0
        %2125 = vmatprep.subr.mxu0 0.0
        %2126 = vmatpush2.msra.mxu0 0.0
        %2127 = vmatprep.subr.mxu0 0.0
        %2128 = vmatpush2.msra.mxu0 0.0
        %2129 = vmatprep.subr.mxu0 0.0
        %2130 = vmatpush2.msra.mxu0 0.0
        %2131 = vmatprep.subr.mxu0 0.0
        %2132 = vmatpush2.msra.mxu0 0.0
        %2133 = vmatprep.mubr.f32.mxu0 0.0
        %2134 = vmatmul.mubr.f32.gmra.mxu0 %v2061
        %v2135 = vpop.f32.mrf.mxu0
        %v2136 = vadd.f32 0.0, %v2135
        %v2137 = vpop.f32.mrf.mxu0
        %v2138 = vadd.f32 0.0, %v2137
        %2139 = vdwg.mxu0
        %2140 = vmatprep.subr.mxu0 0.0
        %2141 = vmatpush1.msra.mxu0 0.0
        %2142 = vmatprep.subr.mxu0 0.0
        %2143 = vmatpush1.msra.mxu0 0.0
        %2144 = vmatprep.subr.mxu0 0.0
        %2145 = vmatpush1.msra.mxu0 0.0
        %2146 = vmatprep.subr.mxu0 0.0
        %2147 = vmatpush1.msra.mxu0 0.0
        %2148 = vmatprep.subr.mxu0 0.0
        %2149 = vmatpush1.msra.mxu0 0.0
        %2150 = vmatprep.subr.mxu0 0.0
        %2151 = vmatpush1.msra.mxu0 0.0
        %2152 = vmatprep.subr.mxu0 0.0
        %2153 = vmatpush1.msra.mxu0 0.0
        %2154 = vmatprep.subr.mxu0 0.0
        %2155 = vmatpush1.msra.mxu0 0.0
        %2156 = vmatprep.subr.mxu0 0.0
        %2157 = vmatpush1.msra.mxu0 0.0
        %2158 = vmatprep.subr.mxu0 0.0
        %2159 = vmatpush1.msra.mxu0 0.0
        %2160 = vmatprep.subr.mxu0 0.0
        %2161 = vmatpush1.msra.mxu0 0.0
        %2162 = vmatprep.subr.mxu0 0.0
        %2163 = vmatpush1.msra.mxu0 0.0
        %2164 = vmatprep.subr.mxu0 0.0
        %2165 = vmatpush1.msra.mxu0 0.0
        %2166 = vmatprep.subr.mxu0 0.0
        %2167 = vmatpush1.msra.mxu0 0.0
        %2168 = vmatprep.subr.mxu0 0.0
        %2169 = vmatpush1.msra.mxu0 0.0
        %2170 = vmatprep.subr.mxu0 0.0
        %2171 = vmatpush1.msra.mxu0 %v2067
        %2172 = vmatprep.subr.mxu0 0.0
        %2173 = vmatpush2.msra.mxu0 0.0
        %2174 = vmatprep.subr.mxu0 0.0
        %2175 = vmatpush2.msra.mxu0 0.0
        %2176 = vmatprep.subr.mxu0 0.0
        %2177 = vmatpush2.msra.mxu0 0.0
        %2178 = vmatprep.subr.mxu0 0.0
        %2179 = vmatpush2.msra.mxu0 0.0
        %2180 = vmatprep.subr.mxu0 0.0
        %2181 = vmatpush2.msra.mxu0 0.0
        %2182 = vmatprep.subr.mxu0 0.0
        %2183 = vmatpush2.msra.mxu0 0.0
        %2184 = vmatprep.subr.mxu0 0.0
        %2185 = vmatpush2.msra.mxu0 0.0
        %2186 = vmatprep.subr.mxu0 0.0
        %2187 = vmatpush2.msra.mxu0 0.0
        %2188 = vmatprep.subr.mxu0 0.0
        %2189 = vmatpush2.msra.mxu0 0.0
        %2190 = vmatprep.subr.mxu0 0.0
        %2191 = vmatpush2.msra.mxu0 0.0
        %2192 = vmatprep.subr.mxu0 0.0
        %2193 = vmatpush2.msra.mxu0 0.0
        %2194 = vmatprep.subr.mxu0 0.0
        %2195 = vmatpush2.msra.mxu0 0.0
        %2196 = vmatprep.subr.mxu0 0.0
        %2197 = vmatpush2.msra.mxu0 0.0
        %2198 = vmatprep.subr.mxu0 0.0
        %2199 = vmatpush2.msra.mxu0 0.0
        %2200 = vmatprep.subr.mxu0 0.0
        %2201 = vmatpush2.msra.mxu0 0.0
        %2202 = vmatprep.subr.mxu0 0.0
        %2203 = vmatpush2.msra.mxu0 0.0
        %2204 = vmatprep.mubr.f32.mxu0 0.0
        %2205 = vmatmul.mubr.f32.gmra.mxu0 %v2061
        %v2206 = vpop.f32.mrf.mxu0
        %v2207 = vadd.f32 0.0, %v2206
        %v2208 = vpop.f32.mrf.mxu0
        %2209 = vdwg.mxu0
        %2210 = vrot.lane.b32.xlu0 %v2040, 19
        %v2211 = vpop.permute.xlu0 %2210
        %2212 = vrot.lane.b32.xlu0 %v2047, 19
        %v2213 = vpop.permute.xlu0 %2212
        %2214 = vrot.lane.b32.xlu0 %v2041, 19
        %v2215 = vpop.permute.xlu0 %2214
        %2216 = vrot.lane.b32.xlu0 %v2048, 19
        %v2217 = vpop.permute.xlu0 %2216
        %v2218 = vsel %vm674, %v2211, %v2213
        %v2219 = vsel %vm674, %v2213, %v2215
        %v2220 = vsel %vm674, %v2215, %v2217
        %v2222 = vsel %vm514, %v2042, 0
        %v2224 = vsel %vm518, %v2218, 0
        %v2226 = vsel %vm518, %v2219, 0
        %v2228 = vsel %vm518, %v2220, 0
        %2230 = vmatprep.subr.mxu0 0.0
        %2231 = vmatpush1.msra.mxu0 0.0
        %2232 = vmatprep.subr.mxu0 0.0
        %2233 = vmatpush1.msra.mxu0 0.0
        %2234 = vmatprep.subr.mxu0 0.0
        %2235 = vmatpush1.msra.mxu0 0.0
        %2236 = vmatprep.subr.mxu0 0.0
        %2237 = vmatpush1.msra.mxu0 0.0
        %2238 = vmatprep.subr.mxu0 0.0
        %2239 = vmatpush1.msra.mxu0 0.0
        %2240 = vmatprep.subr.mxu0 0.0
        %2241 = vmatpush1.msra.mxu0 0.0
        %2242 = vmatprep.subr.mxu0 0.0
        %2243 = vmatpush1.msra.mxu0 0.0
        %2244 = vmatprep.subr.mxu0 0.0
        %2245 = vmatpush1.msra.mxu0 0.0
        %2246 = vmatprep.subr.mxu0 0.0
        %2247 = vmatpush1.msra.mxu0 0.0
        %2248 = vmatprep.subr.mxu0 0.0
        %2249 = vmatpush1.msra.mxu0 0.0
        %2250 = vmatprep.subr.mxu0 0.0
        %2251 = vmatpush1.msra.mxu0 0.0
        %2252 = vmatprep.subr.mxu0 0.0
        %2253 = vmatpush1.msra.mxu0 0.0
        %2254 = vmatprep.subr.mxu0 0.0
        %2255 = vmatpush1.msra.mxu0 0.0
        %2256 = vmatprep.subr.mxu0 0.0
        %2257 = vmatpush1.msra.mxu0 0.0
        %2258 = vmatprep.subr.mxu0 0.0
        %2259 = vmatpush1.msra.mxu0 0.0
        %2260 = vmatprep.subr.mxu0 %v2226
        %2261 = vmatpush1.msra.mxu0 %v2224
        %2262 = vmatprep.subr.mxu0 0.0
        %2263 = vmatpush2.msra.mxu0 0.0
        %2264 = vmatprep.subr.mxu0 0.0
        %2265 = vmatpush2.msra.mxu0 0.0
        %2266 = vmatprep.subr.mxu0 0.0
        %2267 = vmatpush2.msra.mxu0 0.0
        %2268 = vmatprep.subr.mxu0 0.0
        %2269 = vmatpush2.msra.mxu0 0.0
        %2270 = vmatprep.subr.mxu0 0.0
        %2271 = vmatpush2.msra.mxu0 0.0
        %2272 = vmatprep.subr.mxu0 0.0
        %2273 = vmatpush2.msra.mxu0 0.0
        %2274 = vmatprep.subr.mxu0 0.0
        %2275 = vmatpush2.msra.mxu0 0.0
        %2276 = vmatprep.subr.mxu0 0.0
        %2277 = vmatpush2.msra.mxu0 0.0
        %2278 = vmatprep.subr.mxu0 0.0
        %2279 = vmatpush2.msra.mxu0 0.0
        %2280 = vmatprep.subr.mxu0 0.0
        %2281 = vmatpush2.msra.mxu0 0.0
        %2282 = vmatprep.subr.mxu0 0.0
        %2283 = vmatpush2.msra.mxu0 0.0
        %2284 = vmatprep.subr.mxu0 0.0
        %2285 = vmatpush2.msra.mxu0 0.0
        %2286 = vmatprep.subr.mxu0 0.0
        %2287 = vmatpush2.msra.mxu0 0.0
        %2288 = vmatprep.subr.mxu0 0.0
        %2289 = vmatpush2.msra.mxu0 0.0
        %2290 = vmatprep.subr.mxu0 0.0
        %2291 = vmatpush2.msra.mxu0 0.0
        %2292 = vmatprep.subr.mxu0 0.0
        %2293 = vmatpush2.msra.mxu0 0.0
        %2294 = vmatprep.mubr.f32.mxu0 0.0
        %2295 = vmatmul.mubr.f32.gmra.mxu0 %v2222
        %v2296 = vpop.f32.mrf.mxu0
        %v2297 = vadd.f32 %v2136, %v2296
        %v2298 = vpop.f32.mrf.mxu0
        %v2299 = vadd.f32 %v2138, %v2298
        %2300 = vdwg.mxu0
        %2301 = vmatprep.subr.mxu0 0.0
        %2302 = vmatpush1.msra.mxu0 0.0
        %2303 = vmatprep.subr.mxu0 0.0
        %2304 = vmatpush1.msra.mxu0 0.0
        %2305 = vmatprep.subr.mxu0 0.0
        %2306 = vmatpush1.msra.mxu0 0.0
        %2307 = vmatprep.subr.mxu0 0.0
        %2308 = vmatpush1.msra.mxu0 0.0
        %2309 = vmatprep.subr.mxu0 0.0
        %2310 = vmatpush1.msra.mxu0 0.0
        %2311 = vmatprep.subr.mxu0 0.0
        %2312 = vmatpush1.msra.mxu0 0.0
        %2313 = vmatprep.subr.mxu0 0.0
        %2314 = vmatpush1.msra.mxu0 0.0
        %2315 = vmatprep.subr.mxu0 0.0
        %2316 = vmatpush1.msra.mxu0 0.0
        %2317 = vmatprep.subr.mxu0 0.0
        %2318 = vmatpush1.msra.mxu0 0.0
        %2319 = vmatprep.subr.mxu0 0.0
        %2320 = vmatpush1.msra.mxu0 0.0
        %2321 = vmatprep.subr.mxu0 0.0
        %2322 = vmatpush1.msra.mxu0 0.0
        %2323 = vmatprep.subr.mxu0 0.0
        %2324 = vmatpush1.msra.mxu0 0.0
        %2325 = vmatprep.subr.mxu0 0.0
        %2326 = vmatpush1.msra.mxu0 0.0
        %2327 = vmatprep.subr.mxu0 0.0
        %2328 = vmatpush1.msra.mxu0 0.0
        %2329 = vmatprep.subr.mxu0 0.0
        %2330 = vmatpush1.msra.mxu0 0.0
        %2331 = vmatprep.subr.mxu0 0.0
        %2332 = vmatpush1.msra.mxu0 %v2228
        %2333 = vmatprep.subr.mxu0 0.0
        %2334 = vmatpush2.msra.mxu0 0.0
        %2335 = vmatprep.subr.mxu0 0.0
        %2336 = vmatpush2.msra.mxu0 0.0
        %2337 = vmatprep.subr.mxu0 0.0
        %2338 = vmatpush2.msra.mxu0 0.0
        %2339 = vmatprep.subr.mxu0 0.0
        %2340 = vmatpush2.msra.mxu0 0.0
        %2341 = vmatprep.subr.mxu0 0.0
        %2342 = vmatpush2.msra.mxu0 0.0
        %2343 = vmatprep.subr.mxu0 0.0
        %2344 = vmatpush2.msra.mxu0 0.0
        %2345 = vmatprep.subr.mxu0 0.0
        %2346 = vmatpush2.msra.mxu0 0.0
        %2347 = vmatprep.subr.mxu0 0.0
        %2348 = vmatpush2.msra.mxu0 0.0
        %2349 = vmatprep.subr.mxu0 0.0
        %2350 = vmatpush2.msra.mxu0 0.0
        %2351 = vmatprep.subr.mxu0 0.0
        %2352 = vmatpush2.msra.mxu0 0.0
        %2353 = vmatprep.subr.mxu0 0.0
        %2354 = vmatpush2.msra.mxu0 0.0
        %2355 = vmatprep.subr.mxu0 0.0
        %2356 = vmatpush2.msra.mxu0 0.0
        %2357 = vmatprep.subr.mxu0 0.0
        %2358 = vmatpush2.msra.mxu0 0.0
        %2359 = vmatprep.subr.mxu0 0.0
        %2360 = vmatpush2.msra.mxu0 0.0
        %2361 = vmatprep.subr.mxu0 0.0
        %2362 = vmatpush2.msra.mxu0 0.0
        %2363 = vmatprep.subr.mxu0 0.0
        %2364 = vmatpush2.msra.mxu0 0.0
        %2365 = vmatprep.mubr.f32.mxu0 0.0
        %2366 = vmatmul.mubr.f32.gmra.mxu0 %v2222
        %v2367 = vpop.f32.mrf.mxu0
        %v2368 = vadd.f32 %v2207, %v2367
        %v2369 = vpop.f32.mrf.mxu0
        %2370 = vdwg.mxu0
        %v2371 = vld [vmem:[#allocation2] sm:$0xff]
        %v2372 = vld [vmem:[#allocation2 + $0x8] sm:$0xff]
        %s2373 = scalar_lea.vmem %s4, 8
        %v2374 = vld [vmem:[%s2373] sm:$0xf]
        %v2377 = vcombine.high %v2371, %v2371
        %v2378 = vcombine.high %v2372, %v2372
        %2379 = vrot.lane.b32.xlu0 %v2371, 17
        %v2380 = vpop.permute.xlu0 %2379
        %2381 = vrot.lane.b32.xlu0 %v2377, 17
        %v2382 = vpop.permute.xlu0 %2381
        %2383 = vrot.lane.b32.xlu0 %v2372, 17
        %v2384 = vpop.permute.xlu0 %2383
        %2385 = vrot.lane.b32.xlu0 %v2378, 17
        %v2386 = vpop.permute.xlu0 %2385
        %v2387 = vsel %vm844, %v2380, %v2382
        %v2388 = vsel %vm844, %v2382, %v2384
        %v2389 = vsel %vm844, %v2384, %v2386
        %v2391 = vsel %vm514, %v2374, 0
        %v2393 = vsel %vm518, %v2387, 0
        %v2395 = vsel %vm518, %v2388, 0
        %v2397 = vsel %vm518, %v2389, 0
        %2399 = vmatprep.subr.mxu0 0.0
        %2400 = vmatpush1.msra.mxu0 0.0
        %2401 = vmatprep.subr.mxu0 0.0
        %2402 = vmatpush1.msra.mxu0 0.0
        %2403 = vmatprep.subr.mxu0 0.0
        %2404 = vmatpush1.msra.mxu0 0.0
        %2405 = vmatprep.subr.mxu0 0.0
        %2406 = vmatpush1.msra.mxu0 0.0
        %2407 = vmatprep.subr.mxu0 0.0
        %2408 = vmatpush1.msra.mxu0 0.0
        %2409 = vmatprep.subr.mxu0 0.0
        %2410 = vmatpush1.msra.mxu0 0.0
        %2411 = vmatprep.subr.mxu0 0.0
        %2412 = vmatpush1.msra.mxu0 0.0
        %2413 = vmatprep.subr.mxu0 0.0
        %2414 = vmatpush1.msra.mxu0 0.0
        %2415 = vmatprep.subr.mxu0 0.0
        %2416 = vmatpush1.msra.mxu0 0.0
        %2417 = vmatprep.subr.mxu0 0.0
        %2418 = vmatpush1.msra.mxu0 0.0
        %2419 = vmatprep.subr.mxu0 0.0
        %2420 = vmatpush1.msra.mxu0 0.0
        %2421 = vmatprep.subr.mxu0 0.0
        %2422 = vmatpush1.msra.mxu0 0.0
        %2423 = vmatprep.subr.mxu0 0.0
        %2424 = vmatpush1.msra.mxu0 0.0
        %2425 = vmatprep.subr.mxu0 0.0
        %2426 = vmatpush1.msra.mxu0 0.0
        %2427 = vmatprep.subr.mxu0 0.0
        %2428 = vmatpush1.msra.mxu0 0.0
        %2429 = vmatprep.subr.mxu0 %v2395
        %2430 = vmatpush1.msra.mxu0 %v2393
        %2431 = vmatprep.subr.mxu0 0.0
        %2432 = vmatpush2.msra.mxu0 0.0
        %2433 = vmatprep.subr.mxu0 0.0
        %2434 = vmatpush2.msra.mxu0 0.0
        %2435 = vmatprep.subr.mxu0 0.0
        %2436 = vmatpush2.msra.mxu0 0.0
        %2437 = vmatprep.subr.mxu0 0.0
        %2438 = vmatpush2.msra.mxu0 0.0
        %2439 = vmatprep.subr.mxu0 0.0
        %2440 = vmatpush2.msra.mxu0 0.0
        %2441 = vmatprep.subr.mxu0 0.0
        %2442 = vmatpush2.msra.mxu0 0.0
        %2443 = vmatprep.subr.mxu0 0.0
        %2444 = vmatpush2.msra.mxu0 0.0
        %2445 = vmatprep.subr.mxu0 0.0
        %2446 = vmatpush2.msra.mxu0 0.0
        %2447 = vmatprep.subr.mxu0 0.0
        %2448 = vmatpush2.msra.mxu0 0.0
        %2449 = vmatprep.subr.mxu0 0.0
        %2450 = vmatpush2.msra.mxu0 0.0
        %2451 = vmatprep.subr.mxu0 0.0
        %2452 = vmatpush2.msra.mxu0 0.0
        %2453 = vmatprep.subr.mxu0 0.0
        %2454 = vmatpush2.msra.mxu0 0.0
        %2455 = vmatprep.subr.mxu0 0.0
        %2456 = vmatpush2.msra.mxu0 0.0
        %2457 = vmatprep.subr.mxu0 0.0
        %2458 = vmatpush2.msra.mxu0 0.0
        %2459 = vmatprep.subr.mxu0 0.0
        %2460 = vmatpush2.msra.mxu0 0.0
        %2461 = vmatprep.subr.mxu0 0.0
        %2462 = vmatpush2.msra.mxu0 0.0
        %2463 = vmatprep.mubr.f32.mxu0 0.0
        %2464 = vmatmul.mubr.f32.gmra.mxu0 %v2391
        %v2465 = vpop.f32.mrf.mxu0
        %v2466 = vadd.f32 0.0, %v2465
        %v2467 = vpop.f32.mrf.mxu0
        %v2468 = vadd.f32 0.0, %v2467
        %2469 = vdwg.mxu0
        %2470 = vmatprep.subr.mxu0 0.0
        %2471 = vmatpush1.msra.mxu0 0.0
        %2472 = vmatprep.subr.mxu0 0.0
        %2473 = vmatpush1.msra.mxu0 0.0
        %2474 = vmatprep.subr.mxu0 0.0
        %2475 = vmatpush1.msra.mxu0 0.0
        %2476 = vmatprep.subr.mxu0 0.0
        %2477 = vmatpush1.msra.mxu0 0.0
        %2478 = vmatprep.subr.mxu0 0.0
        %2479 = vmatpush1.msra.mxu0 0.0
        %2480 = vmatprep.subr.mxu0 0.0
        %2481 = vmatpush1.msra.mxu0 0.0
        %2482 = vmatprep.subr.mxu0 0.0
        %2483 = vmatpush1.msra.mxu0 0.0
        %2484 = vmatprep.subr.mxu0 0.0
        %2485 = vmatpush1.msra.mxu0 0.0
        %2486 = vmatprep.subr.mxu0 0.0
        %2487 = vmatpush1.msra.mxu0 0.0
        %2488 = vmatprep.subr.mxu0 0.0
        %2489 = vmatpush1.msra.mxu0 0.0
        %2490 = vmatprep.subr.mxu0 0.0
        %2491 = vmatpush1.msra.mxu0 0.0
        %2492 = vmatprep.subr.mxu0 0.0
        %2493 = vmatpush1.msra.mxu0 0.0
        %2494 = vmatprep.subr.mxu0 0.0
        %2495 = vmatpush1.msra.mxu0 0.0
        %2496 = vmatprep.subr.mxu0 0.0
        %2497 = vmatpush1.msra.mxu0 0.0
        %2498 = vmatprep.subr.mxu0 0.0
        %2499 = vmatpush1.msra.mxu0 0.0
        %2500 = vmatprep.subr.mxu0 0.0
        %2501 = vmatpush1.msra.mxu0 %v2397
        %2502 = vmatprep.subr.mxu0 0.0
        %2503 = vmatpush2.msra.mxu0 0.0
        %2504 = vmatprep.subr.mxu0 0.0
        %2505 = vmatpush2.msra.mxu0 0.0
        %2506 = vmatprep.subr.mxu0 0.0
        %2507 = vmatpush2.msra.mxu0 0.0
        %2508 = vmatprep.subr.mxu0 0.0
        %2509 = vmatpush2.msra.mxu0 0.0
        %2510 = vmatprep.subr.mxu0 0.0
        %2511 = vmatpush2.msra.mxu0 0.0
        %2512 = vmatprep.subr.mxu0 0.0
        %2513 = vmatpush2.msra.mxu0 0.0
        %2514 = vmatprep.subr.mxu0 0.0
        %2515 = vmatpush2.msra.mxu0 0.0
        %2516 = vmatprep.subr.mxu0 0.0
        %2517 = vmatpush2.msra.mxu0 0.0
        %2518 = vmatprep.subr.mxu0 0.0
        %2519 = vmatpush2.msra.mxu0 0.0
        %2520 = vmatprep.subr.mxu0 0.0
        %2521 = vmatpush2.msra.mxu0 0.0
        %2522 = vmatprep.subr.mxu0 0.0
        %2523 = vmatpush2.msra.mxu0 0.0
        %2524 = vmatprep.subr.mxu0 0.0
        %2525 = vmatpush2.msra.mxu0 0.0
        %2526 = vmatprep.subr.mxu0 0.0
        %2527 = vmatpush2.msra.mxu0 0.0
        %2528 = vmatprep.subr.mxu0 0.0
        %2529 = vmatpush2.msra.mxu0 0.0
        %2530 = vmatprep.subr.mxu0 0.0
        %2531 = vmatpush2.msra.mxu0 0.0
        %2532 = vmatprep.subr.mxu0 0.0
        %2533 = vmatpush2.msra.mxu0 0.0
        %2534 = vmatprep.mubr.f32.mxu0 0.0
        %2535 = vmatmul.mubr.f32.gmra.mxu0 %v2391
        %v2536 = vpop.f32.mrf.mxu0
        %v2537 = vadd.f32 0.0, %v2536
        %v2538 = vpop.f32.mrf.mxu0
        %2539 = vdwg.mxu0
        %v2540 = vadd.f32 %v2297, %v2466
        %v2541 = vadd.f32 %v2299, %v2468
        %v2542 = vadd.f32 %v2368, %v2537
        %v2543 = vld [vmem:[#allocation2] sm:$0xff]
        %v2544 = vld [vmem:[#allocation2 + $0x8] sm:$0xff]
        %s2545 = scalar_lea.vmem %s4, 12
        %v2546 = vld [vmem:[%s2545] sm:$0xf]
        %v2549 = vcombine.high %v2543, %v2543
        %v2550 = vcombine.high %v2544, %v2544
        %2551 = vrot.lane.b32.xlu0 %v2543, 1
        %v2552 = vpop.permute.xlu0 %2551
        %2553 = vrot.lane.b32.xlu0 %v2549, 1
        %v2554 = vpop.permute.xlu0 %2553
        %2555 = vrot.lane.b32.xlu0 %v2544, 1
        %v2556 = vpop.permute.xlu0 %2555
        %2557 = vrot.lane.b32.xlu0 %v2550, 1
        %v2558 = vpop.permute.xlu0 %2557
        %v2559 = vsel %vm1017, %v2552, %v2554
        %v2560 = vsel %vm1017, %v2554, %v2556
        %v2561 = vsel %vm1017, %v2556, %v2558
        %v2563 = vsel %vm514, %v2546, 0
        %v2565 = vsel %vm518, %v2559, 0
        %v2567 = vsel %vm518, %v2560, 0
        %v2569 = vsel %vm518, %v2561, 0
        %2571 = vmatprep.subr.mxu0 0.0
        %2572 = vmatpush1.msra.mxu0 0.0
        %2573 = vmatprep.subr.mxu0 0.0
        %2574 = vmatpush1.msra.mxu0 0.0
        %2575 = vmatprep.subr.mxu0 0.0
        %2576 = vmatpush1.msra.mxu0 0.0
        %2577 = vmatprep.subr.mxu0 0.0
        %2578 = vmatpush1.msra.mxu0 0.0
        %2579 = vmatprep.subr.mxu0 0.0
        %2580 = vmatpush1.msra.mxu0 0.0
        %2581 = vmatprep.subr.mxu0 0.0
        %2582 = vmatpush1.msra.mxu0 0.0
        %2583 = vmatprep.subr.mxu0 0.0
        %2584 = vmatpush1.msra.mxu0 0.0
        %2585 = vmatprep.subr.mxu0 0.0
        %2586 = vmatpush1.msra.mxu0 0.0
        %2587 = vmatprep.subr.mxu0 0.0
        %2588 = vmatpush1.msra.mxu0 0.0
        %2589 = vmatprep.subr.mxu0 0.0
        %2590 = vmatpush1.msra.mxu0 0.0
        %2591 = vmatprep.subr.mxu0 0.0
        %2592 = vmatpush1.msra.mxu0 0.0
        %2593 = vmatprep.subr.mxu0 0.0
        %2594 = vmatpush1.msra.mxu0 0.0
        %2595 = vmatprep.subr.mxu0 0.0
        %2596 = vmatpush1.msra.mxu0 0.0
        %2597 = vmatprep.subr.mxu0 0.0
        %2598 = vmatpush1.msra.mxu0 0.0
        %2599 = vmatprep.subr.mxu0 0.0
        %2600 = vmatpush1.msra.mxu0 0.0
        %2601 = vmatprep.subr.mxu0 %v2567
        %2602 = vmatpush1.msra.mxu0 %v2565
        %2603 = vmatprep.subr.mxu0 0.0
        %2604 = vmatpush2.msra.mxu0 0.0
        %2605 = vmatprep.subr.mxu0 0.0
        %2606 = vmatpush2.msra.mxu0 0.0
        %2607 = vmatprep.subr.mxu0 0.0
        %2608 = vmatpush2.msra.mxu0 0.0
        %2609 = vmatprep.subr.mxu0 0.0
        %2610 = vmatpush2.msra.mxu0 0.0
        %2611 = vmatprep.subr.mxu0 0.0
        %2612 = vmatpush2.msra.mxu0 0.0
        %2613 = vmatprep.subr.mxu0 0.0
        %2614 = vmatpush2.msra.mxu0 0.0
        %2615 = vmatprep.subr.mxu0 0.0
        %2616 = vmatpush2.msra.mxu0 0.0
        %2617 = vmatprep.subr.mxu0 0.0
        %2618 = vmatpush2.msra.mxu0 0.0
        %2619 = vmatprep.subr.mxu0 0.0
        %2620 = vmatpush2.msra.mxu0 0.0
        %2621 = vmatprep.subr.mxu0 0.0
        %2622 = vmatpush2.msra.mxu0 0.0
        %2623 = vmatprep.subr.mxu0 0.0
        %2624 = vmatpush2.msra.mxu0 0.0
        %2625 = vmatprep.subr.mxu0 0.0
        %2626 = vmatpush2.msra.mxu0 0.0
        %2627 = vmatprep.subr.mxu0 0.0
        %2628 = vmatpush2.msra.mxu0 0.0
        %2629 = vmatprep.subr.mxu0 0.0
        %2630 = vmatpush2.msra.mxu0 0.0
        %2631 = vmatprep.subr.mxu0 0.0
        %2632 = vmatpush2.msra.mxu0 0.0
        %2633 = vmatprep.subr.mxu0 0.0
        %2634 = vmatpush2.msra.mxu0 0.0
        %2635 = vmatprep.mubr.f32.mxu0 0.0
        %2636 = vmatmul.mubr.f32.gmra.mxu0 %v2563
        %v2637 = vpop.f32.mrf.mxu0
        %v2638 = vadd.f32 0.0, %v2637
        %v2639 = vpop.f32.mrf.mxu0
        %v2640 = vadd.f32 0.0, %v2639
        %2641 = vdwg.mxu0
        %2642 = vmatprep.subr.mxu0 0.0
        %2643 = vmatpush1.msra.mxu0 0.0
        %2644 = vmatprep.subr.mxu0 0.0
        %2645 = vmatpush1.msra.mxu0 0.0
        %2646 = vmatprep.subr.mxu0 0.0
        %2647 = vmatpush1.msra.mxu0 0.0
        %2648 = vmatprep.subr.mxu0 0.0
        %2649 = vmatpush1.msra.mxu0 0.0
        %2650 = vmatprep.subr.mxu0 0.0
        %2651 = vmatpush1.msra.mxu0 0.0
        %2652 = vmatprep.subr.mxu0 0.0
        %2653 = vmatpush1.msra.mxu0 0.0
        %2654 = vmatprep.subr.mxu0 0.0
        %2655 = vmatpush1.msra.mxu0 0.0
        %2656 = vmatprep.subr.mxu0 0.0
        %2657 = vmatpush1.msra.mxu0 0.0
        %2658 = vmatprep.subr.mxu0 0.0
        %2659 = vmatpush1.msra.mxu0 0.0
        %2660 = vmatprep.subr.mxu0 0.0
        %2661 = vmatpush1.msra.mxu0 0.0
        %2662 = vmatprep.subr.mxu0 0.0
        %2663 = vmatpush1.msra.mxu0 0.0
        %2664 = vmatprep.subr.mxu0 0.0
        %2665 = vmatpush1.msra.mxu0 0.0
        %2666 = vmatprep.subr.mxu0 0.0
        %2667 = vmatpush1.msra.mxu0 0.0
        %2668 = vmatprep.subr.mxu0 0.0
        %2669 = vmatpush1.msra.mxu0 0.0
        %2670 = vmatprep.subr.mxu0 0.0
        %2671 = vmatpush1.msra.mxu0 0.0
        %2672 = vmatprep.subr.mxu0 0.0
        %2673 = vmatpush1.msra.mxu0 %v2569
        %2674 = vmatprep.subr.mxu0 0.0
        %2675 = vmatpush2.msra.mxu0 0.0
        %2676 = vmatprep.subr.mxu0 0.0
        %2677 = vmatpush2.msra.mxu0 0.0
        %2678 = vmatprep.subr.mxu0 0.0
        %2679 = vmatpush2.msra.mxu0 0.0
        %2680 = vmatprep.subr.mxu0 0.0
        %2681 = vmatpush2.msra.mxu0 0.0
        %2682 = vmatprep.subr.mxu0 0.0
        %2683 = vmatpush2.msra.mxu0 0.0
        %2684 = vmatprep.subr.mxu0 0.0
        %2685 = vmatpush2.msra.mxu0 0.0
        %2686 = vmatprep.subr.mxu0 0.0
        %2687 = vmatpush2.msra.mxu0 0.0
        %2688 = vmatprep.subr.mxu0 0.0
        %2689 = vmatpush2.msra.mxu0 0.0
        %2690 = vmatprep.subr.mxu0 0.0
        %2691 = vmatpush2.msra.mxu0 0.0
        %2692 = vmatprep.subr.mxu0 0.0
        %2693 = vmatpush2.msra.mxu0 0.0
        %2694 = vmatprep.subr.mxu0 0.0
        %2695 = vmatpush2.msra.mxu0 0.0
        %2696 = vmatprep.subr.mxu0 0.0
        %2697 = vmatpush2.msra.mxu0 0.0
        %2698 = vmatprep.subr.mxu0 0.0
        %2699 = vmatpush2.msra.mxu0 0.0
        %2700 = vmatprep.subr.mxu0 0.0
        %2701 = vmatpush2.msra.mxu0 0.0
        %2702 = vmatprep.subr.mxu0 0.0
        %2703 = vmatpush2.msra.mxu0 0.0
        %2704 = vmatprep.subr.mxu0 0.0
        %2705 = vmatpush2.msra.mxu0 0.0
        %2706 = vmatprep.mubr.f32.mxu0 0.0
        %2707 = vmatmul.mubr.f32.gmra.mxu0 %v2563
        %v2708 = vpop.f32.mrf.mxu0
        %v2709 = vadd.f32 0.0, %v2708
        %v2710 = vpop.f32.mrf.mxu0
        %2711 = vdwg.mxu0
        %v2712 = vadd.f32 %v2540, %v2638
        %v2713 = vadd.f32 %v2541, %v2640
        %v2714 = vadd.f32 %v2542, %v2709
        %v2715 = vld [vmem:[#allocation2 + $0x4] sm:$0xff]
        %v2716 = vld [vmem:[#allocation2 + $0xc] sm:$0xf]
        %s2717 = scalar_lea.vmem %s4, 16
        %v2718 = vld [vmem:[%s2717] sm:$0xf]
        %v2721 = vcombine.high %v2715, %v2715
        %v2723 = vsel %vm514, %v2718, 0
        %v2725 = vsel %vm518, %v2715, 0
        %v2727 = vsel %vm518, %v2721, 0
        %v2729 = vsel %vm518, %v2716, 0
        %2731 = vmatprep.subr.mxu0 0.0
        %2732 = vmatpush1.msra.mxu0 0.0
        %2733 = vmatprep.subr.mxu0 0.0
        %2734 = vmatpush1.msra.mxu0 0.0
        %2735 = vmatprep.subr.mxu0 0.0
        %2736 = vmatpush1.msra.mxu0 0.0
        %2737 = vmatprep.subr.mxu0 0.0
        %2738 = vmatpush1.msra.mxu0 0.0
        %2739 = vmatprep.subr.mxu0 0.0
        %2740 = vmatpush1.msra.mxu0 0.0
        %2741 = vmatprep.subr.mxu0 0.0
        %2742 = vmatpush1.msra.mxu0 0.0
        %2743 = vmatprep.subr.mxu0 0.0
        %2744 = vmatpush1.msra.mxu0 0.0
        %2745 = vmatprep.subr.mxu0 0.0
        %2746 = vmatpush1.msra.mxu0 0.0
        %2747 = vmatprep.subr.mxu0 0.0
        %2748 = vmatpush1.msra.mxu0 0.0
        %2749 = vmatprep.subr.mxu0 0.0
        %2750 = vmatpush1.msra.mxu0 0.0
        %2751 = vmatprep.subr.mxu0 0.0
        %2752 = vmatpush1.msra.mxu0 0.0
        %2753 = vmatprep.subr.mxu0 0.0
        %2754 = vmatpush1.msra.mxu0 0.0
        %2755 = vmatprep.subr.mxu0 0.0
        %2756 = vmatpush1.msra.mxu0 0.0
        %2757 = vmatprep.subr.mxu0 0.0
        %2758 = vmatpush1.msra.mxu0 0.0
        %2759 = vmatprep.subr.mxu0 0.0
        %2760 = vmatpush1.msra.mxu0 0.0
        %2761 = vmatprep.subr.mxu0 %v2727
        %2762 = vmatpush1.msra.mxu0 %v2725
        %2763 = vmatprep.subr.mxu0 0.0
        %2764 = vmatpush2.msra.mxu0 0.0
        %2765 = vmatprep.subr.mxu0 0.0
        %2766 = vmatpush2.msra.mxu0 0.0
        %2767 = vmatprep.subr.mxu0 0.0
        %2768 = vmatpush2.msra.mxu0 0.0
        %2769 = vmatprep.subr.mxu0 0.0
        %2770 = vmatpush2.msra.mxu0 0.0
        %2771 = vmatprep.subr.mxu0 0.0
        %2772 = vmatpush2.msra.mxu0 0.0
        %2773 = vmatprep.subr.mxu0 0.0
        %2774 = vmatpush2.msra.mxu0 0.0
        %2775 = vmatprep.subr.mxu0 0.0
        %2776 = vmatpush2.msra.mxu0 0.0
        %2777 = vmatprep.subr.mxu0 0.0
        %2778 = vmatpush2.msra.mxu0 0.0
        %2779 = vmatprep.subr.mxu0 0.0
        %2780 = vmatpush2.msra.mxu0 0.0
        %2781 = vmatprep.subr.mxu0 0.0
        %2782 = vmatpush2.msra.mxu0 0.0
        %2783 = vmatprep.subr.mxu0 0.0
        %2784 = vmatpush2.msra.mxu0 0.0
        %2785 = vmatprep.subr.mxu0 0.0
        %2786 = vmatpush2.msra.mxu0 0.0
        %2787 = vmatprep.subr.mxu0 0.0
        %2788 = vmatpush2.msra.mxu0 0.0
        %2789 = vmatprep.subr.mxu0 0.0
        %2790 = vmatpush2.msra.mxu0 0.0
        %2791 = vmatprep.subr.mxu0 0.0
        %2792 = vmatpush2.msra.mxu0 0.0
        %2793 = vmatprep.subr.mxu0 0.0
        %2794 = vmatpush2.msra.mxu0 0.0
        %2795 = vmatprep.mubr.f32.mxu0 0.0
        %2796 = vmatmul.mubr.f32.gmra.mxu0 %v2723
        %v2797 = vpop.f32.mrf.mxu0
        %v2798 = vadd.f32 0.0, %v2797
        %v2799 = vpop.f32.mrf.mxu0
        %v2800 = vadd.f32 0.0, %v2799
        %2801 = vdwg.mxu0
        %2802 = vmatprep.subr.mxu0 0.0
        %2803 = vmatpush1.msra.mxu0 0.0
        %2804 = vmatprep.subr.mxu0 0.0
        %2805 = vmatpush1.msra.mxu0 0.0
        %2806 = vmatprep.subr.mxu0 0.0
        %2807 = vmatpush1.msra.mxu0 0.0
        %2808 = vmatprep.subr.mxu0 0.0
        %2809 = vmatpush1.msra.mxu0 0.0
        %2810 = vmatprep.subr.mxu0 0.0
        %2811 = vmatpush1.msra.mxu0 0.0
        %2812 = vmatprep.subr.mxu0 0.0
        %2813 = vmatpush1.msra.mxu0 0.0
        %2814 = vmatprep.subr.mxu0 0.0
        %2815 = vmatpush1.msra.mxu0 0.0
        %2816 = vmatprep.subr.mxu0 0.0
        %2817 = vmatpush1.msra.mxu0 0.0
        %2818 = vmatprep.subr.mxu0 0.0
        %2819 = vmatpush1.msra.mxu0 0.0
        %2820 = vmatprep.subr.mxu0 0.0
        %2821 = vmatpush1.msra.mxu0 0.0
        %2822 = vmatprep.subr.mxu0 0.0
        %2823 = vmatpush1.msra.mxu0 0.0
        %2824 = vmatprep.subr.mxu0 0.0
        %2825 = vmatpush1.msra.mxu0 0.0
        %2826 = vmatprep.subr.mxu0 0.0
        %2827 = vmatpush1.msra.mxu0 0.0
        %2828 = vmatprep.subr.mxu0 0.0
        %2829 = vmatpush1.msra.mxu0 0.0
        %2830 = vmatprep.subr.mxu0 0.0
        %2831 = vmatpush1.msra.mxu0 0.0
        %2832 = vmatprep.subr.mxu0 0.0
        %2833 = vmatpush1.msra.mxu0 %v2729
        %2834 = vmatprep.subr.mxu0 0.0
        %2835 = vmatpush2.msra.mxu0 0.0
        %2836 = vmatprep.subr.mxu0 0.0
        %2837 = vmatpush2.msra.mxu0 0.0
        %2838 = vmatprep.subr.mxu0 0.0
        %2839 = vmatpush2.msra.mxu0 0.0
        %2840 = vmatprep.subr.mxu0 0.0
        %2841 = vmatpush2.msra.mxu0 0.0
        %2842 = vmatprep.subr.mxu0 0.0
        %2843 = vmatpush2.msra.mxu0 0.0
        %2844 = vmatprep.subr.mxu0 0.0
        %2845 = vmatpush2.msra.mxu0 0.0
        %2846 = vmatprep.subr.mxu0 0.0
        %2847 = vmatpush2.msra.mxu0 0.0
        %2848 = vmatprep.subr.mxu0 0.0
        %2849 = vmatpush2.msra.mxu0 0.0
        %2850 = vmatprep.subr.mxu0 0.0
        %2851 = vmatpush2.msra.mxu0 0.0
        %2852 = vmatprep.subr.mxu0 0.0
        %2853 = vmatpush2.msra.mxu0 0.0
        %2854 = vmatprep.subr.mxu0 0.0
        %2855 = vmatpush2.msra.mxu0 0.0
        %2856 = vmatprep.subr.mxu0 0.0
        %2857 = vmatpush2.msra.mxu0 0.0
        %2858 = vmatprep.subr.mxu0 0.0
        %2859 = vmatpush2.msra.mxu0 0.0
        %2860 = vmatprep.subr.mxu0 0.0
        %2861 = vmatpush2.msra.mxu0 0.0
        %2862 = vmatprep.subr.mxu0 0.0
        %2863 = vmatpush2.msra.mxu0 0.0
        %2864 = vmatprep.subr.mxu0 0.0
        %2865 = vmatpush2.msra.mxu0 0.0
        %2866 = vmatprep.mubr.f32.mxu0 0.0
        %2867 = vmatmul.mubr.f32.gmra.mxu0 %v2723
        %v2868 = vpop.f32.mrf.mxu0
        %v2869 = vadd.f32 0.0, %v2868
        %v2870 = vpop.f32.mrf.mxu0
        %2871 = vdwg.mxu0
        %v2872 = vadd.f32 %v2712, %v2798
        %v2873 = vadd.f32 %v2713, %v2800
        %v2874 = vadd.f32 %v2714, %v2869
        %v2875 = vld [vmem:[#allocation2 + $0x4] sm:$0xff]
        %v2876 = vld [vmem:[#allocation2 + $0xc] sm:$0xf]
        %s2877 = scalar_lea.vmem %s4, 20
        %v2878 = vld [vmem:[%s2877] sm:$0xf]
        %v2881 = vcombine.high %v2875, %v2875
        %2882 = vrot.lane.b32.xlu0 %v2875, 127
        %v2883 = vpop.permute.xlu0 %2882
        %2884 = vrot.lane.b32.xlu0 %v2881, 127
        %v2885 = vpop.permute.xlu0 %2884
        %2886 = vrot.lane.b32.xlu0 %v2876, 127
        %v2887 = vpop.permute.xlu0 %2886
        %v2888 = vsel %vm1347, %v2883, %v2885
        %v2889 = vsel %vm1347, %v2885, %v2887
        %v2891 = vsel %vm514, %v2878, 0
        %v2893 = vsel %vm518, %v2888, 0
        %v2895 = vsel %vm518, %v2889, 0
        %v2897 = vsel %vm518, %v2887, 0
        %2899 = vmatprep.subr.mxu0 0.0
        %2900 = vmatpush1.msra.mxu0 0.0
        %2901 = vmatprep.subr.mxu0 0.0
        %2902 = vmatpush1.msra.mxu0 0.0
        %2903 = vmatprep.subr.mxu0 0.0
        %2904 = vmatpush1.msra.mxu0 0.0
        %2905 = vmatprep.subr.mxu0 0.0
        %2906 = vmatpush1.msra.mxu0 0.0
        %2907 = vmatprep.subr.mxu0 0.0
        %2908 = vmatpush1.msra.mxu0 0.0
        %2909 = vmatprep.subr.mxu0 0.0
        %2910 = vmatpush1.msra.mxu0 0.0
        %2911 = vmatprep.subr.mxu0 0.0
        %2912 = vmatpush1.msra.mxu0 0.0
        %2913 = vmatprep.subr.mxu0 0.0
        %2914 = vmatpush1.msra.mxu0 0.0
        %2915 = vmatprep.subr.mxu0 0.0
        %2916 = vmatpush1.msra.mxu0 0.0
        %2917 = vmatprep.subr.mxu0 0.0
        %2918 = vmatpush1.msra.mxu0 0.0
        %2919 = vmatprep.subr.mxu0 0.0
        %2920 = vmatpush1.msra.mxu0 0.0
        %2921 = vmatprep.subr.mxu0 0.0
        %2922 = vmatpush1.msra.mxu0 0.0
        %2923 = vmatprep.subr.mxu0 0.0
        %2924 = vmatpush1.msra.mxu0 0.0
        %2925 = vmatprep.subr.mxu0 0.0
        %2926 = vmatpush1.msra.mxu0 0.0
        %2927 = vmatprep.subr.mxu0 0.0
        %2928 = vmatpush1.msra.mxu0 0.0
        %2929 = vmatprep.subr.mxu0 %v2895
        %2930 = vmatpush1.msra.mxu0 %v2893
        %2931 = vmatprep.subr.mxu0 0.0
        %2932 = vmatpush2.msra.mxu0 0.0
        %2933 = vmatprep.subr.mxu0 0.0
        %2934 = vmatpush2.msra.mxu0 0.0
        %2935 = vmatprep.subr.mxu0 0.0
        %2936 = vmatpush2.msra.mxu0 0.0
        %2937 = vmatprep.subr.mxu0 0.0
        %2938 = vmatpush2.msra.mxu0 0.0
        %2939 = vmatprep.subr.mxu0 0.0
        %2940 = vmatpush2.msra.mxu0 0.0
        %2941 = vmatprep.subr.mxu0 0.0
        %2942 = vmatpush2.msra.mxu0 0.0
        %2943 = vmatprep.subr.mxu0 0.0
        %2944 = vmatpush2.msra.mxu0 0.0
        %2945 = vmatprep.subr.mxu0 0.0
        %2946 = vmatpush2.msra.mxu0 0.0
        %2947 = vmatprep.subr.mxu0 0.0
        %2948 = vmatpush2.msra.mxu0 0.0
        %2949 = vmatprep.subr.mxu0 0.0
        %2950 = vmatpush2.msra.mxu0 0.0
        %2951 = vmatprep.subr.mxu0 0.0
        %2952 = vmatpush2.msra.mxu0 0.0
        %2953 = vmatprep.subr.mxu0 0.0
        %2954 = vmatpush2.msra.mxu0 0.0
        %2955 = vmatprep.subr.mxu0 0.0
        %2956 = vmatpush2.msra.mxu0 0.0
        %2957 = vmatprep.subr.mxu0 0.0
        %2958 = vmatpush2.msra.mxu0 0.0
        %2959 = vmatprep.subr.mxu0 0.0
        %2960 = vmatpush2.msra.mxu0 0.0
        %2961 = vmatprep.subr.mxu0 0.0
        %2962 = vmatpush2.msra.mxu0 0.0
        %2963 = vmatprep.mubr.f32.mxu0 0.0
        %2964 = vmatmul.mubr.f32.gmra.mxu0 %v2891
        %v2965 = vpop.f32.mrf.mxu0
        %v2966 = vadd.f32 0.0, %v2965
        %v2967 = vpop.f32.mrf.mxu0
        %v2968 = vadd.f32 0.0, %v2967
        %2969 = vdwg.mxu0
        %2970 = vmatprep.subr.mxu0 0.0
        %2971 = vmatpush1.msra.mxu0 0.0
        %2972 = vmatprep.subr.mxu0 0.0
        %2973 = vmatpush1.msra.mxu0 0.0
        %2974 = vmatprep.subr.mxu0 0.0
        %2975 = vmatpush1.msra.mxu0 0.0
        %2976 = vmatprep.subr.mxu0 0.0
        %2977 = vmatpush1.msra.mxu0 0.0
        %2978 = vmatprep.subr.mxu0 0.0
        %2979 = vmatpush1.msra.mxu0 0.0
        %2980 = vmatprep.subr.mxu0 0.0
        %2981 = vmatpush1.msra.mxu0 0.0
        %2982 = vmatprep.subr.mxu0 0.0
        %2983 = vmatpush1.msra.mxu0 0.0
        %2984 = vmatprep.subr.mxu0 0.0
        %2985 = vmatpush1.msra.mxu0 0.0
        %2986 = vmatprep.subr.mxu0 0.0
        %2987 = vmatpush1.msra.mxu0 0.0
        %2988 = vmatprep.subr.mxu0 0.0
        %2989 = vmatpush1.msra.mxu0 0.0
        %2990 = vmatprep.subr.mxu0 0.0
        %2991 = vmatpush1.msra.mxu0 0.0
        %2992 = vmatprep.subr.mxu0 0.0
        %2993 = vmatpush1.msra.mxu0 0.0
        %2994 = vmatprep.subr.mxu0 0.0
        %2995 = vmatpush1.msra.mxu0 0.0
        %2996 = vmatprep.subr.mxu0 0.0
        %2997 = vmatpush1.msra.mxu0 0.0
        %2998 = vmatprep.subr.mxu0 0.0
        %2999 = vmatpush1.msra.mxu0 0.0
        %3000 = vmatprep.subr.mxu0 0.0
        %3001 = vmatpush1.msra.mxu0 %v2897
        %3002 = vmatprep.subr.mxu0 0.0
        %3003 = vmatpush2.msra.mxu0 0.0
        %3004 = vmatprep.subr.mxu0 0.0
        %3005 = vmatpush2.msra.mxu0 0.0
        %3006 = vmatprep.subr.mxu0 0.0
        %3007 = vmatpush2.msra.mxu0 0.0
        %3008 = vmatprep.subr.mxu0 0.0
        %3009 = vmatpush2.msra.mxu0 0.0
        %3010 = vmatprep.subr.mxu0 0.0
        %3011 = vmatpush2.msra.mxu0 0.0
        %3012 = vmatprep.subr.mxu0 0.0
        %3013 = vmatpush2.msra.mxu0 0.0
        %3014 = vmatprep.subr.mxu0 0.0
        %3015 = vmatpush2.msra.mxu0 0.0
        %3016 = vmatprep.subr.mxu0 0.0
        %3017 = vmatpush2.msra.mxu0 0.0
        %3018 = vmatprep.subr.mxu0 0.0
        %3019 = vmatpush2.msra.mxu0 0.0
        %3020 = vmatprep.subr.mxu0 0.0
        %3021 = vmatpush2.msra.mxu0 0.0
        %3022 = vmatprep.subr.mxu0 0.0
        %3023 = vmatpush2.msra.mxu0 0.0
        %3024 = vmatprep.subr.mxu0 0.0
        %3025 = vmatpush2.msra.mxu0 0.0
        %3026 = vmatprep.subr.mxu0 0.0
        %3027 = vmatpush2.msra.mxu0 0.0
        %3028 = vmatprep.subr.mxu0 0.0
        %3029 = vmatpush2.msra.mxu0 0.0
        %3030 = vmatprep.subr.mxu0 0.0
        %3031 = vmatpush2.msra.mxu0 0.0
        %3032 = vmatprep.subr.mxu0 0.0
        %3033 = vmatpush2.msra.mxu0 0.0
        %3034 = vmatprep.mubr.f32.mxu0 0.0
        %3035 = vmatmul.mubr.f32.gmra.mxu0 %v2891
        %v3036 = vpop.f32.mrf.mxu0
        %v3037 = vadd.f32 0.0, %v3036
        %v3038 = vpop.f32.mrf.mxu0
        %3039 = vdwg.mxu0
        %v3040 = vadd.f32 %v2872, %v2966
        %v3041 = vadd.f32 %v2873, %v2968
        %v3042 = vadd.f32 %v2874, %v3037
        %v3043 = vld [vmem:[#allocation2 + $0x4] sm:$0xff]
        %v3044 = vld [vmem:[#allocation2 + $0xc] sm:$0xf]
        %s3045 = scalar_lea.vmem %s4, 24
        %v3046 = vld [vmem:[%s3045] sm:$0xf]
        %v3049 = vcombine.high %v3043, %v3043
        %3050 = vrot.lane.b32.xlu0 %v3043, 111
        %v3051 = vpop.permute.xlu0 %3050
        %3052 = vrot.lane.b32.xlu0 %v3049, 111
        %v3053 = vpop.permute.xlu0 %3052
        %3054 = vrot.lane.b32.xlu0 %v3044, 111
        %v3055 = vpop.permute.xlu0 %3054
        %v3056 = vsel %vm1516, %v3051, %v3053
        %v3057 = vsel %vm1516, %v3053, %v3055
        %v3059 = vsel %vm514, %v3046, 0
        %v3061 = vsel %vm518, %v3056, 0
        %v3063 = vsel %vm518, %v3057, 0
        %v3065 = vsel %vm518, %v3055, 0
        %3067 = vmatprep.subr.mxu0 0.0
        %3068 = vmatpush1.msra.mxu0 0.0
        %3069 = vmatprep.subr.mxu0 0.0
        %3070 = vmatpush1.msra.mxu0 0.0
        %3071 = vmatprep.subr.mxu0 0.0
        %3072 = vmatpush1.msra.mxu0 0.0
        %3073 = vmatprep.subr.mxu0 0.0
        %3074 = vmatpush1.msra.mxu0 0.0
        %3075 = vmatprep.subr.mxu0 0.0
        %3076 = vmatpush1.msra.mxu0 0.0
        %3077 = vmatprep.subr.mxu0 0.0
        %3078 = vmatpush1.msra.mxu0 0.0
        %3079 = vmatprep.subr.mxu0 0.0
        %3080 = vmatpush1.msra.mxu0 0.0
        %3081 = vmatprep.subr.mxu0 0.0
        %3082 = vmatpush1.msra.mxu0 0.0
        %3083 = vmatprep.subr.mxu0 0.0
        %3084 = vmatpush1.msra.mxu0 0.0
        %3085 = vmatprep.subr.mxu0 0.0
        %3086 = vmatpush1.msra.mxu0 0.0
        %3087 = vmatprep.subr.mxu0 0.0
        %3088 = vmatpush1.msra.mxu0 0.0
        %3089 = vmatprep.subr.mxu0 0.0
        %3090 = vmatpush1.msra.mxu0 0.0
        %3091 = vmatprep.subr.mxu0 0.0
        %3092 = vmatpush1.msra.mxu0 0.0
        %3093 = vmatprep.subr.mxu0 0.0
        %3094 = vmatpush1.msra.mxu0 0.0
        %3095 = vmatprep.subr.mxu0 0.0
        %3096 = vmatpush1.msra.mxu0 0.0
        %3097 = vmatprep.subr.mxu0 %v3063
        %3098 = vmatpush1.msra.mxu0 %v3061
        %3099 = vmatprep.subr.mxu0 0.0
        %3100 = vmatpush2.msra.mxu0 0.0
        %3101 = vmatprep.subr.mxu0 0.0
        %3102 = vmatpush2.msra.mxu0 0.0
        %3103 = vmatprep.subr.mxu0 0.0
        %3104 = vmatpush2.msra.mxu0 0.0
        %3105 = vmatprep.subr.mxu0 0.0
        %3106 = vmatpush2.msra.mxu0 0.0
        %3107 = vmatprep.subr.mxu0 0.0
        %3108 = vmatpush2.msra.mxu0 0.0
        %3109 = vmatprep.subr.mxu0 0.0
        %3110 = vmatpush2.msra.mxu0 0.0
        %3111 = vmatprep.subr.mxu0 0.0
        %3112 = vmatpush2.msra.mxu0 0.0
        %3113 = vmatprep.subr.mxu0 0.0
        %3114 = vmatpush2.msra.mxu0 0.0
        %3115 = vmatprep.subr.mxu0 0.0
        %3116 = vmatpush2.msra.mxu0 0.0
        %3117 = vmatprep.subr.mxu0 0.0
        %3118 = vmatpush2.msra.mxu0 0.0
        %3119 = vmatprep.subr.mxu0 0.0
        %3120 = vmatpush2.msra.mxu0 0.0
        %3121 = vmatprep.subr.mxu0 0.0
        %3122 = vmatpush2.msra.mxu0 0.0
        %3123 = vmatprep.subr.mxu0 0.0
        %3124 = vmatpush2.msra.mxu0 0.0
        %3125 = vmatprep.subr.mxu0 0.0
        %3126 = vmatpush2.msra.mxu0 0.0
        %3127 = vmatprep.subr.mxu0 0.0
        %3128 = vmatpush2.msra.mxu0 0.0
        %3129 = vmatprep.subr.mxu0 0.0
        %3130 = vmatpush2.msra.mxu0 0.0
        %3131 = vmatprep.mubr.f32.mxu0 0.0
        %3132 = vmatmul.mubr.f32.gmra.mxu0 %v3059
        %v3133 = vpop.f32.mrf.mxu0
        %v3134 = vadd.f32 0.0, %v3133
        %v3135 = vpop.f32.mrf.mxu0
        %v3136 = vadd.f32 0.0, %v3135
        %3137 = vdwg.mxu0
        %3138 = vmatprep.subr.mxu0 0.0
        %3139 = vmatpush1.msra.mxu0 0.0
        %3140 = vmatprep.subr.mxu0 0.0
        %3141 = vmatpush1.msra.mxu0 0.0
        %3142 = vmatprep.subr.mxu0 0.0
        %3143 = vmatpush1.msra.mxu0 0.0
        %3144 = vmatprep.subr.mxu0 0.0
        %3145 = vmatpush1.msra.mxu0 0.0
        %3146 = vmatprep.subr.mxu0 0.0
        %3147 = vmatpush1.msra.mxu0 0.0
        %3148 = vmatprep.subr.mxu0 0.0
        %3149 = vmatpush1.msra.mxu0 0.0
        %3150 = vmatprep.subr.mxu0 0.0
        %3151 = vmatpush1.msra.mxu0 0.0
        %3152 = vmatprep.subr.mxu0 0.0
        %3153 = vmatpush1.msra.mxu0 0.0
        %3154 = vmatprep.subr.mxu0 0.0
        %3155 = vmatpush1.msra.mxu0 0.0
        %3156 = vmatprep.subr.mxu0 0.0
        %3157 = vmatpush1.msra.mxu0 0.0
        %3158 = vmatprep.subr.mxu0 0.0
        %3159 = vmatpush1.msra.mxu0 0.0
        %3160 = vmatprep.subr.mxu0 0.0
        %3161 = vmatpush1.msra.mxu0 0.0
        %3162 = vmatprep.subr.mxu0 0.0
        %3163 = vmatpush1.msra.mxu0 0.0
        %3164 = vmatprep.subr.mxu0 0.0
        %3165 = vmatpush1.msra.mxu0 0.0
        %3166 = vmatprep.subr.mxu0 0.0
        %3167 = vmatpush1.msra.mxu0 0.0
        %3168 = vmatprep.subr.mxu0 0.0
        %3169 = vmatpush1.msra.mxu0 %v3065
        %3170 = vmatprep.subr.mxu0 0.0
        %3171 = vmatpush2.msra.mxu0 0.0
        %3172 = vmatprep.subr.mxu0 0.0
        %3173 = vmatpush2.msra.mxu0 0.0
        %3174 = vmatprep.subr.mxu0 0.0
        %3175 = vmatpush2.msra.mxu0 0.0
        %3176 = vmatprep.subr.mxu0 0.0
        %3177 = vmatpush2.msra.mxu0 0.0
        %3178 = vmatprep.subr.mxu0 0.0
        %3179 = vmatpush2.msra.mxu0 0.0
        %3180 = vmatprep.subr.mxu0 0.0
        %3181 = vmatpush2.msra.mxu0 0.0
        %3182 = vmatprep.subr.mxu0 0.0
        %3183 = vmatpush2.msra.mxu0 0.0
        %3184 = vmatprep.subr.mxu0 0.0
        %3185 = vmatpush2.msra.mxu0 0.0
        %3186 = vmatprep.subr.mxu0 0.0
        %3187 = vmatpush2.msra.mxu0 0.0
        %3188 = vmatprep.subr.mxu0 0.0
        %3189 = vmatpush2.msra.mxu0 0.0
        %3190 = vmatprep.subr.mxu0 0.0
        %3191 = vmatpush2.msra.mxu0 0.0
        %3192 = vmatprep.subr.mxu0 0.0
        %3193 = vmatpush2.msra.mxu0 0.0
        %3194 = vmatprep.subr.mxu0 0.0
        %3195 = vmatpush2.msra.mxu0 0.0
        %3196 = vmatprep.subr.mxu0 0.0
        %3197 = vmatpush2.msra.mxu0 0.0
        %3198 = vmatprep.subr.mxu0 0.0
        %3199 = vmatpush2.msra.mxu0 0.0
        %3200 = vmatprep.subr.mxu0 0.0
        %3201 = vmatpush2.msra.mxu0 0.0
        %3202 = vmatprep.mubr.f32.mxu0 0.0
        %3203 = vmatmul.mubr.f32.gmra.mxu0 %v3059
        %v3204 = vpop.f32.mrf.mxu0
        %v3205 = vadd.f32 0.0, %v3204
        %v3206 = vpop.f32.mrf.mxu0
        %3207 = vdwg.mxu0
        %v3208 = vadd.f32 %v3040, %v3134
        %v3209 = vadd.f32 %v3041, %v3136
        %v3210 = vadd.f32 %v3042, %v3205
        %v3211 = vld [vmem:[#allocation2 + $0x4] sm:$0xff]
        %v3212 = vld [vmem:[#allocation2 + $0xc] sm:$0xf]
        %s3213 = scalar_lea.vmem %s4, 28
        %v3214 = vld [vmem:[%s3213] sm:$0xf]
        %v3217 = vcombine.high %v3211, %v3211
        %3218 = vrot.lane.b32.xlu0 %v3211, 110
        %v3219 = vpop.permute.xlu0 %3218
        %3220 = vrot.lane.b32.xlu0 %v3217, 110
        %v3221 = vpop.permute.xlu0 %3220
        %3222 = vrot.lane.b32.xlu0 %v3212, 110
        %v3223 = vpop.permute.xlu0 %3222
        %v3224 = vsel %vm1685, %v3219, %v3221
        %v3225 = vsel %vm1685, %v3221, %v3223
        %v3227 = vsel %vm514, %v3214, 0
        %v3229 = vsel %vm518, %v3224, 0
        %v3231 = vsel %vm518, %v3225, 0
        %v3233 = vsel %vm518, %v3223, 0
        %3235 = vmatprep.subr.mxu0 0.0
        %3236 = vmatpush1.msra.mxu0 0.0
        %3237 = vmatprep.subr.mxu0 0.0
        %3238 = vmatpush1.msra.mxu0 0.0
        %3239 = vmatprep.subr.mxu0 0.0
        %3240 = vmatpush1.msra.mxu0 0.0
        %3241 = vmatprep.subr.mxu0 0.0
        %3242 = vmatpush1.msra.mxu0 0.0
        %3243 = vmatprep.subr.mxu0 0.0
        %3244 = vmatpush1.msra.mxu0 0.0
        %3245 = vmatprep.subr.mxu0 0.0
        %3246 = vmatpush1.msra.mxu0 0.0
        %3247 = vmatprep.subr.mxu0 0.0
        %3248 = vmatpush1.msra.mxu0 0.0
        %3249 = vmatprep.subr.mxu0 0.0
        %3250 = vmatpush1.msra.mxu0 0.0
        %3251 = vmatprep.subr.mxu0 0.0
        %3252 = vmatpush1.msra.mxu0 0.0
        %3253 = vmatprep.subr.mxu0 0.0
        %3254 = vmatpush1.msra.mxu0 0.0
        %3255 = vmatprep.subr.mxu0 0.0
        %3256 = vmatpush1.msra.mxu0 0.0
        %3257 = vmatprep.subr.mxu0 0.0
        %3258 = vmatpush1.msra.mxu0 0.0
        %3259 = vmatprep.subr.mxu0 0.0
        %3260 = vmatpush1.msra.mxu0 0.0
        %3261 = vmatprep.subr.mxu0 0.0
        %3262 = vmatpush1.msra.mxu0 0.0
        %3263 = vmatprep.subr.mxu0 0.0
        %3264 = vmatpush1.msra.mxu0 0.0
        %3265 = vmatprep.subr.mxu0 %v3231
        %3266 = vmatpush1.msra.mxu0 %v3229
        %3267 = vmatprep.subr.mxu0 0.0
        %3268 = vmatpush2.msra.mxu0 0.0
        %3269 = vmatprep.subr.mxu0 0.0
        %3270 = vmatpush2.msra.mxu0 0.0
        %3271 = vmatprep.subr.mxu0 0.0
        %3272 = vmatpush2.msra.mxu0 0.0
        %3273 = vmatprep.subr.mxu0 0.0
        %3274 = vmatpush2.msra.mxu0 0.0
        %3275 = vmatprep.subr.mxu0 0.0
        %3276 = vmatpush2.msra.mxu0 0.0
        %3277 = vmatprep.subr.mxu0 0.0
        %3278 = vmatpush2.msra.mxu0 0.0
        %3279 = vmatprep.subr.mxu0 0.0
        %3280 = vmatpush2.msra.mxu0 0.0
        %3281 = vmatprep.subr.mxu0 0.0
        %3282 = vmatpush2.msra.mxu0 0.0
        %3283 = vmatprep.subr.mxu0 0.0
        %3284 = vmatpush2.msra.mxu0 0.0
        %3285 = vmatprep.subr.mxu0 0.0
        %3286 = vmatpush2.msra.mxu0 0.0
        %3287 = vmatprep.subr.mxu0 0.0
        %3288 = vmatpush2.msra.mxu0 0.0
        %3289 = vmatprep.subr.mxu0 0.0
        %3290 = vmatpush2.msra.mxu0 0.0
        %3291 = vmatprep.subr.mxu0 0.0
        %3292 = vmatpush2.msra.mxu0 0.0
        %3293 = vmatprep.subr.mxu0 0.0
        %3294 = vmatpush2.msra.mxu0 0.0
        %3295 = vmatprep.subr.mxu0 0.0
        %3296 = vmatpush2.msra.mxu0 0.0
        %3297 = vmatprep.subr.mxu0 0.0
        %3298 = vmatpush2.msra.mxu0 0.0
        %3299 = vmatprep.mubr.f32.mxu0 0.0
        %3300 = vmatmul.mubr.f32.gmra.mxu0 %v3227
        %v3301 = vpop.f32.mrf.mxu0
        %v3302 = vadd.f32 0.0, %v3301
        %v3303 = vpop.f32.mrf.mxu0
        %v3304 = vadd.f32 0.0, %v3303
        %3305 = vdwg.mxu0
        %3306 = vmatprep.subr.mxu0 0.0
        %3307 = vmatpush1.msra.mxu0 0.0
        %3308 = vmatprep.subr.mxu0 0.0
        %3309 = vmatpush1.msra.mxu0 0.0
        %3310 = vmatprep.subr.mxu0 0.0
        %3311 = vmatpush1.msra.mxu0 0.0
        %3312 = vmatprep.subr.mxu0 0.0
        %3313 = vmatpush1.msra.mxu0 0.0
        %3314 = vmatprep.subr.mxu0 0.0
        %3315 = vmatpush1.msra.mxu0 0.0
        %3316 = vmatprep.subr.mxu0 0.0
        %3317 = vmatpush1.msra.mxu0 0.0
        %3318 = vmatprep.subr.mxu0 0.0
        %3319 = vmatpush1.msra.mxu0 0.0
        %3320 = vmatprep.subr.mxu0 0.0
        %3321 = vmatpush1.msra.mxu0 0.0
        %3322 = vmatprep.subr.mxu0 0.0
        %3323 = vmatpush1.msra.mxu0 0.0
        %3324 = vmatprep.subr.mxu0 0.0
        %3325 = vmatpush1.msra.mxu0 0.0
        %3326 = vmatprep.subr.mxu0 0.0
        %3327 = vmatpush1.msra.mxu0 0.0
        %3328 = vmatprep.subr.mxu0 0.0
        %3329 = vmatpush1.msra.mxu0 0.0
        %3330 = vmatprep.subr.mxu0 0.0
        %3331 = vmatpush1.msra.mxu0 0.0
        %3332 = vmatprep.subr.mxu0 0.0
        %3333 = vmatpush1.msra.mxu0 0.0
        %3334 = vmatprep.subr.mxu0 0.0
        %3335 = vmatpush1.msra.mxu0 0.0
        %3336 = vmatprep.subr.mxu0 0.0
        %3337 = vmatpush1.msra.mxu0 %v3233
        %3338 = vmatprep.subr.mxu0 0.0
        %3339 = vmatpush2.msra.mxu0 0.0
        %3340 = vmatprep.subr.mxu0 0.0
        %3341 = vmatpush2.msra.mxu0 0.0
        %3342 = vmatprep.subr.mxu0 0.0
        %3343 = vmatpush2.msra.mxu0 0.0
        %3344 = vmatprep.subr.mxu0 0.0
        %3345 = vmatpush2.msra.mxu0 0.0
        %3346 = vmatprep.subr.mxu0 0.0
        %3347 = vmatpush2.msra.mxu0 0.0
        %3348 = vmatprep.subr.mxu0 0.0
        %3349 = vmatpush2.msra.mxu0 0.0
        %3350 = vmatprep.subr.mxu0 0.0
        %3351 = vmatpush2.msra.mxu0 0.0
        %3352 = vmatprep.subr.mxu0 0.0
        %3353 = vmatpush2.msra.mxu0 0.0
        %3354 = vmatprep.subr.mxu0 0.0
        %3355 = vmatpush2.msra.mxu0 0.0
        %3356 = vmatprep.subr.mxu0 0.0
        %3357 = vmatpush2.msra.mxu0 0.0
        %3358 = vmatprep.subr.mxu0 0.0
        %3359 = vmatpush2.msra.mxu0 0.0
        %3360 = vmatprep.subr.mxu0 0.0
        %3361 = vmatpush2.msra.mxu0 0.0
        %3362 = vmatprep.subr.mxu0 0.0
        %3363 = vmatpush2.msra.mxu0 0.0
        %3364 = vmatprep.subr.mxu0 0.0
        %3365 = vmatpush2.msra.mxu0 0.0
        %3366 = vmatprep.subr.mxu0 0.0
        %3367 = vmatpush2.msra.mxu0 0.0
        %3368 = vmatprep.subr.mxu0 0.0
        %3369 = vmatpush2.msra.mxu0 0.0
        %3370 = vmatprep.mubr.f32.mxu0 0.0
        %3371 = vmatmul.mubr.f32.gmra.mxu0 %v3227
        %v3372 = vpop.f32.mrf.mxu0
        %v3373 = vadd.f32 0.0, %v3372
        %v3374 = vpop.f32.mrf.mxu0
        %3375 = vdwg.mxu0
        %v3376 = vadd.f32 %v3208, %v3302
        %v3377 = vadd.f32 %v3209, %v3304
        %v3378 = vadd.f32 %v3210, %v3373
        %v3379 = vld [vmem:[#allocation2 + $0x4] sm:$0xff]
        %v3380 = vld [vmem:[#allocation2 + $0xc] sm:$0xf]
        %s3381 = scalar_lea.vmem %s4, 32
        %v3382 = vld [vmem:[%s3381] sm:$0xf]
        %v3385 = vcombine.high %v3379, %v3379
        %3386 = vrot.lane.b32.xlu0 %v3379, 109
        %v3387 = vpop.permute.xlu0 %3386
        %3388 = vrot.lane.b32.xlu0 %v3385, 109
        %v3389 = vpop.permute.xlu0 %3388
        %3390 = vrot.lane.b32.xlu0 %v3380, 109
        %v3391 = vpop.permute.xlu0 %3390
        %v3392 = vsel %vm1854, %v3387, %v3389
        %v3393 = vsel %vm1854, %v3389, %v3391
        %v3395 = vsel %vm514, %v3382, 0
        %v3397 = vsel %vm518, %v3392, 0
        %v3399 = vsel %vm518, %v3393, 0
        %v3401 = vsel %vm518, %v3391, 0
        %3403 = vmatprep.subr.mxu0 0.0
        %3404 = vmatpush1.msra.mxu0 0.0
        %3405 = vmatprep.subr.mxu0 0.0
        %3406 = vmatpush1.msra.mxu0 0.0
        %3407 = vmatprep.subr.mxu0 0.0
        %3408 = vmatpush1.msra.mxu0 0.0
        %3409 = vmatprep.subr.mxu0 0.0
        %3410 = vmatpush1.msra.mxu0 0.0
        %3411 = vmatprep.subr.mxu0 0.0
        %3412 = vmatpush1.msra.mxu0 0.0
        %3413 = vmatprep.subr.mxu0 0.0
        %3414 = vmatpush1.msra.mxu0 0.0
        %3415 = vmatprep.subr.mxu0 0.0
        %3416 = vmatpush1.msra.mxu0 0.0
        %3417 = vmatprep.subr.mxu0 0.0
        %3418 = vmatpush1.msra.mxu0 0.0
        %3419 = vmatprep.subr.mxu0 0.0
        %3420 = vmatpush1.msra.mxu0 0.0
        %3421 = vmatprep.subr.mxu0 0.0
        %3422 = vmatpush1.msra.mxu0 0.0
        %3423 = vmatprep.subr.mxu0 0.0
        %3424 = vmatpush1.msra.mxu0 0.0
        %3425 = vmatprep.subr.mxu0 0.0
        %3426 = vmatpush1.msra.mxu0 0.0
        %3427 = vmatprep.subr.mxu0 0.0
        %3428 = vmatpush1.msra.mxu0 0.0
        %3429 = vmatprep.subr.mxu0 0.0
        %3430 = vmatpush1.msra.mxu0 0.0
        %3431 = vmatprep.subr.mxu0 0.0
        %3432 = vmatpush1.msra.mxu0 0.0
        %3433 = vmatprep.subr.mxu0 %v3399
        %3434 = vmatpush1.msra.mxu0 %v3397
        %3435 = vmatprep.subr.mxu0 0.0
        %3436 = vmatpush2.msra.mxu0 0.0
        %3437 = vmatprep.subr.mxu0 0.0
        %3438 = vmatpush2.msra.mxu0 0.0
        %3439 = vmatprep.subr.mxu0 0.0
        %3440 = vmatpush2.msra.mxu0 0.0
        %3441 = vmatprep.subr.mxu0 0.0
        %3442 = vmatpush2.msra.mxu0 0.0
        %3443 = vmatprep.subr.mxu0 0.0
        %3444 = vmatpush2.msra.mxu0 0.0
        %3445 = vmatprep.subr.mxu0 0.0
        %3446 = vmatpush2.msra.mxu0 0.0
        %3447 = vmatprep.subr.mxu0 0.0
        %3448 = vmatpush2.msra.mxu0 0.0
        %3449 = vmatprep.subr.mxu0 0.0
        %3450 = vmatpush2.msra.mxu0 0.0
        %3451 = vmatprep.subr.mxu0 0.0
        %3452 = vmatpush2.msra.mxu0 0.0
        %3453 = vmatprep.subr.mxu0 0.0
        %3454 = vmatpush2.msra.mxu0 0.0
        %3455 = vmatprep.subr.mxu0 0.0
        %3456 = vmatpush2.msra.mxu0 0.0
        %3457 = vmatprep.subr.mxu0 0.0
        %3458 = vmatpush2.msra.mxu0 0.0
        %3459 = vmatprep.subr.mxu0 0.0
        %3460 = vmatpush2.msra.mxu0 0.0
        %3461 = vmatprep.subr.mxu0 0.0
        %3462 = vmatpush2.msra.mxu0 0.0
        %3463 = vmatprep.subr.mxu0 0.0
        %3464 = vmatpush2.msra.mxu0 0.0
        %3465 = vmatprep.subr.mxu0 0.0
        %3466 = vmatpush2.msra.mxu0 0.0
        %3467 = vmatprep.mubr.f32.mxu0 0.0
        %3468 = vmatmul.mubr.f32.gmra.mxu0 %v3395
        %v3469 = vpop.f32.mrf.mxu0
        %v3470 = vadd.f32 0.0, %v3469
        %v3471 = vpop.f32.mrf.mxu0
        %v3472 = vadd.f32 0.0, %v3471
        %3473 = vdwg.mxu0
        %3474 = vmatprep.subr.mxu0 0.0
        %3475 = vmatpush1.msra.mxu0 0.0
        %3476 = vmatprep.subr.mxu0 0.0
        %3477 = vmatpush1.msra.mxu0 0.0
        %3478 = vmatprep.subr.mxu0 0.0
        %3479 = vmatpush1.msra.mxu0 0.0
        %3480 = vmatprep.subr.mxu0 0.0
        %3481 = vmatpush1.msra.mxu0 0.0
        %3482 = vmatprep.subr.mxu0 0.0
        %3483 = vmatpush1.msra.mxu0 0.0
        %3484 = vmatprep.subr.mxu0 0.0
        %3485 = vmatpush1.msra.mxu0 0.0
        %3486 = vmatprep.subr.mxu0 0.0
        %3487 = vmatpush1.msra.mxu0 0.0
        %3488 = vmatprep.subr.mxu0 0.0
        %3489 = vmatpush1.msra.mxu0 0.0
        %3490 = vmatprep.subr.mxu0 0.0
        %3491 = vmatpush1.msra.mxu0 0.0
        %3492 = vmatprep.subr.mxu0 0.0
        %3493 = vmatpush1.msra.mxu0 0.0
        %3494 = vmatprep.subr.mxu0 0.0
        %3495 = vmatpush1.msra.mxu0 0.0
        %3496 = vmatprep.subr.mxu0 0.0
        %3497 = vmatpush1.msra.mxu0 0.0
        %3498 = vmatprep.subr.mxu0 0.0
        %3499 = vmatpush1.msra.mxu0 0.0
        %3500 = vmatprep.subr.mxu0 0.0
        %3501 = vmatpush1.msra.mxu0 0.0
        %3502 = vmatprep.subr.mxu0 0.0
        %3503 = vmatpush1.msra.mxu0 0.0
        %3504 = vmatprep.subr.mxu0 0.0
        %3505 = vmatpush1.msra.mxu0 %v3401
        %3506 = vmatprep.subr.mxu0 0.0
        %3507 = vmatpush2.msra.mxu0 0.0
        %3508 = vmatprep.subr.mxu0 0.0
        %3509 = vmatpush2.msra.mxu0 0.0
        %3510 = vmatprep.subr.mxu0 0.0
        %3511 = vmatpush2.msra.mxu0 0.0
        %3512 = vmatprep.subr.mxu0 0.0
        %3513 = vmatpush2.msra.mxu0 0.0
        %3514 = vmatprep.subr.mxu0 0.0
        %3515 = vmatpush2.msra.mxu0 0.0
        %3516 = vmatprep.subr.mxu0 0.0
        %3517 = vmatpush2.msra.mxu0 0.0
        %3518 = vmatprep.subr.mxu0 0.0
        %3519 = vmatpush2.msra.mxu0 0.0
        %3520 = vmatprep.subr.mxu0 0.0
        %3521 = vmatpush2.msra.mxu0 0.0
        %3522 = vmatprep.subr.mxu0 0.0
        %3523 = vmatpush2.msra.mxu0 0.0
        %3524 = vmatprep.subr.mxu0 0.0
        %3525 = vmatpush2.msra.mxu0 0.0
        %3526 = vmatprep.subr.mxu0 0.0
        %3527 = vmatpush2.msra.mxu0 0.0
        %3528 = vmatprep.subr.mxu0 0.0
        %3529 = vmatpush2.msra.mxu0 0.0
        %3530 = vmatprep.subr.mxu0 0.0
        %3531 = vmatpush2.msra.mxu0 0.0
        %3532 = vmatprep.subr.mxu0 0.0
        %3533 = vmatpush2.msra.mxu0 0.0
        %3534 = vmatprep.subr.mxu0 0.0
        %3535 = vmatpush2.msra.mxu0 0.0
        %3536 = vmatprep.subr.mxu0 0.0
        %3537 = vmatpush2.msra.mxu0 0.0
        %3538 = vmatprep.mubr.f32.mxu0 0.0
        %3539 = vmatmul.mubr.f32.gmra.mxu0 %v3395
        %v3540 = vpop.f32.mrf.mxu0
        %v3541 = vadd.f32 0.0, %v3540
        %v3542 = vpop.f32.mrf.mxu0
        %3543 = vdwg.mxu0
        %v3544 = vadd.f32 %v3376, %v3470
        %v3545 = vadd.f32 %v3377, %v3472
        %v3546 = vadd.f32 %v3378, %v3541
        %v3548 = vcombine.high %v437, %v437
        %v3550 = vadd.f32 %v3544, %v437
        %v3551 = vadd.f32 %v3545, %v3548
        %v3552 = vadd.f32 %v3546, %v438
        %v3553 = vld [vmem:[%s10] sm:$0xf]
        %3555 = vset.pattern.permute.xlu0 0
        %3556 = vperm.xlu0 %3555, %v3553
        %v3557 = vpop.permute.xlu0 %3556
        %v3559 = vmul.f32 %v3550, %v3557
        %v3560 = vmul.f32 %v3551, %v3557
        %v3561 = vmul.f32 %v3552, %v3557
        %v3562 = vld [vmem:[%s11] sm:$0xf]
        %3564 = vset.pattern.permute.xlu0 0
        %3565 = vperm.xlu0 %3564, %v3562
        %v3566 = vpop.permute.xlu0 %3565
        %v3568 = vadd.f32 %v3559, %v3566
        %v3569 = vadd.f32 %v3560, %v3566
        %v3570 = vadd.f32 %v3561, %v3566
        %v3571 = vmax.f32 %v3568, 0.0
        %v3572 = vmax.f32 %v3569, 0.0
        %v3573 = vmax.f32 %v3570, 0.0
        %v3574 = vld [vmem:[%s5] sm:$0xf]
        %v3575 = vld [vmem:[%s6] sm:$0xf]
        %v3576 = vld [vmem:[%s7] sm:$0xf]
        %3578 = vset.pattern.permute.xlu0 0
        %3579 = vperm.xlu0 %3578, %v3575
        %v3580 = vpop.permute.xlu0 %3579
        %v3582 = vmul.f32 %v3550, %v3580
        %v3583 = vmul.f32 %v3551, %v3580
        %v3584 = vmul.f32 %v3552, %v3580
        %3586 = vset.pattern.permute.xlu0 0
        %3587 = vperm.xlu0 %3586, %v3576
        %v3588 = vpop.permute.xlu0 %3587
        %v3590 = vadd.f32 %v3582, %v3588
        %v3591 = vadd.f32 %v3583, %v3588
        %v3592 = vadd.f32 %v3584, %v3588
        %v3593 = vmax.f32 %v3590, 0.0
        %v3594 = vmax.f32 %v3591, 0.0
        %v3595 = vmax.f32 %v3592, 0.0
        %v3596 = vmul.f32 %v3593, %v475
        %v3597 = vmul.f32 %v3594, %v479
        %v3598 = vmul.f32 %v3595, %v483
        %v3601 = vcombine.low %v3596, %v3597
        %3603 = vst [vmem:[#allocation2 + $0x4] sm:$0xff] %v3601
        %3604 = vst.msk [vmem:[#allocation2 + $0xc] sm:$0xf] %vm435, %v3598
        %v3605 = vld [vmem:[#allocation2] sm:$0xff]
        %v3606 = vld [vmem:[#allocation2 + $0x8] sm:$0xff]
        %v3607 = vld [vmem:[%s3] sm:$0xf]
        %v3608 = vld [vmem:[%s496] sm:$0xf]
        %v3611 = vcombine.high %v3605, %v3605
        %v3612 = vcombine.high %v3606, %v3606
        %3613 = vrot.lane.b32.xlu0 %v3605, 18
        %v3614 = vpop.permute.xlu0 %3613
        %3615 = vrot.lane.b32.xlu0 %v3611, 18
        %v3616 = vpop.permute.xlu0 %3615
        %3617 = vrot.lane.b32.xlu0 %v3606, 18
        %v3618 = vpop.permute.xlu0 %3617
        %3619 = vrot.lane.b32.xlu0 %v3612, 18
        %v3620 = vpop.permute.xlu0 %3619
        %v3621 = vsel %vm510, %v3614, %v3616
        %v3622 = vsel %vm510, %v3616, %v3618
        %v3623 = vsel %vm510, %v3618, %v3620
        %v3625 = vsel %vm514, %v3608, 0
        %v3627 = vsel %vm518, %v3621, 0
        %v3629 = vsel %vm518, %v3622, 0
        %v3631 = vsel %vm518, %v3623, 0
        %3633 = vmatprep.subr.mxu0 0.0
        %3634 = vmatpush1.msra.mxu0 0.0
        %3635 = vmatprep.subr.mxu0 0.0
        %3636 = vmatpush1.msra.mxu0 0.0
        %3637 = vmatprep.subr.mxu0 0.0
        %3638 = vmatpush1.msra.mxu0 0.0
        %3639 = vmatprep.subr.mxu0 0.0
        %3640 = vmatpush1.msra.mxu0 0.0
        %3641 = vmatprep.subr.mxu0 0.0
        %3642 = vmatpush1.msra.mxu0 0.0
        %3643 = vmatprep.subr.mxu0 0.0
        %3644 = vmatpush1.msra.mxu0 0.0
        %3645 = vmatprep.subr.mxu0 0.0
        %3646 = vmatpush1.msra.mxu0 0.0
        %3647 = vmatprep.subr.mxu0 0.0
        %3648 = vmatpush1.msra.mxu0 0.0
        %3649 = vmatprep.subr.mxu0 0.0
        %3650 = vmatpush1.msra.mxu0 0.0
        %3651 = vmatprep.subr.mxu0 0.0
        %3652 = vmatpush1.msra.mxu0 0.0
        %3653 = vmatprep.subr.mxu0 0.0
        %3654 = vmatpush1.msra.mxu0 0.0
        %3655 = vmatprep.subr.mxu0 0.0
        %3656 = vmatpush1.msra.mxu0 0.0
        %3657 = vmatprep.subr.mxu0 0.0
        %3658 = vmatpush1.msra.mxu0 0.0
        %3659 = vmatprep.subr.mxu0 0.0
        %3660 = vmatpush1.msra.mxu0 0.0
        %3661 = vmatprep.subr.mxu0 0.0
        %3662 = vmatpush1.msra.mxu0 0.0
        %3663 = vmatprep.subr.mxu0 %v3629
        %3664 = vmatpush1.msra.mxu0 %v3627
        %3665 = vmatprep.subr.mxu0 0.0
        %3666 = vmatpush2.msra.mxu0 0.0
        %3667 = vmatprep.subr.mxu0 0.0
        %3668 = vmatpush2.msra.mxu0 0.0
        %3669 = vmatprep.subr.mxu0 0.0
        %3670 = vmatpush2.msra.mxu0 0.0
        %3671 = vmatprep.subr.mxu0 0.0
        %3672 = vmatpush2.msra.mxu0 0.0
        %3673 = vmatprep.subr.mxu0 0.0
        %3674 = vmatpush2.msra.mxu0 0.0
        %3675 = vmatprep.subr.mxu0 0.0
        %3676 = vmatpush2.msra.mxu0 0.0
        %3677 = vmatprep.subr.mxu0 0.0
        %3678 = vmatpush2.msra.mxu0 0.0
        %3679 = vmatprep.subr.mxu0 0.0
        %3680 = vmatpush2.msra.mxu0 0.0
        %3681 = vmatprep.subr.mxu0 0.0
        %3682 = vmatpush2.msra.mxu0 0.0
        %3683 = vmatprep.subr.mxu0 0.0
        %3684 = vmatpush2.msra.mxu0 0.0
        %3685 = vmatprep.subr.mxu0 0.0
        %3686 = vmatpush2.msra.mxu0 0.0
        %3687 = vmatprep.subr.mxu0 0.0
        %3688 = vmatpush2.msra.mxu0 0.0
        %3689 = vmatprep.subr.mxu0 0.0
        %3690 = vmatpush2.msra.mxu0 0.0
        %3691 = vmatprep.subr.mxu0 0.0
        %3692 = vmatpush2.msra.mxu0 0.0
        %3693 = vmatprep.subr.mxu0 0.0
        %3694 = vmatpush2.msra.mxu0 0.0
        %3695 = vmatprep.subr.mxu0 0.0
        %3696 = vmatpush2.msra.mxu0 0.0
        %3697 = vmatprep.mubr.f32.mxu0 0.0
        %3698 = vmatmul.mubr.f32.gmra.mxu0 %v3625
        %v3699 = vpop.f32.mrf.mxu0
        %v3700 = vadd.f32 0.0, %v3699
        %v3701 = vpop.f32.mrf.mxu0
        %v3702 = vadd.f32 0.0, %v3701
        %3703 = vdwg.mxu0
        %3704 = vmatprep.subr.mxu0 0.0
        %3705 = vmatpush1.msra.mxu0 0.0
        %3706 = vmatprep.subr.mxu0 0.0
        %3707 = vmatpush1.msra.mxu0 0.0
        %3708 = vmatprep.subr.mxu0 0.0
        %3709 = vmatpush1.msra.mxu0 0.0
        %3710 = vmatprep.subr.mxu0 0.0
        %3711 = vmatpush1.msra.mxu0 0.0
        %3712 = vmatprep.subr.mxu0 0.0
        %3713 = vmatpush1.msra.mxu0 0.0
        %3714 = vmatprep.subr.mxu0 0.0
        %3715 = vmatpush1.msra.mxu0 0.0
        %3716 = vmatprep.subr.mxu0 0.0
        %3717 = vmatpush1.msra.mxu0 0.0
        %3718 = vmatprep.subr.mxu0 0.0
        %3719 = vmatpush1.msra.mxu0 0.0
        %3720 = vmatprep.subr.mxu0 0.0
        %3721 = vmatpush1.msra.mxu0 0.0
        %3722 = vmatprep.subr.mxu0 0.0
        %3723 = vmatpush1.msra.mxu0 0.0
        %3724 = vmatprep.subr.mxu0 0.0
        %3725 = vmatpush1.msra.mxu0 0.0
        %3726 = vmatprep.subr.mxu0 0.0
        %3727 = vmatpush1.msra.mxu0 0.0
        %3728 = vmatprep.subr.mxu0 0.0
        %3729 = vmatpush1.msra.mxu0 0.0
        %3730 = vmatprep.subr.mxu0 0.0
        %3731 = vmatpush1.msra.mxu0 0.0
        %3732 = vmatprep.subr.mxu0 0.0
        %3733 = vmatpush1.msra.mxu0 0.0
        %3734 = vmatprep.subr.mxu0 0.0
        %3735 = vmatpush1.msra.mxu0 %v3631
        %3736 = vmatprep.subr.mxu0 0.0
        %3737 = vmatpush2.msra.mxu0 0.0
        %3738 = vmatprep.subr.mxu0 0.0
        %3739 = vmatpush2.msra.mxu0 0.0
        %3740 = vmatprep.subr.mxu0 0.0
        %3741 = vmatpush2.msra.mxu0 0.0
        %3742 = vmatprep.subr.mxu0 0.0
        %3743 = vmatpush2.msra.mxu0 0.0
        %3744 = vmatprep.subr.mxu0 0.0
        %3745 = vmatpush2.msra.mxu0 0.0
        %3746 = vmatprep.subr.mxu0 0.0
        %3747 = vmatpush2.msra.mxu0 0.0
        %3748 = vmatprep.subr.mxu0 0.0
        %3749 = vmatpush2.msra.mxu0 0.0
        %3750 = vmatprep.subr.mxu0 0.0
        %3751 = vmatpush2.msra.mxu0 0.0
        %3752 = vmatprep.subr.mxu0 0.0
        %3753 = vmatpush2.msra.mxu0 0.0
        %3754 = vmatprep.subr.mxu0 0.0
        %3755 = vmatpush2.msra.mxu0 0.0
        %3756 = vmatprep.subr.mxu0 0.0
        %3757 = vmatpush2.msra.mxu0 0.0
        %3758 = vmatprep.subr.mxu0 0.0
        %3759 = vmatpush2.msra.mxu0 0.0
        %3760 = vmatprep.subr.mxu0 0.0
        %3761 = vmatpush2.msra.mxu0 0.0
        %3762 = vmatprep.subr.mxu0 0.0
        %3763 = vmatpush2.msra.mxu0 0.0
        %3764 = vmatprep.subr.mxu0 0.0
        %3765 = vmatpush2.msra.mxu0 0.0
        %3766 = vmatprep.subr.mxu0 0.0
        %3767 = vmatpush2.msra.mxu0 0.0
        %3768 = vmatprep.mubr.f32.mxu0 0.0
        %3769 = vmatmul.mubr.f32.gmra.mxu0 %v3625
        %v3770 = vpop.f32.mrf.mxu0
        %v3771 = vadd.f32 0.0, %v3770
        %v3772 = vpop.f32.mrf.mxu0
        %3773 = vdwg.mxu0
        %3774 = vrot.lane.b32.xlu0 %v3605, 19
        %v3775 = vpop.permute.xlu0 %3774
        %3776 = vrot.lane.b32.xlu0 %v3611, 19
        %v3777 = vpop.permute.xlu0 %3776
        %3778 = vrot.lane.b32.xlu0 %v3606, 19
        %v3779 = vpop.permute.xlu0 %3778
        %3780 = vrot.lane.b32.xlu0 %v3612, 19
        %v3781 = vpop.permute.xlu0 %3780
        %v3782 = vsel %vm674, %v3775, %v3777
        %v3783 = vsel %vm674, %v3777, %v3779
        %v3784 = vsel %vm674, %v3779, %v3781
        %v3786 = vsel %vm514, %v3607, 0
        %v3788 = vsel %vm518, %v3782, 0
        %v3790 = vsel %vm518, %v3783, 0
        %v3792 = vsel %vm518, %v3784, 0
        %3794 = vmatprep.subr.mxu0 0.0
        %3795 = vmatpush1.msra.mxu0 0.0
        %3796 = vmatprep.subr.mxu0 0.0
        %3797 = vmatpush1.msra.mxu0 0.0
        %3798 = vmatprep.subr.mxu0 0.0
        %3799 = vmatpush1.msra.mxu0 0.0
        %3800 = vmatprep.subr.mxu0 0.0
        %3801 = vmatpush1.msra.mxu0 0.0
        %3802 = vmatprep.subr.mxu0 0.0
        %3803 = vmatpush1.msra.mxu0 0.0
        %3804 = vmatprep.subr.mxu0 0.0
        %3805 = vmatpush1.msra.mxu0 0.0
        %3806 = vmatprep.subr.mxu0 0.0
        %3807 = vmatpush1.msra.mxu0 0.0
        %3808 = vmatprep.subr.mxu0 0.0
        %3809 = vmatpush1.msra.mxu0 0.0
        %3810 = vmatprep.subr.mxu0 0.0
        %3811 = vmatpush1.msra.mxu0 0.0
        %3812 = vmatprep.subr.mxu0 0.0
        %3813 = vmatpush1.msra.mxu0 0.0
        %3814 = vmatprep.subr.mxu0 0.0
        %3815 = vmatpush1.msra.mxu0 0.0
        %3816 = vmatprep.subr.mxu0 0.0
        %3817 = vmatpush1.msra.mxu0 0.0
        %3818 = vmatprep.subr.mxu0 0.0
        %3819 = vmatpush1.msra.mxu0 0.0
        %3820 = vmatprep.subr.mxu0 0.0
        %3821 = vmatpush1.msra.mxu0 0.0
        %3822 = vmatprep.subr.mxu0 0.0
        %3823 = vmatpush1.msra.mxu0 0.0
        %3824 = vmatprep.subr.mxu0 %v3790
        %3825 = vmatpush1.msra.mxu0 %v3788
        %3826 = vmatprep.subr.mxu0 0.0
        %3827 = vmatpush2.msra.mxu0 0.0
        %3828 = vmatprep.subr.mxu0 0.0
        %3829 = vmatpush2.msra.mxu0 0.0
        %3830 = vmatprep.subr.mxu0 0.0
        %3831 = vmatpush2.msra.mxu0 0.0
        %3832 = vmatprep.subr.mxu0 0.0
        %3833 = vmatpush2.msra.mxu0 0.0
        %3834 = vmatprep.subr.mxu0 0.0
        %3835 = vmatpush2.msra.mxu0 0.0
        %3836 = vmatprep.subr.mxu0 0.0
        %3837 = vmatpush2.msra.mxu0 0.0
        %3838 = vmatprep.subr.mxu0 0.0
        %3839 = vmatpush2.msra.mxu0 0.0
        %3840 = vmatprep.subr.mxu0 0.0
        %3841 = vmatpush2.msra.mxu0 0.0
        %3842 = vmatprep.subr.mxu0 0.0
        %3843 = vmatpush2.msra.mxu0 0.0
        %3844 = vmatprep.subr.mxu0 0.0
        %3845 = vmatpush2.msra.mxu0 0.0
        %3846 = vmatprep.subr.mxu0 0.0
        %3847 = vmatpush2.msra.mxu0 0.0
        %3848 = vmatprep.subr.mxu0 0.0
        %3849 = vmatpush2.msra.mxu0 0.0
        %3850 = vmatprep.subr.mxu0 0.0
        %3851 = vmatpush2.msra.mxu0 0.0
        %3852 = vmatprep.subr.mxu0 0.0
        %3853 = vmatpush2.msra.mxu0 0.0
        %3854 = vmatprep.subr.mxu0 0.0
        %3855 = vmatpush2.msra.mxu0 0.0
        %3856 = vmatprep.subr.mxu0 0.0
        %3857 = vmatpush2.msra.mxu0 0.0
        %3858 = vmatprep.mubr.f32.mxu0 0.0
        %3859 = vmatmul.mubr.f32.gmra.mxu0 %v3786
        %v3860 = vpop.f32.mrf.mxu0
        %v3861 = vadd.f32 %v3700, %v3860
        %v3862 = vpop.f32.mrf.mxu0
        %v3863 = vadd.f32 %v3702, %v3862
        %3864 = vdwg.mxu0
        %3865 = vmatprep.subr.mxu0 0.0
        %3866 = vmatpush1.msra.mxu0 0.0
        %3867 = vmatprep.subr.mxu0 0.0
        %3868 = vmatpush1.msra.mxu0 0.0
        %3869 = vmatprep.subr.mxu0 0.0
        %3870 = vmatpush1.msra.mxu0 0.0
        %3871 = vmatprep.subr.mxu0 0.0
        %3872 = vmatpush1.msra.mxu0 0.0
        %3873 = vmatprep.subr.mxu0 0.0
        %3874 = vmatpush1.msra.mxu0 0.0
        %3875 = vmatprep.subr.mxu0 0.0
        %3876 = vmatpush1.msra.mxu0 0.0
        %3877 = vmatprep.subr.mxu0 0.0
        %3878 = vmatpush1.msra.mxu0 0.0
        %3879 = vmatprep.subr.mxu0 0.0
        %3880 = vmatpush1.msra.mxu0 0.0
        %3881 = vmatprep.subr.mxu0 0.0
        %3882 = vmatpush1.msra.mxu0 0.0
        %3883 = vmatprep.subr.mxu0 0.0
        %3884 = vmatpush1.msra.mxu0 0.0
        %3885 = vmatprep.subr.mxu0 0.0
        %3886 = vmatpush1.msra.mxu0 0.0
        %3887 = vmatprep.subr.mxu0 0.0
        %3888 = vmatpush1.msra.mxu0 0.0
        %3889 = vmatprep.subr.mxu0 0.0
        %3890 = vmatpush1.msra.mxu0 0.0
        %3891 = vmatprep.subr.mxu0 0.0
        %3892 = vmatpush1.msra.mxu0 0.0
        %3893 = vmatprep.subr.mxu0 0.0
        %3894 = vmatpush1.msra.mxu0 0.0
        %3895 = vmatprep.subr.mxu0 0.0
        %3896 = vmatpush1.msra.mxu0 %v3792
        %3897 = vmatprep.subr.mxu0 0.0
        %3898 = vmatpush2.msra.mxu0 0.0
        %3899 = vmatprep.subr.mxu0 0.0
        %3900 = vmatpush2.msra.mxu0 0.0
        %3901 = vmatprep.subr.mxu0 0.0
        %3902 = vmatpush2.msra.mxu0 0.0
        %3903 = vmatprep.subr.mxu0 0.0
        %3904 = vmatpush2.msra.mxu0 0.0
        %3905 = vmatprep.subr.mxu0 0.0
        %3906 = vmatpush2.msra.mxu0 0.0
        %3907 = vmatprep.subr.mxu0 0.0
        %3908 = vmatpush2.msra.mxu0 0.0
        %3909 = vmatprep.subr.mxu0 0.0
        %3910 = vmatpush2.msra.mxu0 0.0
        %3911 = vmatprep.subr.mxu0 0.0
        %3912 = vmatpush2.msra.mxu0 0.0
        %3913 = vmatprep.subr.mxu0 0.0
        %3914 = vmatpush2.msra.mxu0 0.0
        %3915 = vmatprep.subr.mxu0 0.0
        %3916 = vmatpush2.msra.mxu0 0.0
        %3917 = vmatprep.subr.mxu0 0.0
        %3918 = vmatpush2.msra.mxu0 0.0
        %3919 = vmatprep.subr.mxu0 0.0
        %3920 = vmatpush2.msra.mxu0 0.0
        %3921 = vmatprep.subr.mxu0 0.0
        %3922 = vmatpush2.msra.mxu0 0.0
        %3923 = vmatprep.subr.mxu0 0.0
        %3924 = vmatpush2.msra.mxu0 0.0
        %3925 = vmatprep.subr.mxu0 0.0
        %3926 = vmatpush2.msra.mxu0 0.0
        %3927 = vmatprep.subr.mxu0 0.0
        %3928 = vmatpush2.msra.mxu0 0.0
        %3929 = vmatprep.mubr.f32.mxu0 0.0
        %3930 = vmatmul.mubr.f32.gmra.mxu0 %v3786
        %v3931 = vpop.f32.mrf.mxu0
        %v3932 = vadd.f32 %v3771, %v3931
        %v3933 = vpop.f32.mrf.mxu0
        %3934 = vdwg.mxu0
        %v3935 = vld [vmem:[#allocation2] sm:$0xff]
        %v3936 = vld [vmem:[#allocation2 + $0x8] sm:$0xff]
        %v3937 = vld [vmem:[%s830] sm:$0xf]
        %v3940 = vcombine.high %v3935, %v3935
        %v3941 = vcombine.high %v3936, %v3936
        %3942 = vrot.lane.b32.xlu0 %v3935, 17
        %v3943 = vpop.permute.xlu0 %3942
        %3944 = vrot.lane.b32.xlu0 %v3940, 17
        %v3945 = vpop.permute.xlu0 %3944
        %3946 = vrot.lane.b32.xlu0 %v3936, 17
        %v3947 = vpop.permute.xlu0 %3946
        %3948 = vrot.lane.b32.xlu0 %v3941, 17
        %v3949 = vpop.permute.xlu0 %3948
        %v3950 = vsel %vm844, %v3943, %v3945
        %v3951 = vsel %vm844, %v3945, %v3947
        %v3952 = vsel %vm844, %v3947, %v3949
        %v3954 = vsel %vm514, %v3937, 0
        %v3956 = vsel %vm518, %v3950, 0
        %v3958 = vsel %vm518, %v3951, 0
        %v3960 = vsel %vm518, %v3952, 0
        %3962 = vmatprep.subr.mxu0 0.0
        %3963 = vmatpush1.msra.mxu0 0.0
        %3964 = vmatprep.subr.mxu0 0.0
        %3965 = vmatpush1.msra.mxu0 0.0
        %3966 = vmatprep.subr.mxu0 0.0
        %3967 = vmatpush1.msra.mxu0 0.0
        %3968 = vmatprep.subr.mxu0 0.0
        %3969 = vmatpush1.msra.mxu0 0.0
        %3970 = vmatprep.subr.mxu0 0.0
        %3971 = vmatpush1.msra.mxu0 0.0
        %3972 = vmatprep.subr.mxu0 0.0
        %3973 = vmatpush1.msra.mxu0 0.0
        %3974 = vmatprep.subr.mxu0 0.0
        %3975 = vmatpush1.msra.mxu0 0.0
        %3976 = vmatprep.subr.mxu0 0.0
        %3977 = vmatpush1.msra.mxu0 0.0
        %3978 = vmatprep.subr.mxu0 0.0
        %3979 = vmatpush1.msra.mxu0 0.0
        %3980 = vmatprep.subr.mxu0 0.0
        %3981 = vmatpush1.msra.mxu0 0.0
        %3982 = vmatprep.subr.mxu0 0.0
        %3983 = vmatpush1.msra.mxu0 0.0
        %3984 = vmatprep.subr.mxu0 0.0
        %3985 = vmatpush1.msra.mxu0 0.0
        %3986 = vmatprep.subr.mxu0 0.0
        %3987 = vmatpush1.msra.mxu0 0.0
        %3988 = vmatprep.subr.mxu0 0.0
        %3989 = vmatpush1.msra.mxu0 0.0
        %3990 = vmatprep.subr.mxu0 0.0
        %3991 = vmatpush1.msra.mxu0 0.0
        %3992 = vmatprep.subr.mxu0 %v3958
        %3993 = vmatpush1.msra.mxu0 %v3956
        %3994 = vmatprep.subr.mxu0 0.0
        %3995 = vmatpush2.msra.mxu0 0.0
        %3996 = vmatprep.subr.mxu0 0.0
        %3997 = vmatpush2.msra.mxu0 0.0
        %3998 = vmatprep.subr.mxu0 0.0
        %3999 = vmatpush2.msra.mxu0 0.0
        %4000 = vmatprep.subr.mxu0 0.0
        %4001 = vmatpush2.msra.mxu0 0.0
        %4002 = vmatprep.subr.mxu0 0.0
        %4003 = vmatpush2.msra.mxu0 0.0
        %4004 = vmatprep.subr.mxu0 0.0
        %4005 = vmatpush2.msra.mxu0 0.0
        %4006 = vmatprep.subr.mxu0 0.0
        %4007 = vmatpush2.msra.mxu0 0.0
        %4008 = vmatprep.subr.mxu0 0.0
        %4009 = vmatpush2.msra.mxu0 0.0
        %4010 = vmatprep.subr.mxu0 0.0
        %4011 = vmatpush2.msra.mxu0 0.0
        %4012 = vmatprep.subr.mxu0 0.0
        %4013 = vmatpush2.msra.mxu0 0.0
        %4014 = vmatprep.subr.mxu0 0.0
        %4015 = vmatpush2.msra.mxu0 0.0
        %4016 = vmatprep.subr.mxu0 0.0
        %4017 = vmatpush2.msra.mxu0 0.0
        %4018 = vmatprep.subr.mxu0 0.0
        %4019 = vmatpush2.msra.mxu0 0.0
        %4020 = vmatprep.subr.mxu0 0.0
        %4021 = vmatpush2.msra.mxu0 0.0
        %4022 = vmatprep.subr.mxu0 0.0
        %4023 = vmatpush2.msra.mxu0 0.0
        %4024 = vmatprep.subr.mxu0 0.0
        %4025 = vmatpush2.msra.mxu0 0.0
        %4026 = vmatprep.mubr.f32.mxu0 0.0
        %4027 = vmatmul.mubr.f32.gmra.mxu0 %v3954
        %v4028 = vpop.f32.mrf.mxu0
        %v4029 = vadd.f32 0.0, %v4028
        %v4030 = vpop.f32.mrf.mxu0
        %v4031 = vadd.f32 0.0, %v4030
        %4032 = vdwg.mxu0
        %4033 = vmatprep.subr.mxu0 0.0
        %4034 = vmatpush1.msra.mxu0 0.0
        %4035 = vmatprep.subr.mxu0 0.0
        %4036 = vmatpush1.msra.mxu0 0.0
        %4037 = vmatprep.subr.mxu0 0.0
        %4038 = vmatpush1.msra.mxu0 0.0
        %4039 = vmatprep.subr.mxu0 0.0
        %4040 = vmatpush1.msra.mxu0 0.0
        %4041 = vmatprep.subr.mxu0 0.0
        %4042 = vmatpush1.msra.mxu0 0.0
        %4043 = vmatprep.subr.mxu0 0.0
        %4044 = vmatpush1.msra.mxu0 0.0
        %4045 = vmatprep.subr.mxu0 0.0
        %4046 = vmatpush1.msra.mxu0 0.0
        %4047 = vmatprep.subr.mxu0 0.0
        %4048 = vmatpush1.msra.mxu0 0.0
        %4049 = vmatprep.subr.mxu0 0.0
        %4050 = vmatpush1.msra.mxu0 0.0
        %4051 = vmatprep.subr.mxu0 0.0
        %4052 = vmatpush1.msra.mxu0 0.0
        %4053 = vmatprep.subr.mxu0 0.0
        %4054 = vmatpush1.msra.mxu0 0.0
        %4055 = vmatprep.subr.mxu0 0.0
        %4056 = vmatpush1.msra.mxu0 0.0
        %4057 = vmatprep.subr.mxu0 0.0
        %4058 = vmatpush1.msra.mxu0 0.0
        %4059 = vmatprep.subr.mxu0 0.0
        %4060 = vmatpush1.msra.mxu0 0.0
        %4061 = vmatprep.subr.mxu0 0.0
        %4062 = vmatpush1.msra.mxu0 0.0
        %4063 = vmatprep.subr.mxu0 0.0
        %4064 = vmatpush1.msra.mxu0 %v3960
        %4065 = vmatprep.subr.mxu0 0.0
        %4066 = vmatpush2.msra.mxu0 0.0
        %4067 = vmatprep.subr.mxu0 0.0
        %4068 = vmatpush2.msra.mxu0 0.0
        %4069 = vmatprep.subr.mxu0 0.0
        %4070 = vmatpush2.msra.mxu0 0.0
        %4071 = vmatprep.subr.mxu0 0.0
        %4072 = vmatpush2.msra.mxu0 0.0
        %4073 = vmatprep.subr.mxu0 0.0
        %4074 = vmatpush2.msra.mxu0 0.0
        %4075 = vmatprep.subr.mxu0 0.0
        %4076 = vmatpush2.msra.mxu0 0.0
        %4077 = vmatprep.subr.mxu0 0.0
        %4078 = vmatpush2.msra.mxu0 0.0
        %4079 = vmatprep.subr.mxu0 0.0
        %4080 = vmatpush2.msra.mxu0 0.0
        %4081 = vmatprep.subr.mxu0 0.0
        %4082 = vmatpush2.msra.mxu0 0.0
        %4083 = vmatprep.subr.mxu0 0.0
        %4084 = vmatpush2.msra.mxu0 0.0
        %4085 = vmatprep.subr.mxu0 0.0
        %4086 = vmatpush2.msra.mxu0 0.0
        %4087 = vmatprep.subr.mxu0 0.0
        %4088 = vmatpush2.msra.mxu0 0.0
        %4089 = vmatprep.subr.mxu0 0.0
        %4090 = vmatpush2.msra.mxu0 0.0
        %4091 = vmatprep.subr.mxu0 0.0
        %4092 = vmatpush2.msra.mxu0 0.0
        %4093 = vmatprep.subr.mxu0 0.0
        %4094 = vmatpush2.msra.mxu0 0.0
        %4095 = vmatprep.subr.mxu0 0.0
        %4096 = vmatpush2.msra.mxu0 0.0
        %4097 = vmatprep.mubr.f32.mxu0 0.0
        %4098 = vmatmul.mubr.f32.gmra.mxu0 %v3954
        %v4099 = vpop.f32.mrf.mxu0
        %v4100 = vadd.f32 0.0, %v4099
        %v4101 = vpop.f32.mrf.mxu0
        %4102 = vdwg.mxu0
        %v4103 = vadd.f32 %v3861, %v4029
        %v4104 = vadd.f32 %v3863, %v4031
        %v4105 = vadd.f32 %v3932, %v4100
        %v4106 = vld [vmem:[#allocation2] sm:$0xff]
        %v4107 = vld [vmem:[#allocation2 + $0x8] sm:$0xff]
        %v4108 = vld [vmem:[%s1003] sm:$0xf]
        %v4111 = vcombine.high %v4106, %v4106
        %v4112 = vcombine.high %v4107, %v4107
        %4113 = vrot.lane.b32.xlu0 %v4106, 1
        %v4114 = vpop.permute.xlu0 %4113
        %4115 = vrot.lane.b32.xlu0 %v4111, 1
        %v4116 = vpop.permute.xlu0 %4115
        %4117 = vrot.lane.b32.xlu0 %v4107, 1
        %v4118 = vpop.permute.xlu0 %4117
        %4119 = vrot.lane.b32.xlu0 %v4112, 1
        %v4120 = vpop.permute.xlu0 %4119
        %v4121 = vsel %vm1017, %v4114, %v4116
        %v4122 = vsel %vm1017, %v4116, %v4118
        %v4123 = vsel %vm1017, %v4118, %v4120
        %v4125 = vsel %vm514, %v4108, 0
        %v4127 = vsel %vm518, %v4121, 0
        %v4129 = vsel %vm518, %v4122, 0
        %v4131 = vsel %vm518, %v4123, 0
        %4133 = vmatprep.subr.mxu0 0.0
        %4134 = vmatpush1.msra.mxu0 0.0
        %4135 = vmatprep.subr.mxu0 0.0
        %4136 = vmatpush1.msra.mxu0 0.0
        %4137 = vmatprep.subr.mxu0 0.0
        %4138 = vmatpush1.msra.mxu0 0.0
        %4139 = vmatprep.subr.mxu0 0.0
        %4140 = vmatpush1.msra.mxu0 0.0
        %4141 = vmatprep.subr.mxu0 0.0
        %4142 = vmatpush1.msra.mxu0 0.0
        %4143 = vmatprep.subr.mxu0 0.0
        %4144 = vmatpush1.msra.mxu0 0.0
        %4145 = vmatprep.subr.mxu0 0.0
        %4146 = vmatpush1.msra.mxu0 0.0
        %4147 = vmatprep.subr.mxu0 0.0
        %4148 = vmatpush1.msra.mxu0 0.0
        %4149 = vmatprep.subr.mxu0 0.0
        %4150 = vmatpush1.msra.mxu0 0.0
        %4151 = vmatprep.subr.mxu0 0.0
        %4152 = vmatpush1.msra.mxu0 0.0
        %4153 = vmatprep.subr.mxu0 0.0
        %4154 = vmatpush1.msra.mxu0 0.0
        %4155 = vmatprep.subr.mxu0 0.0
        %4156 = vmatpush1.msra.mxu0 0.0
        %4157 = vmatprep.subr.mxu0 0.0
        %4158 = vmatpush1.msra.mxu0 0.0
        %4159 = vmatprep.subr.mxu0 0.0
        %4160 = vmatpush1.msra.mxu0 0.0
        %4161 = vmatprep.subr.mxu0 0.0
        %4162 = vmatpush1.msra.mxu0 0.0
        %4163 = vmatprep.subr.mxu0 %v4129
        %4164 = vmatpush1.msra.mxu0 %v4127
        %4165 = vmatprep.subr.mxu0 0.0
        %4166 = vmatpush2.msra.mxu0 0.0
        %4167 = vmatprep.subr.mxu0 0.0
        %4168 = vmatpush2.msra.mxu0 0.0
        %4169 = vmatprep.subr.mxu0 0.0
        %4170 = vmatpush2.msra.mxu0 0.0
        %4171 = vmatprep.subr.mxu0 0.0
        %4172 = vmatpush2.msra.mxu0 0.0
        %4173 = vmatprep.subr.mxu0 0.0
        %4174 = vmatpush2.msra.mxu0 0.0
        %4175 = vmatprep.subr.mxu0 0.0
        %4176 = vmatpush2.msra.mxu0 0.0
        %4177 = vmatprep.subr.mxu0 0.0
        %4178 = vmatpush2.msra.mxu0 0.0
        %4179 = vmatprep.subr.mxu0 0.0
        %4180 = vmatpush2.msra.mxu0 0.0
        %4181 = vmatprep.subr.mxu0 0.0
        %4182 = vmatpush2.msra.mxu0 0.0
        %4183 = vmatprep.subr.mxu0 0.0
        %4184 = vmatpush2.msra.mxu0 0.0
        %4185 = vmatprep.subr.mxu0 0.0
        %4186 = vmatpush2.msra.mxu0 0.0
        %4187 = vmatprep.subr.mxu0 0.0
        %4188 = vmatpush2.msra.mxu0 0.0
        %4189 = vmatprep.subr.mxu0 0.0
        %4190 = vmatpush2.msra.mxu0 0.0
        %4191 = vmatprep.subr.mxu0 0.0
        %4192 = vmatpush2.msra.mxu0 0.0
        %4193 = vmatprep.subr.mxu0 0.0
        %4194 = vmatpush2.msra.mxu0 0.0
        %4195 = vmatprep.subr.mxu0 0.0
        %4196 = vmatpush2.msra.mxu0 0.0
        %4197 = vmatprep.mubr.f32.mxu0 0.0
        %4198 = vmatmul.mubr.f32.gmra.mxu0 %v4125
        %v4199 = vpop.f32.mrf.mxu0
        %v4200 = vadd.f32 0.0, %v4199
        %v4201 = vpop.f32.mrf.mxu0
        %v4202 = vadd.f32 0.0, %v4201
        %4203 = vdwg.mxu0
        %4204 = vmatprep.subr.mxu0 0.0
        %4205 = vmatpush1.msra.mxu0 0.0
        %4206 = vmatprep.subr.mxu0 0.0
        %4207 = vmatpush1.msra.mxu0 0.0
        %4208 = vmatprep.subr.mxu0 0.0
        %4209 = vmatpush1.msra.mxu0 0.0
        %4210 = vmatprep.subr.mxu0 0.0
        %4211 = vmatpush1.msra.mxu0 0.0
        %4212 = vmatprep.subr.mxu0 0.0
        %4213 = vmatpush1.msra.mxu0 0.0
        %4214 = vmatprep.subr.mxu0 0.0
        %4215 = vmatpush1.msra.mxu0 0.0
        %4216 = vmatprep.subr.mxu0 0.0
        %4217 = vmatpush1.msra.mxu0 0.0
        %4218 = vmatprep.subr.mxu0 0.0
        %4219 = vmatpush1.msra.mxu0 0.0
        %4220 = vmatprep.subr.mxu0 0.0
        %4221 = vmatpush1.msra.mxu0 0.0
        %4222 = vmatprep.subr.mxu0 0.0
        %4223 = vmatpush1.msra.mxu0 0.0
        %4224 = vmatprep.subr.mxu0 0.0
        %4225 = vmatpush1.msra.mxu0 0.0
        %4226 = vmatprep.subr.mxu0 0.0
        %4227 = vmatpush1.msra.mxu0 0.0
        %4228 = vmatprep.subr.mxu0 0.0
        %4229 = vmatpush1.msra.mxu0 0.0
        %4230 = vmatprep.subr.mxu0 0.0
        %4231 = vmatpush1.msra.mxu0 0.0
        %4232 = vmatprep.subr.mxu0 0.0
        %4233 = vmatpush1.msra.mxu0 0.0
        %4234 = vmatprep.subr.mxu0 0.0
        %4235 = vmatpush1.msra.mxu0 %v4131
        %4236 = vmatprep.subr.mxu0 0.0
        %4237 = vmatpush2.msra.mxu0 0.0
        %4238 = vmatprep.subr.mxu0 0.0
        %4239 = vmatpush2.msra.mxu0 0.0
        %4240 = vmatprep.subr.mxu0 0.0
        %4241 = vmatpush2.msra.mxu0 0.0
        %4242 = vmatprep.subr.mxu0 0.0
        %4243 = vmatpush2.msra.mxu0 0.0
        %4244 = vmatprep.subr.mxu0 0.0
        %4245 = vmatpush2.msra.mxu0 0.0
        %4246 = vmatprep.subr.mxu0 0.0
        %4247 = vmatpush2.msra.mxu0 0.0
        %4248 = vmatprep.subr.mxu0 0.0
        %4249 = vmatpush2.msra.mxu0 0.0
        %4250 = vmatprep.subr.mxu0 0.0
        %4251 = vmatpush2.msra.mxu0 0.0
        %4252 = vmatprep.subr.mxu0 0.0
        %4253 = vmatpush2.msra.mxu0 0.0
        %4254 = vmatprep.subr.mxu0 0.0
        %4255 = vmatpush2.msra.mxu0 0.0
        %4256 = vmatprep.subr.mxu0 0.0
        %4257 = vmatpush2.msra.mxu0 0.0
        %4258 = vmatprep.subr.mxu0 0.0
        %4259 = vmatpush2.msra.mxu0 0.0
        %4260 = vmatprep.subr.mxu0 0.0
        %4261 = vmatpush2.msra.mxu0 0.0
        %4262 = vmatprep.subr.mxu0 0.0
        %4263 = vmatpush2.msra.mxu0 0.0
        %4264 = vmatprep.subr.mxu0 0.0
        %4265 = vmatpush2.msra.mxu0 0.0
        %4266 = vmatprep.subr.mxu0 0.0
        %4267 = vmatpush2.msra.mxu0 0.0
        %4268 = vmatprep.mubr.f32.mxu0 0.0
        %4269 = vmatmul.mubr.f32.gmra.mxu0 %v4125
        %v4270 = vpop.f32.mrf.mxu0
        %v4271 = vadd.f32 0.0, %v4270
        %v4272 = vpop.f32.mrf.mxu0
        %4273 = vdwg.mxu0
        %v4274 = vadd.f32 %v4103, %v4200
        %v4275 = vadd.f32 %v4104, %v4202
        %v4276 = vadd.f32 %v4105, %v4271
        %v4277 = vld [vmem:[#allocation2 + $0x4] sm:$0xff]
        %v4278 = vld [vmem:[#allocation2 + $0xc] sm:$0xf]
        %v4279 = vld [vmem:[%s1176] sm:$0xf]
        %v4282 = vcombine.high %v4277, %v4277
        %v4284 = vsel %vm514, %v4279, 0
        %v4286 = vsel %vm518, %v4277, 0
        %v4288 = vsel %vm518, %v4282, 0
        %v4290 = vsel %vm518, %v4278, 0
        %4292 = vmatprep.subr.mxu0 0.0
        %4293 = vmatpush1.msra.mxu0 0.0
        %4294 = vmatprep.subr.mxu0 0.0
        %4295 = vmatpush1.msra.mxu0 0.0
        %4296 = vmatprep.subr.mxu0 0.0
        %4297 = vmatpush1.msra.mxu0 0.0
        %4298 = vmatprep.subr.mxu0 0.0
        %4299 = vmatpush1.msra.mxu0 0.0
        %4300 = vmatprep.subr.mxu0 0.0
        %4301 = vmatpush1.msra.mxu0 0.0
        %4302 = vmatprep.subr.mxu0 0.0
        %4303 = vmatpush1.msra.mxu0 0.0
        %4304 = vmatprep.subr.mxu0 0.0
        %4305 = vmatpush1.msra.mxu0 0.0
        %4306 = vmatprep.subr.mxu0 0.0
        %4307 = vmatpush1.msra.mxu0 0.0
        %4308 = vmatprep.subr.mxu0 0.0
        %4309 = vmatpush1.msra.mxu0 0.0
        %4310 = vmatprep.subr.mxu0 0.0
        %4311 = vmatpush1.msra.mxu0 0.0
        %4312 = vmatprep.subr.mxu0 0.0
        %4313 = vmatpush1.msra.mxu0 0.0
        %4314 = vmatprep.subr.mxu0 0.0
        %4315 = vmatpush1.msra.mxu0 0.0
        %4316 = vmatprep.subr.mxu0 0.0
        %4317 = vmatpush1.msra.mxu0 0.0
        %4318 = vmatprep.subr.mxu0 0.0
        %4319 = vmatpush1.msra.mxu0 0.0
        %4320 = vmatprep.subr.mxu0 0.0
        %4321 = vmatpush1.msra.mxu0 0.0
        %4322 = vmatprep.subr.mxu0 %v4288
        %4323 = vmatpush1.msra.mxu0 %v4286
        %4324 = vmatprep.subr.mxu0 0.0
        %4325 = vmatpush2.msra.mxu0 0.0
        %4326 = vmatprep.subr.mxu0 0.0
        %4327 = vmatpush2.msra.mxu0 0.0
        %4328 = vmatprep.subr.mxu0 0.0
        %4329 = vmatpush2.msra.mxu0 0.0
        %4330 = vmatprep.subr.mxu0 0.0
        %4331 = vmatpush2.msra.mxu0 0.0
        %4332 = vmatprep.subr.mxu0 0.0
        %4333 = vmatpush2.msra.mxu0 0.0
        %4334 = vmatprep.subr.mxu0 0.0
        %4335 = vmatpush2.msra.mxu0 0.0
        %4336 = vmatprep.subr.mxu0 0.0
        %4337 = vmatpush2.msra.mxu0 0.0
        %4338 = vmatprep.subr.mxu0 0.0
        %4339 = vmatpush2.msra.mxu0 0.0
        %4340 = vmatprep.subr.mxu0 0.0
        %4341 = vmatpush2.msra.mxu0 0.0
        %4342 = vmatprep.subr.mxu0 0.0
        %4343 = vmatpush2.msra.mxu0 0.0
        %4344 = vmatprep.subr.mxu0 0.0
        %4345 = vmatpush2.msra.mxu0 0.0
        %4346 = vmatprep.subr.mxu0 0.0
        %4347 = vmatpush2.msra.mxu0 0.0
        %4348 = vmatprep.subr.mxu0 0.0
        %4349 = vmatpush2.msra.mxu0 0.0
        %4350 = vmatprep.subr.mxu0 0.0
        %4351 = vmatpush2.msra.mxu0 0.0
        %4352 = vmatprep.subr.mxu0 0.0
        %4353 = vmatpush2.msra.mxu0 0.0
        %4354 = vmatprep.subr.mxu0 0.0
        %4355 = vmatpush2.msra.mxu0 0.0
        %4356 = vmatprep.mubr.f32.mxu0 0.0
        %4357 = vmatmul.mubr.f32.gmra.mxu0 %v4284
        %v4358 = vpop.f32.mrf.mxu0
        %v4359 = vadd.f32 0.0, %v4358
        %v4360 = vpop.f32.mrf.mxu0
        %v4361 = vadd.f32 0.0, %v4360
        %4362 = vdwg.mxu0
        %4363 = vmatprep.subr.mxu0 0.0
        %4364 = vmatpush1.msra.mxu0 0.0
        %4365 = vmatprep.subr.mxu0 0.0
        %4366 = vmatpush1.msra.mxu0 0.0
        %4367 = vmatprep.subr.mxu0 0.0
        %4368 = vmatpush1.msra.mxu0 0.0
        %4369 = vmatprep.subr.mxu0 0.0
        %4370 = vmatpush1.msra.mxu0 0.0
        %4371 = vmatprep.subr.mxu0 0.0
        %4372 = vmatpush1.msra.mxu0 0.0
        %4373 = vmatprep.subr.mxu0 0.0
        %4374 = vmatpush1.msra.mxu0 0.0
        %4375 = vmatprep.subr.mxu0 0.0
        %4376 = vmatpush1.msra.mxu0 0.0
        %4377 = vmatprep.subr.mxu0 0.0
        %4378 = vmatpush1.msra.mxu0 0.0
        %4379 = vmatprep.subr.mxu0 0.0
        %4380 = vmatpush1.msra.mxu0 0.0
        %4381 = vmatprep.subr.mxu0 0.0
        %4382 = vmatpush1.msra.mxu0 0.0
        %4383 = vmatprep.subr.mxu0 0.0
        %4384 = vmatpush1.msra.mxu0 0.0
        %4385 = vmatprep.subr.mxu0 0.0
        %4386 = vmatpush1.msra.mxu0 0.0
        %4387 = vmatprep.subr.mxu0 0.0
        %4388 = vmatpush1.msra.mxu0 0.0
        %4389 = vmatprep.subr.mxu0 0.0
        %4390 = vmatpush1.msra.mxu0 0.0
        %4391 = vmatprep.subr.mxu0 0.0
        %4392 = vmatpush1.msra.mxu0 0.0
        %4393 = vmatprep.subr.mxu0 0.0
        %4394 = vmatpush1.msra.mxu0 %v4290
        %4395 = vmatprep.subr.mxu0 0.0
        %4396 = vmatpush2.msra.mxu0 0.0
        %4397 = vmatprep.subr.mxu0 0.0
        %4398 = vmatpush2.msra.mxu0 0.0
        %4399 = vmatprep.subr.mxu0 0.0
        %4400 = vmatpush2.msra.mxu0 0.0
        %4401 = vmatprep.subr.mxu0 0.0
        %4402 = vmatpush2.msra.mxu0 0.0
        %4403 = vmatprep.subr.mxu0 0.0
        %4404 = vmatpush2.msra.mxu0 0.0
        %4405 = vmatprep.subr.mxu0 0.0
        %4406 = vmatpush2.msra.mxu0 0.0
        %4407 = vmatprep.subr.mxu0 0.0
        %4408 = vmatpush2.msra.mxu0 0.0
        %4409 = vmatprep.subr.mxu0 0.0
        %4410 = vmatpush2.msra.mxu0 0.0
        %4411 = vmatprep.subr.mxu0 0.0
        %4412 = vmatpush2.msra.mxu0 0.0
        %4413 = vmatprep.subr.mxu0 0.0
        %4414 = vmatpush2.msra.mxu0 0.0
        %4415 = vmatprep.subr.mxu0 0.0
        %4416 = vmatpush2.msra.mxu0 0.0
        %4417 = vmatprep.subr.mxu0 0.0
        %4418 = vmatpush2.msra.mxu0 0.0
        %4419 = vmatprep.subr.mxu0 0.0
        %4420 = vmatpush2.msra.mxu0 0.0
        %4421 = vmatprep.subr.mxu0 0.0
        %4422 = vmatpush2.msra.mxu0 0.0
        %4423 = vmatprep.subr.mxu0 0.0
        %4424 = vmatpush2.msra.mxu0 0.0
        %4425 = vmatprep.subr.mxu0 0.0
        %4426 = vmatpush2.msra.mxu0 0.0
        %4427 = vmatprep.mubr.f32.mxu0 0.0
        %4428 = vmatmul.mubr.f32.gmra.mxu0 %v4284
        %v4429 = vpop.f32.mrf.mxu0
        %v4430 = vadd.f32 0.0, %v4429
        %v4431 = vpop.f32.mrf.mxu0
        %4432 = vdwg.mxu0
        %v4433 = vadd.f32 %v4274, %v4359
        %v4434 = vadd.f32 %v4275, %v4361
        %v4435 = vadd.f32 %v4276, %v4430
        %v4436 = vld [vmem:[#allocation2 + $0x4] sm:$0xff]
        %v4437 = vld [vmem:[#allocation2 + $0xc] sm:$0xf]
        %v4438 = vld [vmem:[%s1336] sm:$0xf]
        %v4441 = vcombine.high %v4436, %v4436
        %4442 = vrot.lane.b32.xlu0 %v4436, 127
        %v4443 = vpop.permute.xlu0 %4442
        %4444 = vrot.lane.b32.xlu0 %v4441, 127
        %v4445 = vpop.permute.xlu0 %4444
        %4446 = vrot.lane.b32.xlu0 %v4437, 127
        %v4447 = vpop.permute.xlu0 %4446
        %v4448 = vsel %vm1347, %v4443, %v4445
        %v4449 = vsel %vm1347, %v4445, %v4447
        %v4451 = vsel %vm514, %v4438, 0
        %v4453 = vsel %vm518, %v4448, 0
        %v4455 = vsel %vm518, %v4449, 0
        %v4457 = vsel %vm518, %v4447, 0
        %4459 = vmatprep.subr.mxu0 0.0
        %4460 = vmatpush1.msra.mxu0 0.0
        %4461 = vmatprep.subr.mxu0 0.0
        %4462 = vmatpush1.msra.mxu0 0.0
        %4463 = vmatprep.subr.mxu0 0.0
        %4464 = vmatpush1.msra.mxu0 0.0
        %4465 = vmatprep.subr.mxu0 0.0
        %4466 = vmatpush1.msra.mxu0 0.0
        %4467 = vmatprep.subr.mxu0 0.0
        %4468 = vmatpush1.msra.mxu0 0.0
        %4469 = vmatprep.subr.mxu0 0.0
        %4470 = vmatpush1.msra.mxu0 0.0
        %4471 = vmatprep.subr.mxu0 0.0
        %4472 = vmatpush1.msra.mxu0 0.0
        %4473 = vmatprep.subr.mxu0 0.0
        %4474 = vmatpush1.msra.mxu0 0.0
        %4475 = vmatprep.subr.mxu0 0.0
        %4476 = vmatpush1.msra.mxu0 0.0
        %4477 = vmatprep.subr.mxu0 0.0
        %4478 = vmatpush1.msra.mxu0 0.0
        %4479 = vmatprep.subr.mxu0 0.0
        %4480 = vmatpush1.msra.mxu0 0.0
        %4481 = vmatprep.subr.mxu0 0.0
        %4482 = vmatpush1.msra.mxu0 0.0
        %4483 = vmatprep.subr.mxu0 0.0
        %4484 = vmatpush1.msra.mxu0 0.0
        %4485 = vmatprep.subr.mxu0 0.0
        %4486 = vmatpush1.msra.mxu0 0.0
        %4487 = vmatprep.subr.mxu0 0.0
        %4488 = vmatpush1.msra.mxu0 0.0
        %4489 = vmatprep.subr.mxu0 %v4455
        %4490 = vmatpush1.msra.mxu0 %v4453
        %4491 = vmatprep.subr.mxu0 0.0
        %4492 = vmatpush2.msra.mxu0 0.0
        %4493 = vmatprep.subr.mxu0 0.0
        %4494 = vmatpush2.msra.mxu0 0.0
        %4495 = vmatprep.subr.mxu0 0.0
        %4496 = vmatpush2.msra.mxu0 0.0
        %4497 = vmatprep.subr.mxu0 0.0
        %4498 = vmatpush2.msra.mxu0 0.0
        %4499 = vmatprep.subr.mxu0 0.0
        %4500 = vmatpush2.msra.mxu0 0.0
        %4501 = vmatprep.subr.mxu0 0.0
        %4502 = vmatpush2.msra.mxu0 0.0
        %4503 = vmatprep.subr.mxu0 0.0
        %4504 = vmatpush2.msra.mxu0 0.0
        %4505 = vmatprep.subr.mxu0 0.0
        %4506 = vmatpush2.msra.mxu0 0.0
        %4507 = vmatprep.subr.mxu0 0.0
        %4508 = vmatpush2.msra.mxu0 0.0
        %4509 = vmatprep.subr.mxu0 0.0
        %4510 = vmatpush2.msra.mxu0 0.0
        %4511 = vmatprep.subr.mxu0 0.0
        %4512 = vmatpush2.msra.mxu0 0.0
        %4513 = vmatprep.subr.mxu0 0.0
        %4514 = vmatpush2.msra.mxu0 0.0
        %4515 = vmatprep.subr.mxu0 0.0
        %4516 = vmatpush2.msra.mxu0 0.0
        %4517 = vmatprep.subr.mxu0 0.0
        %4518 = vmatpush2.msra.mxu0 0.0
        %4519 = vmatprep.subr.mxu0 0.0
        %4520 = vmatpush2.msra.mxu0 0.0
        %4521 = vmatprep.subr.mxu0 0.0
        %4522 = vmatpush2.msra.mxu0 0.0
        %4523 = vmatprep.mubr.f32.mxu0 0.0
        %4524 = vmatmul.mubr.f32.gmra.mxu0 %v4451
        %v4525 = vpop.f32.mrf.mxu0
        %v4526 = vadd.f32 0.0, %v4525
        %v4527 = vpop.f32.mrf.mxu0
        %v4528 = vadd.f32 0.0, %v4527
        %4529 = vdwg.mxu0
        %4530 = vmatprep.subr.mxu0 0.0
        %4531 = vmatpush1.msra.mxu0 0.0
        %4532 = vmatprep.subr.mxu0 0.0
        %4533 = vmatpush1.msra.mxu0 0.0
        %4534 = vmatprep.subr.mxu0 0.0
        %4535 = vmatpush1.msra.mxu0 0.0
        %4536 = vmatprep.subr.mxu0 0.0
        %4537 = vmatpush1.msra.mxu0 0.0
        %4538 = vmatprep.subr.mxu0 0.0
        %4539 = vmatpush1.msra.mxu0 0.0
        %4540 = vmatprep.subr.mxu0 0.0
        %4541 = vmatpush1.msra.mxu0 0.0
        %4542 = vmatprep.subr.mxu0 0.0
        %4543 = vmatpush1.msra.mxu0 0.0
        %4544 = vmatprep.subr.mxu0 0.0
        %4545 = vmatpush1.msra.mxu0 0.0
        %4546 = vmatprep.subr.mxu0 0.0
        %4547 = vmatpush1.msra.mxu0 0.0
        %4548 = vmatprep.subr.mxu0 0.0
        %4549 = vmatpush1.msra.mxu0 0.0
        %4550 = vmatprep.subr.mxu0 0.0
        %4551 = vmatpush1.msra.mxu0 0.0
        %4552 = vmatprep.subr.mxu0 0.0
        %4553 = vmatpush1.msra.mxu0 0.0
        %4554 = vmatprep.subr.mxu0 0.0
        %4555 = vmatpush1.msra.mxu0 0.0
        %4556 = vmatprep.subr.mxu0 0.0
        %4557 = vmatpush1.msra.mxu0 0.0
        %4558 = vmatprep.subr.mxu0 0.0
        %4559 = vmatpush1.msra.mxu0 0.0
        %4560 = vmatprep.subr.mxu0 0.0
        %4561 = vmatpush1.msra.mxu0 %v4457
        %4562 = vmatprep.subr.mxu0 0.0
        %4563 = vmatpush2.msra.mxu0 0.0
        %4564 = vmatprep.subr.mxu0 0.0
        %4565 = vmatpush2.msra.mxu0 0.0
        %4566 = vmatprep.subr.mxu0 0.0
        %4567 = vmatpush2.msra.mxu0 0.0
        %4568 = vmatprep.subr.mxu0 0.0
        %4569 = vmatpush2.msra.mxu0 0.0
        %4570 = vmatprep.subr.mxu0 0.0
        %4571 = vmatpush2.msra.mxu0 0.0
        %4572 = vmatprep.subr.mxu0 0.0
        %4573 = vmatpush2.msra.mxu0 0.0
        %4574 = vmatprep.subr.mxu0 0.0
        %4575 = vmatpush2.msra.mxu0 0.0
        %4576 = vmatprep.subr.mxu0 0.0
        %4577 = vmatpush2.msra.mxu0 0.0
        %4578 = vmatprep.subr.mxu0 0.0
        %4579 = vmatpush2.msra.mxu0 0.0
        %4580 = vmatprep.subr.mxu0 0.0
        %4581 = vmatpush2.msra.mxu0 0.0
        %4582 = vmatprep.subr.mxu0 0.0
        %4583 = vmatpush2.msra.mxu0 0.0
        %4584 = vmatprep.subr.mxu0 0.0
        %4585 = vmatpush2.msra.mxu0 0.0
        %4586 = vmatprep.subr.mxu0 0.0
        %4587 = vmatpush2.msra.mxu0 0.0
        %4588 = vmatprep.subr.mxu0 0.0
        %4589 = vmatpush2.msra.mxu0 0.0
        %4590 = vmatprep.subr.mxu0 0.0
        %4591 = vmatpush2.msra.mxu0 0.0
        %4592 = vmatprep.subr.mxu0 0.0
        %4593 = vmatpush2.msra.mxu0 0.0
        %4594 = vmatprep.mubr.f32.mxu0 0.0
        %4595 = vmatmul.mubr.f32.gmra.mxu0 %v4451
        %v4596 = vpop.f32.mrf.mxu0
        %v4597 = vadd.f32 0.0, %v4596
        %v4598 = vpop.f32.mrf.mxu0
        %4599 = vdwg.mxu0
        %v4600 = vadd.f32 %v4433, %v4526
        %v4601 = vadd.f32 %v4434, %v4528
        %v4602 = vadd.f32 %v4435, %v4597
        %v4603 = vld [vmem:[#allocation2 + $0x4] sm:$0xff]
        %v4604 = vld [vmem:[#allocation2 + $0xc] sm:$0xf]
        %v4605 = vld [vmem:[%s1505] sm:$0xf]
        %v4608 = vcombine.high %v4603, %v4603
        %4609 = vrot.lane.b32.xlu0 %v4603, 111
        %v4610 = vpop.permute.xlu0 %4609
        %4611 = vrot.lane.b32.xlu0 %v4608, 111
        %v4612 = vpop.permute.xlu0 %4611
        %4613 = vrot.lane.b32.xlu0 %v4604, 111
        %v4614 = vpop.permute.xlu0 %4613
        %v4615 = vsel %vm1516, %v4610, %v4612
        %v4616 = vsel %vm1516, %v4612, %v4614
        %v4618 = vsel %vm514, %v4605, 0
        %v4620 = vsel %vm518, %v4615, 0
        %v4622 = vsel %vm518, %v4616, 0
        %v4624 = vsel %vm518, %v4614, 0
        %4626 = vmatprep.subr.mxu0 0.0
        %4627 = vmatpush1.msra.mxu0 0.0
        %4628 = vmatprep.subr.mxu0 0.0
        %4629 = vmatpush1.msra.mxu0 0.0
        %4630 = vmatprep.subr.mxu0 0.0
        %4631 = vmatpush1.msra.mxu0 0.0
        %4632 = vmatprep.subr.mxu0 0.0
        %4633 = vmatpush1.msra.mxu0 0.0
        %4634 = vmatprep.subr.mxu0 0.0
        %4635 = vmatpush1.msra.mxu0 0.0
        %4636 = vmatprep.subr.mxu0 0.0
        %4637 = vmatpush1.msra.mxu0 0.0
        %4638 = vmatprep.subr.mxu0 0.0
        %4639 = vmatpush1.msra.mxu0 0.0
        %4640 = vmatprep.subr.mxu0 0.0
        %4641 = vmatpush1.msra.mxu0 0.0
        %4642 = vmatprep.subr.mxu0 0.0
        %4643 = vmatpush1.msra.mxu0 0.0
        %4644 = vmatprep.subr.mxu0 0.0
        %4645 = vmatpush1.msra.mxu0 0.0
        %4646 = vmatprep.subr.mxu0 0.0
        %4647 = vmatpush1.msra.mxu0 0.0
        %4648 = vmatprep.subr.mxu0 0.0
        %4649 = vmatpush1.msra.mxu0 0.0
        %4650 = vmatprep.subr.mxu0 0.0
        %4651 = vmatpush1.msra.mxu0 0.0
        %4652 = vmatprep.subr.mxu0 0.0
        %4653 = vmatpush1.msra.mxu0 0.0
        %4654 = vmatprep.subr.mxu0 0.0
        %4655 = vmatpush1.msra.mxu0 0.0
        %4656 = vmatprep.subr.mxu0 %v4622
        %4657 = vmatpush1.msra.mxu0 %v4620
        %4658 = vmatprep.subr.mxu0 0.0
        %4659 = vmatpush2.msra.mxu0 0.0
        %4660 = vmatprep.subr.mxu0 0.0
        %4661 = vmatpush2.msra.mxu0 0.0
        %4662 = vmatprep.subr.mxu0 0.0
        %4663 = vmatpush2.msra.mxu0 0.0
        %4664 = vmatprep.subr.mxu0 0.0
        %4665 = vmatpush2.msra.mxu0 0.0
        %4666 = vmatprep.subr.mxu0 0.0
        %4667 = vmatpush2.msra.mxu0 0.0
        %4668 = vmatprep.subr.mxu0 0.0
        %4669 = vmatpush2.msra.mxu0 0.0
        %4670 = vmatprep.subr.mxu0 0.0
        %4671 = vmatpush2.msra.mxu0 0.0
        %4672 = vmatprep.subr.mxu0 0.0
        %4673 = vmatpush2.msra.mxu0 0.0
        %4674 = vmatprep.subr.mxu0 0.0
        %4675 = vmatpush2.msra.mxu0 0.0
        %4676 = vmatprep.subr.mxu0 0.0
        %4677 = vmatpush2.msra.mxu0 0.0
        %4678 = vmatprep.subr.mxu0 0.0
        %4679 = vmatpush2.msra.mxu0 0.0
        %4680 = vmatprep.subr.mxu0 0.0
        %4681 = vmatpush2.msra.mxu0 0.0
        %4682 = vmatprep.subr.mxu0 0.0
        %4683 = vmatpush2.msra.mxu0 0.0
        %4684 = vmatprep.subr.mxu0 0.0
        %4685 = vmatpush2.msra.mxu0 0.0
        %4686 = vmatprep.subr.mxu0 0.0
        %4687 = vmatpush2.msra.mxu0 0.0
        %4688 = vmatprep.subr.mxu0 0.0
        %4689 = vmatpush2.msra.mxu0 0.0
        %4690 = vmatprep.mubr.f32.mxu0 0.0
        %4691 = vmatmul.mubr.f32.gmra.mxu0 %v4618
        %v4692 = vpop.f32.mrf.mxu0
        %v4693 = vadd.f32 0.0, %v4692
        %v4694 = vpop.f32.mrf.mxu0
        %v4695 = vadd.f32 0.0, %v4694
        %4696 = vdwg.mxu0
        %4697 = vmatprep.subr.mxu0 0.0
        %4698 = vmatpush1.msra.mxu0 0.0
        %4699 = vmatprep.subr.mxu0 0.0
        %4700 = vmatpush1.msra.mxu0 0.0
        %4701 = vmatprep.subr.mxu0 0.0
        %4702 = vmatpush1.msra.mxu0 0.0
        %4703 = vmatprep.subr.mxu0 0.0
        %4704 = vmatpush1.msra.mxu0 0.0
        %4705 = vmatprep.subr.mxu0 0.0
        %4706 = vmatpush1.msra.mxu0 0.0
        %4707 = vmatprep.subr.mxu0 0.0
        %4708 = vmatpush1.msra.mxu0 0.0
        %4709 = vmatprep.subr.mxu0 0.0
        %4710 = vmatpush1.msra.mxu0 0.0
        %4711 = vmatprep.subr.mxu0 0.0
        %4712 = vmatpush1.msra.mxu0 0.0
        %4713 = vmatprep.subr.mxu0 0.0
        %4714 = vmatpush1.msra.mxu0 0.0
        %4715 = vmatprep.subr.mxu0 0.0
        %4716 = vmatpush1.msra.mxu0 0.0
        %4717 = vmatprep.subr.mxu0 0.0
        %4718 = vmatpush1.msra.mxu0 0.0
        %4719 = vmatprep.subr.mxu0 0.0
        %4720 = vmatpush1.msra.mxu0 0.0
        %4721 = vmatprep.subr.mxu0 0.0
        %4722 = vmatpush1.msra.mxu0 0.0
        %4723 = vmatprep.subr.mxu0 0.0
        %4724 = vmatpush1.msra.mxu0 0.0
        %4725 = vmatprep.subr.mxu0 0.0
        %4726 = vmatpush1.msra.mxu0 0.0
        %4727 = vmatprep.subr.mxu0 0.0
        %4728 = vmatpush1.msra.mxu0 %v4624
        %4729 = vmatprep.subr.mxu0 0.0
        %4730 = vmatpush2.msra.mxu0 0.0
        %4731 = vmatprep.subr.mxu0 0.0
        %4732 = vmatpush2.msra.mxu0 0.0
        %4733 = vmatprep.subr.mxu0 0.0
        %4734 = vmatpush2.msra.mxu0 0.0
        %4735 = vmatprep.subr.mxu0 0.0
        %4736 = vmatpush2.msra.mxu0 0.0
        %4737 = vmatprep.subr.mxu0 0.0
        %4738 = vmatpush2.msra.mxu0 0.0
        %4739 = vmatprep.subr.mxu0 0.0
        %4740 = vmatpush2.msra.mxu0 0.0
        %4741 = vmatprep.subr.mxu0 0.0
        %4742 = vmatpush2.msra.mxu0 0.0
        %4743 = vmatprep.subr.mxu0 0.0
        %4744 = vmatpush2.msra.mxu0 0.0
        %4745 = vmatprep.subr.mxu0 0.0
        %4746 = vmatpush2.msra.mxu0 0.0
        %4747 = vmatprep.subr.mxu0 0.0
        %4748 = vmatpush2.msra.mxu0 0.0
        %4749 = vmatprep.subr.mxu0 0.0
        %4750 = vmatpush2.msra.mxu0 0.0
        %4751 = vmatprep.subr.mxu0 0.0
        %4752 = vmatpush2.msra.mxu0 0.0
        %4753 = vmatprep.subr.mxu0 0.0
        %4754 = vmatpush2.msra.mxu0 0.0
        %4755 = vmatprep.subr.mxu0 0.0
        %4756 = vmatpush2.msra.mxu0 0.0
        %4757 = vmatprep.subr.mxu0 0.0
        %4758 = vmatpush2.msra.mxu0 0.0
        %4759 = vmatprep.subr.mxu0 0.0
        %4760 = vmatpush2.msra.mxu0 0.0
        %4761 = vmatprep.mubr.f32.mxu0 0.0
        %4762 = vmatmul.mubr.f32.gmra.mxu0 %v4618
        %v4763 = vpop.f32.mrf.mxu0
        %v4764 = vadd.f32 0.0, %v4763
        %v4765 = vpop.f32.mrf.mxu0
        %4766 = vdwg.mxu0
        %v4767 = vadd.f32 %v4600, %v4693
        %v4768 = vadd.f32 %v4601, %v4695
        %v4769 = vadd.f32 %v4602, %v4764
        %v4770 = vld [vmem:[#allocation2 + $0x4] sm:$0xff]
        %v4771 = vld [vmem:[#allocation2 + $0xc] sm:$0xf]
        %v4772 = vld [vmem:[%s1674] sm:$0xf]
        %v4775 = vcombine.high %v4770, %v4770
        %4776 = vrot.lane.b32.xlu0 %v4770, 110
        %v4777 = vpop.permute.xlu0 %4776
        %4778 = vrot.lane.b32.xlu0 %v4775, 110
        %v4779 = vpop.permute.xlu0 %4778
        %4780 = vrot.lane.b32.xlu0 %v4771, 110
        %v4781 = vpop.permute.xlu0 %4780
        %v4782 = vsel %vm1685, %v4777, %v4779
        %v4783 = vsel %vm1685, %v4779, %v4781
        %v4785 = vsel %vm514, %v4772, 0
        %v4787 = vsel %vm518, %v4782, 0
        %v4789 = vsel %vm518, %v4783, 0
        %v4791 = vsel %vm518, %v4781, 0
        %4793 = vmatprep.subr.mxu0 0.0
        %4794 = vmatpush1.msra.mxu0 0.0
        %4795 = vmatprep.subr.mxu0 0.0
        %4796 = vmatpush1.msra.mxu0 0.0
        %4797 = vmatprep.subr.mxu0 0.0
        %4798 = vmatpush1.msra.mxu0 0.0
        %4799 = vmatprep.subr.mxu0 0.0
        %4800 = vmatpush1.msra.mxu0 0.0
        %4801 = vmatprep.subr.mxu0 0.0
        %4802 = vmatpush1.msra.mxu0 0.0
        %4803 = vmatprep.subr.mxu0 0.0
        %4804 = vmatpush1.msra.mxu0 0.0
        %4805 = vmatprep.subr.mxu0 0.0
        %4806 = vmatpush1.msra.mxu0 0.0
        %4807 = vmatprep.subr.mxu0 0.0
        %4808 = vmatpush1.msra.mxu0 0.0
        %4809 = vmatprep.subr.mxu0 0.0
        %4810 = vmatpush1.msra.mxu0 0.0
        %4811 = vmatprep.subr.mxu0 0.0
        %4812 = vmatpush1.msra.mxu0 0.0
        %4813 = vmatprep.subr.mxu0 0.0
        %4814 = vmatpush1.msra.mxu0 0.0
        %4815 = vmatprep.subr.mxu0 0.0
        %4816 = vmatpush1.msra.mxu0 0.0
        %4817 = vmatprep.subr.mxu0 0.0
        %4818 = vmatpush1.msra.mxu0 0.0
        %4819 = vmatprep.subr.mxu0 0.0
        %4820 = vmatpush1.msra.mxu0 0.0
        %4821 = vmatprep.subr.mxu0 0.0
        %4822 = vmatpush1.msra.mxu0 0.0
        %4823 = vmatprep.subr.mxu0 %v4789
        %4824 = vmatpush1.msra.mxu0 %v4787
        %4825 = vmatprep.subr.mxu0 0.0
        %4826 = vmatpush2.msra.mxu0 0.0
        %4827 = vmatprep.subr.mxu0 0.0
        %4828 = vmatpush2.msra.mxu0 0.0
        %4829 = vmatprep.subr.mxu0 0.0
        %4830 = vmatpush2.msra.mxu0 0.0
        %4831 = vmatprep.subr.mxu0 0.0
        %4832 = vmatpush2.msra.mxu0 0.0
        %4833 = vmatprep.subr.mxu0 0.0
        %4834 = vmatpush2.msra.mxu0 0.0
        %4835 = vmatprep.subr.mxu0 0.0
        %4836 = vmatpush2.msra.mxu0 0.0
        %4837 = vmatprep.subr.mxu0 0.0
        %4838 = vmatpush2.msra.mxu0 0.0
        %4839 = vmatprep.subr.mxu0 0.0
        %4840 = vmatpush2.msra.mxu0 0.0
        %4841 = vmatprep.subr.mxu0 0.0
        %4842 = vmatpush2.msra.mxu0 0.0
        %4843 = vmatprep.subr.mxu0 0.0
        %4844 = vmatpush2.msra.mxu0 0.0
        %4845 = vmatprep.subr.mxu0 0.0
        %4846 = vmatpush2.msra.mxu0 0.0
        %4847 = vmatprep.subr.mxu0 0.0
        %4848 = vmatpush2.msra.mxu0 0.0
        %4849 = vmatprep.subr.mxu0 0.0
        %4850 = vmatpush2.msra.mxu0 0.0
        %4851 = vmatprep.subr.mxu0 0.0
        %4852 = vmatpush2.msra.mxu0 0.0
        %4853 = vmatprep.subr.mxu0 0.0
        %4854 = vmatpush2.msra.mxu0 0.0
        %4855 = vmatprep.subr.mxu0 0.0
        %4856 = vmatpush2.msra.mxu0 0.0
        %4857 = vmatprep.mubr.f32.mxu0 0.0
        %4858 = vmatmul.mubr.f32.gmra.mxu0 %v4785
        %v4859 = vpop.f32.mrf.mxu0
        %v4860 = vadd.f32 0.0, %v4859
        %v4861 = vpop.f32.mrf.mxu0
        %v4862 = vadd.f32 0.0, %v4861
        %4863 = vdwg.mxu0
        %4864 = vmatprep.subr.mxu0 0.0
        %4865 = vmatpush1.msra.mxu0 0.0
        %4866 = vmatprep.subr.mxu0 0.0
        %4867 = vmatpush1.msra.mxu0 0.0
        %4868 = vmatprep.subr.mxu0 0.0
        %4869 = vmatpush1.msra.mxu0 0.0
        %4870 = vmatprep.subr.mxu0 0.0
        %4871 = vmatpush1.msra.mxu0 0.0
        %4872 = vmatprep.subr.mxu0 0.0
        %4873 = vmatpush1.msra.mxu0 0.0
        %4874 = vmatprep.subr.mxu0 0.0
        %4875 = vmatpush1.msra.mxu0 0.0
        %4876 = vmatprep.subr.mxu0 0.0
        %4877 = vmatpush1.msra.mxu0 0.0
        %4878 = vmatprep.subr.mxu0 0.0
        %4879 = vmatpush1.msra.mxu0 0.0
        %4880 = vmatprep.subr.mxu0 0.0
        %4881 = vmatpush1.msra.mxu0 0.0
        %4882 = vmatprep.subr.mxu0 0.0
        %4883 = vmatpush1.msra.mxu0 0.0
        %4884 = vmatprep.subr.mxu0 0.0
        %4885 = vmatpush1.msra.mxu0 0.0
        %4886 = vmatprep.subr.mxu0 0.0
        %4887 = vmatpush1.msra.mxu0 0.0
        %4888 = vmatprep.subr.mxu0 0.0
        %4889 = vmatpush1.msra.mxu0 0.0
        %4890 = vmatprep.subr.mxu0 0.0
        %4891 = vmatpush1.msra.mxu0 0.0
        %4892 = vmatprep.subr.mxu0 0.0
        %4893 = vmatpush1.msra.mxu0 0.0
        %4894 = vmatprep.subr.mxu0 0.0
        %4895 = vmatpush1.msra.mxu0 %v4791
        %4896 = vmatprep.subr.mxu0 0.0
        %4897 = vmatpush2.msra.mxu0 0.0
        %4898 = vmatprep.subr.mxu0 0.0
        %4899 = vmatpush2.msra.mxu0 0.0
        %4900 = vmatprep.subr.mxu0 0.0
        %4901 = vmatpush2.msra.mxu0 0.0
        %4902 = vmatprep.subr.mxu0 0.0
        %4903 = vmatpush2.msra.mxu0 0.0
        %4904 = vmatprep.subr.mxu0 0.0
        %4905 = vmatpush2.msra.mxu0 0.0
        %4906 = vmatprep.subr.mxu0 0.0
        %4907 = vmatpush2.msra.mxu0 0.0
        %4908 = vmatprep.subr.mxu0 0.0
        %4909 = vmatpush2.msra.mxu0 0.0
        %4910 = vmatprep.subr.mxu0 0.0
        %4911 = vmatpush2.msra.mxu0 0.0
        %4912 = vmatprep.subr.mxu0 0.0
        %4913 = vmatpush2.msra.mxu0 0.0
        %4914 = vmatprep.subr.mxu0 0.0
        %4915 = vmatpush2.msra.mxu0 0.0
        %4916 = vmatprep.subr.mxu0 0.0
        %4917 = vmatpush2.msra.mxu0 0.0
        %4918 = vmatprep.subr.mxu0 0.0
        %4919 = vmatpush2.msra.mxu0 0.0
        %4920 = vmatprep.subr.mxu0 0.0
        %4921 = vmatpush2.msra.mxu0 0.0
        %4922 = vmatprep.subr.mxu0 0.0
        %4923 = vmatpush2.msra.mxu0 0.0
        %4924 = vmatprep.subr.mxu0 0.0
        %4925 = vmatpush2.msra.mxu0 0.0
        %4926 = vmatprep.subr.mxu0 0.0
        %4927 = vmatpush2.msra.mxu0 0.0
        %4928 = vmatprep.mubr.f32.mxu0 0.0
        %4929 = vmatmul.mubr.f32.gmra.mxu0 %v4785
        %v4930 = vpop.f32.mrf.mxu0
        %v4931 = vadd.f32 0.0, %v4930
        %v4932 = vpop.f32.mrf.mxu0
        %4933 = vdwg.mxu0
        %v4934 = vadd.f32 %v4767, %v4860
        %v4935 = vadd.f32 %v4768, %v4862
        %v4936 = vadd.f32 %v4769, %v4931
        %v4937 = vld [vmem:[#allocation2 + $0x4] sm:$0xff]
        %v4938 = vld [vmem:[#allocation2 + $0xc] sm:$0xf]
        %v4939 = vld [vmem:[%s1843] sm:$0xf]
        %v4942 = vcombine.high %v4937, %v4937
        %4943 = vrot.lane.b32.xlu0 %v4937, 109
        %v4944 = vpop.permute.xlu0 %4943
        %4945 = vrot.lane.b32.xlu0 %v4942, 109
        %v4946 = vpop.permute.xlu0 %4945
        %4947 = vrot.lane.b32.xlu0 %v4938, 109
        %v4948 = vpop.permute.xlu0 %4947
        %v4949 = vsel %vm1854, %v4944, %v4946
        %v4950 = vsel %vm1854, %v4946, %v4948
        %v4952 = vsel %vm514, %v4939, 0
        %v4954 = vsel %vm518, %v4949, 0
        %v4956 = vsel %vm518, %v4950, 0
        %v4958 = vsel %vm518, %v4948, 0
        %4960 = vmatprep.subr.mxu0 0.0
        %4961 = vmatpush1.msra.mxu0 0.0
        %4962 = vmatprep.subr.mxu0 0.0
        %4963 = vmatpush1.msra.mxu0 0.0
        %4964 = vmatprep.subr.mxu0 0.0
        %4965 = vmatpush1.msra.mxu0 0.0
        %4966 = vmatprep.subr.mxu0 0.0
        %4967 = vmatpush1.msra.mxu0 0.0
        %4968 = vmatprep.subr.mxu0 0.0
        %4969 = vmatpush1.msra.mxu0 0.0
        %4970 = vmatprep.subr.mxu0 0.0
        %4971 = vmatpush1.msra.mxu0 0.0
        %4972 = vmatprep.subr.mxu0 0.0
        %4973 = vmatpush1.msra.mxu0 0.0
        %4974 = vmatprep.subr.mxu0 0.0
        %4975 = vmatpush1.msra.mxu0 0.0
        %4976 = vmatprep.subr.mxu0 0.0
        %4977 = vmatpush1.msra.mxu0 0.0
        %4978 = vmatprep.subr.mxu0 0.0
        %4979 = vmatpush1.msra.mxu0 0.0
        %4980 = vmatprep.subr.mxu0 0.0
        %4981 = vmatpush1.msra.mxu0 0.0
        %4982 = vmatprep.subr.mxu0 0.0
        %4983 = vmatpush1.msra.mxu0 0.0
        %4984 = vmatprep.subr.mxu0 0.0
        %4985 = vmatpush1.msra.mxu0 0.0
        %4986 = vmatprep.subr.mxu0 0.0
        %4987 = vmatpush1.msra.mxu0 0.0
        %4988 = vmatprep.subr.mxu0 0.0
        %4989 = vmatpush1.msra.mxu0 0.0
        %4990 = vmatprep.subr.mxu0 %v4956
        %4991 = vmatpush1.msra.mxu0 %v4954
        %4992 = vmatprep.subr.mxu0 0.0
        %4993 = vmatpush2.msra.mxu0 0.0
        %4994 = vmatprep.subr.mxu0 0.0
        %4995 = vmatpush2.msra.mxu0 0.0
        %4996 = vmatprep.subr.mxu0 0.0
        %4997 = vmatpush2.msra.mxu0 0.0
        %4998 = vmatprep.subr.mxu0 0.0
        %4999 = vmatpush2.msra.mxu0 0.0
        %5000 = vmatprep.subr.mxu0 0.0
        %5001 = vmatpush2.msra.mxu0 0.0
        %5002 = vmatprep.subr.mxu0 0.0
        %5003 = vmatpush2.msra.mxu0 0.0
        %5004 = vmatprep.subr.mxu0 0.0
        %5005 = vmatpush2.msra.mxu0 0.0
        %5006 = vmatprep.subr.mxu0 0.0
        %5007 = vmatpush2.msra.mxu0 0.0
        %5008 = vmatprep.subr.mxu0 0.0
        %5009 = vmatpush2.msra.mxu0 0.0
        %5010 = vmatprep.subr.mxu0 0.0
        %5011 = vmatpush2.msra.mxu0 0.0
        %5012 = vmatprep.subr.mxu0 0.0
        %5013 = vmatpush2.msra.mxu0 0.0
        %5014 = vmatprep.subr.mxu0 0.0
        %5015 = vmatpush2.msra.mxu0 0.0
        %5016 = vmatprep.subr.mxu0 0.0
        %5017 = vmatpush2.msra.mxu0 0.0
        %5018 = vmatprep.subr.mxu0 0.0
        %5019 = vmatpush2.msra.mxu0 0.0
        %5020 = vmatprep.subr.mxu0 0.0
        %5021 = vmatpush2.msra.mxu0 0.0
        %5022 = vmatprep.subr.mxu0 0.0
        %5023 = vmatpush2.msra.mxu0 0.0
        %5024 = vmatprep.mubr.f32.mxu0 0.0
        %5025 = vmatmul.mubr.f32.gmra.mxu0 %v4952
        %v5026 = vpop.f32.mrf.mxu0
        %v5027 = vadd.f32 0.0, %v5026
        %v5028 = vpop.f32.mrf.mxu0
        %v5029 = vadd.f32 0.0, %v5028
        %5030 = vdwg.mxu0
        %5031 = vmatprep.subr.mxu0 0.0
        %5032 = vmatpush1.msra.mxu0 0.0
        %5033 = vmatprep.subr.mxu0 0.0
        %5034 = vmatpush1.msra.mxu0 0.0
        %5035 = vmatprep.subr.mxu0 0.0
        %5036 = vmatpush1.msra.mxu0 0.0
        %5037 = vmatprep.subr.mxu0 0.0
        %5038 = vmatpush1.msra.mxu0 0.0
        %5039 = vmatprep.subr.mxu0 0.0
        %5040 = vmatpush1.msra.mxu0 0.0
        %5041 = vmatprep.subr.mxu0 0.0
        %5042 = vmatpush1.msra.mxu0 0.0
        %5043 = vmatprep.subr.mxu0 0.0
        %5044 = vmatpush1.msra.mxu0 0.0
        %5045 = vmatprep.subr.mxu0 0.0
        %5046 = vmatpush1.msra.mxu0 0.0
        %5047 = vmatprep.subr.mxu0 0.0
        %5048 = vmatpush1.msra.mxu0 0.0
        %5049 = vmatprep.subr.mxu0 0.0
        %5050 = vmatpush1.msra.mxu0 0.0
        %5051 = vmatprep.subr.mxu0 0.0
        %5052 = vmatpush1.msra.mxu0 0.0
        %5053 = vmatprep.subr.mxu0 0.0
        %5054 = vmatpush1.msra.mxu0 0.0
        %5055 = vmatprep.subr.mxu0 0.0
        %5056 = vmatpush1.msra.mxu0 0.0
        %5057 = vmatprep.subr.mxu0 0.0
        %5058 = vmatpush1.msra.mxu0 0.0
        %5059 = vmatprep.subr.mxu0 0.0
        %5060 = vmatpush1.msra.mxu0 0.0
        %5061 = vmatprep.subr.mxu0 0.0
        %5062 = vmatpush1.msra.mxu0 %v4958
        %5063 = vmatprep.subr.mxu0 0.0
        %5064 = vmatpush2.msra.mxu0 0.0
        %5065 = vmatprep.subr.mxu0 0.0
        %5066 = vmatpush2.msra.mxu0 0.0
        %5067 = vmatprep.subr.mxu0 0.0
        %5068 = vmatpush2.msra.mxu0 0.0
        %5069 = vmatprep.subr.mxu0 0.0
        %5070 = vmatpush2.msra.mxu0 0.0
        %5071 = vmatprep.subr.mxu0 0.0
        %5072 = vmatpush2.msra.mxu0 0.0
        %5073 = vmatprep.subr.mxu0 0.0
        %5074 = vmatpush2.msra.mxu0 0.0
        %5075 = vmatprep.subr.mxu0 0.0
        %5076 = vmatpush2.msra.mxu0 0.0
        %5077 = vmatprep.subr.mxu0 0.0
        %5078 = vmatpush2.msra.mxu0 0.0
        %5079 = vmatprep.subr.mxu0 0.0
        %5080 = vmatpush2.msra.mxu0 0.0
        %5081 = vmatprep.subr.mxu0 0.0
        %5082 = vmatpush2.msra.mxu0 0.0
        %5083 = vmatprep.subr.mxu0 0.0
        %5084 = vmatpush2.msra.mxu0 0.0
        %5085 = vmatprep.subr.mxu0 0.0
        %5086 = vmatpush2.msra.mxu0 0.0
        %5087 = vmatprep.subr.mxu0 0.0
        %5088 = vmatpush2.msra.mxu0 0.0
        %5089 = vmatprep.subr.mxu0 0.0
        %5090 = vmatpush2.msra.mxu0 0.0
        %5091 = vmatprep.subr.mxu0 0.0
        %5092 = vmatpush2.msra.mxu0 0.0
        %5093 = vmatprep.subr.mxu0 0.0
        %5094 = vmatpush2.msra.mxu0 0.0
        %5095 = vmatprep.mubr.f32.mxu0 0.0
        %5096 = vmatmul.mubr.f32.gmra.mxu0 %v4952
        %v5097 = vpop.f32.mrf.mxu0
        %v5098 = vadd.f32 0.0, %v5097
        %v5099 = vpop.f32.mrf.mxu0
        %5100 = vdwg.mxu0
        %v5101 = vadd.f32 %v4934, %v5027
        %v5102 = vadd.f32 %v4935, %v5029
        %v5103 = vadd.f32 %v4936, %v5098
        %v5104 = vld [vmem:[%s8] sm:$0xf]
        %v5105 = vld [vmem:[%s9] sm:$0xf]
        %5107 = vset.pattern.permute.xlu0 0
        %5108 = vperm.xlu0 %5107, %v5104
        %v5109 = vpop.permute.xlu0 %5108
        %v5111 = vmul.f32 %v5101, %v5109
        %v5112 = vmul.f32 %v5102, %v5109
        %v5113 = vmul.f32 %v5103, %v5109
        %5115 = vset.pattern.permute.xlu0 0
        %5116 = vperm.xlu0 %5115, %v5105
        %v5117 = vpop.permute.xlu0 %5116
        %v5119 = vadd.f32 %v5111, %v5117
        %v5120 = vadd.f32 %v5112, %v5117
        %v5121 = vadd.f32 %v5113, %v5117
        %v5122 = vmax.f32 %v5119, 0.0
        %v5123 = vmax.f32 %v5120, 0.0
        %v5124 = vmax.f32 %v5121, 0.0
        %v5125 = vmul.f32 %v5122, %v475
        %v5126 = vmul.f32 %v5123, %v479
        %v5127 = vmul.f32 %v5124, %v483
        %v5130 = vcombine.low %v5125, %v5126
        %5132 = vst [vmem:[#allocation2 + $0x4] sm:$0xff] %v5130
        %5133 = vst.msk [vmem:[#allocation2 + $0xc] sm:$0xf] %vm435, %v5127
        %v5134 = vld [vmem:[#allocation2] sm:$0xff]
        %v5135 = vld [vmem:[#allocation2 + $0x8] sm:$0xff]
        %v5136 = vld [vmem:[%s4] sm:$0xf]
        %v5137 = vld [vmem:[%s2043] sm:$0xf]
        %v5140 = vcombine.high %v5134, %v5134
        %v5141 = vcombine.high %v5135, %v5135
        %5142 = vrot.lane.b32.xlu0 %v5134, 18
        %v5143 = vpop.permute.xlu0 %5142
        %5144 = vrot.lane.b32.xlu0 %v5140, 18
        %v5145 = vpop.permute.xlu0 %5144
        %5146 = vrot.lane.b32.xlu0 %v5135, 18
        %v5147 = vpop.permute.xlu0 %5146
        %5148 = vrot.lane.b32.xlu0 %v5141, 18
        %v5149 = vpop.permute.xlu0 %5148
        %v5150 = vsel %vm510, %v5143, %v5145
        %v5151 = vsel %vm510, %v5145, %v5147
        %v5152 = vsel %vm510, %v5147, %v5149
        %v5154 = vsel %vm514, %v5137, 0
        %v5156 = vsel %vm518, %v5150, 0
        %v5158 = vsel %vm518, %v5151, 0
        %v5160 = vsel %vm518, %v5152, 0
        %5162 = vmatprep.subr.mxu0 0.0
        %5163 = vmatpush1.msra.mxu0 0.0
        %5164 = vmatprep.subr.mxu0 0.0
        %5165 = vmatpush1.msra.mxu0 0.0
        %5166 = vmatprep.subr.mxu0 0.0
        %5167 = vmatpush1.msra.mxu0 0.0
        %5168 = vmatprep.subr.mxu0 0.0
        %5169 = vmatpush1.msra.mxu0 0.0
        %5170 = vmatprep.subr.mxu0 0.0
        %5171 = vmatpush1.msra.mxu0 0.0
        %5172 = vmatprep.subr.mxu0 0.0
        %5173 = vmatpush1.msra.mxu0 0.0
        %5174 = vmatprep.subr.mxu0 0.0
        %5175 = vmatpush1.msra.mxu0 0.0
        %5176 = vmatprep.subr.mxu0 0.0
        %5177 = vmatpush1.msra.mxu0 0.0
        %5178 = vmatprep.subr.mxu0 0.0
        %5179 = vmatpush1.msra.mxu0 0.0
        %5180 = vmatprep.subr.mxu0 0.0
        %5181 = vmatpush1.msra.mxu0 0.0
        %5182 = vmatprep.subr.mxu0 0.0
        %5183 = vmatpush1.msra.mxu0 0.0
        %5184 = vmatprep.subr.mxu0 0.0
        %5185 = vmatpush1.msra.mxu0 0.0
        %5186 = vmatprep.subr.mxu0 0.0
        %5187 = vmatpush1.msra.mxu0 0.0
        %5188 = vmatprep.subr.mxu0 0.0
        %5189 = vmatpush1.msra.mxu0 0.0
        %5190 = vmatprep.subr.mxu0 0.0
        %5191 = vmatpush1.msra.mxu0 0.0
        %5192 = vmatprep.subr.mxu0 %v5158
        %5193 = vmatpush1.msra.mxu0 %v5156
        %5194 = vmatprep.subr.mxu0 0.0
        %5195 = vmatpush2.msra.mxu0 0.0
        %5196 = vmatprep.subr.mxu0 0.0
        %5197 = vmatpush2.msra.mxu0 0.0
        %5198 = vmatprep.subr.mxu0 0.0
        %5199 = vmatpush2.msra.mxu0 0.0
        %5200 = vmatprep.subr.mxu0 0.0
        %5201 = vmatpush2.msra.mxu0 0.0
        %5202 = vmatprep.subr.mxu0 0.0
        %5203 = vmatpush2.msra.mxu0 0.0
        %5204 = vmatprep.subr.mxu0 0.0
        %5205 = vmatpush2.msra.mxu0 0.0
        %5206 = vmatprep.subr.mxu0 0.0
        %5207 = vmatpush2.msra.mxu0 0.0
        %5208 = vmatprep.subr.mxu0 0.0
        %5209 = vmatpush2.msra.mxu0 0.0
        %5210 = vmatprep.subr.mxu0 0.0
        %5211 = vmatpush2.msra.mxu0 0.0
        %5212 = vmatprep.subr.mxu0 0.0
        %5213 = vmatpush2.msra.mxu0 0.0
        %5214 = vmatprep.subr.mxu0 0.0
        %5215 = vmatpush2.msra.mxu0 0.0
        %5216 = vmatprep.subr.mxu0 0.0
        %5217 = vmatpush2.msra.mxu0 0.0
        %5218 = vmatprep.subr.mxu0 0.0
        %5219 = vmatpush2.msra.mxu0 0.0
        %5220 = vmatprep.subr.mxu0 0.0
        %5221 = vmatpush2.msra.mxu0 0.0
        %5222 = vmatprep.subr.mxu0 0.0
        %5223 = vmatpush2.msra.mxu0 0.0
        %5224 = vmatprep.subr.mxu0 0.0
        %5225 = vmatpush2.msra.mxu0 0.0
        %5226 = vmatprep.mubr.f32.mxu0 0.0
        %5227 = vmatmul.mubr.f32.gmra.mxu0 %v5154
        %v5228 = vpop.f32.mrf.mxu0
        %v5229 = vadd.f32 0.0, %v5228
        %v5230 = vpop.f32.mrf.mxu0
        %v5231 = vadd.f32 0.0, %v5230
        %5232 = vdwg.mxu0
        %5233 = vmatprep.subr.mxu0 0.0
        %5234 = vmatpush1.msra.mxu0 0.0
        %5235 = vmatprep.subr.mxu0 0.0
        %5236 = vmatpush1.msra.mxu0 0.0
        %5237 = vmatprep.subr.mxu0 0.0
        %5238 = vmatpush1.msra.mxu0 0.0
        %5239 = vmatprep.subr.mxu0 0.0
        %5240 = vmatpush1.msra.mxu0 0.0
        %5241 = vmatprep.subr.mxu0 0.0
        %5242 = vmatpush1.msra.mxu0 0.0
        %5243 = vmatprep.subr.mxu0 0.0
        %5244 = vmatpush1.msra.mxu0 0.0
        %5245 = vmatprep.subr.mxu0 0.0
        %5246 = vmatpush1.msra.mxu0 0.0
        %5247 = vmatprep.subr.mxu0 0.0
        %5248 = vmatpush1.msra.mxu0 0.0
        %5249 = vmatprep.subr.mxu0 0.0
        %5250 = vmatpush1.msra.mxu0 0.0
        %5251 = vmatprep.subr.mxu0 0.0
        %5252 = vmatpush1.msra.mxu0 0.0
        %5253 = vmatprep.subr.mxu0 0.0
        %5254 = vmatpush1.msra.mxu0 0.0
        %5255 = vmatprep.subr.mxu0 0.0
        %5256 = vmatpush1.msra.mxu0 0.0
        %5257 = vmatprep.subr.mxu0 0.0
        %5258 = vmatpush1.msra.mxu0 0.0
        %5259 = vmatprep.subr.mxu0 0.0
        %5260 = vmatpush1.msra.mxu0 0.0
        %5261 = vmatprep.subr.mxu0 0.0
        %5262 = vmatpush1.msra.mxu0 0.0
        %5263 = vmatprep.subr.mxu0 0.0
        %5264 = vmatpush1.msra.mxu0 %v5160
        %5265 = vmatprep.subr.mxu0 0.0
        %5266 = vmatpush2.msra.mxu0 0.0
        %5267 = vmatprep.subr.mxu0 0.0
        %5268 = vmatpush2.msra.mxu0 0.0
        %5269 = vmatprep.subr.mxu0 0.0
        %5270 = vmatpush2.msra.mxu0 0.0
        %5271 = vmatprep.subr.mxu0 0.0
        %5272 = vmatpush2.msra.mxu0 0.0
        %5273 = vmatprep.subr.mxu0 0.0
        %5274 = vmatpush2.msra.mxu0 0.0
        %5275 = vmatprep.subr.mxu0 0.0
        %5276 = vmatpush2.msra.mxu0 0.0
        %5277 = vmatprep.subr.mxu0 0.0
        %5278 = vmatpush2.msra.mxu0 0.0
        %5279 = vmatprep.subr.mxu0 0.0
        %5280 = vmatpush2.msra.mxu0 0.0
        %5281 = vmatprep.subr.mxu0 0.0
        %5282 = vmatpush2.msra.mxu0 0.0
        %5283 = vmatprep.subr.mxu0 0.0
        %5284 = vmatpush2.msra.mxu0 0.0
        %5285 = vmatprep.subr.mxu0 0.0
        %5286 = vmatpush2.msra.mxu0 0.0
        %5287 = vmatprep.subr.mxu0 0.0
        %5288 = vmatpush2.msra.mxu0 0.0
        %5289 = vmatprep.subr.mxu0 0.0
        %5290 = vmatpush2.msra.mxu0 0.0
        %5291 = vmatprep.subr.mxu0 0.0
        %5292 = vmatpush2.msra.mxu0 0.0
        %5293 = vmatprep.subr.mxu0 0.0
        %5294 = vmatpush2.msra.mxu0 0.0
        %5295 = vmatprep.subr.mxu0 0.0
        %5296 = vmatpush2.msra.mxu0 0.0
        %5297 = vmatprep.mubr.f32.mxu0 0.0
        %5298 = vmatmul.mubr.f32.gmra.mxu0 %v5154
        %v5299 = vpop.f32.mrf.mxu0
        %v5300 = vadd.f32 0.0, %v5299
        %v5301 = vpop.f32.mrf.mxu0
        %5302 = vdwg.mxu0
        %5303 = vrot.lane.b32.xlu0 %v5134, 19
        %v5304 = vpop.permute.xlu0 %5303
        %5305 = vrot.lane.b32.xlu0 %v5140, 19
        %v5306 = vpop.permute.xlu0 %5305
        %5307 = vrot.lane.b32.xlu0 %v5135, 19
        %v5308 = vpop.permute.xlu0 %5307
        %5309 = vrot.lane.b32.xlu0 %v5141, 19
        %v5310 = vpop.permute.xlu0 %5309
        %v5311 = vsel %vm674, %v5304, %v5306
        %v5312 = vsel %vm674, %v5306, %v5308
        %v5313 = vsel %vm674, %v5308, %v5310
        %v5315 = vsel %vm514, %v5136, 0
        %v5317 = vsel %vm518, %v5311, 0
        %v5319 = vsel %vm518, %v5312, 0
        %v5321 = vsel %vm518, %v5313, 0
        %5323 = vmatprep.subr.mxu0 0.0
        %5324 = vmatpush1.msra.mxu0 0.0
        %5325 = vmatprep.subr.mxu0 0.0
        %5326 = vmatpush1.msra.mxu0 0.0
        %5327 = vmatprep.subr.mxu0 0.0
        %5328 = vmatpush1.msra.mxu0 0.0
        %5329 = vmatprep.subr.mxu0 0.0
        %5330 = vmatpush1.msra.mxu0 0.0
        %5331 = vmatprep.subr.mxu0 0.0
        %5332 = vmatpush1.msra.mxu0 0.0
        %5333 = vmatprep.subr.mxu0 0.0
        %5334 = vmatpush1.msra.mxu0 0.0
        %5335 = vmatprep.subr.mxu0 0.0
        %5336 = vmatpush1.msra.mxu0 0.0
        %5337 = vmatprep.subr.mxu0 0.0
        %5338 = vmatpush1.msra.mxu0 0.0
        %5339 = vmatprep.subr.mxu0 0.0
        %5340 = vmatpush1.msra.mxu0 0.0
        %5341 = vmatprep.subr.mxu0 0.0
        %5342 = vmatpush1.msra.mxu0 0.0
        %5343 = vmatprep.subr.mxu0 0.0
        %5344 = vmatpush1.msra.mxu0 0.0
        %5345 = vmatprep.subr.mxu0 0.0
        %5346 = vmatpush1.msra.mxu0 0.0
        %5347 = vmatprep.subr.mxu0 0.0
        %5348 = vmatpush1.msra.mxu0 0.0
        %5349 = vmatprep.subr.mxu0 0.0
        %5350 = vmatpush1.msra.mxu0 0.0
        %5351 = vmatprep.subr.mxu0 0.0
        %5352 = vmatpush1.msra.mxu0 0.0
        %5353 = vmatprep.subr.mxu0 %v5319
        %5354 = vmatpush1.msra.mxu0 %v5317
        %5355 = vmatprep.subr.mxu0 0.0
        %5356 = vmatpush2.msra.mxu0 0.0
        %5357 = vmatprep.subr.mxu0 0.0
        %5358 = vmatpush2.msra.mxu0 0.0
        %5359 = vmatprep.subr.mxu0 0.0
        %5360 = vmatpush2.msra.mxu0 0.0
        %5361 = vmatprep.subr.mxu0 0.0
        %5362 = vmatpush2.msra.mxu0 0.0
        %5363 = vmatprep.subr.mxu0 0.0
        %5364 = vmatpush2.msra.mxu0 0.0
        %5365 = vmatprep.subr.mxu0 0.0
        %5366 = vmatpush2.msra.mxu0 0.0
        %5367 = vmatprep.subr.mxu0 0.0
        %5368 = vmatpush2.msra.mxu0 0.0
        %5369 = vmatprep.subr.mxu0 0.0
        %5370 = vmatpush2.msra.mxu0 0.0
        %5371 = vmatprep.subr.mxu0 0.0
        %5372 = vmatpush2.msra.mxu0 0.0
        %5373 = vmatprep.subr.mxu0 0.0
        %5374 = vmatpush2.msra.mxu0 0.0
        %5375 = vmatprep.subr.mxu0 0.0
        %5376 = vmatpush2.msra.mxu0 0.0
        %5377 = vmatprep.subr.mxu0 0.0
        %5378 = vmatpush2.msra.mxu0 0.0
        %5379 = vmatprep.subr.mxu0 0.0
        %5380 = vmatpush2.msra.mxu0 0.0
        %5381 = vmatprep.subr.mxu0 0.0
        %5382 = vmatpush2.msra.mxu0 0.0
        %5383 = vmatprep.subr.mxu0 0.0
        %5384 = vmatpush2.msra.mxu0 0.0
        %5385 = vmatprep.subr.mxu0 0.0
        %5386 = vmatpush2.msra.mxu0 0.0
        %5387 = vmatprep.mubr.f32.mxu0 0.0
        %5388 = vmatmul.mubr.f32.gmra.mxu0 %v5315
        %v5389 = vpop.f32.mrf.mxu0
        %v5390 = vadd.f32 %v5229, %v5389
        %v5391 = vpop.f32.mrf.mxu0
        %v5392 = vadd.f32 %v5231, %v5391
        %5393 = vdwg.mxu0
        %5394 = vmatprep.subr.mxu0 0.0
        %5395 = vmatpush1.msra.mxu0 0.0
        %5396 = vmatprep.subr.mxu0 0.0
        %5397 = vmatpush1.msra.mxu0 0.0
        %5398 = vmatprep.subr.mxu0 0.0
        %5399 = vmatpush1.msra.mxu0 0.0
        %5400 = vmatprep.subr.mxu0 0.0
        %5401 = vmatpush1.msra.mxu0 0.0
        %5402 = vmatprep.subr.mxu0 0.0
        %5403 = vmatpush1.msra.mxu0 0.0
        %5404 = vmatprep.subr.mxu0 0.0
        %5405 = vmatpush1.msra.mxu0 0.0
        %5406 = vmatprep.subr.mxu0 0.0
        %5407 = vmatpush1.msra.mxu0 0.0
        %5408 = vmatprep.subr.mxu0 0.0
        %5409 = vmatpush1.msra.mxu0 0.0
        %5410 = vmatprep.subr.mxu0 0.0
        %5411 = vmatpush1.msra.mxu0 0.0
        %5412 = vmatprep.subr.mxu0 0.0
        %5413 = vmatpush1.msra.mxu0 0.0
        %5414 = vmatprep.subr.mxu0 0.0
        %5415 = vmatpush1.msra.mxu0 0.0
        %5416 = vmatprep.subr.mxu0 0.0
        %5417 = vmatpush1.msra.mxu0 0.0
        %5418 = vmatprep.subr.mxu0 0.0
        %5419 = vmatpush1.msra.mxu0 0.0
        %5420 = vmatprep.subr.mxu0 0.0
        %5421 = vmatpush1.msra.mxu0 0.0
        %5422 = vmatprep.subr.mxu0 0.0
        %5423 = vmatpush1.msra.mxu0 0.0
        %5424 = vmatprep.subr.mxu0 0.0
        %5425 = vmatpush1.msra.mxu0 %v5321
        %5426 = vmatprep.subr.mxu0 0.0
        %5427 = vmatpush2.msra.mxu0 0.0
        %5428 = vmatprep.subr.mxu0 0.0
        %5429 = vmatpush2.msra.mxu0 0.0
        %5430 = vmatprep.subr.mxu0 0.0
        %5431 = vmatpush2.msra.mxu0 0.0
        %5432 = vmatprep.subr.mxu0 0.0
        %5433 = vmatpush2.msra.mxu0 0.0
        %5434 = vmatprep.subr.mxu0 0.0
        %5435 = vmatpush2.msra.mxu0 0.0
        %5436 = vmatprep.subr.mxu0 0.0
        %5437 = vmatpush2.msra.mxu0 0.0
        %5438 = vmatprep.subr.mxu0 0.0
        %5439 = vmatpush2.msra.mxu0 0.0
        %5440 = vmatprep.subr.mxu0 0.0
        %5441 = vmatpush2.msra.mxu0 0.0
        %5442 = vmatprep.subr.mxu0 0.0
        %5443 = vmatpush2.msra.mxu0 0.0
        %5444 = vmatprep.subr.mxu0 0.0
        %5445 = vmatpush2.msra.mxu0 0.0
        %5446 = vmatprep.subr.mxu0 0.0
        %5447 = vmatpush2.msra.mxu0 0.0
        %5448 = vmatprep.subr.mxu0 0.0
        %5449 = vmatpush2.msra.mxu0 0.0
        %5450 = vmatprep.subr.mxu0 0.0
        %5451 = vmatpush2.msra.mxu0 0.0
        %5452 = vmatprep.subr.mxu0 0.0
        %5453 = vmatpush2.msra.mxu0 0.0
        %5454 = vmatprep.subr.mxu0 0.0
        %5455 = vmatpush2.msra.mxu0 0.0
        %5456 = vmatprep.subr.mxu0 0.0
        %5457 = vmatpush2.msra.mxu0 0.0
        %5458 = vmatprep.mubr.f32.mxu0 0.0
        %5459 = vmatmul.mubr.f32.gmra.mxu0 %v5315
        %v5460 = vpop.f32.mrf.mxu0
        %v5461 = vadd.f32 %v5300, %v5460
        %v5462 = vpop.f32.mrf.mxu0
        %5463 = vdwg.mxu0
        %v5464 = vld [vmem:[#allocation2] sm:$0xff]
        %v5465 = vld [vmem:[#allocation2 + $0x8] sm:$0xff]
        %v5466 = vld [vmem:[%s2373] sm:$0xf]
        %v5469 = vcombine.high %v5464, %v5464
        %v5470 = vcombine.high %v5465, %v5465
        %5471 = vrot.lane.b32.xlu0 %v5464, 17
        %v5472 = vpop.permute.xlu0 %5471
        %5473 = vrot.lane.b32.xlu0 %v5469, 17
        %v5474 = vpop.permute.xlu0 %5473
        %5475 = vrot.lane.b32.xlu0 %v5465, 17
        %v5476 = vpop.permute.xlu0 %5475
        %5477 = vrot.lane.b32.xlu0 %v5470, 17
        %v5478 = vpop.permute.xlu0 %5477
        %v5479 = vsel %vm844, %v5472, %v5474
        %v5480 = vsel %vm844, %v5474, %v5476
        %v5481 = vsel %vm844, %v5476, %v5478
        %v5483 = vsel %vm514, %v5466, 0
        %v5485 = vsel %vm518, %v5479, 0
        %v5487 = vsel %vm518, %v5480, 0
        %v5489 = vsel %vm518, %v5481, 0
        %5491 = vmatprep.subr.mxu0 0.0
        %5492 = vmatpush1.msra.mxu0 0.0
        %5493 = vmatprep.subr.mxu0 0.0
        %5494 = vmatpush1.msra.mxu0 0.0
        %5495 = vmatprep.subr.mxu0 0.0
        %5496 = vmatpush1.msra.mxu0 0.0
        %5497 = vmatprep.subr.mxu0 0.0
        %5498 = vmatpush1.msra.mxu0 0.0
        %5499 = vmatprep.subr.mxu0 0.0
        %5500 = vmatpush1.msra.mxu0 0.0
        %5501 = vmatprep.subr.mxu0 0.0
        %5502 = vmatpush1.msra.mxu0 0.0
        %5503 = vmatprep.subr.mxu0 0.0
        %5504 = vmatpush1.msra.mxu0 0.0
        %5505 = vmatprep.subr.mxu0 0.0
        %5506 = vmatpush1.msra.mxu0 0.0
        %5507 = vmatprep.subr.mxu0 0.0
        %5508 = vmatpush1.msra.mxu0 0.0
        %5509 = vmatprep.subr.mxu0 0.0
        %5510 = vmatpush1.msra.mxu0 0.0
        %5511 = vmatprep.subr.mxu0 0.0
        %5512 = vmatpush1.msra.mxu0 0.0
        %5513 = vmatprep.subr.mxu0 0.0
        %5514 = vmatpush1.msra.mxu0 0.0
        %5515 = vmatprep.subr.mxu0 0.0
        %5516 = vmatpush1.msra.mxu0 0.0
        %5517 = vmatprep.subr.mxu0 0.0
        %5518 = vmatpush1.msra.mxu0 0.0
        %5519 = vmatprep.subr.mxu0 0.0
        %5520 = vmatpush1.msra.mxu0 0.0
        %5521 = vmatprep.subr.mxu0 %v5487
        %5522 = vmatpush1.msra.mxu0 %v5485
        %5523 = vmatprep.subr.mxu0 0.0
        %5524 = vmatpush2.msra.mxu0 0.0
        %5525 = vmatprep.subr.mxu0 0.0
        %5526 = vmatpush2.msra.mxu0 0.0
        %5527 = vmatprep.subr.mxu0 0.0
        %5528 = vmatpush2.msra.mxu0 0.0
        %5529 = vmatprep.subr.mxu0 0.0
        %5530 = vmatpush2.msra.mxu0 0.0
        %5531 = vmatprep.subr.mxu0 0.0
        %5532 = vmatpush2.msra.mxu0 0.0
        %5533 = vmatprep.subr.mxu0 0.0
        %5534 = vmatpush2.msra.mxu0 0.0
        %5535 = vmatprep.subr.mxu0 0.0
        %5536 = vmatpush2.msra.mxu0 0.0
        %5537 = vmatprep.subr.mxu0 0.0
        %5538 = vmatpush2.msra.mxu0 0.0
        %5539 = vmatprep.subr.mxu0 0.0
        %5540 = vmatpush2.msra.mxu0 0.0
        %5541 = vmatprep.subr.mxu0 0.0
        %5542 = vmatpush2.msra.mxu0 0.0
        %5543 = vmatprep.subr.mxu0 0.0
        %5544 = vmatpush2.msra.mxu0 0.0
        %5545 = vmatprep.subr.mxu0 0.0
        %5546 = vmatpush2.msra.mxu0 0.0
        %5547 = vmatprep.subr.mxu0 0.0
        %5548 = vmatpush2.msra.mxu0 0.0
        %5549 = vmatprep.subr.mxu0 0.0
        %5550 = vmatpush2.msra.mxu0 0.0
        %5551 = vmatprep.subr.mxu0 0.0
        %5552 = vmatpush2.msra.mxu0 0.0
        %5553 = vmatprep.subr.mxu0 0.0
        %5554 = vmatpush2.msra.mxu0 0.0
        %5555 = vmatprep.mubr.f32.mxu0 0.0
        %5556 = vmatmul.mubr.f32.gmra.mxu0 %v5483
        %v5557 = vpop.f32.mrf.mxu0
        %v5558 = vadd.f32 0.0, %v5557
        %v5559 = vpop.f32.mrf.mxu0
        %v5560 = vadd.f32 0.0, %v5559
        %5561 = vdwg.mxu0
        %5562 = vmatprep.subr.mxu0 0.0
        %5563 = vmatpush1.msra.mxu0 0.0
        %5564 = vmatprep.subr.mxu0 0.0
        %5565 = vmatpush1.msra.mxu0 0.0
        %5566 = vmatprep.subr.mxu0 0.0
        %5567 = vmatpush1.msra.mxu0 0.0
        %5568 = vmatprep.subr.mxu0 0.0
        %5569 = vmatpush1.msra.mxu0 0.0
        %5570 = vmatprep.subr.mxu0 0.0
        %5571 = vmatpush1.msra.mxu0 0.0
        %5572 = vmatprep.subr.mxu0 0.0
        %5573 = vmatpush1.msra.mxu0 0.0
        %5574 = vmatprep.subr.mxu0 0.0
        %5575 = vmatpush1.msra.mxu0 0.0
        %5576 = vmatprep.subr.mxu0 0.0
        %5577 = vmatpush1.msra.mxu0 0.0
        %5578 = vmatprep.subr.mxu0 0.0
        %5579 = vmatpush1.msra.mxu0 0.0
        %5580 = vmatprep.subr.mxu0 0.0
        %5581 = vmatpush1.msra.mxu0 0.0
        %5582 = vmatprep.subr.mxu0 0.0
        %5583 = vmatpush1.msra.mxu0 0.0
        %5584 = vmatprep.subr.mxu0 0.0
        %5585 = vmatpush1.msra.mxu0 0.0
        %5586 = vmatprep.subr.mxu0 0.0
        %5587 = vmatpush1.msra.mxu0 0.0
        %5588 = vmatprep.subr.mxu0 0.0
        %5589 = vmatpush1.msra.mxu0 0.0
        %5590 = vmatprep.subr.mxu0 0.0
        %5591 = vmatpush1.msra.mxu0 0.0
        %5592 = vmatprep.subr.mxu0 0.0
        %5593 = vmatpush1.msra.mxu0 %v5489
        %5594 = vmatprep.subr.mxu0 0.0
        %5595 = vmatpush2.msra.mxu0 0.0
        %5596 = vmatprep.subr.mxu0 0.0
        %5597 = vmatpush2.msra.mxu0 0.0
        %5598 = vmatprep.subr.mxu0 0.0
        %5599 = vmatpush2.msra.mxu0 0.0
        %5600 = vmatprep.subr.mxu0 0.0
        %5601 = vmatpush2.msra.mxu0 0.0
        %5602 = vmatprep.subr.mxu0 0.0
        %5603 = vmatpush2.msra.mxu0 0.0
        %5604 = vmatprep.subr.mxu0 0.0
        %5605 = vmatpush2.msra.mxu0 0.0
        %5606 = vmatprep.subr.mxu0 0.0
        %5607 = vmatpush2.msra.mxu0 0.0
        %5608 = vmatprep.subr.mxu0 0.0
        %5609 = vmatpush2.msra.mxu0 0.0
        %5610 = vmatprep.subr.mxu0 0.0
        %5611 = vmatpush2.msra.mxu0 0.0
        %5612 = vmatprep.subr.mxu0 0.0
        %5613 = vmatpush2.msra.mxu0 0.0
        %5614 = vmatprep.subr.mxu0 0.0
        %5615 = vmatpush2.msra.mxu0 0.0
        %5616 = vmatprep.subr.mxu0 0.0
        %5617 = vmatpush2.msra.mxu0 0.0
        %5618 = vmatprep.subr.mxu0 0.0
        %5619 = vmatpush2.msra.mxu0 0.0
        %5620 = vmatprep.subr.mxu0 0.0
        %5621 = vmatpush2.msra.mxu0 0.0
        %5622 = vmatprep.subr.mxu0 0.0
        %5623 = vmatpush2.msra.mxu0 0.0
        %5624 = vmatprep.subr.mxu0 0.0
        %5625 = vmatpush2.msra.mxu0 0.0
        %5626 = vmatprep.mubr.f32.mxu0 0.0
        %5627 = vmatmul.mubr.f32.gmra.mxu0 %v5483
        %v5628 = vpop.f32.mrf.mxu0
        %v5629 = vadd.f32 0.0, %v5628
        %v5630 = vpop.f32.mrf.mxu0
        %5631 = vdwg.mxu0
        %v5632 = vadd.f32 %v5390, %v5558
        %v5633 = vadd.f32 %v5392, %v5560
        %v5634 = vadd.f32 %v5461, %v5629
        %v5635 = vld [vmem:[#allocation2] sm:$0xff]
        %v5636 = vld [vmem:[#allocation2 + $0x8] sm:$0xff]
        %v5637 = vld [vmem:[%s2545] sm:$0xf]
        %v5640 = vcombine.high %v5635, %v5635
        %v5641 = vcombine.high %v5636, %v5636
        %5642 = vrot.lane.b32.xlu0 %v5635, 1
        %v5643 = vpop.permute.xlu0 %5642
        %5644 = vrot.lane.b32.xlu0 %v5640, 1
        %v5645 = vpop.permute.xlu0 %5644
        %5646 = vrot.lane.b32.xlu0 %v5636, 1
        %v5647 = vpop.permute.xlu0 %5646
        %5648 = vrot.lane.b32.xlu0 %v5641, 1
        %v5649 = vpop.permute.xlu0 %5648
        %v5650 = vsel %vm1017, %v5643, %v5645
        %v5651 = vsel %vm1017, %v5645, %v5647
        %v5652 = vsel %vm1017, %v5647, %v5649
        %v5654 = vsel %vm514, %v5637, 0
        %v5656 = vsel %vm518, %v5650, 0
        %v5658 = vsel %vm518, %v5651, 0
        %v5660 = vsel %vm518, %v5652, 0
        %5662 = vmatprep.subr.mxu0 0.0
        %5663 = vmatpush1.msra.mxu0 0.0
        %5664 = vmatprep.subr.mxu0 0.0
        %5665 = vmatpush1.msra.mxu0 0.0
        %5666 = vmatprep.subr.mxu0 0.0
        %5667 = vmatpush1.msra.mxu0 0.0
        %5668 = vmatprep.subr.mxu0 0.0
        %5669 = vmatpush1.msra.mxu0 0.0
        %5670 = vmatprep.subr.mxu0 0.0
        %5671 = vmatpush1.msra.mxu0 0.0
        %5672 = vmatprep.subr.mxu0 0.0
        %5673 = vmatpush1.msra.mxu0 0.0
        %5674 = vmatprep.subr.mxu0 0.0
        %5675 = vmatpush1.msra.mxu0 0.0
        %5676 = vmatprep.subr.mxu0 0.0
        %5677 = vmatpush1.msra.mxu0 0.0
        %5678 = vmatprep.subr.mxu0 0.0
        %5679 = vmatpush1.msra.mxu0 0.0
        %5680 = vmatprep.subr.mxu0 0.0
        %5681 = vmatpush1.msra.mxu0 0.0
        %5682 = vmatprep.subr.mxu0 0.0
        %5683 = vmatpush1.msra.mxu0 0.0
        %5684 = vmatprep.subr.mxu0 0.0
        %5685 = vmatpush1.msra.mxu0 0.0
        %5686 = vmatprep.subr.mxu0 0.0
        %5687 = vmatpush1.msra.mxu0 0.0
        %5688 = vmatprep.subr.mxu0 0.0
        %5689 = vmatpush1.msra.mxu0 0.0
        %5690 = vmatprep.subr.mxu0 0.0
        %5691 = vmatpush1.msra.mxu0 0.0
        %5692 = vmatprep.subr.mxu0 %v5658
        %5693 = vmatpush1.msra.mxu0 %v5656
        %5694 = vmatprep.subr.mxu0 0.0
        %5695 = vmatpush2.msra.mxu0 0.0
        %5696 = vmatprep.subr.mxu0 0.0
        %5697 = vmatpush2.msra.mxu0 0.0
        %5698 = vmatprep.subr.mxu0 0.0
        %5699 = vmatpush2.msra.mxu0 0.0
        %5700 = vmatprep.subr.mxu0 0.0
        %5701 = vmatpush2.msra.mxu0 0.0
        %5702 = vmatprep.subr.mxu0 0.0
        %5703 = vmatpush2.msra.mxu0 0.0
        %5704 = vmatprep.subr.mxu0 0.0
        %5705 = vmatpush2.msra.mxu0 0.0
        %5706 = vmatprep.subr.mxu0 0.0
        %5707 = vmatpush2.msra.mxu0 0.0
        %5708 = vmatprep.subr.mxu0 0.0
        %5709 = vmatpush2.msra.mxu0 0.0
        %5710 = vmatprep.subr.mxu0 0.0
        %5711 = vmatpush2.msra.mxu0 0.0
        %5712 = vmatprep.subr.mxu0 0.0
        %5713 = vmatpush2.msra.mxu0 0.0
        %5714 = vmatprep.subr.mxu0 0.0
        %5715 = vmatpush2.msra.mxu0 0.0
        %5716 = vmatprep.subr.mxu0 0.0
        %5717 = vmatpush2.msra.mxu0 0.0
        %5718 = vmatprep.subr.mxu0 0.0
        %5719 = vmatpush2.msra.mxu0 0.0
        %5720 = vmatprep.subr.mxu0 0.0
        %5721 = vmatpush2.msra.mxu0 0.0
        %5722 = vmatprep.subr.mxu0 0.0
        %5723 = vmatpush2.msra.mxu0 0.0
        %5724 = vmatprep.subr.mxu0 0.0
        %5725 = vmatpush2.msra.mxu0 0.0
        %5726 = vmatprep.mubr.f32.mxu0 0.0
        %5727 = vmatmul.mubr.f32.gmra.mxu0 %v5654
        %v5728 = vpop.f32.mrf.mxu0
        %v5729 = vadd.f32 0.0, %v5728
        %v5730 = vpop.f32.mrf.mxu0
        %v5731 = vadd.f32 0.0, %v5730
        %5732 = vdwg.mxu0
        %5733 = vmatprep.subr.mxu0 0.0
        %5734 = vmatpush1.msra.mxu0 0.0
        %5735 = vmatprep.subr.mxu0 0.0
        %5736 = vmatpush1.msra.mxu0 0.0
        %5737 = vmatprep.subr.mxu0 0.0
        %5738 = vmatpush1.msra.mxu0 0.0
        %5739 = vmatprep.subr.mxu0 0.0
        %5740 = vmatpush1.msra.mxu0 0.0
        %5741 = vmatprep.subr.mxu0 0.0
        %5742 = vmatpush1.msra.mxu0 0.0
        %5743 = vmatprep.subr.mxu0 0.0
        %5744 = vmatpush1.msra.mxu0 0.0
        %5745 = vmatprep.subr.mxu0 0.0
        %5746 = vmatpush1.msra.mxu0 0.0
        %5747 = vmatprep.subr.mxu0 0.0
        %5748 = vmatpush1.msra.mxu0 0.0
        %5749 = vmatprep.subr.mxu0 0.0
        %5750 = vmatpush1.msra.mxu0 0.0
        %5751 = vmatprep.subr.mxu0 0.0
        %5752 = vmatpush1.msra.mxu0 0.0
        %5753 = vmatprep.subr.mxu0 0.0
        %5754 = vmatpush1.msra.mxu0 0.0
        %5755 = vmatprep.subr.mxu0 0.0
        %5756 = vmatpush1.msra.mxu0 0.0
        %5757 = vmatprep.subr.mxu0 0.0
        %5758 = vmatpush1.msra.mxu0 0.0
        %5759 = vmatprep.subr.mxu0 0.0
        %5760 = vmatpush1.msra.mxu0 0.0
        %5761 = vmatprep.subr.mxu0 0.0
        %5762 = vmatpush1.msra.mxu0 0.0
        %5763 = vmatprep.subr.mxu0 0.0
        %5764 = vmatpush1.msra.mxu0 %v5660
        %5765 = vmatprep.subr.mxu0 0.0
        %5766 = vmatpush2.msra.mxu0 0.0
        %5767 = vmatprep.subr.mxu0 0.0
        %5768 = vmatpush2.msra.mxu0 0.0
        %5769 = vmatprep.subr.mxu0 0.0
        %5770 = vmatpush2.msra.mxu0 0.0
        %5771 = vmatprep.subr.mxu0 0.0
        %5772 = vmatpush2.msra.mxu0 0.0
        %5773 = vmatprep.subr.mxu0 0.0
        %5774 = vmatpush2.msra.mxu0 0.0
        %5775 = vmatprep.subr.mxu0 0.0
        %5776 = vmatpush2.msra.mxu0 0.0
        %5777 = vmatprep.subr.mxu0 0.0
        %5778 = vmatpush2.msra.mxu0 0.0
        %5779 = vmatprep.subr.mxu0 0.0
        %5780 = vmatpush2.msra.mxu0 0.0
        %5781 = vmatprep.subr.mxu0 0.0
        %5782 = vmatpush2.msra.mxu0 0.0
        %5783 = vmatprep.subr.mxu0 0.0
        %5784 = vmatpush2.msra.mxu0 0.0
        %5785 = vmatprep.subr.mxu0 0.0
        %5786 = vmatpush2.msra.mxu0 0.0
        %5787 = vmatprep.subr.mxu0 0.0
        %5788 = vmatpush2.msra.mxu0 0.0
        %5789 = vmatprep.subr.mxu0 0.0
        %5790 = vmatpush2.msra.mxu0 0.0
        %5791 = vmatprep.subr.mxu0 0.0
        %5792 = vmatpush2.msra.mxu0 0.0
        %5793 = vmatprep.subr.mxu0 0.0
        %5794 = vmatpush2.msra.mxu0 0.0
        %5795 = vmatprep.subr.mxu0 0.0
        %5796 = vmatpush2.msra.mxu0 0.0
        %5797 = vmatprep.mubr.f32.mxu0 0.0
        %5798 = vmatmul.mubr.f32.gmra.mxu0 %v5654
        %v5799 = vpop.f32.mrf.mxu0
        %v5800 = vadd.f32 0.0, %v5799
        %v5801 = vpop.f32.mrf.mxu0
        %5802 = vdwg.mxu0
        %v5803 = vadd.f32 %v5632, %v5729
        %v5804 = vadd.f32 %v5633, %v5731
        %v5805 = vadd.f32 %v5634, %v5800
        %v5806 = vld [vmem:[#allocation2 + $0x4] sm:$0xff]
        %v5807 = vld [vmem:[#allocation2 + $0xc] sm:$0xf]
        %v5808 = vld [vmem:[%s2717] sm:$0xf]
        %v5811 = vcombine.high %v5806, %v5806
        %v5813 = vsel %vm514, %v5808, 0
        %v5815 = vsel %vm518, %v5806, 0
        %v5817 = vsel %vm518, %v5811, 0
        %v5819 = vsel %vm518, %v5807, 0
        %5821 = vmatprep.subr.mxu0 0.0
        %5822 = vmatpush1.msra.mxu0 0.0
        %5823 = vmatprep.subr.mxu0 0.0
        %5824 = vmatpush1.msra.mxu0 0.0
        %5825 = vmatprep.subr.mxu0 0.0
        %5826 = vmatpush1.msra.mxu0 0.0
        %5827 = vmatprep.subr.mxu0 0.0
        %5828 = vmatpush1.msra.mxu0 0.0
        %5829 = vmatprep.subr.mxu0 0.0
        %5830 = vmatpush1.msra.mxu0 0.0
        %5831 = vmatprep.subr.mxu0 0.0
        %5832 = vmatpush1.msra.mxu0 0.0
        %5833 = vmatprep.subr.mxu0 0.0
        %5834 = vmatpush1.msra.mxu0 0.0
        %5835 = vmatprep.subr.mxu0 0.0
        %5836 = vmatpush1.msra.mxu0 0.0
        %5837 = vmatprep.subr.mxu0 0.0
        %5838 = vmatpush1.msra.mxu0 0.0
        %5839 = vmatprep.subr.mxu0 0.0
        %5840 = vmatpush1.msra.mxu0 0.0
        %5841 = vmatprep.subr.mxu0 0.0
        %5842 = vmatpush1.msra.mxu0 0.0
        %5843 = vmatprep.subr.mxu0 0.0
        %5844 = vmatpush1.msra.mxu0 0.0
        %5845 = vmatprep.subr.mxu0 0.0
        %5846 = vmatpush1.msra.mxu0 0.0
        %5847 = vmatprep.subr.mxu0 0.0
        %5848 = vmatpush1.msra.mxu0 0.0
        %5849 = vmatprep.subr.mxu0 0.0
        %5850 = vmatpush1.msra.mxu0 0.0
        %5851 = vmatprep.subr.mxu0 %v5817
        %5852 = vmatpush1.msra.mxu0 %v5815
        %5853 = vmatprep.subr.mxu0 0.0
        %5854 = vmatpush2.msra.mxu0 0.0
        %5855 = vmatprep.subr.mxu0 0.0
        %5856 = vmatpush2.msra.mxu0 0.0
        %5857 = vmatprep.subr.mxu0 0.0
        %5858 = vmatpush2.msra.mxu0 0.0
        %5859 = vmatprep.subr.mxu0 0.0
        %5860 = vmatpush2.msra.mxu0 0.0
        %5861 = vmatprep.subr.mxu0 0.0
        %5862 = vmatpush2.msra.mxu0 0.0
        %5863 = vmatprep.subr.mxu0 0.0
        %5864 = vmatpush2.msra.mxu0 0.0
        %5865 = vmatprep.subr.mxu0 0.0
        %5866 = vmatpush2.msra.mxu0 0.0
        %5867 = vmatprep.subr.mxu0 0.0
        %5868 = vmatpush2.msra.mxu0 0.0
        %5869 = vmatprep.subr.mxu0 0.0
        %5870 = vmatpush2.msra.mxu0 0.0
        %5871 = vmatprep.subr.mxu0 0.0
        %5872 = vmatpush2.msra.mxu0 0.0
        %5873 = vmatprep.subr.mxu0 0.0
        %5874 = vmatpush2.msra.mxu0 0.0
        %5875 = vmatprep.subr.mxu0 0.0
        %5876 = vmatpush2.msra.mxu0 0.0
        %5877 = vmatprep.subr.mxu0 0.0
        %5878 = vmatpush2.msra.mxu0 0.0
        %5879 = vmatprep.subr.mxu0 0.0
        %5880 = vmatpush2.msra.mxu0 0.0
        %5881 = vmatprep.subr.mxu0 0.0
        %5882 = vmatpush2.msra.mxu0 0.0
        %5883 = vmatprep.subr.mxu0 0.0
        %5884 = vmatpush2.msra.mxu0 0.0
        %5885 = vmatprep.mubr.f32.mxu0 0.0
        %5886 = vmatmul.mubr.f32.gmra.mxu0 %v5813
        %v5887 = vpop.f32.mrf.mxu0
        %v5888 = vadd.f32 0.0, %v5887
        %v5889 = vpop.f32.mrf.mxu0
        %v5890 = vadd.f32 0.0, %v5889
        %5891 = vdwg.mxu0
        %5892 = vmatprep.subr.mxu0 0.0
        %5893 = vmatpush1.msra.mxu0 0.0
        %5894 = vmatprep.subr.mxu0 0.0
        %5895 = vmatpush1.msra.mxu0 0.0
        %5896 = vmatprep.subr.mxu0 0.0
        %5897 = vmatpush1.msra.mxu0 0.0
        %5898 = vmatprep.subr.mxu0 0.0
        %5899 = vmatpush1.msra.mxu0 0.0
        %5900 = vmatprep.subr.mxu0 0.0
        %5901 = vmatpush1.msra.mxu0 0.0
        %5902 = vmatprep.subr.mxu0 0.0
        %5903 = vmatpush1.msra.mxu0 0.0
        %5904 = vmatprep.subr.mxu0 0.0
        %5905 = vmatpush1.msra.mxu0 0.0
        %5906 = vmatprep.subr.mxu0 0.0
        %5907 = vmatpush1.msra.mxu0 0.0
        %5908 = vmatprep.subr.mxu0 0.0
        %5909 = vmatpush1.msra.mxu0 0.0
        %5910 = vmatprep.subr.mxu0 0.0
        %5911 = vmatpush1.msra.mxu0 0.0
        %5912 = vmatprep.subr.mxu0 0.0
        %5913 = vmatpush1.msra.mxu0 0.0
        %5914 = vmatprep.subr.mxu0 0.0
        %5915 = vmatpush1.msra.mxu0 0.0
        %5916 = vmatprep.subr.mxu0 0.0
        %5917 = vmatpush1.msra.mxu0 0.0
        %5918 = vmatprep.subr.mxu0 0.0
        %5919 = vmatpush1.msra.mxu0 0.0
        %5920 = vmatprep.subr.mxu0 0.0
        %5921 = vmatpush1.msra.mxu0 0.0
        %5922 = vmatprep.subr.mxu0 0.0
        %5923 = vmatpush1.msra.mxu0 %v5819
        %5924 = vmatprep.subr.mxu0 0.0
        %5925 = vmatpush2.msra.mxu0 0.0
        %5926 = vmatprep.subr.mxu0 0.0
        %5927 = vmatpush2.msra.mxu0 0.0
        %5928 = vmatprep.subr.mxu0 0.0
        %5929 = vmatpush2.msra.mxu0 0.0
        %5930 = vmatprep.subr.mxu0 0.0
        %5931 = vmatpush2.msra.mxu0 0.0
        %5932 = vmatprep.subr.mxu0 0.0
        %5933 = vmatpush2.msra.mxu0 0.0
        %5934 = vmatprep.subr.mxu0 0.0
        %5935 = vmatpush2.msra.mxu0 0.0
        %5936 = vmatprep.subr.mxu0 0.0
        %5937 = vmatpush2.msra.mxu0 0.0
        %5938 = vmatprep.subr.mxu0 0.0
        %5939 = vmatpush2.msra.mxu0 0.0
        %5940 = vmatprep.subr.mxu0 0.0
        %5941 = vmatpush2.msra.mxu0 0.0
        %5942 = vmatprep.subr.mxu0 0.0
        %5943 = vmatpush2.msra.mxu0 0.0
        %5944 = vmatprep.subr.mxu0 0.0
        %5945 = vmatpush2.msra.mxu0 0.0
        %5946 = vmatprep.subr.mxu0 0.0
        %5947 = vmatpush2.msra.mxu0 0.0
        %5948 = vmatprep.subr.mxu0 0.0
        %5949 = vmatpush2.msra.mxu0 0.0
        %5950 = vmatprep.subr.mxu0 0.0
        %5951 = vmatpush2.msra.mxu0 0.0
        %5952 = vmatprep.subr.mxu0 0.0
        %5953 = vmatpush2.msra.mxu0 0.0
        %5954 = vmatprep.subr.mxu0 0.0
        %5955 = vmatpush2.msra.mxu0 0.0
        %5956 = vmatprep.mubr.f32.mxu0 0.0
        %5957 = vmatmul.mubr.f32.gmra.mxu0 %v5813
        %v5958 = vpop.f32.mrf.mxu0
        %v5959 = vadd.f32 0.0, %v5958
        %v5960 = vpop.f32.mrf.mxu0
        %5961 = vdwg.mxu0
        %v5962 = vadd.f32 %v5803, %v5888
        %v5963 = vadd.f32 %v5804, %v5890
        %v5964 = vadd.f32 %v5805, %v5959
        %v5965 = vld [vmem:[#allocation2 + $0x4] sm:$0xff]
        %v5966 = vld [vmem:[#allocation2 + $0xc] sm:$0xf]
        %v5967 = vld [vmem:[%s2877] sm:$0xf]
        %v5970 = vcombine.high %v5965, %v5965
        %5971 = vrot.lane.b32.xlu0 %v5965, 127
        %v5972 = vpop.permute.xlu0 %5971
        %5973 = vrot.lane.b32.xlu0 %v5970, 127
        %v5974 = vpop.permute.xlu0 %5973
        %5975 = vrot.lane.b32.xlu0 %v5966, 127
        %v5976 = vpop.permute.xlu0 %5975
        %v5977 = vsel %vm1347, %v5972, %v5974
        %v5978 = vsel %vm1347, %v5974, %v5976
        %v5980 = vsel %vm514, %v5967, 0
        %v5982 = vsel %vm518, %v5977, 0
        %v5984 = vsel %vm518, %v5978, 0
        %v5986 = vsel %vm518, %v5976, 0
        %5988 = vmatprep.subr.mxu0 0.0
        %5989 = vmatpush1.msra.mxu0 0.0
        %5990 = vmatprep.subr.mxu0 0.0
        %5991 = vmatpush1.msra.mxu0 0.0
        %5992 = vmatprep.subr.mxu0 0.0
        %5993 = vmatpush1.msra.mxu0 0.0
        %5994 = vmatprep.subr.mxu0 0.0
        %5995 = vmatpush1.msra.mxu0 0.0
        %5996 = vmatprep.subr.mxu0 0.0
        %5997 = vmatpush1.msra.mxu0 0.0
        %5998 = vmatprep.subr.mxu0 0.0
        %5999 = vmatpush1.msra.mxu0 0.0
        %6000 = vmatprep.subr.mxu0 0.0
        %6001 = vmatpush1.msra.mxu0 0.0
        %6002 = vmatprep.subr.mxu0 0.0
        %6003 = vmatpush1.msra.mxu0 0.0
        %6004 = vmatprep.subr.mxu0 0.0
        %6005 = vmatpush1.msra.mxu0 0.0
        %6006 = vmatprep.subr.mxu0 0.0
        %6007 = vmatpush1.msra.mxu0 0.0
        %6008 = vmatprep.subr.mxu0 0.0
        %6009 = vmatpush1.msra.mxu0 0.0
        %6010 = vmatprep.subr.mxu0 0.0
        %6011 = vmatpush1.msra.mxu0 0.0
        %6012 = vmatprep.subr.mxu0 0.0
        %6013 = vmatpush1.msra.mxu0 0.0
        %6014 = vmatprep.subr.mxu0 0.0
        %6015 = vmatpush1.msra.mxu0 0.0
        %6016 = vmatprep.subr.mxu0 0.0
        %6017 = vmatpush1.msra.mxu0 0.0
        %6018 = vmatprep.subr.mxu0 %v5984
        %6019 = vmatpush1.msra.mxu0 %v5982
        %6020 = vmatprep.subr.mxu0 0.0
        %6021 = vmatpush2.msra.mxu0 0.0
        %6022 = vmatprep.subr.mxu0 0.0
        %6023 = vmatpush2.msra.mxu0 0.0
        %6024 = vmatprep.subr.mxu0 0.0
        %6025 = vmatpush2.msra.mxu0 0.0
        %6026 = vmatprep.subr.mxu0 0.0
        %6027 = vmatpush2.msra.mxu0 0.0
        %6028 = vmatprep.subr.mxu0 0.0
        %6029 = vmatpush2.msra.mxu0 0.0
        %6030 = vmatprep.subr.mxu0 0.0
        %6031 = vmatpush2.msra.mxu0 0.0
        %6032 = vmatprep.subr.mxu0 0.0
        %6033 = vmatpush2.msra.mxu0 0.0
        %6034 = vmatprep.subr.mxu0 0.0
        %6035 = vmatpush2.msra.mxu0 0.0
        %6036 = vmatprep.subr.mxu0 0.0
        %6037 = vmatpush2.msra.mxu0 0.0
        %6038 = vmatprep.subr.mxu0 0.0
        %6039 = vmatpush2.msra.mxu0 0.0
        %6040 = vmatprep.subr.mxu0 0.0
        %6041 = vmatpush2.msra.mxu0 0.0
        %6042 = vmatprep.subr.mxu0 0.0
        %6043 = vmatpush2.msra.mxu0 0.0
        %6044 = vmatprep.subr.mxu0 0.0
        %6045 = vmatpush2.msra.mxu0 0.0
        %6046 = vmatprep.subr.mxu0 0.0
        %6047 = vmatpush2.msra.mxu0 0.0
        %6048 = vmatprep.subr.mxu0 0.0
        %6049 = vmatpush2.msra.mxu0 0.0
        %6050 = vmatprep.subr.mxu0 0.0
        %6051 = vmatpush2.msra.mxu0 0.0
        %6052 = vmatprep.mubr.f32.mxu0 0.0
        %6053 = vmatmul.mubr.f32.gmra.mxu0 %v5980
        %v6054 = vpop.f32.mrf.mxu0
        %v6055 = vadd.f32 0.0, %v6054
        %v6056 = vpop.f32.mrf.mxu0
        %v6057 = vadd.f32 0.0, %v6056
        %6058 = vdwg.mxu0
        %6059 = vmatprep.subr.mxu0 0.0
        %6060 = vmatpush1.msra.mxu0 0.0
        %6061 = vmatprep.subr.mxu0 0.0
        %6062 = vmatpush1.msra.mxu0 0.0
        %6063 = vmatprep.subr.mxu0 0.0
        %6064 = vmatpush1.msra.mxu0 0.0
        %6065 = vmatprep.subr.mxu0 0.0
        %6066 = vmatpush1.msra.mxu0 0.0
        %6067 = vmatprep.subr.mxu0 0.0
        %6068 = vmatpush1.msra.mxu0 0.0
        %6069 = vmatprep.subr.mxu0 0.0
        %6070 = vmatpush1.msra.mxu0 0.0
        %6071 = vmatprep.subr.mxu0 0.0
        %6072 = vmatpush1.msra.mxu0 0.0
        %6073 = vmatprep.subr.mxu0 0.0
        %6074 = vmatpush1.msra.mxu0 0.0
        %6075 = vmatprep.subr.mxu0 0.0
        %6076 = vmatpush1.msra.mxu0 0.0
        %6077 = vmatprep.subr.mxu0 0.0
        %6078 = vmatpush1.msra.mxu0 0.0
        %6079 = vmatprep.subr.mxu0 0.0
        %6080 = vmatpush1.msra.mxu0 0.0
        %6081 = vmatprep.subr.mxu0 0.0
        %6082 = vmatpush1.msra.mxu0 0.0
        %6083 = vmatprep.subr.mxu0 0.0
        %6084 = vmatpush1.msra.mxu0 0.0
        %6085 = vmatprep.subr.mxu0 0.0
        %6086 = vmatpush1.msra.mxu0 0.0
        %6087 = vmatprep.subr.mxu0 0.0
        %6088 = vmatpush1.msra.mxu0 0.0
        %6089 = vmatprep.subr.mxu0 0.0
        %6090 = vmatpush1.msra.mxu0 %v5986
        %6091 = vmatprep.subr.mxu0 0.0
        %6092 = vmatpush2.msra.mxu0 0.0
        %6093 = vmatprep.subr.mxu0 0.0
        %6094 = vmatpush2.msra.mxu0 0.0
        %6095 = vmatprep.subr.mxu0 0.0
        %6096 = vmatpush2.msra.mxu0 0.0
        %6097 = vmatprep.subr.mxu0 0.0
        %6098 = vmatpush2.msra.mxu0 0.0
        %6099 = vmatprep.subr.mxu0 0.0
        %6100 = vmatpush2.msra.mxu0 0.0
        %6101 = vmatprep.subr.mxu0 0.0
        %6102 = vmatpush2.msra.mxu0 0.0
        %6103 = vmatprep.subr.mxu0 0.0
        %6104 = vmatpush2.msra.mxu0 0.0
        %6105 = vmatprep.subr.mxu0 0.0
        %6106 = vmatpush2.msra.mxu0 0.0
        %6107 = vmatprep.subr.mxu0 0.0
        %6108 = vmatpush2.msra.mxu0 0.0
        %6109 = vmatprep.subr.mxu0 0.0
        %6110 = vmatpush2.msra.mxu0 0.0
        %6111 = vmatprep.subr.mxu0 0.0
        %6112 = vmatpush2.msra.mxu0 0.0
        %6113 = vmatprep.subr.mxu0 0.0
        %6114 = vmatpush2.msra.mxu0 0.0
        %6115 = vmatprep.subr.mxu0 0.0
        %6116 = vmatpush2.msra.mxu0 0.0
        %6117 = vmatprep.subr.mxu0 0.0
        %6118 = vmatpush2.msra.mxu0 0.0
        %6119 = vmatprep.subr.mxu0 0.0
        %6120 = vmatpush2.msra.mxu0 0.0
        %6121 = vmatprep.subr.mxu0 0.0
        %6122 = vmatpush2.msra.mxu0 0.0
        %6123 = vmatprep.mubr.f32.mxu0 0.0
        %6124 = vmatmul.mubr.f32.gmra.mxu0 %v5980
        %v6125 = vpop.f32.mrf.mxu0
        %v6126 = vadd.f32 0.0, %v6125
        %v6127 = vpop.f32.mrf.mxu0
        %6128 = vdwg.mxu0
        %v6129 = vadd.f32 %v5962, %v6055
        %v6130 = vadd.f32 %v5963, %v6057
        %v6131 = vadd.f32 %v5964, %v6126
        %v6132 = vld [vmem:[#allocation2 + $0x4] sm:$0xff]
        %v6133 = vld [vmem:[#allocation2 + $0xc] sm:$0xf]
        %v6134 = vld [vmem:[%s3045] sm:$0xf]
        %v6137 = vcombine.high %v6132, %v6132
        %6138 = vrot.lane.b32.xlu0 %v6132, 111
        %v6139 = vpop.permute.xlu0 %6138
        %6140 = vrot.lane.b32.xlu0 %v6137, 111
        %v6141 = vpop.permute.xlu0 %6140
        %6142 = vrot.lane.b32.xlu0 %v6133, 111
        %v6143 = vpop.permute.xlu0 %6142
        %v6144 = vsel %vm1516, %v6139, %v6141
        %v6145 = vsel %vm1516, %v6141, %v6143
        %v6147 = vsel %vm514, %v6134, 0
        %v6149 = vsel %vm518, %v6144, 0
        %v6151 = vsel %vm518, %v6145, 0
        %v6153 = vsel %vm518, %v6143, 0
        %6155 = vmatprep.subr.mxu0 0.0
        %6156 = vmatpush1.msra.mxu0 0.0
        %6157 = vmatprep.subr.mxu0 0.0
        %6158 = vmatpush1.msra.mxu0 0.0
        %6159 = vmatprep.subr.mxu0 0.0
        %6160 = vmatpush1.msra.mxu0 0.0
        %6161 = vmatprep.subr.mxu0 0.0
        %6162 = vmatpush1.msra.mxu0 0.0
        %6163 = vmatprep.subr.mxu0 0.0
        %6164 = vmatpush1.msra.mxu0 0.0
        %6165 = vmatprep.subr.mxu0 0.0
        %6166 = vmatpush1.msra.mxu0 0.0
        %6167 = vmatprep.subr.mxu0 0.0
        %6168 = vmatpush1.msra.mxu0 0.0
        %6169 = vmatprep.subr.mxu0 0.0
        %6170 = vmatpush1.msra.mxu0 0.0
        %6171 = vmatprep.subr.mxu0 0.0
        %6172 = vmatpush1.msra.mxu0 0.0
        %6173 = vmatprep.subr.mxu0 0.0
        %6174 = vmatpush1.msra.mxu0 0.0
        %6175 = vmatprep.subr.mxu0 0.0
        %6176 = vmatpush1.msra.mxu0 0.0
        %6177 = vmatprep.subr.mxu0 0.0
        %6178 = vmatpush1.msra.mxu0 0.0
        %6179 = vmatprep.subr.mxu0 0.0
        %6180 = vmatpush1.msra.mxu0 0.0
        %6181 = vmatprep.subr.mxu0 0.0
        %6182 = vmatpush1.msra.mxu0 0.0
        %6183 = vmatprep.subr.mxu0 0.0
        %6184 = vmatpush1.msra.mxu0 0.0
        %6185 = vmatprep.subr.mxu0 %v6151
        %6186 = vmatpush1.msra.mxu0 %v6149
        %6187 = vmatprep.subr.mxu0 0.0
        %6188 = vmatpush2.msra.mxu0 0.0
        %6189 = vmatprep.subr.mxu0 0.0
        %6190 = vmatpush2.msra.mxu0 0.0
        %6191 = vmatprep.subr.mxu0 0.0
        %6192 = vmatpush2.msra.mxu0 0.0
        %6193 = vmatprep.subr.mxu0 0.0
        %6194 = vmatpush2.msra.mxu0 0.0
        %6195 = vmatprep.subr.mxu0 0.0
        %6196 = vmatpush2.msra.mxu0 0.0
        %6197 = vmatprep.subr.mxu0 0.0
        %6198 = vmatpush2.msra.mxu0 0.0
        %6199 = vmatprep.subr.mxu0 0.0
        %6200 = vmatpush2.msra.mxu0 0.0
        %6201 = vmatprep.subr.mxu0 0.0
        %6202 = vmatpush2.msra.mxu0 0.0
        %6203 = vmatprep.subr.mxu0 0.0
        %6204 = vmatpush2.msra.mxu0 0.0
        %6205 = vmatprep.subr.mxu0 0.0
        %6206 = vmatpush2.msra.mxu0 0.0
        %6207 = vmatprep.subr.mxu0 0.0
        %6208 = vmatpush2.msra.mxu0 0.0
        %6209 = vmatprep.subr.mxu0 0.0
        %6210 = vmatpush2.msra.mxu0 0.0
        %6211 = vmatprep.subr.mxu0 0.0
        %6212 = vmatpush2.msra.mxu0 0.0
        %6213 = vmatprep.subr.mxu0 0.0
        %6214 = vmatpush2.msra.mxu0 0.0
        %6215 = vmatprep.subr.mxu0 0.0
        %6216 = vmatpush2.msra.mxu0 0.0
        %6217 = vmatprep.subr.mxu0 0.0
        %6218 = vmatpush2.msra.mxu0 0.0
        %6219 = vmatprep.mubr.f32.mxu0 0.0
        %6220 = vmatmul.mubr.f32.gmra.mxu0 %v6147
        %v6221 = vpop.f32.mrf.mxu0
        %v6222 = vadd.f32 0.0, %v6221
        %v6223 = vpop.f32.mrf.mxu0
        %v6224 = vadd.f32 0.0, %v6223
        %6225 = vdwg.mxu0
        %6226 = vmatprep.subr.mxu0 0.0
        %6227 = vmatpush1.msra.mxu0 0.0
        %6228 = vmatprep.subr.mxu0 0.0
        %6229 = vmatpush1.msra.mxu0 0.0
        %6230 = vmatprep.subr.mxu0 0.0
        %6231 = vmatpush1.msra.mxu0 0.0
        %6232 = vmatprep.subr.mxu0 0.0
        %6233 = vmatpush1.msra.mxu0 0.0
        %6234 = vmatprep.subr.mxu0 0.0
        %6235 = vmatpush1.msra.mxu0 0.0
        %6236 = vmatprep.subr.mxu0 0.0
        %6237 = vmatpush1.msra.mxu0 0.0
        %6238 = vmatprep.subr.mxu0 0.0
        %6239 = vmatpush1.msra.mxu0 0.0
        %6240 = vmatprep.subr.mxu0 0.0
        %6241 = vmatpush1.msra.mxu0 0.0
        %6242 = vmatprep.subr.mxu0 0.0
        %6243 = vmatpush1.msra.mxu0 0.0
        %6244 = vmatprep.subr.mxu0 0.0
        %6245 = vmatpush1.msra.mxu0 0.0
        %6246 = vmatprep.subr.mxu0 0.0
        %6247 = vmatpush1.msra.mxu0 0.0
        %6248 = vmatprep.subr.mxu0 0.0
        %6249 = vmatpush1.msra.mxu0 0.0
        %6250 = vmatprep.subr.mxu0 0.0
        %6251 = vmatpush1.msra.mxu0 0.0
        %6252 = vmatprep.subr.mxu0 0.0
        %6253 = vmatpush1.msra.mxu0 0.0
        %6254 = vmatprep.subr.mxu0 0.0
        %6255 = vmatpush1.msra.mxu0 0.0
        %6256 = vmatprep.subr.mxu0 0.0
        %6257 = vmatpush1.msra.mxu0 %v6153
        %6258 = vmatprep.subr.mxu0 0.0
        %6259 = vmatpush2.msra.mxu0 0.0
        %6260 = vmatprep.subr.mxu0 0.0
        %6261 = vmatpush2.msra.mxu0 0.0
        %6262 = vmatprep.subr.mxu0 0.0
        %6263 = vmatpush2.msra.mxu0 0.0
        %6264 = vmatprep.subr.mxu0 0.0
        %6265 = vmatpush2.msra.mxu0 0.0
        %6266 = vmatprep.subr.mxu0 0.0
        %6267 = vmatpush2.msra.mxu0 0.0
        %6268 = vmatprep.subr.mxu0 0.0
        %6269 = vmatpush2.msra.mxu0 0.0
        %6270 = vmatprep.subr.mxu0 0.0
        %6271 = vmatpush2.msra.mxu0 0.0
        %6272 = vmatprep.subr.mxu0 0.0
        %6273 = vmatpush2.msra.mxu0 0.0
        %6274 = vmatprep.subr.mxu0 0.0
        %6275 = vmatpush2.msra.mxu0 0.0
        %6276 = vmatprep.subr.mxu0 0.0
        %6277 = vmatpush2.msra.mxu0 0.0
        %6278 = vmatprep.subr.mxu0 0.0
        %6279 = vmatpush2.msra.mxu0 0.0
        %6280 = vmatprep.subr.mxu0 0.0
        %6281 = vmatpush2.msra.mxu0 0.0
        %6282 = vmatprep.subr.mxu0 0.0
        %6283 = vmatpush2.msra.mxu0 0.0
        %6284 = vmatprep.subr.mxu0 0.0
        %6285 = vmatpush2.msra.mxu0 0.0
        %6286 = vmatprep.subr.mxu0 0.0
        %6287 = vmatpush2.msra.mxu0 0.0
        %6288 = vmatprep.subr.mxu0 0.0
        %6289 = vmatpush2.msra.mxu0 0.0
        %6290 = vmatprep.mubr.f32.mxu0 0.0
        %6291 = vmatmul.mubr.f32.gmra.mxu0 %v6147
        %v6292 = vpop.f32.mrf.mxu0
        %v6293 = vadd.f32 0.0, %v6292
        %v6294 = vpop.f32.mrf.mxu0
        %6295 = vdwg.mxu0
        %v6296 = vadd.f32 %v6129, %v6222
        %v6297 = vadd.f32 %v6130, %v6224
        %v6298 = vadd.f32 %v6131, %v6293
        %v6299 = vld [vmem:[#allocation2 + $0x4] sm:$0xff]
        %v6300 = vld [vmem:[#allocation2 + $0xc] sm:$0xf]
        %v6301 = vld [vmem:[%s3213] sm:$0xf]
        %v6304 = vcombine.high %v6299, %v6299
        %6305 = vrot.lane.b32.xlu0 %v6299, 110
        %v6306 = vpop.permute.xlu0 %6305
        %6307 = vrot.lane.b32.xlu0 %v6304, 110
        %v6308 = vpop.permute.xlu0 %6307
        %6309 = vrot.lane.b32.xlu0 %v6300, 110
        %v6310 = vpop.permute.xlu0 %6309
        %v6311 = vsel %vm1685, %v6306, %v6308
        %v6312 = vsel %vm1685, %v6308, %v6310
        %v6314 = vsel %vm514, %v6301, 0
        %v6316 = vsel %vm518, %v6311, 0
        %v6318 = vsel %vm518, %v6312, 0
        %v6320 = vsel %vm518, %v6310, 0
        %6322 = vmatprep.subr.mxu0 0.0
        %6323 = vmatpush1.msra.mxu0 0.0
        %6324 = vmatprep.subr.mxu0 0.0
        %6325 = vmatpush1.msra.mxu0 0.0
        %6326 = vmatprep.subr.mxu0 0.0
        %6327 = vmatpush1.msra.mxu0 0.0
        %6328 = vmatprep.subr.mxu0 0.0
        %6329 = vmatpush1.msra.mxu0 0.0
        %6330 = vmatprep.subr.mxu0 0.0
        %6331 = vmatpush1.msra.mxu0 0.0
        %6332 = vmatprep.subr.mxu0 0.0
        %6333 = vmatpush1.msra.mxu0 0.0
        %6334 = vmatprep.subr.mxu0 0.0
        %6335 = vmatpush1.msra.mxu0 0.0
        %6336 = vmatprep.subr.mxu0 0.0
        %6337 = vmatpush1.msra.mxu0 0.0
        %6338 = vmatprep.subr.mxu0 0.0
        %6339 = vmatpush1.msra.mxu0 0.0
        %6340 = vmatprep.subr.mxu0 0.0
        %6341 = vmatpush1.msra.mxu0 0.0
        %6342 = vmatprep.subr.mxu0 0.0
        %6343 = vmatpush1.msra.mxu0 0.0
        %6344 = vmatprep.subr.mxu0 0.0
        %6345 = vmatpush1.msra.mxu0 0.0
        %6346 = vmatprep.subr.mxu0 0.0
        %6347 = vmatpush1.msra.mxu0 0.0
        %6348 = vmatprep.subr.mxu0 0.0
        %6349 = vmatpush1.msra.mxu0 0.0
        %6350 = vmatprep.subr.mxu0 0.0
        %6351 = vmatpush1.msra.mxu0 0.0
        %6352 = vmatprep.subr.mxu0 %v6318
        %6353 = vmatpush1.msra.mxu0 %v6316
        %6354 = vmatprep.subr.mxu0 0.0
        %6355 = vmatpush2.msra.mxu0 0.0
        %6356 = vmatprep.subr.mxu0 0.0
        %6357 = vmatpush2.msra.mxu0 0.0
        %6358 = vmatprep.subr.mxu0 0.0
        %6359 = vmatpush2.msra.mxu0 0.0
        %6360 = vmatprep.subr.mxu0 0.0
        %6361 = vmatpush2.msra.mxu0 0.0
        %6362 = vmatprep.subr.mxu0 0.0
        %6363 = vmatpush2.msra.mxu0 0.0
        %6364 = vmatprep.subr.mxu0 0.0
        %6365 = vmatpush2.msra.mxu0 0.0
        %6366 = vmatprep.subr.mxu0 0.0
        %6367 = vmatpush2.msra.mxu0 0.0
        %6368 = vmatprep.subr.mxu0 0.0
        %6369 = vmatpush2.msra.mxu0 0.0
        %6370 = vmatprep.subr.mxu0 0.0
        %6371 = vmatpush2.msra.mxu0 0.0
        %6372 = vmatprep.subr.mxu0 0.0
        %6373 = vmatpush2.msra.mxu0 0.0
        %6374 = vmatprep.subr.mxu0 0.0
        %6375 = vmatpush2.msra.mxu0 0.0
        %6376 = vmatprep.subr.mxu0 0.0
        %6377 = vmatpush2.msra.mxu0 0.0
        %6378 = vmatprep.subr.mxu0 0.0
        %6379 = vmatpush2.msra.mxu0 0.0
        %6380 = vmatprep.subr.mxu0 0.0
        %6381 = vmatpush2.msra.mxu0 0.0
        %6382 = vmatprep.subr.mxu0 0.0
        %6383 = vmatpush2.msra.mxu0 0.0
        %6384 = vmatprep.subr.mxu0 0.0
        %6385 = vmatpush2.msra.mxu0 0.0
        %6386 = vmatprep.mubr.f32.mxu0 0.0
        %6387 = vmatmul.mubr.f32.gmra.mxu0 %v6314
        %v6388 = vpop.f32.mrf.mxu0
        %v6389 = vadd.f32 0.0, %v6388
        %v6390 = vpop.f32.mrf.mxu0
        %v6391 = vadd.f32 0.0, %v6390
        %6392 = vdwg.mxu0
        %6393 = vmatprep.subr.mxu0 0.0
        %6394 = vmatpush1.msra.mxu0 0.0
        %6395 = vmatprep.subr.mxu0 0.0
        %6396 = vmatpush1.msra.mxu0 0.0
        %6397 = vmatprep.subr.mxu0 0.0
        %6398 = vmatpush1.msra.mxu0 0.0
        %6399 = vmatprep.subr.mxu0 0.0
        %6400 = vmatpush1.msra.mxu0 0.0
        %6401 = vmatprep.subr.mxu0 0.0
        %6402 = vmatpush1.msra.mxu0 0.0
        %6403 = vmatprep.subr.mxu0 0.0
        %6404 = vmatpush1.msra.mxu0 0.0
        %6405 = vmatprep.subr.mxu0 0.0
        %6406 = vmatpush1.msra.mxu0 0.0
        %6407 = vmatprep.subr.mxu0 0.0
        %6408 = vmatpush1.msra.mxu0 0.0
        %6409 = vmatprep.subr.mxu0 0.0
        %6410 = vmatpush1.msra.mxu0 0.0
        %6411 = vmatprep.subr.mxu0 0.0
        %6412 = vmatpush1.msra.mxu0 0.0
        %6413 = vmatprep.subr.mxu0 0.0
        %6414 = vmatpush1.msra.mxu0 0.0
        %6415 = vmatprep.subr.mxu0 0.0
        %6416 = vmatpush1.msra.mxu0 0.0
        %6417 = vmatprep.subr.mxu0 0.0
        %6418 = vmatpush1.msra.mxu0 0.0
        %6419 = vmatprep.subr.mxu0 0.0
        %6420 = vmatpush1.msra.mxu0 0.0
        %6421 = vmatprep.subr.mxu0 0.0
        %6422 = vmatpush1.msra.mxu0 0.0
        %6423 = vmatprep.subr.mxu0 0.0
        %6424 = vmatpush1.msra.mxu0 %v6320
        %6425 = vmatprep.subr.mxu0 0.0
        %6426 = vmatpush2.msra.mxu0 0.0
        %6427 = vmatprep.subr.mxu0 0.0
        %6428 = vmatpush2.msra.mxu0 0.0
        %6429 = vmatprep.subr.mxu0 0.0
        %6430 = vmatpush2.msra.mxu0 0.0
        %6431 = vmatprep.subr.mxu0 0.0
        %6432 = vmatpush2.msra.mxu0 0.0
        %6433 = vmatprep.subr.mxu0 0.0
        %6434 = vmatpush2.msra.mxu0 0.0
        %6435 = vmatprep.subr.mxu0 0.0
        %6436 = vmatpush2.msra.mxu0 0.0
        %6437 = vmatprep.subr.mxu0 0.0
        %6438 = vmatpush2.msra.mxu0 0.0
        %6439 = vmatprep.subr.mxu0 0.0
        %6440 = vmatpush2.msra.mxu0 0.0
        %6441 = vmatprep.subr.mxu0 0.0
        %6442 = vmatpush2.msra.mxu0 0.0
        %6443 = vmatprep.subr.mxu0 0.0
        %6444 = vmatpush2.msra.mxu0 0.0
        %6445 = vmatprep.subr.mxu0 0.0
        %6446 = vmatpush2.msra.mxu0 0.0
        %6447 = vmatprep.subr.mxu0 0.0
        %6448 = vmatpush2.msra.mxu0 0.0
        %6449 = vmatprep.subr.mxu0 0.0
        %6450 = vmatpush2.msra.mxu0 0.0
        %6451 = vmatprep.subr.mxu0 0.0
        %6452 = vmatpush2.msra.mxu0 0.0
        %6453 = vmatprep.subr.mxu0 0.0
        %6454 = vmatpush2.msra.mxu0 0.0
        %6455 = vmatprep.subr.mxu0 0.0
        %6456 = vmatpush2.msra.mxu0 0.0
        %6457 = vmatprep.mubr.f32.mxu0 0.0
        %6458 = vmatmul.mubr.f32.gmra.mxu0 %v6314
        %v6459 = vpop.f32.mrf.mxu0
        %v6460 = vadd.f32 0.0, %v6459
        %v6461 = vpop.f32.mrf.mxu0
        %6462 = vdwg.mxu0
        %v6463 = vadd.f32 %v6296, %v6389
        %v6464 = vadd.f32 %v6297, %v6391
        %v6465 = vadd.f32 %v6298, %v6460
        %v6466 = vld [vmem:[#allocation2 + $0x4] sm:$0xff]
        %v6467 = vld [vmem:[#allocation2 + $0xc] sm:$0xf]
        %v6468 = vld [vmem:[%s3381] sm:$0xf]
        %v6471 = vcombine.high %v6466, %v6466
        %6472 = vrot.lane.b32.xlu0 %v6466, 109
        %v6473 = vpop.permute.xlu0 %6472
        %6474 = vrot.lane.b32.xlu0 %v6471, 109
        %v6475 = vpop.permute.xlu0 %6474
        %6476 = vrot.lane.b32.xlu0 %v6467, 109
        %v6477 = vpop.permute.xlu0 %6476
        %v6478 = vsel %vm1854, %v6473, %v6475
        %v6479 = vsel %vm1854, %v6475, %v6477
        %v6481 = vsel %vm514, %v6468, 0
        %v6483 = vsel %vm518, %v6478, 0
        %v6485 = vsel %vm518, %v6479, 0
        %v6487 = vsel %vm518, %v6477, 0
        %6489 = vmatprep.subr.mxu0 0.0
        %6490 = vmatpush1.msra.mxu0 0.0
        %6491 = vmatprep.subr.mxu0 0.0
        %6492 = vmatpush1.msra.mxu0 0.0
        %6493 = vmatprep.subr.mxu0 0.0
        %6494 = vmatpush1.msra.mxu0 0.0
        %6495 = vmatprep.subr.mxu0 0.0
        %6496 = vmatpush1.msra.mxu0 0.0
        %6497 = vmatprep.subr.mxu0 0.0
        %6498 = vmatpush1.msra.mxu0 0.0
        %6499 = vmatprep.subr.mxu0 0.0
        %6500 = vmatpush1.msra.mxu0 0.0
        %6501 = vmatprep.subr.mxu0 0.0
        %6502 = vmatpush1.msra.mxu0 0.0
        %6503 = vmatprep.subr.mxu0 0.0
        %6504 = vmatpush1.msra.mxu0 0.0
        %6505 = vmatprep.subr.mxu0 0.0
        %6506 = vmatpush1.msra.mxu0 0.0
        %6507 = vmatprep.subr.mxu0 0.0
        %6508 = vmatpush1.msra.mxu0 0.0
        %6509 = vmatprep.subr.mxu0 0.0
        %6510 = vmatpush1.msra.mxu0 0.0
        %6511 = vmatprep.subr.mxu0 0.0
        %6512 = vmatpush1.msra.mxu0 0.0
        %6513 = vmatprep.subr.mxu0 0.0
        %6514 = vmatpush1.msra.mxu0 0.0
        %6515 = vmatprep.subr.mxu0 0.0
        %6516 = vmatpush1.msra.mxu0 0.0
        %6517 = vmatprep.subr.mxu0 0.0
        %6518 = vmatpush1.msra.mxu0 0.0
        %6519 = vmatprep.subr.mxu0 %v6485
        %6520 = vmatpush1.msra.mxu0 %v6483
        %6521 = vmatprep.subr.mxu0 0.0
        %6522 = vmatpush2.msra.mxu0 0.0
        %6523 = vmatprep.subr.mxu0 0.0
        %6524 = vmatpush2.msra.mxu0 0.0
        %6525 = vmatprep.subr.mxu0 0.0
        %6526 = vmatpush2.msra.mxu0 0.0
        %6527 = vmatprep.subr.mxu0 0.0
        %6528 = vmatpush2.msra.mxu0 0.0
        %6529 = vmatprep.subr.mxu0 0.0
        %6530 = vmatpush2.msra.mxu0 0.0
        %6531 = vmatprep.subr.mxu0 0.0
        %6532 = vmatpush2.msra.mxu0 0.0
        %6533 = vmatprep.subr.mxu0 0.0
        %6534 = vmatpush2.msra.mxu0 0.0
        %6535 = vmatprep.subr.mxu0 0.0
        %6536 = vmatpush2.msra.mxu0 0.0
        %6537 = vmatprep.subr.mxu0 0.0
        %6538 = vmatpush2.msra.mxu0 0.0
        %6539 = vmatprep.subr.mxu0 0.0
        %6540 = vmatpush2.msra.mxu0 0.0
        %6541 = vmatprep.subr.mxu0 0.0
        %6542 = vmatpush2.msra.mxu0 0.0
        %6543 = vmatprep.subr.mxu0 0.0
        %6544 = vmatpush2.msra.mxu0 0.0
        %6545 = vmatprep.subr.mxu0 0.0
        %6546 = vmatpush2.msra.mxu0 0.0
        %6547 = vmatprep.subr.mxu0 0.0
        %6548 = vmatpush2.msra.mxu0 0.0
        %6549 = vmatprep.subr.mxu0 0.0
        %6550 = vmatpush2.msra.mxu0 0.0
        %6551 = vmatprep.subr.mxu0 0.0
        %6552 = vmatpush2.msra.mxu0 0.0
        %6553 = vmatprep.mubr.f32.mxu0 0.0
        %6554 = vmatmul.mubr.f32.gmra.mxu0 %v6481
        %v6555 = vpop.f32.mrf.mxu0
        %v6556 = vadd.f32 0.0, %v6555
        %v6557 = vpop.f32.mrf.mxu0
        %v6558 = vadd.f32 0.0, %v6557
        %6559 = vdwg.mxu0
        %6560 = vmatprep.subr.mxu0 0.0
        %6561 = vmatpush1.msra.mxu0 0.0
        %6562 = vmatprep.subr.mxu0 0.0
        %6563 = vmatpush1.msra.mxu0 0.0
        %6564 = vmatprep.subr.mxu0 0.0
        %6565 = vmatpush1.msra.mxu0 0.0
        %6566 = vmatprep.subr.mxu0 0.0
        %6567 = vmatpush1.msra.mxu0 0.0
        %6568 = vmatprep.subr.mxu0 0.0
        %6569 = vmatpush1.msra.mxu0 0.0
        %6570 = vmatprep.subr.mxu0 0.0
        %6571 = vmatpush1.msra.mxu0 0.0
        %6572 = vmatprep.subr.mxu0 0.0
        %6573 = vmatpush1.msra.mxu0 0.0
        %6574 = vmatprep.subr.mxu0 0.0
        %6575 = vmatpush1.msra.mxu0 0.0
        %6576 = vmatprep.subr.mxu0 0.0
        %6577 = vmatpush1.msra.mxu0 0.0
        %6578 = vmatprep.subr.mxu0 0.0
        %6579 = vmatpush1.msra.mxu0 0.0
        %6580 = vmatprep.subr.mxu0 0.0
        %6581 = vmatpush1.msra.mxu0 0.0
        %6582 = vmatprep.subr.mxu0 0.0
        %6583 = vmatpush1.msra.mxu0 0.0
        %6584 = vmatprep.subr.mxu0 0.0
        %6585 = vmatpush1.msra.mxu0 0.0
        %6586 = vmatprep.subr.mxu0 0.0
        %6587 = vmatpush1.msra.mxu0 0.0
        %6588 = vmatprep.subr.mxu0 0.0
        %6589 = vmatpush1.msra.mxu0 0.0
        %6590 = vmatprep.subr.mxu0 0.0
        %6591 = vmatpush1.msra.mxu0 %v6487
        %6592 = vmatprep.subr.mxu0 0.0
        %6593 = vmatpush2.msra.mxu0 0.0
        %6594 = vmatprep.subr.mxu0 0.0
        %6595 = vmatpush2.msra.mxu0 0.0
        %6596 = vmatprep.subr.mxu0 0.0
        %6597 = vmatpush2.msra.mxu0 0.0
        %6598 = vmatprep.subr.mxu0 0.0
        %6599 = vmatpush2.msra.mxu0 0.0
        %6600 = vmatprep.subr.mxu0 0.0
        %6601 = vmatpush2.msra.mxu0 0.0
        %6602 = vmatprep.subr.mxu0 0.0
        %6603 = vmatpush2.msra.mxu0 0.0
        %6604 = vmatprep.subr.mxu0 0.0
        %6605 = vmatpush2.msra.mxu0 0.0
        %6606 = vmatprep.subr.mxu0 0.0
        %6607 = vmatpush2.msra.mxu0 0.0
        %6608 = vmatprep.subr.mxu0 0.0
        %6609 = vmatpush2.msra.mxu0 0.0
        %6610 = vmatprep.subr.mxu0 0.0
        %6611 = vmatpush2.msra.mxu0 0.0
        %6612 = vmatprep.subr.mxu0 0.0
        %6613 = vmatpush2.msra.mxu0 0.0
        %6614 = vmatprep.subr.mxu0 0.0
        %6615 = vmatpush2.msra.mxu0 0.0
        %6616 = vmatprep.subr.mxu0 0.0
        %6617 = vmatpush2.msra.mxu0 0.0
        %6618 = vmatprep.subr.mxu0 0.0
        %6619 = vmatpush2.msra.mxu0 0.0
        %6620 = vmatprep.subr.mxu0 0.0
        %6621 = vmatpush2.msra.mxu0 0.0
        %6622 = vmatprep.subr.mxu0 0.0
        %6623 = vmatpush2.msra.mxu0 0.0
        %6624 = vmatprep.mubr.f32.mxu0 0.0
        %6625 = vmatmul.mubr.f32.gmra.mxu0 %v6481
        %v6626 = vpop.f32.mrf.mxu0
        %v6627 = vadd.f32 0.0, %v6626
        %v6628 = vpop.f32.mrf.mxu0
        %6629 = vdwg.mxu0
        %v6630 = vadd.f32 %v6463, %v6556
        %v6631 = vadd.f32 %v6464, %v6558
        %v6632 = vadd.f32 %v6465, %v6627
        %v6633 = vadd.f32 %v6630, %v3550
        %v6634 = vadd.f32 %v6631, %v3551
        %v6635 = vadd.f32 %v6632, %v3552
        %s6636 = scalar_lea.vmem %s10, 4
        %v6637 = vld [vmem:[%s6636] sm:$0xf]
        %6639 = vset.pattern.permute.xlu0 0
        %6640 = vperm.xlu0 %6639, %v6637
        %v6641 = vpop.permute.xlu0 %6640
        %v6643 = vmul.f32 %v6633, %v6641
        %v6644 = vmul.f32 %v6634, %v6641
        %v6645 = vmul.f32 %v6635, %v6641
        %s6646 = scalar_lea.vmem %s11, 4
        %v6647 = vld [vmem:[%s6646] sm:$0xf]
        %6649 = vset.pattern.permute.xlu0 0
        %6650 = vperm.xlu0 %6649, %v6647
        %v6651 = vpop.permute.xlu0 %6650
        %v6653 = vadd.f32 %v6643, %v6651
        %v6654 = vadd.f32 %v6644, %v6651
        %v6655 = vadd.f32 %v6645, %v6651
        %v6656 = vmax.f32 %v6653, 0.0
        %v6657 = vmax.f32 %v6654, 0.0
        %v6658 = vmax.f32 %v6655, 0.0
        %s6659 = scalar_lea.vmem %s5, 4
        %v6660 = vld [vmem:[%s6659] sm:$0xf]
        %v6662 = vsel %vm514, %v6660, 0
        %v6665 = vsel %vm518, %v6656, 0
        %v6668 = vsel %vm518, %v6657, 0
        %v6671 = vsel %vm518, %v6658, 0
        %6673 = vmatprep.subr.mxu0 0.0
        %6674 = vmatpush1.msra.mxu0 0.0
        %6675 = vmatprep.subr.mxu0 0.0
        %6676 = vmatpush1.msra.mxu0 0.0
        %6677 = vmatprep.subr.mxu0 0.0
        %6678 = vmatpush1.msra.mxu0 0.0
        %6679 = vmatprep.subr.mxu0 0.0
        %6680 = vmatpush1.msra.mxu0 0.0
        %6681 = vmatprep.subr.mxu0 0.0
        %6682 = vmatpush1.msra.mxu0 0.0
        %6683 = vmatprep.subr.mxu0 0.0
        %6684 = vmatpush1.msra.mxu0 0.0
        %6685 = vmatprep.subr.mxu0 0.0
        %6686 = vmatpush1.msra.mxu0 0.0
        %6687 = vmatprep.subr.mxu0 0.0
        %6688 = vmatpush1.msra.mxu0 0.0
        %6689 = vmatprep.subr.mxu0 0.0
        %6690 = vmatpush1.msra.mxu0 0.0
        %6691 = vmatprep.subr.mxu0 0.0
        %6692 = vmatpush1.msra.mxu0 0.0
        %6693 = vmatprep.subr.mxu0 0.0
        %6694 = vmatpush1.msra.mxu0 0.0
        %6695 = vmatprep.subr.mxu0 0.0
        %6696 = vmatpush1.msra.mxu0 0.0
        %6697 = vmatprep.subr.mxu0 0.0
        %6698 = vmatpush1.msra.mxu0 0.0
        %6699 = vmatprep.subr.mxu0 0.0
        %6700 = vmatpush1.msra.mxu0 0.0
        %6701 = vmatprep.subr.mxu0 0.0
        %6702 = vmatpush1.msra.mxu0 0.0
        %6703 = vmatprep.subr.mxu0 %v6668
        %6704 = vmatpush1.msra.mxu0 %v6665
        %6705 = vmatprep.subr.mxu0 0.0
        %6706 = vmatpush2.msra.mxu0 0.0
        %6707 = vmatprep.subr.mxu0 0.0
        %6708 = vmatpush2.msra.mxu0 0.0
        %6709 = vmatprep.subr.mxu0 0.0
        %6710 = vmatpush2.msra.mxu0 0.0
        %6711 = vmatprep.subr.mxu0 0.0
        %6712 = vmatpush2.msra.mxu0 0.0
        %6713 = vmatprep.subr.mxu0 0.0
        %6714 = vmatpush2.msra.mxu0 0.0
        %6715 = vmatprep.subr.mxu0 0.0
        %6716 = vmatpush2.msra.mxu0 0.0
        %6717 = vmatprep.subr.mxu0 0.0
        %6718 = vmatpush2.msra.mxu0 0.0
        %6719 = vmatprep.subr.mxu0 0.0
        %6720 = vmatpush2.msra.mxu0 0.0
        %6721 = vmatprep.subr.mxu0 0.0
        %6722 = vmatpush2.msra.mxu0 0.0
        %6723 = vmatprep.subr.mxu0 0.0
        %6724 = vmatpush2.msra.mxu0 0.0
        %6725 = vmatprep.subr.mxu0 0.0
        %6726 = vmatpush2.msra.mxu0 0.0
        %6727 = vmatprep.subr.mxu0 0.0
        %6728 = vmatpush2.msra.mxu0 0.0
        %6729 = vmatprep.subr.mxu0 0.0
        %6730 = vmatpush2.msra.mxu0 0.0
        %6731 = vmatprep.subr.mxu0 0.0
        %6732 = vmatpush2.msra.mxu0 0.0
        %6733 = vmatprep.subr.mxu0 0.0
        %6734 = vmatpush2.msra.mxu0 0.0
        %6735 = vmatprep.subr.mxu0 0.0
        %6736 = vmatpush2.msra.mxu0 0.0
        %6737 = vmatprep.mubr.f32.mxu0 0.0
        %6738 = vmatmul.mubr.f32.gmra.mxu0 %v6662
        %v6739 = vpop.f32.mrf.mxu0
        %v6740 = vadd.f32 0.0, %v6739
        %v6741 = vpop.f32.mrf.mxu0
        %v6742 = vadd.f32 0.0, %v6741
        %6743 = vdwg.mxu0
        %6744 = vmatprep.subr.mxu0 0.0
        %6745 = vmatpush1.msra.mxu0 0.0
        %6746 = vmatprep.subr.mxu0 0.0
        %6747 = vmatpush1.msra.mxu0 0.0
        %6748 = vmatprep.subr.mxu0 0.0
        %6749 = vmatpush1.msra.mxu0 0.0
        %6750 = vmatprep.subr.mxu0 0.0
        %6751 = vmatpush1.msra.mxu0 0.0
        %6752 = vmatprep.subr.mxu0 0.0
        %6753 = vmatpush1.msra.mxu0 0.0
        %6754 = vmatprep.subr.mxu0 0.0
        %6755 = vmatpush1.msra.mxu0 0.0
        %6756 = vmatprep.subr.mxu0 0.0
        %6757 = vmatpush1.msra.mxu0 0.0
        %6758 = vmatprep.subr.mxu0 0.0
        %6759 = vmatpush1.msra.mxu0 0.0
        %6760 = vmatprep.subr.mxu0 0.0
        %6761 = vmatpush1.msra.mxu0 0.0
        %6762 = vmatprep.subr.mxu0 0.0
        %6763 = vmatpush1.msra.mxu0 0.0
        %6764 = vmatprep.subr.mxu0 0.0
        %6765 = vmatpush1.msra.mxu0 0.0
        %6766 = vmatprep.subr.mxu0 0.0
        %6767 = vmatpush1.msra.mxu0 0.0
        %6768 = vmatprep.subr.mxu0 0.0
        %6769 = vmatpush1.msra.mxu0 0.0
        %6770 = vmatprep.subr.mxu0 0.0
        %6771 = vmatpush1.msra.mxu0 0.0
        %6772 = vmatprep.subr.mxu0 0.0
        %6773 = vmatpush1.msra.mxu0 0.0
        %6774 = vmatprep.subr.mxu0 0.0
        %6775 = vmatpush1.msra.mxu0 %v6671
        %6776 = vmatprep.subr.mxu0 0.0
        %6777 = vmatpush2.msra.mxu0 0.0
        %6778 = vmatprep.subr.mxu0 0.0
        %6779 = vmatpush2.msra.mxu0 0.0
        %6780 = vmatprep.subr.mxu0 0.0
        %6781 = vmatpush2.msra.mxu0 0.0
        %6782 = vmatprep.subr.mxu0 0.0
        %6783 = vmatpush2.msra.mxu0 0.0
        %6784 = vmatprep.subr.mxu0 0.0
        %6785 = vmatpush2.msra.mxu0 0.0
        %6786 = vmatprep.subr.mxu0 0.0
        %6787 = vmatpush2.msra.mxu0 0.0
        %6788 = vmatprep.subr.mxu0 0.0
        %6789 = vmatpush2.msra.mxu0 0.0
        %6790 = vmatprep.subr.mxu0 0.0
        %6791 = vmatpush2.msra.mxu0 0.0
        %6792 = vmatprep.subr.mxu0 0.0
        %6793 = vmatpush2.msra.mxu0 0.0
        %6794 = vmatprep.subr.mxu0 0.0
        %6795 = vmatpush2.msra.mxu0 0.0
        %6796 = vmatprep.subr.mxu0 0.0
        %6797 = vmatpush2.msra.mxu0 0.0
        %6798 = vmatprep.subr.mxu0 0.0
        %6799 = vmatpush2.msra.mxu0 0.0
        %6800 = vmatprep.subr.mxu0 0.0
        %6801 = vmatpush2.msra.mxu0 0.0
        %6802 = vmatprep.subr.mxu0 0.0
        %6803 = vmatpush2.msra.mxu0 0.0
        %6804 = vmatprep.subr.mxu0 0.0
        %6805 = vmatpush2.msra.mxu0 0.0
        %6806 = vmatprep.subr.mxu0 0.0
        %6807 = vmatpush2.msra.mxu0 0.0
        %6808 = vmatprep.mubr.f32.mxu0 0.0
        %6809 = vmatmul.mubr.f32.gmra.mxu0 %v6662
        %v6810 = vpop.f32.mrf.mxu0
        %v6811 = vadd.f32 0.0, %v6810
        %v6812 = vpop.f32.mrf.mxu0
        %6813 = vdwg.mxu0
        %v6815 = vsel %vm514, %v3574, 0
        %v6818 = vsel %vm518, %v3571, 0
        %v6821 = vsel %vm518, %v3572, 0
        %v6824 = vsel %vm518, %v3573, 0
        %6826 = vmatprep.subr.mxu0 0.0
        %6827 = vmatpush1.msra.mxu0 0.0
        %6828 = vmatprep.subr.mxu0 0.0
        %6829 = vmatpush1.msra.mxu0 0.0
        %6830 = vmatprep.subr.mxu0 0.0
        %6831 = vmatpush1.msra.mxu0 0.0
        %6832 = vmatprep.subr.mxu0 0.0
        %6833 = vmatpush1.msra.mxu0 0.0
        %6834 = vmatprep.subr.mxu0 0.0
        %6835 = vmatpush1.msra.mxu0 0.0
        %6836 = vmatprep.subr.mxu0 0.0
        %6837 = vmatpush1.msra.mxu0 0.0
        %6838 = vmatprep.subr.mxu0 0.0
        %6839 = vmatpush1.msra.mxu0 0.0
        %6840 = vmatprep.subr.mxu0 0.0
        %6841 = vmatpush1.msra.mxu0 0.0
        %6842 = vmatprep.subr.mxu0 0.0
        %6843 = vmatpush1.msra.mxu0 0.0
        %6844 = vmatprep.subr.mxu0 0.0
        %6845 = vmatpush1.msra.mxu0 0.0
        %6846 = vmatprep.subr.mxu0 0.0
        %6847 = vmatpush1.msra.mxu0 0.0
        %6848 = vmatprep.subr.mxu0 0.0
        %6849 = vmatpush1.msra.mxu0 0.0
        %6850 = vmatprep.subr.mxu0 0.0
        %6851 = vmatpush1.msra.mxu0 0.0
        %6852 = vmatprep.subr.mxu0 0.0
        %6853 = vmatpush1.msra.mxu0 0.0
        %6854 = vmatprep.subr.mxu0 0.0
        %6855 = vmatpush1.msra.mxu0 0.0
        %6856 = vmatprep.subr.mxu0 %v6821
        %6857 = vmatpush1.msra.mxu0 %v6818
        %6858 = vmatprep.subr.mxu0 0.0
        %6859 = vmatpush2.msra.mxu0 0.0
        %6860 = vmatprep.subr.mxu0 0.0
        %6861 = vmatpush2.msra.mxu0 0.0
        %6862 = vmatprep.subr.mxu0 0.0
        %6863 = vmatpush2.msra.mxu0 0.0
        %6864 = vmatprep.subr.mxu0 0.0
        %6865 = vmatpush2.msra.mxu0 0.0
        %6866 = vmatprep.subr.mxu0 0.0
        %6867 = vmatpush2.msra.mxu0 0.0
        %6868 = vmatprep.subr.mxu0 0.0
        %6869 = vmatpush2.msra.mxu0 0.0
        %6870 = vmatprep.subr.mxu0 0.0
        %6871 = vmatpush2.msra.mxu0 0.0
        %6872 = vmatprep.subr.mxu0 0.0
        %6873 = vmatpush2.msra.mxu0 0.0
        %6874 = vmatprep.subr.mxu0 0.0
        %6875 = vmatpush2.msra.mxu0 0.0
        %6876 = vmatprep.subr.mxu0 0.0
        %6877 = vmatpush2.msra.mxu0 0.0
        %6878 = vmatprep.subr.mxu0 0.0
        %6879 = vmatpush2.msra.mxu0 0.0
        %6880 = vmatprep.subr.mxu0 0.0
        %6881 = vmatpush2.msra.mxu0 0.0
        %6882 = vmatprep.subr.mxu0 0.0
        %6883 = vmatpush2.msra.mxu0 0.0
        %6884 = vmatprep.subr.mxu0 0.0
        %6885 = vmatpush2.msra.mxu0 0.0
        %6886 = vmatprep.subr.mxu0 0.0
        %6887 = vmatpush2.msra.mxu0 0.0
        %6888 = vmatprep.subr.mxu0 0.0
        %6889 = vmatpush2.msra.mxu0 0.0
        %6890 = vmatprep.mubr.f32.mxu0 0.0
        %6891 = vmatmul.mubr.f32.gmra.mxu0 %v6815
        %v6892 = vpop.f32.mrf.mxu0
        %v6893 = vadd.f32 %v6740, %v6892
        %v6894 = vpop.f32.mrf.mxu0
        %v6895 = vadd.f32 %v6742, %v6894
        %6896 = vdwg.mxu0
        %6897 = vmatprep.subr.mxu0 0.0
        %6898 = vmatpush1.msra.mxu0 0.0
        %6899 = vmatprep.subr.mxu0 0.0
        %6900 = vmatpush1.msra.mxu0 0.0
        %6901 = vmatprep.subr.mxu0 0.0
        %6902 = vmatpush1.msra.mxu0 0.0
        %6903 = vmatprep.subr.mxu0 0.0
        %6904 = vmatpush1.msra.mxu0 0.0
        %6905 = vmatprep.subr.mxu0 0.0
        %6906 = vmatpush1.msra.mxu0 0.0
        %6907 = vmatprep.subr.mxu0 0.0
        %6908 = vmatpush1.msra.mxu0 0.0
        %6909 = vmatprep.subr.mxu0 0.0
        %6910 = vmatpush1.msra.mxu0 0.0
        %6911 = vmatprep.subr.mxu0 0.0
        %6912 = vmatpush1.msra.mxu0 0.0
        %6913 = vmatprep.subr.mxu0 0.0
        %6914 = vmatpush1.msra.mxu0 0.0
        %6915 = vmatprep.subr.mxu0 0.0
        %6916 = vmatpush1.msra.mxu0 0.0
        %6917 = vmatprep.subr.mxu0 0.0
        %6918 = vmatpush1.msra.mxu0 0.0
        %6919 = vmatprep.subr.mxu0 0.0
        %6920 = vmatpush1.msra.mxu0 0.0
        %6921 = vmatprep.subr.mxu0 0.0
        %6922 = vmatpush1.msra.mxu0 0.0
        %6923 = vmatprep.subr.mxu0 0.0
        %6924 = vmatpush1.msra.mxu0 0.0
        %6925 = vmatprep.subr.mxu0 0.0
        %6926 = vmatpush1.msra.mxu0 0.0
        %6927 = vmatprep.subr.mxu0 0.0
        %6928 = vmatpush1.msra.mxu0 %v6824
        %6929 = vmatprep.subr.mxu0 0.0
        %6930 = vmatpush2.msra.mxu0 0.0
        %6931 = vmatprep.subr.mxu0 0.0
        %6932 = vmatpush2.msra.mxu0 0.0
        %6933 = vmatprep.subr.mxu0 0.0
        %6934 = vmatpush2.msra.mxu0 0.0
        %6935 = vmatprep.subr.mxu0 0.0
        %6936 = vmatpush2.msra.mxu0 0.0
        %6937 = vmatprep.subr.mxu0 0.0
        %6938 = vmatpush2.msra.mxu0 0.0
        %6939 = vmatprep.subr.mxu0 0.0
        %6940 = vmatpush2.msra.mxu0 0.0
        %6941 = vmatprep.subr.mxu0 0.0
        %6942 = vmatpush2.msra.mxu0 0.0
        %6943 = vmatprep.subr.mxu0 0.0
        %6944 = vmatpush2.msra.mxu0 0.0
        %6945 = vmatprep.subr.mxu0 0.0
        %6946 = vmatpush2.msra.mxu0 0.0
        %6947 = vmatprep.subr.mxu0 0.0
        %6948 = vmatpush2.msra.mxu0 0.0
        %6949 = vmatprep.subr.mxu0 0.0
        %6950 = vmatpush2.msra.mxu0 0.0
        %6951 = vmatprep.subr.mxu0 0.0
        %6952 = vmatpush2.msra.mxu0 0.0
        %6953 = vmatprep.subr.mxu0 0.0
        %6954 = vmatpush2.msra.mxu0 0.0
        %6955 = vmatprep.subr.mxu0 0.0
        %6956 = vmatpush2.msra.mxu0 0.0
        %6957 = vmatprep.subr.mxu0 0.0
        %6958 = vmatpush2.msra.mxu0 0.0
        %6959 = vmatprep.subr.mxu0 0.0
        %6960 = vmatpush2.msra.mxu0 0.0
        %6961 = vmatprep.mubr.f32.mxu0 0.0
        %6962 = vmatmul.mubr.f32.gmra.mxu0 %v6815
        %v6963 = vpop.f32.mrf.mxu0
        %v6964 = vadd.f32 %v6811, %v6963
        %v6965 = vpop.f32.mrf.mxu0
        %6966 = vdwg.mxu0
        %v6967 = vld [vmem:[%s431] sm:$0xff]
        %v6968 = vld [vmem:[%s431 + $0x8] sm:$0xf]
        %s6969 = scalar_lea.vmem %s10, 8
        %v6970 = vld [vmem:[%s6969] sm:$0xf]
        %6972 = vset.pattern.permute.xlu0 0
        %6973 = vperm.xlu0 %6972, %v6970
        %v6974 = vpop.permute.xlu0 %6973
        %v6976 = vunpack.c.l.s4 839922192
        %v6977 = vunpack.c.0.s8 %v6976
        %v6978 = vlaneseq
        %v6979 = vshrl.u32 %v6978, 7
        %v6980 = vsub.s32 %v6977, %v6979
        %v6981 = vrot.slane %v6974, %v6980
        %v6983 = vmul.f32 %v6967, %v6981
        %v6984 = vmul.f32 %v6968, %v6981
        %s6985 = scalar_lea.vmem %s11, 8
        %v6986 = vld [vmem:[%s6985] sm:$0xf]
        %6988 = vset.pattern.permute.xlu0 0
        %6989 = vperm.xlu0 %6988, %v6986
        %v6990 = vpop.permute.xlu0 %6989
        %v6992 = vunpack.c.l.s4 839922192
        %v6993 = vunpack.c.0.s8 %v6992
        %v6994 = vlaneseq
        %v6995 = vshrl.u32 %v6994, 7
        %v6996 = vsub.s32 %v6993, %v6995
        %v6997 = vrot.slane %v6990, %v6996
        %v6999 = vadd.f32 %v6983, %v6997
        %v7000 = vadd.f32 %v6984, %v6997
        %v7001 = vmax.f32 %v6999, 0.0
        %v7002 = vmax.f32 %v7000, 0.0
        %s7003 = scalar_lea.vmem %s5, 8
        %v7004 = vld [vmem:[%s7003] sm:$0xf]
        %v7007 = vcombine.high %v7001, %v7001
        %v7009 = vsel %vm514, %v7004, 0
        %v7011 = vsel %vm518, %v7001, 0
        %v7013 = vsel %vm518, %v7007, 0
        %v7015 = vsel %vm518, %v7002, 0
        %7017 = vmatprep.subr.mxu0 0.0
        %7018 = vmatpush1.msra.mxu0 0.0
        %7019 = vmatprep.subr.mxu0 0.0
        %7020 = vmatpush1.msra.mxu0 0.0
        %7021 = vmatprep.subr.mxu0 0.0
        %7022 = vmatpush1.msra.mxu0 0.0
        %7023 = vmatprep.subr.mxu0 0.0
        %7024 = vmatpush1.msra.mxu0 0.0
        %7025 = vmatprep.subr.mxu0 0.0
        %7026 = vmatpush1.msra.mxu0 0.0
        %7027 = vmatprep.subr.mxu0 0.0
        %7028 = vmatpush1.msra.mxu0 0.0
        %7029 = vmatprep.subr.mxu0 0.0
        %7030 = vmatpush1.msra.mxu0 0.0
        %7031 = vmatprep.subr.mxu0 0.0
        %7032 = vmatpush1.msra.mxu0 0.0
        %7033 = vmatprep.subr.mxu0 0.0
        %7034 = vmatpush1.msra.mxu0 0.0
        %7035 = vmatprep.subr.mxu0 0.0
        %7036 = vmatpush1.msra.mxu0 0.0
        %7037 = vmatprep.subr.mxu0 0.0
        %7038 = vmatpush1.msra.mxu0 0.0
        %7039 = vmatprep.subr.mxu0 0.0
        %7040 = vmatpush1.msra.mxu0 0.0
        %7041 = vmatprep.subr.mxu0 0.0
        %7042 = vmatpush1.msra.mxu0 0.0
        %7043 = vmatprep.subr.mxu0 0.0
        %7044 = vmatpush1.msra.mxu0 0.0
        %7045 = vmatprep.subr.mxu0 0.0
        %7046 = vmatpush1.msra.mxu0 0.0
        %7047 = vmatprep.subr.mxu0 %v7013
        %7048 = vmatpush1.msra.mxu0 %v7011
        %7049 = vmatprep.subr.mxu0 0.0
        %7050 = vmatpush2.msra.mxu0 0.0
        %7051 = vmatprep.subr.mxu0 0.0
        %7052 = vmatpush2.msra.mxu0 0.0
        %7053 = vmatprep.subr.mxu0 0.0
        %7054 = vmatpush2.msra.mxu0 0.0
        %7055 = vmatprep.subr.mxu0 0.0
        %7056 = vmatpush2.msra.mxu0 0.0
        %7057 = vmatprep.subr.mxu0 0.0
        %7058 = vmatpush2.msra.mxu0 0.0
        %7059 = vmatprep.subr.mxu0 0.0
        %7060 = vmatpush2.msra.mxu0 0.0
        %7061 = vmatprep.subr.mxu0 0.0
        %7062 = vmatpush2.msra.mxu0 0.0
        %7063 = vmatprep.subr.mxu0 0.0
        %7064 = vmatpush2.msra.mxu0 0.0
        %7065 = vmatprep.subr.mxu0 0.0
        %7066 = vmatpush2.msra.mxu0 0.0
        %7067 = vmatprep.subr.mxu0 0.0
        %7068 = vmatpush2.msra.mxu0 0.0
        %7069 = vmatprep.subr.mxu0 0.0
        %7070 = vmatpush2.msra.mxu0 0.0
        %7071 = vmatprep.subr.mxu0 0.0
        %7072 = vmatpush2.msra.mxu0 0.0
        %7073 = vmatprep.subr.mxu0 0.0
        %7074 = vmatpush2.msra.mxu0 0.0
        %7075 = vmatprep.subr.mxu0 0.0
        %7076 = vmatpush2.msra.mxu0 0.0
        %7077 = vmatprep.subr.mxu0 0.0
        %7078 = vmatpush2.msra.mxu0 0.0
        %7079 = vmatprep.subr.mxu0 0.0
        %7080 = vmatpush2.msra.mxu0 0.0
        %7081 = vmatprep.mubr.f32.mxu0 0.0
        %7082 = vmatmul.mubr.f32.gmra.mxu0 %v7009
        %v7083 = vpop.f32.mrf.mxu0
        %v7084 = vadd.f32 0.0, %v7083
        %v7085 = vpop.f32.mrf.mxu0
        %v7086 = vadd.f32 0.0, %v7085
        %7087 = vdwg.mxu0
        %7088 = vmatprep.subr.mxu0 0.0
        %7089 = vmatpush1.msra.mxu0 0.0
        %7090 = vmatprep.subr.mxu0 0.0
        %7091 = vmatpush1.msra.mxu0 0.0
        %7092 = vmatprep.subr.mxu0 0.0
        %7093 = vmatpush1.msra.mxu0 0.0
        %7094 = vmatprep.subr.mxu0 0.0
        %7095 = vmatpush1.msra.mxu0 0.0
        %7096 = vmatprep.subr.mxu0 0.0
        %7097 = vmatpush1.msra.mxu0 0.0
        %7098 = vmatprep.subr.mxu0 0.0
        %7099 = vmatpush1.msra.mxu0 0.0
        %7100 = vmatprep.subr.mxu0 0.0
        %7101 = vmatpush1.msra.mxu0 0.0
        %7102 = vmatprep.subr.mxu0 0.0
        %7103 = vmatpush1.msra.mxu0 0.0
        %7104 = vmatprep.subr.mxu0 0.0
        %7105 = vmatpush1.msra.mxu0 0.0
        %7106 = vmatprep.subr.mxu0 0.0
        %7107 = vmatpush1.msra.mxu0 0.0
        %7108 = vmatprep.subr.mxu0 0.0
        %7109 = vmatpush1.msra.mxu0 0.0
        %7110 = vmatprep.subr.mxu0 0.0
        %7111 = vmatpush1.msra.mxu0 0.0
        %7112 = vmatprep.subr.mxu0 0.0
        %7113 = vmatpush1.msra.mxu0 0.0
        %7114 = vmatprep.subr.mxu0 0.0
        %7115 = vmatpush1.msra.mxu0 0.0
        %7116 = vmatprep.subr.mxu0 0.0
        %7117 = vmatpush1.msra.mxu0 0.0
        %7118 = vmatprep.subr.mxu0 0.0
        %7119 = vmatpush1.msra.mxu0 %v7015
        %7120 = vmatprep.subr.mxu0 0.0
        %7121 = vmatpush2.msra.mxu0 0.0
        %7122 = vmatprep.subr.mxu0 0.0
        %7123 = vmatpush2.msra.mxu0 0.0
        %7124 = vmatprep.subr.mxu0 0.0
        %7125 = vmatpush2.msra.mxu0 0.0
        %7126 = vmatprep.subr.mxu0 0.0
        %7127 = vmatpush2.msra.mxu0 0.0
        %7128 = vmatprep.subr.mxu0 0.0
        %7129 = vmatpush2.msra.mxu0 0.0
        %7130 = vmatprep.subr.mxu0 0.0
        %7131 = vmatpush2.msra.mxu0 0.0
        %7132 = vmatprep.subr.mxu0 0.0
        %7133 = vmatpush2.msra.mxu0 0.0
        %7134 = vmatprep.subr.mxu0 0.0
        %7135 = vmatpush2.msra.mxu0 0.0
        %7136 = vmatprep.subr.mxu0 0.0
        %7137 = vmatpush2.msra.mxu0 0.0
        %7138 = vmatprep.subr.mxu0 0.0
        %7139 = vmatpush2.msra.mxu0 0.0
        %7140 = vmatprep.subr.mxu0 0.0
        %7141 = vmatpush2.msra.mxu0 0.0
        %7142 = vmatprep.subr.mxu0 0.0
        %7143 = vmatpush2.msra.mxu0 0.0
        %7144 = vmatprep.subr.mxu0 0.0
        %7145 = vmatpush2.msra.mxu0 0.0
        %7146 = vmatprep.subr.mxu0 0.0
        %7147 = vmatpush2.msra.mxu0 0.0
        %7148 = vmatprep.subr.mxu0 0.0
        %7149 = vmatpush2.msra.mxu0 0.0
        %7150 = vmatprep.subr.mxu0 0.0
        %7151 = vmatpush2.msra.mxu0 0.0
        %7152 = vmatprep.mubr.f32.mxu0 0.0
        %7153 = vmatmul.mubr.f32.gmra.mxu0 %v7009
        %v7154 = vpop.f32.mrf.mxu0
        %v7155 = vadd.f32 0.0, %v7154
        %v7156 = vpop.f32.mrf.mxu0
        %7157 = vdwg.mxu0
        %v7158 = vadd.f32 %v6893, %v7084
        %v7159 = vadd.f32 %v6895, %v7086
        %v7160 = vadd.f32 %v6964, %v7155
        %s7161 = scalar_lea.vmem %s431, 12
        %v7162 = vld [vmem:[%s7161] sm:$0xff]
        %v7163 = vld [vmem:[%s7161 + $0x8] sm:$0xf]
        %s7164 = scalar_lea.vmem %s10, 12
        %v7165 = vld [vmem:[%s7164] sm:$0xf]
        %7167 = vset.pattern.permute.xlu0 0
        %7168 = vperm.xlu0 %7167, %v7165
        %v7169 = vpop.permute.xlu0 %7168
        %v7171 = vunpack.c.l.s4 839922192
        %v7172 = vunpack.c.0.s8 %v7171
        %v7173 = vlaneseq
        %v7174 = vshrl.u32 %v7173, 7
        %v7175 = vsub.s32 %v7172, %v7174
        %v7176 = vrot.slane %v7169, %v7175
        %v7178 = vmul.f32 %v7162, %v7176
        %v7179 = vmul.f32 %v7163, %v7176
        %s7180 = scalar_lea.vmem %s11, 12
        %v7181 = vld [vmem:[%s7180] sm:$0xf]
        %7183 = vset.pattern.permute.xlu0 0
        %7184 = vperm.xlu0 %7183, %v7181
        %v7185 = vpop.permute.xlu0 %7184
        %v7187 = vunpack.c.l.s4 839922192
        %v7188 = vunpack.c.0.s8 %v7187
        %v7189 = vlaneseq
        %v7190 = vshrl.u32 %v7189, 7
        %v7191 = vsub.s32 %v7188, %v7190
        %v7192 = vrot.slane %v7185, %v7191
        %v7194 = vadd.f32 %v7178, %v7192
        %v7195 = vadd.f32 %v7179, %v7192
        %v7196 = vmax.f32 %v7194, 0.0
        %v7197 = vmax.f32 %v7195, 0.0
        %s7198 = scalar_lea.vmem %s5, 12
        %v7199 = vld [vmem:[%s7198] sm:$0xf]
        %v7202 = vcombine.high %v7196, %v7196
        %v7204 = vsel %vm514, %v7199, 0
        %v7206 = vsel %vm518, %v7196, 0
        %v7208 = vsel %vm518, %v7202, 0
        %v7210 = vsel %vm518, %v7197, 0
        %7212 = vmatprep.subr.mxu0 0.0
        %7213 = vmatpush1.msra.mxu0 0.0
        %7214 = vmatprep.subr.mxu0 0.0
        %7215 = vmatpush1.msra.mxu0 0.0
        %7216 = vmatprep.subr.mxu0 0.0
        %7217 = vmatpush1.msra.mxu0 0.0
        %7218 = vmatprep.subr.mxu0 0.0
        %7219 = vmatpush1.msra.mxu0 0.0
        %7220 = vmatprep.subr.mxu0 0.0
        %7221 = vmatpush1.msra.mxu0 0.0
        %7222 = vmatprep.subr.mxu0 0.0
        %7223 = vmatpush1.msra.mxu0 0.0
        %7224 = vmatprep.subr.mxu0 0.0
        %7225 = vmatpush1.msra.mxu0 0.0
        %7226 = vmatprep.subr.mxu0 0.0
        %7227 = vmatpush1.msra.mxu0 0.0
        %7228 = vmatprep.subr.mxu0 0.0
        %7229 = vmatpush1.msra.mxu0 0.0
        %7230 = vmatprep.subr.mxu0 0.0
        %7231 = vmatpush1.msra.mxu0 0.0
        %7232 = vmatprep.subr.mxu0 0.0
        %7233 = vmatpush1.msra.mxu0 0.0
        %7234 = vmatprep.subr.mxu0 0.0
        %7235 = vmatpush1.msra.mxu0 0.0
        %7236 = vmatprep.subr.mxu0 0.0
        %7237 = vmatpush1.msra.mxu0 0.0
        %7238 = vmatprep.subr.mxu0 0.0
        %7239 = vmatpush1.msra.mxu0 0.0
        %7240 = vmatprep.subr.mxu0 0.0
        %7241 = vmatpush1.msra.mxu0 0.0
        %7242 = vmatprep.subr.mxu0 %v7208
        %7243 = vmatpush1.msra.mxu0 %v7206
        %7244 = vmatprep.subr.mxu0 0.0
        %7245 = vmatpush2.msra.mxu0 0.0
        %7246 = vmatprep.subr.mxu0 0.0
        %7247 = vmatpush2.msra.mxu0 0.0
        %7248 = vmatprep.subr.mxu0 0.0
        %7249 = vmatpush2.msra.mxu0 0.0
        %7250 = vmatprep.subr.mxu0 0.0
        %7251 = vmatpush2.msra.mxu0 0.0
        %7252 = vmatprep.subr.mxu0 0.0
        %7253 = vmatpush2.msra.mxu0 0.0
        %7254 = vmatprep.subr.mxu0 0.0
        %7255 = vmatpush2.msra.mxu0 0.0
        %7256 = vmatprep.subr.mxu0 0.0
        %7257 = vmatpush2.msra.mxu0 0.0
        %7258 = vmatprep.subr.mxu0 0.0
        %7259 = vmatpush2.msra.mxu0 0.0
        %7260 = vmatprep.subr.mxu0 0.0
        %7261 = vmatpush2.msra.mxu0 0.0
        %7262 = vmatprep.subr.mxu0 0.0
        %7263 = vmatpush2.msra.mxu0 0.0
        %7264 = vmatprep.subr.mxu0 0.0
        %7265 = vmatpush2.msra.mxu0 0.0
        %7266 = vmatprep.subr.mxu0 0.0
        %7267 = vmatpush2.msra.mxu0 0.0
        %7268 = vmatprep.subr.mxu0 0.0
        %7269 = vmatpush2.msra.mxu0 0.0
        %7270 = vmatprep.subr.mxu0 0.0
        %7271 = vmatpush2.msra.mxu0 0.0
        %7272 = vmatprep.subr.mxu0 0.0
        %7273 = vmatpush2.msra.mxu0 0.0
        %7274 = vmatprep.subr.mxu0 0.0
        %7275 = vmatpush2.msra.mxu0 0.0
        %7276 = vmatprep.mubr.f32.mxu0 0.0
        %7277 = vmatmul.mubr.f32.gmra.mxu0 %v7204
        %v7278 = vpop.f32.mrf.mxu0
        %v7279 = vadd.f32 0.0, %v7278
        %v7280 = vpop.f32.mrf.mxu0
        %v7281 = vadd.f32 0.0, %v7280
        %7282 = vdwg.mxu0
        %7283 = vmatprep.subr.mxu0 0.0
        %7284 = vmatpush1.msra.mxu0 0.0
        %7285 = vmatprep.subr.mxu0 0.0
        %7286 = vmatpush1.msra.mxu0 0.0
        %7287 = vmatprep.subr.mxu0 0.0
        %7288 = vmatpush1.msra.mxu0 0.0
        %7289 = vmatprep.subr.mxu0 0.0
        %7290 = vmatpush1.msra.mxu0 0.0
        %7291 = vmatprep.subr.mxu0 0.0
        %7292 = vmatpush1.msra.mxu0 0.0
        %7293 = vmatprep.subr.mxu0 0.0
        %7294 = vmatpush1.msra.mxu0 0.0
        %7295 = vmatprep.subr.mxu0 0.0
        %7296 = vmatpush1.msra.mxu0 0.0
        %7297 = vmatprep.subr.mxu0 0.0
        %7298 = vmatpush1.msra.mxu0 0.0
        %7299 = vmatprep.subr.mxu0 0.0
        %7300 = vmatpush1.msra.mxu0 0.0
        %7301 = vmatprep.subr.mxu0 0.0
        %7302 = vmatpush1.msra.mxu0 0.0
        %7303 = vmatprep.subr.mxu0 0.0
        %7304 = vmatpush1.msra.mxu0 0.0
        %7305 = vmatprep.subr.mxu0 0.0
        %7306 = vmatpush1.msra.mxu0 0.0
        %7307 = vmatprep.subr.mxu0 0.0
        %7308 = vmatpush1.msra.mxu0 0.0
        %7309 = vmatprep.subr.mxu0 0.0
        %7310 = vmatpush1.msra.mxu0 0.0
        %7311 = vmatprep.subr.mxu0 0.0
        %7312 = vmatpush1.msra.mxu0 0.0
        %7313 = vmatprep.subr.mxu0 0.0
        %7314 = vmatpush1.msra.mxu0 %v7210
        %7315 = vmatprep.subr.mxu0 0.0
        %7316 = vmatpush2.msra.mxu0 0.0
        %7317 = vmatprep.subr.mxu0 0.0
        %7318 = vmatpush2.msra.mxu0 0.0
        %7319 = vmatprep.subr.mxu0 0.0
        %7320 = vmatpush2.msra.mxu0 0.0
        %7321 = vmatprep.subr.mxu0 0.0
        %7322 = vmatpush2.msra.mxu0 0.0
        %7323 = vmatprep.subr.mxu0 0.0
        %7324 = vmatpush2.msra.mxu0 0.0
        %7325 = vmatprep.subr.mxu0 0.0
        %7326 = vmatpush2.msra.mxu0 0.0
        %7327 = vmatprep.subr.mxu0 0.0
        %7328 = vmatpush2.msra.mxu0 0.0
        %7329 = vmatprep.subr.mxu0 0.0
        %7330 = vmatpush2.msra.mxu0 0.0
        %7331 = vmatprep.subr.mxu0 0.0
        %7332 = vmatpush2.msra.mxu0 0.0
        %7333 = vmatprep.subr.mxu0 0.0
        %7334 = vmatpush2.msra.mxu0 0.0
        %7335 = vmatprep.subr.mxu0 0.0
        %7336 = vmatpush2.msra.mxu0 0.0
        %7337 = vmatprep.subr.mxu0 0.0
        %7338 = vmatpush2.msra.mxu0 0.0
        %7339 = vmatprep.subr.mxu0 0.0
        %7340 = vmatpush2.msra.mxu0 0.0
        %7341 = vmatprep.subr.mxu0 0.0
        %7342 = vmatpush2.msra.mxu0 0.0
        %7343 = vmatprep.subr.mxu0 0.0
        %7344 = vmatpush2.msra.mxu0 0.0
        %7345 = vmatprep.subr.mxu0 0.0
        %7346 = vmatpush2.msra.mxu0 0.0
        %7347 = vmatprep.mubr.f32.mxu0 0.0
        %7348 = vmatmul.mubr.f32.gmra.mxu0 %v7204
        %v7349 = vpop.f32.mrf.mxu0
        %v7350 = vadd.f32 0.0, %v7349
        %v7351 = vpop.f32.mrf.mxu0
        %7352 = vdwg.mxu0
        %v7353 = vadd.f32 %v7158, %v7279
        %v7354 = vadd.f32 %v7159, %v7281
        %v7355 = vadd.f32 %v7160, %v7350
        %v7358 = vcombine.low %v7353, %v7354
        %7360 = vst [vmem:[%s421] sm:$0xff] %v7358
        %7361 = vst.msk [vmem:[%s421 + $0x8] sm:$0xf] %vm435, %v7355
        %s7362 = sand.u32 %s296, 1
        %s7363 = scalar_lea.sflag [#allocation4], %s7362
        %s7364 = sand.u32 %s296, 1
        %s7365 = smul.addr %s7364, 12
        %s7366 = scalar_lea.vmem [#allocation3], %s7365
        // Predicated region
        $region69: #{tpu_custom_call.1} parent=67 // pred_check
          %p7367 = pneg %p306
        $region70: #{tpu_custom_call.1} parent=67 // pred_check_branch
          %7369 = sbr.rel (%p7367) target = $region72
        $region71: #{tpu_custom_call.1} parent=67 // pred_region
          %s7371 = ssub.s32 192, 192
          %7372 = vsyncadd %s7363, %s7371
          %s7373 = smul.addr %s26, 3
          %s7374 = smul.addr %s7373, 64
          %s7375 = scalar_lea.hbm %s12, %s7374
          %s7377 = sshll.u32 %s7366, 4
          %s7378 = int_to_ptr.vmem [resolvable:$true] %s7377
          %7380 = dma.vmem_to_hbm [thread:$0]  %s7378, 192, %s7375, %s7363
        $region72: #{tpu_custom_call.1} parent=67 // pred_fallthru
          _
      $region68: #{tpu_custom_call.1} parent=5 // pred_fallthru
        _
      %p7381 = scmp.le.s32.totalorder 2, %s21
      // Predicated region
      $region73: #{tpu_custom_call.1} parent=5 // pred_check
        %p7382 = pneg %p7381
      $region74: #{tpu_custom_call.1} parent=5 // pred_check_branch
        %7384 = sbr.rel (%p7382) target = $region76
      $region75: #{tpu_custom_call.1} parent=5 // pred_region
        %s7385 = ssub.s32 %s21, 2
        // Predicated region
        $region77: #{tpu_custom_call.1} parent=75 // pred_check
          %p7386 = pneg %p312
        $region78: #{tpu_custom_call.1} parent=75 // pred_check_branch
          %7388 = sbr.rel (%p7386) target = $region80
        $region79: #{tpu_custom_call.1} parent=75 // pred_region
          %s7389 = sand.u32 %s297, 1
          %s7390 = scalar_lea.sflag [#allocation4], %s7389
          %s7391 = sand.u32 %s297, 1
          %s7392 = smul.addr %s7391, 12
          %s7393 = scalar_lea.vmem [#allocation3], %s7392
          %7394 = dma.done %s7390, 192
        $region80: #{tpu_custom_call.1} parent=75 // pred_fallthru
          _
      $region76: #{tpu_custom_call.1} parent=5 // pred_fallthru
        _
    $region6: #{tpu_custom_call.1} parent=1 // loop_footer
      %s25 = sadd.s32 1, %s21
    $region7: #{tpu_custom_call.1} parent=1 // loop_footer_branch
      %20 = sbr.rel target = $region3
    $region8: #{tpu_custom_call.1} parent=1 // loop_exit
      _
    %7395 = vsyncpa [#allocation4], 1
    %s7396 = scalar_lea.sflag [#allocation4], 1
    %7397 = vsyncpa %s7396, 1

</llo_original>
